<compile_context>
chip_gen: v7x
topology: tpu7x:2x2x1
jax: 0.10.0
libtpu: 0.0.40
codegen_flags: <defaults>
</compile_context>

<pallas_src>
import functools
import math

import numpy as np

import jax
import jax.numpy as jnp
from jax.experimental import pallas as pl
from jax.experimental.pallas import tpu as pltpu

# ----------------------------- configuration --------------------------------
IN_CHANNELS = 3
OUT_CH = 3
RESOLUTION = 16
CH = 8
CH_MULT = (1, 2)
Z_CHANNELS = 4
DOUBLE_Z = True
EMBED_DIM = 4
LATENT_RES = RESOLUTION // 2 ** (len(CH_MULT) - 1)   # 8
BATCH = 2

CIN_PAD = 8                       # in_channels 3 padded to 8 sublanes
CPAD_MAX = 16                     # widest (padded) channel count in the net
N_HI = RESOLUTION * RESOLUTION    # 256
N_LO = LATENT_RES * LATENT_RES    # 64


def _round_up(x, m):
    return (x + m - 1) // m * m


# ------------------------- constant helper matrices --------------------------
def _conv_masks(H, W):
    """(9, H*W) border masks: mask[t, y*W+x] = 1 iff tap t of a 3x3 conv
    centered at (y, x) reads an in-bounds pixel (zero padding elsewhere)."""
    m = np.zeros((9, H * W), np.float32)
    t = 0
    for di in (-1, 0, 1):
        for dj in (-1, 0, 1):
            for y in range(H):
                for x in range(W):
                    if 0 <= y + di < H and 0 <= x + dj < W:
                        m[t, y * W + x] = 1.0
            t += 1
    return m


def _downsample_matrix(H, W):
    """(H*W, H*W/4) 0/1 matrix: h_lo = h_hi @ DS picks even (y, x) positions."""
    Hl, Wl = H // 2, W // 2
    m = np.zeros((H * W, Hl * Wl), np.float32)
    for yl in range(Hl):
        for xl in range(Wl):
            m[(2 * yl) * W + 2 * xl, yl * Wl + xl] = 1.0
    return m


def _upsample_matrix(Hl, Wl):
    """(Hl*Wl, 4*Hl*Wl) 0/1 matrix: h_hi = h_lo @ US is nearest-neighbor x2."""
    H, W = 2 * Hl, 2 * Wl
    m = np.zeros((Hl * Wl, H * W), np.float32)
    for y in range(H):
        for x in range(W):
            m[(y // 2) * Wl + (x // 2), y * W + x] = 1.0
    return m


def _block_diag(m, batch):
    r, c = m.shape
    out = np.zeros((batch * r, batch * c), m.dtype)
    for b in range(batch):
        out[b * r:(b + 1) * r, b * c:(b + 1) * c] = m
    return out


def _mask_stack(base, batch):
    """(9, CPAD_MAX, batch*N) f32: per-tap mask tiled over the batch and
    pre-broadcast to 16 sublanes so the kernel never emits broadcast_in_dim."""
    tiled = np.tile(base, (1, batch))                       # (9, batch*N)
    stk = np.broadcast_to(tiled[:, None, :], (9, CPAD_MAX, tiled.shape[1]))
    return jnp.asarray(np.ascontiguousarray(stk), jnp.float32)


def make_constants():
    return {
        "mask_hi": _conv_masks(RESOLUTION, RESOLUTION),
        "mask_lo": _conv_masks(LATENT_RES, LATENT_RES),
        "ds": _downsample_matrix(RESOLUTION, RESOLUTION),
        "us": _upsample_matrix(LATENT_RES, LATENT_RES),
    }


# ------------------------------ Pallas kernel --------------------------------
def _silu(x):
    # exp -> EUP, approx reciprocal -> EUP; no VALU divide.
    return x * pl.reciprocal(1.0 + jnp.exp(-x), approx=True)


def _conv3x3(h, w_ref, b_ref, m_ref, stk_ref, W, act):
    """3x3 same-padding conv on a (Cin_pad, N) slab as ONE stacked-tap matmul.

    h: (cin_pad, n) f32 value.     w_ref: (cout_pad, 9*cin_pad) bf16.
    b_ref: (cout_pad, 1) f32.      m_ref: (9, 16, n) f32 mask stack.
    stk_ref: (>=9*cin_pad, >=n) bf16 VMEM scratch.  Returns (cout_pad, n) f32."""
    cin, n = h.shape
    t = 0
    for di in (-1, 0, 1):
        for dj in (-1, 0, 1):
            shift = di * W + dj                      # flat source offset
            if shift == 0:
                tap = h
            else:
                # tap[m] = h[m + shift]; wrapped / cross-image values are
                # zeroed by the border mask (== the conv's zero padding).
                tap = pltpu.roll(h, shift=(-shift) % n, axis=1)
                tap = tap * m_ref[t, :cin, :]
            stk_ref[t * cin:(t + 1) * cin, :n] = tap.astype(jnp.bfloat16)
            t += 1
    out = jnp.dot(w_ref[...], stk_ref[:9 * cin, :n],
                  preferred_element_type=jnp.float32) + b_ref[...]
    return _silu(out) if act else out


def _ae_kernel(x_ref, eps_ref, mhi_ref, mlo_ref, ds_ref, us_ref, *rest,
               sample_posterior, W, Wl, embed_dim):
    # rest layout: enc 5x(w,b) | qw qb pqw pqb | dec 5x(w,b) | dec_out mom_out | stk
    enc = rest[0:10]
    qw_ref, qb_ref, pqw_ref, pqb_ref = rest[10:14]
    dcv = rest[14:24]
    dec_ref, mom_ref = rest[24:26]
    stk_ref = rest[26]

    h = x_ref[...]                                          # (8, B*N) f32

    # ---------------- encoder (stand-in; see TODO at top) ----------------
    h = _conv3x3(h, enc[0], enc[1], mhi_ref, stk_ref, W, True)   # conv_in 3->8
    h = _conv3x3(h, enc[2], enc[3], mhi_ref, stk_ref, W, True)   # block0  8->8
    h = _conv3x3(h, enc[4], enc[5], mhi_ref, stk_ref, W, True)   # down0   8->16
    h = jnp.dot(h.astype(jnp.bfloat16), ds_ref[...],             # stride-2 pick
                preferred_element_type=jnp.float32)              # (16, B*Nl)
    h = _conv3x3(h, enc[6], enc[7], mlo_ref, stk_ref, Wl, True)  # block1 16->16
    h = _conv3x3(h, enc[8], enc[9], mlo_ref, stk_ref, Wl, False) # conv_out ->2z

    # --------- quant_conv (1x1) + DiagonalGaussianDistribution -----------
    moments = jnp.dot(qw_ref[...], h.astype(jnp.bfloat16),
                      preferred_element_type=jnp.float32) + qb_ref[...]
    mean = moments[:embed_dim, :]
    logvar = jnp.clip(moments[embed_dim:, :], -30.0, 20.0)
    # single dense (8, B*Nl) store: mean rows 0..3, clipped logvar rows 4..7.
    mom_ref[...] = jnp.concatenate([mean, logvar], axis=0).astype(mom_ref.dtype)

    if sample_posterior:                                    # posterior.sample()
        z = mean + jnp.exp(0.5 * logvar) * eps_ref[...]
    else:                                                   # posterior.mode()
        z = mean

    # ------------------------- post_quant_conv ---------------------------
    zq = jnp.dot(pqw_ref[...], z.astype(jnp.bfloat16),
                 preferred_element_type=jnp.float32) + pqb_ref[...]  # (8, B*Nl)

    # ---------------- decoder (stand-in; see TODO at top) ----------------
    h = _conv3x3(zq, dcv[0], dcv[1], mlo_ref, stk_ref, Wl, True)  # conv_in 4->16
    h = _conv3x3(h, dcv[2], dcv[3], mlo_ref, stk_ref, Wl, True)   # block1 16->16
    h = jnp.dot(h.astype(jnp.bfloat16), us_ref[...],              # nearest x2
                preferred_element_type=jnp.float32)               # (16, B*N)
    h = _conv3x3(h, dcv[4], dcv[5], mhi_ref, stk_ref, W, True)    # up1   16->16
    h = _conv3x3(h, dcv[6], dcv[7], mhi_ref, stk_ref, W, True)    # block0 16->8
    h = _conv3x3(h, dcv[8], dcv[9], mhi_ref, stk_ref, W, False)   # conv_out ->3

    dec_ref[...] = h.astype(dec_ref.dtype)


# ------------------------------ parameters -----------------------------------
def _init_conv3x3_params(key, cin, cout):
    kw, kb = jax.random.split(key)
    bound = 1.0 / math.sqrt(9 * cin)
    w = jax.random.uniform(kw, (9, cout, cin), jnp.float32, -bound, bound)
    b = jax.random.uniform(kb, (cout, 1), jnp.float32, -bound, bound)
    return w, b


def _init_conv1x1_params(key, cin, cout):
    kw, kb = jax.random.split(key)
    bound = 1.0 / math.sqrt(cin)
    w = jax.random.uniform(kw, (cout, cin), jnp.float32, -bound, bound)
    b = jax.random.uniform(kb, (cout, 1), jnp.float32, -bound, bound)
    return w, b


def init_params(key):
    keys = jax.random.split(key, 12)
    moments_ch = 2 * Z_CHANNELS if DOUBLE_Z else Z_CHANNELS
    enc_dims = [(IN_CHANNELS, CH),
                (CH, CH * CH_MULT[0]),
                (CH * CH_MULT[0], CH * CH_MULT[1]),
                (CH * CH_MULT[1], CH * CH_MULT[1]),
                (CH * CH_MULT[1], moments_ch)]
    dec_dims = [(Z_CHANNELS, CH * CH_MULT[-1]),
                (CH * CH_MULT[-1], CH * CH_MULT[-1]),
                (CH * CH_MULT[-1], CH * CH_MULT[-1]),
                (CH * CH_MULT[-1], CH * CH_MULT[0]),
                (CH * CH_MULT[0], OUT_CH)]
    return {
        "enc": [_init_conv3x3_params(keys[i], ci, co)
                for i, (ci, co) in enumerate(enc_dims)],
        "quant": _init_conv1x1_params(keys[5], moments_ch, 2 * EMBED_DIM),
        "post_quant": _init_conv1x1_params(keys[6], EMBED_DIM, Z_CHANNELS),
        "dec": [_init_conv3x3_params(keys[7 + i], ci, co)
                for i, (ci, co) in enumerate(dec_dims)],
    }


# -------------------------- host-side operand packing ------------------------
def _pack_conv3x3(w, b):
    """(9,cout,cin),(cout,1) -> (cout_pad, 9*cin_pad) bf16, (cout_pad,1) f32."""
    _, cout, cin = w.shape
    cinp, coutp = _round_up(cin, 8), _round_up(cout, 8)
    wp = jnp.zeros((coutp, 9 * cinp), jnp.float32)
    for t in range(9):
        wp = wp.at[:cout, t * cinp:t * cinp + cin].set(w[t])
    bp = jnp.zeros((coutp, 1), jnp.float32).at[:cout].set(b)
    return wp.astype(jnp.bfloat16), bp


def _pack_conv1x1(w, b):
    cout, cin = w.shape
    coutp = _round_up(cout, 8)
    wp = jnp.zeros((coutp, cin), jnp.float32).at[:cout, :cin].set(w)
    bp = jnp.zeros((coutp, 1), jnp.float32).at[:cout].set(b)
    return wp.astype(jnp.bfloat16), bp


def pack_for_kernel(params, consts, batch):
    ops = [
        _mask_stack(consts["mask_hi"], batch),                       # (9,16,B*N)
        _mask_stack(consts["mask_lo"], batch),                       # (9,16,B*Nl)
        jnp.asarray(_block_diag(consts["ds"], batch), jnp.bfloat16),  # (B*N,B*Nl)
        jnp.asarray(_block_diag(consts["us"], batch), jnp.bfloat16),  # (B*Nl,B*N)
    ]
    for w, b in params["enc"]:
        ops += list(_pack_conv3x3(w, b))
    ops += list(_pack_conv1x1(*params["quant"]))
    ops += list(_pack_conv1x1(*params["post_quant"]))
    for w, b in params["dec"]:
        ops += list(_pack_conv3x3(w, b))
    return ops


# ------------------------------ model forward --------------------------------
def representation_ae_forward(ops, x_nchw, eps, sample_posterior=True):
    """Mirrors RepresentationAE.forward: returns (dec, (mean, logvar))."""
    B, Cin, H, Wd = x_nchw.shape
    Hl, Wl = H // 2, Wd // 2
    N, Nl = H * Wd, Hl * Wl

    # batch-in-lanes, channel-major slab: (C_pad, B*H*W)
    x_flat = jnp.transpose(x_nchw, (1, 0, 2, 3)).reshape(Cin, B * N)
    x_pad = jnp.pad(x_flat, ((0, CIN_PAD - Cin), (0, 0)))

    kernel = functools.partial(_ae_kernel,
                               sample_posterior=sample_posterior,
                               W=Wd, Wl=Wl, embed_dim=EMBED_DIM)

    dec_flat, mom_flat = pl.pallas_call(
        kernel,
        out_shape=(jax.ShapeDtypeStruct((8, B * N), jnp.float32),
                   jax.ShapeDtypeStruct((8, B * Nl), jnp.float32)),
        scratch_shapes=[pltpu.VMEM((9 * CPAD_MAX, B * N), jnp.bfloat16)],
    )(x_pad, eps, *ops)

    dec = dec_flat.reshape(8, B, H, Wd).transpose(1, 0, 2, 3)[:, :OUT_CH]
    mom = mom_flat.reshape(8, B, Hl, Wl).transpose(1, 0, 2, 3)
    mean, logvar = mom[:, :EMBED_DIM], mom[:, EMBED_DIM:]
    return dec, (mean, logvar)


# --------------------- pure-JAX reference (for validation) -------------------
def _q(x):
    # mirror the kernel's bf16 MXU operand rounding (accumulation stays f32)
    return x.astype(jnp.bfloat16).astype(jnp.float32)


def _silu_ref(x):
    return x * jax.nn.sigmoid(x)


def _conv3x3_ref(h, w, b, mask, W, act):
    cout, n = w.shape[1], h.shape[1]
    acc = jnp.zeros((cout, n), jnp.float32)
    t = 0
    for di in (-1, 0, 1):
        for dj in (-1, 0, 1):
            shift = di * W + dj
            if shift == 0:
                tap = h
            else:
                tap = jnp.roll(h, (-shift) % n, axis=1) * mask[t]
            acc = acc + _q(w[t]) @ _q(tap)
            t += 1
    acc = acc + b
    return _silu_ref(acc) if act else acc


def _forward_ref_single(params, consts, x1, eps1, sample):
    """Reference on one (Cin, H*W) example, mirroring the kernel math."""
    W, Wl = RESOLUTION, LATENT_RES
    mh = jnp.asarray(consts["mask_hi"])
    ml = jnp.asarray(consts["mask_lo"])
    ds = jnp.asarray(consts["ds"])
    us = jnp.asarray(consts["us"])
    e, d = params["enc"], params["dec"]
    h = _conv3x3_ref(x1, e[0][0], e[0][1], mh, W, True)
    h = _conv3x3_ref(h, e[1][0], e[1][1], mh, W, True)
    h = _conv3x3_ref(h, e[2][0], e[2][1], mh, W, True)
    h = _q(h) @ _q(ds)
    h = _conv3x3_ref(h, e[3][0], e[3][1], ml, Wl, True)
    h = _conv3x3_ref(h, e[4][0], e[4][1], ml, Wl, False)
    moments = _q(params["quant"][0]) @ _q(h) + params["quant"][1]
    mean = moments[:EMBED_DIM]
    logvar = jnp.clip(moments[EMBED_DIM:], -30.0, 20.0)
    if sample:
        z = mean + jnp.exp(0.5 * logvar) * eps1
    else:
        z = mean
    zq = _q(params["post_quant"][0]) @ _q(z) + params["post_quant"][1]
    h = _conv3x3_ref(zq, d[0][0], d[0][1], ml, Wl, True)
    h = _conv3x3_ref(h, d[1][0], d[1][1], ml, Wl, True)
    h = _q(h) @ _q(us)
    h = _conv3x3_ref(h, d[2][0], d[2][1], mh, W, True)
    h = _conv3x3_ref(h, d[3][0], d[3][1], mh, W, True)
    h = _conv3x3_ref(h, d[4][0], d[4][1], mh, W, False)
    return h, mean, logvar


def _run_reference(params, consts, x, eps, sample):
    dec_l, mean_l, lv_l = [], [], []
    eps_r = eps.reshape(EMBED_DIM, BATCH, N_LO)
    for b in range(BATCH):
        dh, mh, lh = _forward_ref_single(params, consts,
                                         x[b].reshape(IN_CHANNELS, N_HI),
                                         eps_r[:, b, :], sample)
        dec_l.append(dh), mean_l.append(mh), lv_l.append(lh)
    dec = jnp.stack(dec_l).reshape(BATCH, OUT_CH, RESOLUTION, RESOLUTION)
    mean = jnp.stack(mean_l).reshape(BATCH, EMBED_DIM, LATENT_RES, LATENT_RES)
    logvar = jnp.stack(lv_l).reshape(BATCH, EMBED_DIM, LATENT_RES, LATENT_RES)
    return dec, mean, logvar


def _rel_err(a, b):
    return float(jnp.max(jnp.abs(a - b)) / (jnp.max(jnp.abs(b)) + 1e-6))


# ---------------------------------- main --------------------------------------
if __name__ == "__main__":
    key = jax.random.PRNGKey(0)
    pkey, xkey, ekey = jax.random.split(key, 3)
    params = init_params(pkey)
    consts = make_constants()
    ops = pack_for_kernel(params, consts, BATCH)

    x = jax.random.normal(xkey, (BATCH, IN_CHANNELS, RESOLUTION, RESOLUTION),
                          jnp.float32)
    eps = jax.random.normal(ekey, (EMBED_DIM, BATCH * N_LO), jnp.float32)

    fwd = jax.jit(representation_ae_forward,
                  static_argnames=("sample_posterior",))

    # --- deterministic path (posterior.mode) -------------------------------
    dec_m, (mean_m, logvar_m) = fwd(ops, x, eps, sample_posterior=False)
    jax.block_until_ready((dec_m, mean_m, logvar_m))

    with jax.default_matmul_precision("highest"):
        dec_r, mean_r, logvar_r = _run_reference(params, consts, x, eps, False)

    assert _rel_err(dec_m, dec_r) < 5e-2, ("dec mismatch", _rel_err(dec_m, dec_r))
    assert _rel_err(mean_m, mean_r) < 5e-2, ("mean mismatch",
                                             _rel_err(mean_m, mean_r))
    assert _rel_err(logvar_m, logvar_r) < 5e-2, ("logvar mismatch",
                                                 _rel_err(logvar_m, logvar_r))

    # --- stochastic path (default forward: posterior.sample()) -------------
    dec_s, (mean_s, logvar_s) = fwd(ops, x, eps, sample_posterior=True)
    jax.block_until_ready((dec_s, mean_s, logvar_s))

    with jax.default_matmul_precision("highest"):
        dec_sr, mean_sr, logvar_sr = _run_reference(params, consts, x, eps, True)

    assert _rel_err(dec_s, dec_sr) < 5e-2, ("sampled dec mismatch",
                                            _rel_err(dec_s, dec_sr))

    assert dec_s.shape == (BATCH, OUT_CH, RESOLUTION, RESOLUTION)
    assert mean_s.shape == (BATCH, EMBED_DIM, LATENT_RES, LATENT_RES)
    assert logvar_s.shape == (BATCH, EMBED_DIM, LATENT_RES, LATENT_RES)
    assert bool(jnp.all(jnp.isfinite(dec_s)))
    assert bool(jnp.all(jnp.isfinite(mean_s)))
    assert bool(jnp.all(jnp.isfinite(logvar_s)))
    print("KERNEL_OK")
</pallas_src>

<mosaic_0001>
module attributes {stable_mosaic.version = 11 : i64} {
  func.func @_ae_kernel(%arg0: memref<8x512xf32, #tpu.memory_space<vmem>>, %arg1: memref<4x128xf32, #tpu.memory_space<vmem>>, %arg2: memref<9x16x512xf32, #tpu.memory_space<vmem>>, %arg3: memref<9x16x128xf32, #tpu.memory_space<vmem>>, %arg4: memref<512x128xbf16, #tpu.memory_space<vmem>>, %arg5: memref<128x512xbf16, #tpu.memory_space<vmem>>, %arg6: memref<8x72xbf16, #tpu.memory_space<vmem>>, %arg7: memref<8x1xf32, #tpu.memory_space<vmem>>, %arg8: memref<8x72xbf16, #tpu.memory_space<vmem>>, %arg9: memref<8x1xf32, #tpu.memory_space<vmem>>, %arg10: memref<16x72xbf16, #tpu.memory_space<vmem>>, %arg11: memref<16x1xf32, #tpu.memory_space<vmem>>, %arg12: memref<16x144xbf16, #tpu.memory_space<vmem>>, %arg13: memref<16x1xf32, #tpu.memory_space<vmem>>, %arg14: memref<8x144xbf16, #tpu.memory_space<vmem>>, %arg15: memref<8x1xf32, #tpu.memory_space<vmem>>, %arg16: memref<8x8xbf16, #tpu.memory_space<vmem>>, %arg17: memref<8x1xf32, #tpu.memory_space<vmem>>, %arg18: memref<8x4xbf16, #tpu.memory_space<vmem>>, %arg19: memref<8x1xf32, #tpu.memory_space<vmem>>, %arg20: memref<16x72xbf16, #tpu.memory_space<vmem>>, %arg21: memref<16x1xf32, #tpu.memory_space<vmem>>, %arg22: memref<16x144xbf16, #tpu.memory_space<vmem>>, %arg23: memref<16x1xf32, #tpu.memory_space<vmem>>, %arg24: memref<16x144xbf16, #tpu.memory_space<vmem>>, %arg25: memref<16x1xf32, #tpu.memory_space<vmem>>, %arg26: memref<8x144xbf16, #tpu.memory_space<vmem>>, %arg27: memref<8x1xf32, #tpu.memory_space<vmem>>, %arg28: memref<8x72xbf16, #tpu.memory_space<vmem>>, %arg29: memref<8x1xf32, #tpu.memory_space<vmem>>, %arg30: memref<8x512xf32, #tpu.memory_space<vmem>>, %arg31: memref<8x128xf32, #tpu.memory_space<vmem>>, %arg32: memref<144x512xbf16, #tpu.memory_space<vmem>>) attributes {dimension_semantics = [], scalar_prefetch = 0 : i64, scratch_operands = 1 : i64, tpu.core_type = #tpu.core_type<tc>} {
    %c0 = arith.constant 0 : index
    %c0_0 = arith.constant 0 : index
    %0 = vector.load %arg0[%c0, %c0_0] : memref<8x512xf32, #tpu.memory_space<vmem>>, vector<8x512xf32>
    %c17_i32 = arith.constant 17 : i32
    %1 = tpu.dynamic_rotate %0 by %c17_i32 dim 1 : vector<8x512xf32>, i32 -> vector<8x512xf32>
    %c0_1 = arith.constant 0 : index
    %c0_2 = arith.constant 0 : index
    %c0_3 = arith.constant 0 : index
    %2 = vector.load %arg2[%c0_1, %c0_2, %c0_3] : memref<9x16x512xf32, #tpu.memory_space<vmem>>, vector<1x8x512xf32>
    %3 = vector.shape_cast %2 : vector<1x8x512xf32> to vector<8x512xf32>
    %4 = arith.mulf %1, %3 : vector<8x512xf32>
    %5 = arith.truncf %4 : vector<8x512xf32> to vector<8x512xbf16>
    %c0_4 = arith.constant 0 : index
    %c0_5 = arith.constant 0 : index
    %6 = vector.load %arg32[%c0_4, %c0_5] : memref<144x512xbf16, #tpu.memory_space<vmem>>, vector<8x512xbf16>
    tpu.vector_store %arg32[%c0_4, %c0_5], %5 {strides = array<i32>} : memref<144x512xbf16, #tpu.memory_space<vmem>>, vector<8x512xbf16>,
    %c16_i32 = arith.constant 16 : i32
    %7 = tpu.dynamic_rotate %0 by %c16_i32 dim 1 : vector<8x512xf32>, i32 -> vector<8x512xf32>
    %c1 = arith.constant 1 : index
    %c0_6 = arith.constant 0 : index
    %c0_7 = arith.constant 0 : index
    %8 = vector.load %arg2[%c1, %c0_6, %c0_7] : memref<9x16x512xf32, #tpu.memory_space<vmem>>, vector<1x8x512xf32>
    %9 = vector.shape_cast %8 : vector<1x8x512xf32> to vector<8x512xf32>
    %10 = arith.mulf %7, %9 : vector<8x512xf32>
    %11 = arith.truncf %10 : vector<8x512xf32> to vector<8x512xbf16>
    %c8 = arith.constant 8 : index
    %c0_8 = arith.constant 0 : index
    %12 = vector.load %arg32[%c8, %c0_8] : memref<144x512xbf16, #tpu.memory_space<vmem>>, vector<8x512xbf16>
    tpu.vector_store %arg32[%c8, %c0_8], %11 {strides = array<i32>} : memref<144x512xbf16, #tpu.memory_space<vmem>>, vector<8x512xbf16>,
    %c15_i32 = arith.constant 15 : i32
    %13 = tpu.dynamic_rotate %0 by %c15_i32 dim 1 : vector<8x512xf32>, i32 -> vector<8x512xf32>
    %c2 = arith.constant 2 : index
    %c0_9 = arith.constant 0 : index
    %c0_10 = arith.constant 0 : index
    %14 = vector.load %arg2[%c2, %c0_9, %c0_10] : memref<9x16x512xf32, #tpu.memory_space<vmem>>, vector<1x8x512xf32>
    %15 = vector.shape_cast %14 : vector<1x8x512xf32> to vector<8x512xf32>
    %16 = arith.mulf %13, %15 : vector<8x512xf32>
    %17 = arith.truncf %16 : vector<8x512xf32> to vector<8x512xbf16>
    %c16 = arith.constant 16 : index
    %c0_11 = arith.constant 0 : index
    %18 = vector.load %arg32[%c16, %c0_11] : memref<144x512xbf16, #tpu.memory_space<vmem>>, vector<8x512xbf16>
    tpu.vector_store %arg32[%c16, %c0_11], %17 {strides = array<i32>} : memref<144x512xbf16, #tpu.memory_space<vmem>>, vector<8x512xbf16>,
    %c1_i32 = arith.constant 1 : i32
    %19 = tpu.dynamic_rotate %0 by %c1_i32 dim 1 : vector<8x512xf32>, i32 -> vector<8x512xf32>
    %c3 = arith.constant 3 : index
    %c0_12 = arith.constant 0 : index
    %c0_13 = arith.constant 0 : index
    %20 = vector.load %arg2[%c3, %c0_12, %c0_13] : memref<9x16x512xf32, #tpu.memory_space<vmem>>, vector<1x8x512xf32>
    %21 = vector.shape_cast %20 : vector<1x8x512xf32> to vector<8x512xf32>
    %22 = arith.mulf %19, %21 : vector<8x512xf32>
    %23 = arith.truncf %22 : vector<8x512xf32> to vector<8x512xbf16>
    %c24 = arith.constant 24 : index
    %c0_14 = arith.constant 0 : index
    %24 = vector.load %arg32[%c24, %c0_14] : memref<144x512xbf16, #tpu.memory_space<vmem>>, vector<8x512xbf16>
    tpu.vector_store %arg32[%c24, %c0_14], %23 {strides = array<i32>} : memref<144x512xbf16, #tpu.memory_space<vmem>>, vector<8x512xbf16>,
    %25 = arith.truncf %0 : vector<8x512xf32> to vector<8x512xbf16>
    %c32 = arith.constant 32 : index
    %c0_15 = arith.constant 0 : index
    %26 = vector.load %arg32[%c32, %c0_15] : memref<144x512xbf16, #tpu.memory_space<vmem>>, vector<8x512xbf16>
    tpu.vector_store %arg32[%c32, %c0_15], %25 {strides = array<i32>} : memref<144x512xbf16, #tpu.memory_space<vmem>>, vector<8x512xbf16>,
    %c511_i32 = arith.constant 511 : i32
    %27 = tpu.dynamic_rotate %0 by %c511_i32 dim 1 : vector<8x512xf32>, i32 -> vector<8x512xf32>
    %c5 = arith.constant 5 : index
    %c0_16 = arith.constant 0 : index
    %c0_17 = arith.constant 0 : index
    %28 = vector.load %arg2[%c5, %c0_16, %c0_17] : memref<9x16x512xf32, #tpu.memory_space<vmem>>, vector<1x8x512xf32>
    %29 = vector.shape_cast %28 : vector<1x8x512xf32> to vector<8x512xf32>
    %30 = arith.mulf %27, %29 : vector<8x512xf32>
    %31 = arith.truncf %30 : vector<8x512xf32> to vector<8x512xbf16>
    %c40 = arith.constant 40 : index
    %c0_18 = arith.constant 0 : index
    %32 = vector.load %arg32[%c40, %c0_18] : memref<144x512xbf16, #tpu.memory_space<vmem>>, vector<8x512xbf16>
    tpu.vector_store %arg32[%c40, %c0_18], %31 {strides = array<i32>} : memref<144x512xbf16, #tpu.memory_space<vmem>>, vector<8x512xbf16>,
    %c497_i32 = arith.constant 497 : i32
    %33 = tpu.dynamic_rotate %0 by %c497_i32 dim 1 : vector<8x512xf32>, i32 -> vector<8x512xf32>
    %c6 = arith.constant 6 : index
    %c0_19 = arith.constant 0 : index
    %c0_20 = arith.constant 0 : index
    %34 = vector.load %arg2[%c6, %c0_19, %c0_20] : memref<9x16x512xf32, #tpu.memory_space<vmem>>, vector<1x8x512xf32>
    %35 = vector.shape_cast %34 : vector<1x8x512xf32> to vector<8x512xf32>
    %36 = arith.mulf %33, %35 : vector<8x512xf32>
    %37 = arith.truncf %36 : vector<8x512xf32> to vector<8x512xbf16>
    %c48 = arith.constant 48 : index
    %c0_21 = arith.constant 0 : index
    %38 = vector.load %arg32[%c48, %c0_21] : memref<144x512xbf16, #tpu.memory_space<vmem>>, vector<8x512xbf16>
    tpu.vector_store %arg32[%c48, %c0_21], %37 {strides = array<i32>} : memref<144x512xbf16, #tpu.memory_space<vmem>>, vector<8x512xbf16>,
    %c496_i32 = arith.constant 496 : i32
    %39 = tpu.dynamic_rotate %0 by %c496_i32 dim 1 : vector<8x512xf32>, i32 -> vector<8x512xf32>
    %c7 = arith.constant 7 : index
    %c0_22 = arith.constant 0 : index
    %c0_23 = arith.constant 0 : index
    %40 = vector.load %arg2[%c7, %c0_22, %c0_23] : memref<9x16x512xf32, #tpu.memory_space<vmem>>, vector<1x8x512xf32>
    %41 = vector.shape_cast %40 : vector<1x8x512xf32> to vector<8x512xf32>
    %42 = arith.mulf %39, %41 : vector<8x512xf32>
    %43 = arith.truncf %42 : vector<8x512xf32> to vector<8x512xbf16>
    %c56 = arith.constant 56 : index
    %c0_24 = arith.constant 0 : index
    %44 = vector.load %arg32[%c56, %c0_24] : memref<144x512xbf16, #tpu.memory_space<vmem>>, vector<8x512xbf16>
    tpu.vector_store %arg32[%c56, %c0_24], %43 {strides = array<i32>} : memref<144x512xbf16, #tpu.memory_space<vmem>>, vector<8x512xbf16>,
    %c495_i32 = arith.constant 495 : i32
    %45 = tpu.dynamic_rotate %0 by %c495_i32 dim 1 : vector<8x512xf32>, i32 -> vector<8x512xf32>
    %c8_25 = arith.constant 8 : index
    %c0_26 = arith.constant 0 : index
    %c0_27 = arith.constant 0 : index
    %46 = vector.load %arg2[%c8_25, %c0_26, %c0_27] : memref<9x16x512xf32, #tpu.memory_space<vmem>>, vector<1x8x512xf32>
    %47 = vector.shape_cast %46 : vector<1x8x512xf32> to vector<8x512xf32>
    %48 = arith.mulf %45, %47 : vector<8x512xf32>
    %49 = arith.truncf %48 : vector<8x512xf32> to vector<8x512xbf16>
    %c64 = arith.constant 64 : index
    %c0_28 = arith.constant 0 : index
    %50 = vector.load %arg32[%c64, %c0_28] : memref<144x512xbf16, #tpu.memory_space<vmem>>, vector<8x512xbf16>
    tpu.vector_store %arg32[%c64, %c0_28], %49 {strides = array<i32>} : memref<144x512xbf16, #tpu.memory_space<vmem>>, vector<8x512xbf16>,
    %c0_29 = arith.constant 0 : index
    %c0_30 = arith.constant 0 : index
    %51 = vector.load %arg6[%c0_29, %c0_30] : memref<8x72xbf16, #tpu.memory_space<vmem>>, vector<8x72xbf16>
    %c0_31 = arith.constant 0 : index
    %c0_32 = arith.constant 0 : index
    %52 = vector.load %arg32[%c0_31, %c0_32] : memref<144x512xbf16, #tpu.memory_space<vmem>>, vector<72x512xbf16>
    %cst = arith.constant dense<0.000000e+00> : vector<8x512xf32>
    %53 = tpu.matmul %51, %52, %cst {dimension_numbers = #tpu.dot_dimension_numbers<[1], [0], [0], [1], [0, 0, 1, 1], [], []>} : vector<8x72xbf16>, vector<72x512xbf16>, vector<8x512xf32> -> vector<8x512xf32>
    %c0_33 = arith.constant 0 : index
    %c0_34 = arith.constant 0 : index
    %54 = vector.load %arg7[%c0_33, %c0_34] : memref<8x1xf32, #tpu.memory_space<vmem>>, vector<8x1xf32>
    %55 = vector.broadcast %54 : vector<8x1xf32> to vector<8x512xf32>
    %56 = arith.addf %53, %55 : vector<8x512xf32>
    %cst_35 = arith.constant 0.000000e+00 : f32
    %57 = vector.broadcast %cst_35 : f32 to vector<8x512xf32>
    %58 = arith.subf %57, %56 : vector<8x512xf32>
    %59 = math.exp %58 : vector<8x512xf32>
    %cst_36 = arith.constant 1.000000e+00 : f32
    %60 = vector.broadcast %cst_36 : f32 to vector<8x512xf32>
    %61 = arith.addf %60, %59 : vector<8x512xf32>
    %62 = tpu.reciprocal %61 {approx = true} : vector<8x512xf32> -> vector<8x512xf32>
    %63 = arith.mulf %56, %62 : vector<8x512xf32>
    %c17_i32_37 = arith.constant 17 : i32
    %64 = tpu.dynamic_rotate %63 by %c17_i32_37 dim 1 : vector<8x512xf32>, i32 -> vector<8x512xf32>
    %c0_38 = arith.constant 0 : index
    %c0_39 = arith.constant 0 : index
    %c0_40 = arith.constant 0 : index
    %65 = vector.load %arg2[%c0_38, %c0_39, %c0_40] : memref<9x16x512xf32, #tpu.memory_space<vmem>>, vector<1x8x512xf32>
    %66 = vector.shape_cast %65 : vector<1x8x512xf32> to vector<8x512xf32>
    %67 = arith.mulf %64, %66 : vector<8x512xf32>
    %68 = arith.truncf %67 : vector<8x512xf32> to vector<8x512xbf16>
    %c0_41 = arith.constant 0 : index
    %c0_42 = arith.constant 0 : index
    %69 = vector.load %arg32[%c0_41, %c0_42] : memref<144x512xbf16, #tpu.memory_space<vmem>>, vector<8x512xbf16>
    tpu.vector_store %arg32[%c0_41, %c0_42], %68 {strides = array<i32>} : memref<144x512xbf16, #tpu.memory_space<vmem>>, vector<8x512xbf16>,
    %c16_i32_43 = arith.constant 16 : i32
    %70 = tpu.dynamic_rotate %63 by %c16_i32_43 dim 1 : vector<8x512xf32>, i32 -> vector<8x512xf32>
    %c1_44 = arith.constant 1 : index
    %c0_45 = arith.constant 0 : index
    %c0_46 = arith.constant 0 : index
    %71 = vector.load %arg2[%c1_44, %c0_45, %c0_46] : memref<9x16x512xf32, #tpu.memory_space<vmem>>, vector<1x8x512xf32>
    %72 = vector.shape_cast %71 : vector<1x8x512xf32> to vector<8x512xf32>
    %73 = arith.mulf %70, %72 : vector<8x512xf32>
    %74 = arith.truncf %73 : vector<8x512xf32> to vector<8x512xbf16>
    %c8_47 = arith.constant 8 : index
    %c0_48 = arith.constant 0 : index
    %75 = vector.load %arg32[%c8_47, %c0_48] : memref<144x512xbf16, #tpu.memory_space<vmem>>, vector<8x512xbf16>
    tpu.vector_store %arg32[%c8_47, %c0_48], %74 {strides = array<i32>} : memref<144x512xbf16, #tpu.memory_space<vmem>>, vector<8x512xbf16>,
    %c15_i32_49 = arith.constant 15 : i32
    %76 = tpu.dynamic_rotate %63 by %c15_i32_49 dim 1 : vector<8x512xf32>, i32 -> vector<8x512xf32>
    %c2_50 = arith.constant 2 : index
    %c0_51 = arith.constant 0 : index
    %c0_52 = arith.constant 0 : index
    %77 = vector.load %arg2[%c2_50, %c0_51, %c0_52] : memref<9x16x512xf32, #tpu.memory_space<vmem>>, vector<1x8x512xf32>
    %78 = vector.shape_cast %77 : vector<1x8x512xf32> to vector<8x512xf32>
    %79 = arith.mulf %76, %78 : vector<8x512xf32>
    %80 = arith.truncf %79 : vector<8x512xf32> to vector<8x512xbf16>
    %c16_53 = arith.constant 16 : index
    %c0_54 = arith.constant 0 : index
    %81 = vector.load %arg32[%c16_53, %c0_54] : memref<144x512xbf16, #tpu.memory_space<vmem>>, vector<8x512xbf16>
    tpu.vector_store %arg32[%c16_53, %c0_54], %80 {strides = array<i32>} : memref<144x512xbf16, #tpu.memory_space<vmem>>, vector<8x512xbf16>,
    %c1_i32_55 = arith.constant 1 : i32
    %82 = tpu.dynamic_rotate %63 by %c1_i32_55 dim 1 : vector<8x512xf32>, i32 -> vector<8x512xf32>
    %c3_56 = arith.constant 3 : index
    %c0_57 = arith.constant 0 : index
    %c0_58 = arith.constant 0 : index
    %83 = vector.load %arg2[%c3_56, %c0_57, %c0_58] : memref<9x16x512xf32, #tpu.memory_space<vmem>>, vector<1x8x512xf32>
    %84 = vector.shape_cast %83 : vector<1x8x512xf32> to vector<8x512xf32>
    %85 = arith.mulf %82, %84 : vector<8x512xf32>
    %86 = arith.truncf %85 : vector<8x512xf32> to vector<8x512xbf16>
    %c24_59 = arith.constant 24 : index
    %c0_60 = arith.constant 0 : index
    %87 = vector.load %arg32[%c24_59, %c0_60] : memref<144x512xbf16, #tpu.memory_space<vmem>>, vector<8x512xbf16>
    tpu.vector_store %arg32[%c24_59, %c0_60], %86 {strides = array<i32>} : memref<144x512xbf16, #tpu.memory_space<vmem>>, vector<8x512xbf16>,
    %88 = arith.truncf %63 : vector<8x512xf32> to vector<8x512xbf16>
    %c32_61 = arith.constant 32 : index
    %c0_62 = arith.constant 0 : index
    %89 = vector.load %arg32[%c32_61, %c0_62] : memref<144x512xbf16, #tpu.memory_space<vmem>>, vector<8x512xbf16>
    tpu.vector_store %arg32[%c32_61, %c0_62], %88 {strides = array<i32>} : memref<144x512xbf16, #tpu.memory_space<vmem>>, vector<8x512xbf16>,
    %c511_i32_63 = arith.constant 511 : i32
    %90 = tpu.dynamic_rotate %63 by %c511_i32_63 dim 1 : vector<8x512xf32>, i32 -> vector<8x512xf32>
    %c5_64 = arith.constant 5 : index
    %c0_65 = arith.constant 0 : index
    %c0_66 = arith.constant 0 : index
    %91 = vector.load %arg2[%c5_64, %c0_65, %c0_66] : memref<9x16x512xf32, #tpu.memory_space<vmem>>, vector<1x8x512xf32>
    %92 = vector.shape_cast %91 : vector<1x8x512xf32> to vector<8x512xf32>
    %93 = arith.mulf %90, %92 : vector<8x512xf32>
    %94 = arith.truncf %93 : vector<8x512xf32> to vector<8x512xbf16>
    %c40_67 = arith.constant 40 : index
    %c0_68 = arith.constant 0 : index
    %95 = vector.load %arg32[%c40_67, %c0_68] : memref<144x512xbf16, #tpu.memory_space<vmem>>, vector<8x512xbf16>
    tpu.vector_store %arg32[%c40_67, %c0_68], %94 {strides = array<i32>} : memref<144x512xbf16, #tpu.memory_space<vmem>>, vector<8x512xbf16>,
    %c497_i32_69 = arith.constant 497 : i32
    %96 = tpu.dynamic_rotate %63 by %c497_i32_69 dim 1 : vector<8x512xf32>, i32 -> vector<8x512xf32>
    %c6_70 = arith.constant 6 : index
    %c0_71 = arith.constant 0 : index
    %c0_72 = arith.constant 0 : index
    %97 = vector.load %arg2[%c6_70, %c0_71, %c0_72] : memref<9x16x512xf32, #tpu.memory_space<vmem>>, vector<1x8x512xf32>
    %98 = vector.shape_cast %97 : vector<1x8x512xf32> to vector<8x512xf32>
    %99 = arith.mulf %96, %98 : vector<8x512xf32>
    %100 = arith.truncf %99 : vector<8x512xf32> to vector<8x512xbf16>
    %c48_73 = arith.constant 48 : index
    %c0_74 = arith.constant 0 : index
    %101 = vector.load %arg32[%c48_73, %c0_74] : memref<144x512xbf16, #tpu.memory_space<vmem>>, vector<8x512xbf16>
    tpu.vector_store %arg32[%c48_73, %c0_74], %100 {strides = array<i32>} : memref<144x512xbf16, #tpu.memory_space<vmem>>, vector<8x512xbf16>,
    %c496_i32_75 = arith.constant 496 : i32
    %102 = tpu.dynamic_rotate %63 by %c496_i32_75 dim 1 : vector<8x512xf32>, i32 -> vector<8x512xf32>
    %c7_76 = arith.constant 7 : index
    %c0_77 = arith.constant 0 : index
    %c0_78 = arith.constant 0 : index
    %103 = vector.load %arg2[%c7_76, %c0_77, %c0_78] : memref<9x16x512xf32, #tpu.memory_space<vmem>>, vector<1x8x512xf32>
    %104 = vector.shape_cast %103 : vector<1x8x512xf32> to vector<8x512xf32>
    %105 = arith.mulf %102, %104 : vector<8x512xf32>
    %106 = arith.truncf %105 : vector<8x512xf32> to vector<8x512xbf16>
    %c56_79 = arith.constant 56 : index
    %c0_80 = arith.constant 0 : index
    %107 = vector.load %arg32[%c56_79, %c0_80] : memref<144x512xbf16, #tpu.memory_space<vmem>>, vector<8x512xbf16>
    tpu.vector_store %arg32[%c56_79, %c0_80], %106 {strides = array<i32>} : memref<144x512xbf16, #tpu.memory_space<vmem>>, vector<8x512xbf16>,
    %c495_i32_81 = arith.constant 495 : i32
    %108 = tpu.dynamic_rotate %63 by %c495_i32_81 dim 1 : vector<8x512xf32>, i32 -> vector<8x512xf32>
    %c8_82 = arith.constant 8 : index
    %c0_83 = arith.constant 0 : index
    %c0_84 = arith.constant 0 : index
    %109 = vector.load %arg2[%c8_82, %c0_83, %c0_84] : memref<9x16x512xf32, #tpu.memory_space<vmem>>, vector<1x8x512xf32>
    %110 = vector.shape_cast %109 : vector<1x8x512xf32> to vector<8x512xf32>
    %111 = arith.mulf %108, %110 : vector<8x512xf32>
    %112 = arith.truncf %111 : vector<8x512xf32> to vector<8x512xbf16>
    %c64_85 = arith.constant 64 : index
    %c0_86 = arith.constant 0 : index
    %113 = vector.load %arg32[%c64_85, %c0_86] : memref<144x512xbf16, #tpu.memory_space<vmem>>, vector<8x512xbf16>
    tpu.vector_store %arg32[%c64_85, %c0_86], %112 {strides = array<i32>} : memref<144x512xbf16, #tpu.memory_space<vmem>>, vector<8x512xbf16>,
    %c0_87 = arith.constant 0 : index
    %c0_88 = arith.constant 0 : index
    %114 = vector.load %arg8[%c0_87, %c0_88] : memref<8x72xbf16, #tpu.memory_space<vmem>>, vector<8x72xbf16>
    %c0_89 = arith.constant 0 : index
    %c0_90 = arith.constant 0 : index
    %115 = vector.load %arg32[%c0_89, %c0_90] : memref<144x512xbf16, #tpu.memory_space<vmem>>, vector<72x512xbf16>
    %cst_91 = arith.constant dense<0.000000e+00> : vector<8x512xf32>
    %116 = tpu.matmul %114, %115, %cst_91 {dimension_numbers = #tpu.dot_dimension_numbers<[1], [0], [0], [1], [0, 0, 1, 1], [], []>} : vector<8x72xbf16>, vector<72x512xbf16>, vector<8x512xf32> -> vector<8x512xf32>
    %c0_92 = arith.constant 0 : index
    %c0_93 = arith.constant 0 : index
    %117 = vector.load %arg9[%c0_92, %c0_93] : memref<8x1xf32, #tpu.memory_space<vmem>>, vector<8x1xf32>
    %118 = vector.broadcast %117 : vector<8x1xf32> to vector<8x512xf32>
    %119 = arith.addf %116, %118 : vector<8x512xf32>
    %cst_94 = arith.constant 0.000000e+00 : f32
    %120 = vector.broadcast %cst_94 : f32 to vector<8x512xf32>
    %121 = arith.subf %120, %119 : vector<8x512xf32>
    %122 = math.exp %121 : vector<8x512xf32>
    %cst_95 = arith.constant 1.000000e+00 : f32
    %123 = vector.broadcast %cst_95 : f32 to vector<8x512xf32>
    %124 = arith.addf %123, %122 : vector<8x512xf32>
    %125 = tpu.reciprocal %124 {approx = true} : vector<8x512xf32> -> vector<8x512xf32>
    %126 = arith.mulf %119, %125 : vector<8x512xf32>
    %c17_i32_96 = arith.constant 17 : i32
    %127 = tpu.dynamic_rotate %126 by %c17_i32_96 dim 1 : vector<8x512xf32>, i32 -> vector<8x512xf32>
    %c0_97 = arith.constant 0 : index
    %c0_98 = arith.constant 0 : index
    %c0_99 = arith.constant 0 : index
    %128 = vector.load %arg2[%c0_97, %c0_98, %c0_99] : memref<9x16x512xf32, #tpu.memory_space<vmem>>, vector<1x8x512xf32>
    %129 = vector.shape_cast %128 : vector<1x8x512xf32> to vector<8x512xf32>
    %130 = arith.mulf %127, %129 : vector<8x512xf32>
    %131 = arith.truncf %130 : vector<8x512xf32> to vector<8x512xbf16>
    %c0_100 = arith.constant 0 : index
    %c0_101 = arith.constant 0 : index
    %132 = vector.load %arg32[%c0_100, %c0_101] : memref<144x512xbf16, #tpu.memory_space<vmem>>, vector<8x512xbf16>
    tpu.vector_store %arg32[%c0_100, %c0_101], %131 {strides = array<i32>} : memref<144x512xbf16, #tpu.memory_space<vmem>>, vector<8x512xbf16>,
    %c16_i32_102 = arith.constant 16 : i32
    %133 = tpu.dynamic_rotate %126 by %c16_i32_102 dim 1 : vector<8x512xf32>, i32 -> vector<8x512xf32>
    %c1_103 = arith.constant 1 : index
    %c0_104 = arith.constant 0 : index
    %c0_105 = arith.constant 0 : index
    %134 = vector.load %arg2[%c1_103, %c0_104, %c0_105] : memref<9x16x512xf32, #tpu.memory_space<vmem>>, vector<1x8x512xf32>
    %135 = vector.shape_cast %134 : vector<1x8x512xf32> to vector<8x512xf32>
    %136 = arith.mulf %133, %135 : vector<8x512xf32>
    %137 = arith.truncf %136 : vector<8x512xf32> to vector<8x512xbf16>
    %c8_106 = arith.constant 8 : index
    %c0_107 = arith.constant 0 : index
    %138 = vector.load %arg32[%c8_106, %c0_107] : memref<144x512xbf16, #tpu.memory_space<vmem>>, vector<8x512xbf16>
    tpu.vector_store %arg32[%c8_106, %c0_107], %137 {strides = array<i32>} : memref<144x512xbf16, #tpu.memory_space<vmem>>, vector<8x512xbf16>,
    %c15_i32_108 = arith.constant 15 : i32
    %139 = tpu.dynamic_rotate %126 by %c15_i32_108 dim 1 : vector<8x512xf32>, i32 -> vector<8x512xf32>
    %c2_109 = arith.constant 2 : index
    %c0_110 = arith.constant 0 : index
    %c0_111 = arith.constant 0 : index
    %140 = vector.load %arg2[%c2_109, %c0_110, %c0_111] : memref<9x16x512xf32, #tpu.memory_space<vmem>>, vector<1x8x512xf32>
    %141 = vector.shape_cast %140 : vector<1x8x512xf32> to vector<8x512xf32>
    %142 = arith.mulf %139, %141 : vector<8x512xf32>
    %143 = arith.truncf %142 : vector<8x512xf32> to vector<8x512xbf16>
    %c16_112 = arith.constant 16 : index
    %c0_113 = arith.constant 0 : index
    %144 = vector.load %arg32[%c16_112, %c0_113] : memref<144x512xbf16, #tpu.memory_space<vmem>>, vector<8x512xbf16>
    tpu.vector_store %arg32[%c16_112, %c0_113], %143 {strides = array<i32>} : memref<144x512xbf16, #tpu.memory_space<vmem>>, vector<8x512xbf16>,
    %c1_i32_114 = arith.constant 1 : i32
    %145 = tpu.dynamic_rotate %126 by %c1_i32_114 dim 1 : vector<8x512xf32>, i32 -> vector<8x512xf32>
    %c3_115 = arith.constant 3 : index
    %c0_116 = arith.constant 0 : index
    %c0_117 = arith.constant 0 : index
    %146 = vector.load %arg2[%c3_115, %c0_116, %c0_117] : memref<9x16x512xf32, #tpu.memory_space<vmem>>, vector<1x8x512xf32>
    %147 = vector.shape_cast %146 : vector<1x8x512xf32> to vector<8x512xf32>
    %148 = arith.mulf %145, %147 : vector<8x512xf32>
    %149 = arith.truncf %148 : vector<8x512xf32> to vector<8x512xbf16>
    %c24_118 = arith.constant 24 : index
    %c0_119 = arith.constant 0 : index
    %150 = vector.load %arg32[%c24_118, %c0_119] : memref<144x512xbf16, #tpu.memory_space<vmem>>, vector<8x512xbf16>
    tpu.vector_store %arg32[%c24_118, %c0_119], %149 {strides = array<i32>} : memref<144x512xbf16, #tpu.memory_space<vmem>>, vector<8x512xbf16>,
    %151 = arith.truncf %126 : vector<8x512xf32> to vector<8x512xbf16>
    %c32_120 = arith.constant 32 : index
    %c0_121 = arith.constant 0 : index
    %152 = vector.load %arg32[%c32_120, %c0_121] : memref<144x512xbf16, #tpu.memory_space<vmem>>, vector<8x512xbf16>
    tpu.vector_store %arg32[%c32_120, %c0_121], %151 {strides = array<i32>} : memref<144x512xbf16, #tpu.memory_space<vmem>>, vector<8x512xbf16>,
    %c511_i32_122 = arith.constant 511 : i32
    %153 = tpu.dynamic_rotate %126 by %c511_i32_122 dim 1 : vector<8x512xf32>, i32 -> vector<8x512xf32>
    %c5_123 = arith.constant 5 : index
    %c0_124 = arith.constant 0 : index
    %c0_125 = arith.constant 0 : index
    %154 = vector.load %arg2[%c5_123, %c0_124, %c0_125] : memref<9x16x512xf32, #tpu.memory_space<vmem>>, vector<1x8x512xf32>
    %155 = vector.shape_cast %154 : vector<1x8x512xf32> to vector<8x512xf32>
    %156 = arith.mulf %153, %155 : vector<8x512xf32>
    %157 = arith.truncf %156 : vector<8x512xf32> to vector<8x512xbf16>
    %c40_126 = arith.constant 40 : index
    %c0_127 = arith.constant 0 : index
    %158 = vector.load %arg32[%c40_126, %c0_127] : memref<144x512xbf16, #tpu.memory_space<vmem>>, vector<8x512xbf16>
    tpu.vector_store %arg32[%c40_126, %c0_127], %157 {strides = array<i32>} : memref<144x512xbf16, #tpu.memory_space<vmem>>, vector<8x512xbf16>,
    %c497_i32_128 = arith.constant 497 : i32
    %159 = tpu.dynamic_rotate %126 by %c497_i32_128 dim 1 : vector<8x512xf32>, i32 -> vector<8x512xf32>
    %c6_129 = arith.constant 6 : index
    %c0_130 = arith.constant 0 : index
    %c0_131 = arith.constant 0 : index
    %160 = vector.load %arg2[%c6_129, %c0_130, %c0_131] : memref<9x16x512xf32, #tpu.memory_space<vmem>>, vector<1x8x512xf32>
    %161 = vector.shape_cast %160 : vector<1x8x512xf32> to vector<8x512xf32>
    %162 = arith.mulf %159, %161 : vector<8x512xf32>
    %163 = arith.truncf %162 : vector<8x512xf32> to vector<8x512xbf16>
    %c48_132 = arith.constant 48 : index
    %c0_133 = arith.constant 0 : index
    %164 = vector.load %arg32[%c48_132, %c0_133] : memref<144x512xbf16, #tpu.memory_space<vmem>>, vector<8x512xbf16>
    tpu.vector_store %arg32[%c48_132, %c0_133], %163 {strides = array<i32>} : memref<144x512xbf16, #tpu.memory_space<vmem>>, vector<8x512xbf16>,
    %c496_i32_134 = arith.constant 496 : i32
    %165 = tpu.dynamic_rotate %126 by %c496_i32_134 dim 1 : vector<8x512xf32>, i32 -> vector<8x512xf32>
    %c7_135 = arith.constant 7 : index
    %c0_136 = arith.constant 0 : index
    %c0_137 = arith.constant 0 : index
    %166 = vector.load %arg2[%c7_135, %c0_136, %c0_137] : memref<9x16x512xf32, #tpu.memory_space<vmem>>, vector<1x8x512xf32>
    %167 = vector.shape_cast %166 : vector<1x8x512xf32> to vector<8x512xf32>
    %168 = arith.mulf %165, %167 : vector<8x512xf32>
    %169 = arith.truncf %168 : vector<8x512xf32> to vector<8x512xbf16>
    %c56_138 = arith.constant 56 : index
    %c0_139 = arith.constant 0 : index
    %170 = vector.load %arg32[%c56_138, %c0_139] : memref<144x512xbf16, #tpu.memory_space<vmem>>, vector<8x512xbf16>
    tpu.vector_store %arg32[%c56_138, %c0_139], %169 {strides = array<i32>} : memref<144x512xbf16, #tpu.memory_space<vmem>>, vector<8x512xbf16>,
    %c495_i32_140 = arith.constant 495 : i32
    %171 = tpu.dynamic_rotate %126 by %c495_i32_140 dim 1 : vector<8x512xf32>, i32 -> vector<8x512xf32>
    %c8_141 = arith.constant 8 : index
    %c0_142 = arith.constant 0 : index
    %c0_143 = arith.constant 0 : index
    %172 = vector.load %arg2[%c8_141, %c0_142, %c0_143] : memref<9x16x512xf32, #tpu.memory_space<vmem>>, vector<1x8x512xf32>
    %173 = vector.shape_cast %172 : vector<1x8x512xf32> to vector<8x512xf32>
    %174 = arith.mulf %171, %173 : vector<8x512xf32>
    %175 = arith.truncf %174 : vector<8x512xf32> to vector<8x512xbf16>
    %c64_144 = arith.constant 64 : index
    %c0_145 = arith.constant 0 : index
    %176 = vector.load %arg32[%c64_144, %c0_145] : memref<144x512xbf16, #tpu.memory_space<vmem>>, vector<8x512xbf16>
    tpu.vector_store %arg32[%c64_144, %c0_145], %175 {strides = array<i32>} : memref<144x512xbf16, #tpu.memory_space<vmem>>, vector<8x512xbf16>,
    %c0_146 = arith.constant 0 : index
    %c0_147 = arith.constant 0 : index
    %177 = vector.load %arg10[%c0_146, %c0_147] : memref<16x72xbf16, #tpu.memory_space<vmem>>, vector<16x72xbf16>
    %c0_148 = arith.constant 0 : index
    %c0_149 = arith.constant 0 : index
    %178 = vector.load %arg32[%c0_148, %c0_149] : memref<144x512xbf16, #tpu.memory_space<vmem>>, vector<72x512xbf16>
    %cst_150 = arith.constant dense<0.000000e+00> : vector<16x512xf32>
    %179 = tpu.matmul %177, %178, %cst_150 {dimension_numbers = #tpu.dot_dimension_numbers<[1], [0], [0], [1], [0, 0, 1, 1], [], []>} : vector<16x72xbf16>, vector<72x512xbf16>, vector<16x512xf32> -> vector<16x512xf32>
    %c0_151 = arith.constant 0 : index
    %c0_152 = arith.constant 0 : index
    %180 = vector.load %arg11[%c0_151, %c0_152] : memref<16x1xf32, #tpu.memory_space<vmem>>, vector<16x1xf32>
    %181 = vector.broadcast %180 : vector<16x1xf32> to vector<16x512xf32>
    %182 = arith.addf %179, %181 : vector<16x512xf32>
    %cst_153 = arith.constant 0.000000e+00 : f32
    %183 = vector.broadcast %cst_153 : f32 to vector<16x512xf32>
    %184 = arith.subf %183, %182 : vector<16x512xf32>
    %185 = math.exp %184 : vector<16x512xf32>
    %cst_154 = arith.constant 1.000000e+00 : f32
    %186 = vector.broadcast %cst_154 : f32 to vector<16x512xf32>
    %187 = arith.addf %186, %185 : vector<16x512xf32>
    %188 = tpu.reciprocal %187 {approx = true} : vector<16x512xf32> -> vector<16x512xf32>
    %189 = arith.mulf %182, %188 : vector<16x512xf32>
    %190 = arith.truncf %189 : vector<16x512xf32> to vector<16x512xbf16>
    %c0_155 = arith.constant 0 : index
    %c0_156 = arith.constant 0 : index
    %191 = vector.load %arg4[%c0_155, %c0_156] : memref<512x128xbf16, #tpu.memory_space<vmem>>, vector<512x128xbf16>
    %cst_157 = arith.constant dense<0.000000e+00> : vector<16x128xf32>
    %192 = tpu.matmul %190, %191, %cst_157 {dimension_numbers = #tpu.dot_dimension_numbers<[1], [0], [0], [1], [0, 0, 1, 1], [], []>} : vector<16x512xbf16>, vector<512x128xbf16>, vector<16x128xf32> -> vector<16x128xf32>
    %c9_i32 = arith.constant 9 : i32
    %193 = tpu.dynamic_rotate %192 by %c9_i32 dim 1 : vector<16x128xf32>, i32 -> vector<16x128xf32>
    %c0_158 = arith.constant 0 : index
    %c0_159 = arith.constant 0 : index
    %c0_160 = arith.constant 0 : index
    %194 = vector.load %arg3[%c0_158, %c0_159, %c0_160] : memref<9x16x128xf32, #tpu.memory_space<vmem>>, vector<1x16x128xf32>
    %195 = vector.shape_cast %194 : vector<1x16x128xf32> to vector<16x128xf32>
    %196 = arith.mulf %193, %195 : vector<16x128xf32>
    %197 = arith.truncf %196 : vector<16x128xf32> to vector<16x128xbf16>
    %c0_161 = arith.constant 0 : index
    %c0_162 = arith.constant 0 : index
    %198 = vector.load %arg32[%c0_161, %c0_162] : memref<144x512xbf16, #tpu.memory_space<vmem>>, vector<16x128xbf16>
    tpu.vector_store %arg32[%c0_161, %c0_162], %197 {strides = array<i32>} : memref<144x512xbf16, #tpu.memory_space<vmem>>, vector<16x128xbf16>,
    %c8_i32 = arith.constant 8 : i32
    %199 = tpu.dynamic_rotate %192 by %c8_i32 dim 1 : vector<16x128xf32>, i32 -> vector<16x128xf32>
    %c1_163 = arith.constant 1 : index
    %c0_164 = arith.constant 0 : index
    %c0_165 = arith.constant 0 : index
    %200 = vector.load %arg3[%c1_163, %c0_164, %c0_165] : memref<9x16x128xf32, #tpu.memory_space<vmem>>, vector<1x16x128xf32>
    %201 = vector.shape_cast %200 : vector<1x16x128xf32> to vector<16x128xf32>
    %202 = arith.mulf %199, %201 : vector<16x128xf32>
    %203 = arith.truncf %202 : vector<16x128xf32> to vector<16x128xbf16>
    %c16_166 = arith.constant 16 : index
    %c0_167 = arith.constant 0 : index
    %204 = vector.load %arg32[%c16_166, %c0_167] : memref<144x512xbf16, #tpu.memory_space<vmem>>, vector<16x128xbf16>
    tpu.vector_store %arg32[%c16_166, %c0_167], %203 {strides = array<i32>} : memref<144x512xbf16, #tpu.memory_space<vmem>>, vector<16x128xbf16>,
    %c7_i32 = arith.constant 7 : i32
    %205 = tpu.dynamic_rotate %192 by %c7_i32 dim 1 : vector<16x128xf32>, i32 -> vector<16x128xf32>
    %c2_168 = arith.constant 2 : index
    %c0_169 = arith.constant 0 : index
    %c0_170 = arith.constant 0 : index
    %206 = vector.load %arg3[%c2_168, %c0_169, %c0_170] : memref<9x16x128xf32, #tpu.memory_space<vmem>>, vector<1x16x128xf32>
    %207 = vector.shape_cast %206 : vector<1x16x128xf32> to vector<16x128xf32>
    %208 = arith.mulf %205, %207 : vector<16x128xf32>
    %209 = arith.truncf %208 : vector<16x128xf32> to vector<16x128xbf16>
    %c32_171 = arith.constant 32 : index
    %c0_172 = arith.constant 0 : index
    %210 = vector.load %arg32[%c32_171, %c0_172] : memref<144x512xbf16, #tpu.memory_space<vmem>>, vector<16x128xbf16>
    tpu.vector_store %arg32[%c32_171, %c0_172], %209 {strides = array<i32>} : memref<144x512xbf16, #tpu.memory_space<vmem>>, vector<16x128xbf16>,
    %c1_i32_173 = arith.constant 1 : i32
    %211 = tpu.dynamic_rotate %192 by %c1_i32_173 dim 1 : vector<16x128xf32>, i32 -> vector<16x128xf32>
    %c3_174 = arith.constant 3 : index
    %c0_175 = arith.constant 0 : index
    %c0_176 = arith.constant 0 : index
    %212 = vector.load %arg3[%c3_174, %c0_175, %c0_176] : memref<9x16x128xf32, #tpu.memory_space<vmem>>, vector<1x16x128xf32>
    %213 = vector.shape_cast %212 : vector<1x16x128xf32> to vector<16x128xf32>
    %214 = arith.mulf %211, %213 : vector<16x128xf32>
    %215 = arith.truncf %214 : vector<16x128xf32> to vector<16x128xbf16>
    %c48_177 = arith.constant 48 : index
    %c0_178 = arith.constant 0 : index
    %216 = vector.load %arg32[%c48_177, %c0_178] : memref<144x512xbf16, #tpu.memory_space<vmem>>, vector<16x128xbf16>
    tpu.vector_store %arg32[%c48_177, %c0_178], %215 {strides = array<i32>} : memref<144x512xbf16, #tpu.memory_space<vmem>>, vector<16x128xbf16>,
    %217 = arith.truncf %192 : vector<16x128xf32> to vector<16x128xbf16>
    %c64_179 = arith.constant 64 : index
    %c0_180 = arith.constant 0 : index
    %218 = vector.load %arg32[%c64_179, %c0_180] : memref<144x512xbf16, #tpu.memory_space<vmem>>, vector<16x128xbf16>
    tpu.vector_store %arg32[%c64_179, %c0_180], %217 {strides = array<i32>} : memref<144x512xbf16, #tpu.memory_space<vmem>>, vector<16x128xbf16>,
    %c127_i32 = arith.constant 127 : i32
    %219 = tpu.dynamic_rotate %192 by %c127_i32 dim 1 : vector<16x128xf32>, i32 -> vector<16x128xf32>
    %c5_181 = arith.constant 5 : index
    %c0_182 = arith.constant 0 : index
    %c0_183 = arith.constant 0 : index
    %220 = vector.load %arg3[%c5_181, %c0_182, %c0_183] : memref<9x16x128xf32, #tpu.memory_space<vmem>>, vector<1x16x128xf32>
    %221 = vector.shape_cast %220 : vector<1x16x128xf32> to vector<16x128xf32>
    %222 = arith.mulf %219, %221 : vector<16x128xf32>
    %223 = arith.truncf %222 : vector<16x128xf32> to vector<16x128xbf16>
    %c80 = arith.constant 80 : index
    %c0_184 = arith.constant 0 : index
    %224 = vector.load %arg32[%c80, %c0_184] : memref<144x512xbf16, #tpu.memory_space<vmem>>, vector<16x128xbf16>
    tpu.vector_store %arg32[%c80, %c0_184], %223 {strides = array<i32>} : memref<144x512xbf16, #tpu.memory_space<vmem>>, vector<16x128xbf16>,
    %c121_i32 = arith.constant 121 : i32
    %225 = tpu.dynamic_rotate %192 by %c121_i32 dim 1 : vector<16x128xf32>, i32 -> vector<16x128xf32>
    %c6_185 = arith.constant 6 : index
    %c0_186 = arith.constant 0 : index
    %c0_187 = arith.constant 0 : index
    %226 = vector.load %arg3[%c6_185, %c0_186, %c0_187] : memref<9x16x128xf32, #tpu.memory_space<vmem>>, vector<1x16x128xf32>
    %227 = vector.shape_cast %226 : vector<1x16x128xf32> to vector<16x128xf32>
    %228 = arith.mulf %225, %227 : vector<16x128xf32>
    %229 = arith.truncf %228 : vector<16x128xf32> to vector<16x128xbf16>
    %c96 = arith.constant 96 : index
    %c0_188 = arith.constant 0 : index
    %230 = vector.load %arg32[%c96, %c0_188] : memref<144x512xbf16, #tpu.memory_space<vmem>>, vector<16x128xbf16>
    tpu.vector_store %arg32[%c96, %c0_188], %229 {strides = array<i32>} : memref<144x512xbf16, #tpu.memory_space<vmem>>, vector<16x128xbf16>,
    %c120_i32 = arith.constant 120 : i32
    %231 = tpu.dynamic_rotate %192 by %c120_i32 dim 1 : vector<16x128xf32>, i32 -> vector<16x128xf32>
    %c7_189 = arith.constant 7 : index
    %c0_190 = arith.constant 0 : index
    %c0_191 = arith.constant 0 : index
    %232 = vector.load %arg3[%c7_189, %c0_190, %c0_191] : memref<9x16x128xf32, #tpu.memory_space<vmem>>, vector<1x16x128xf32>
    %233 = vector.shape_cast %232 : vector<1x16x128xf32> to vector<16x128xf32>
    %234 = arith.mulf %231, %233 : vector<16x128xf32>
    %235 = arith.truncf %234 : vector<16x128xf32> to vector<16x128xbf16>
    %c112 = arith.constant 112 : index
    %c0_192 = arith.constant 0 : index
    %236 = vector.load %arg32[%c112, %c0_192] : memref<144x512xbf16, #tpu.memory_space<vmem>>, vector<16x128xbf16>
    tpu.vector_store %arg32[%c112, %c0_192], %235 {strides = array<i32>} : memref<144x512xbf16, #tpu.memory_space<vmem>>, vector<16x128xbf16>,
    %c119_i32 = arith.constant 119 : i32
    %237 = tpu.dynamic_rotate %192 by %c119_i32 dim 1 : vector<16x128xf32>, i32 -> vector<16x128xf32>
    %c8_193 = arith.constant 8 : index
    %c0_194 = arith.constant 0 : index
    %c0_195 = arith.constant 0 : index
    %238 = vector.load %arg3[%c8_193, %c0_194, %c0_195] : memref<9x16x128xf32, #tpu.memory_space<vmem>>, vector<1x16x128xf32>
    %239 = vector.shape_cast %238 : vector<1x16x128xf32> to vector<16x128xf32>
    %240 = arith.mulf %237, %239 : vector<16x128xf32>
    %241 = arith.truncf %240 : vector<16x128xf32> to vector<16x128xbf16>
    %c128 = arith.constant 128 : index
    %c0_196 = arith.constant 0 : index
    %242 = vector.load %arg32[%c128, %c0_196] : memref<144x512xbf16, #tpu.memory_space<vmem>>, vector<16x128xbf16>
    tpu.vector_store %arg32[%c128, %c0_196], %241 {strides = array<i32>} : memref<144x512xbf16, #tpu.memory_space<vmem>>, vector<16x128xbf16>,
    %c0_197 = arith.constant 0 : index
    %c0_198 = arith.constant 0 : index
    %243 = vector.load %arg12[%c0_197, %c0_198] : memref<16x144xbf16, #tpu.memory_space<vmem>>, vector<16x144xbf16>
    %c0_199 = arith.constant 0 : index
    %c0_200 = arith.constant 0 : index
    %244 = vector.load %arg32[%c0_199, %c0_200] : memref<144x512xbf16, #tpu.memory_space<vmem>>, vector<144x128xbf16>
    %cst_201 = arith.constant dense<0.000000e+00> : vector<16x128xf32>
    %245 = tpu.matmul %243, %244, %cst_201 {dimension_numbers = #tpu.dot_dimension_numbers<[1], [0], [0], [1], [0, 0, 1, 1], [], []>} : vector<16x144xbf16>, vector<144x128xbf16>, vector<16x128xf32> -> vector<16x128xf32>
    %c0_202 = arith.constant 0 : index
    %c0_203 = arith.constant 0 : index
    %246 = vector.load %arg13[%c0_202, %c0_203] : memref<16x1xf32, #tpu.memory_space<vmem>>, vector<16x1xf32>
    %247 = vector.broadcast %246 : vector<16x1xf32> to vector<16x128xf32>
    %248 = arith.addf %245, %247 : vector<16x128xf32>
    %cst_204 = arith.constant 0.000000e+00 : f32
    %249 = vector.broadcast %cst_204 : f32 to vector<16x128xf32>
    %250 = arith.subf %249, %248 : vector<16x128xf32>
    %251 = math.exp %250 : vector<16x128xf32>
    %cst_205 = arith.constant 1.000000e+00 : f32
    %252 = vector.broadcast %cst_205 : f32 to vector<16x128xf32>
    %253 = arith.addf %252, %251 : vector<16x128xf32>
    %254 = tpu.reciprocal %253 {approx = true} : vector<16x128xf32> -> vector<16x128xf32>
    %255 = arith.mulf %248, %254 : vector<16x128xf32>
    %c9_i32_206 = arith.constant 9 : i32
    %256 = tpu.dynamic_rotate %255 by %c9_i32_206 dim 1 : vector<16x128xf32>, i32 -> vector<16x128xf32>
    %c0_207 = arith.constant 0 : index
    %c0_208 = arith.constant 0 : index
    %c0_209 = arith.constant 0 : index
    %257 = vector.load %arg3[%c0_207, %c0_208, %c0_209] : memref<9x16x128xf32, #tpu.memory_space<vmem>>, vector<1x16x128xf32>
    %258 = vector.shape_cast %257 : vector<1x16x128xf32> to vector<16x128xf32>
    %259 = arith.mulf %256, %258 : vector<16x128xf32>
    %260 = arith.truncf %259 : vector<16x128xf32> to vector<16x128xbf16>
    %c0_210 = arith.constant 0 : index
    %c0_211 = arith.constant 0 : index
    %261 = vector.load %arg32[%c0_210, %c0_211] : memref<144x512xbf16, #tpu.memory_space<vmem>>, vector<16x128xbf16>
    tpu.vector_store %arg32[%c0_210, %c0_211], %260 {strides = array<i32>} : memref<144x512xbf16, #tpu.memory_space<vmem>>, vector<16x128xbf16>,
    %c8_i32_212 = arith.constant 8 : i32
    %262 = tpu.dynamic_rotate %255 by %c8_i32_212 dim 1 : vector<16x128xf32>, i32 -> vector<16x128xf32>
    %c1_213 = arith.constant 1 : index
    %c0_214 = arith.constant 0 : index
    %c0_215 = arith.constant 0 : index
    %263 = vector.load %arg3[%c1_213, %c0_214, %c0_215] : memref<9x16x128xf32, #tpu.memory_space<vmem>>, vector<1x16x128xf32>
    %264 = vector.shape_cast %263 : vector<1x16x128xf32> to vector<16x128xf32>
    %265 = arith.mulf %262, %264 : vector<16x128xf32>
    %266 = arith.truncf %265 : vector<16x128xf32> to vector<16x128xbf16>
    %c16_216 = arith.constant 16 : index
    %c0_217 = arith.constant 0 : index
    %267 = vector.load %arg32[%c16_216, %c0_217] : memref<144x512xbf16, #tpu.memory_space<vmem>>, vector<16x128xbf16>
    tpu.vector_store %arg32[%c16_216, %c0_217], %266 {strides = array<i32>} : memref<144x512xbf16, #tpu.memory_space<vmem>>, vector<16x128xbf16>,
    %c7_i32_218 = arith.constant 7 : i32
    %268 = tpu.dynamic_rotate %255 by %c7_i32_218 dim 1 : vector<16x128xf32>, i32 -> vector<16x128xf32>
    %c2_219 = arith.constant 2 : index
    %c0_220 = arith.constant 0 : index
    %c0_221 = arith.constant 0 : index
    %269 = vector.load %arg3[%c2_219, %c0_220, %c0_221] : memref<9x16x128xf32, #tpu.memory_space<vmem>>, vector<1x16x128xf32>
    %270 = vector.shape_cast %269 : vector<1x16x128xf32> to vector<16x128xf32>
    %271 = arith.mulf %268, %270 : vector<16x128xf32>
    %272 = arith.truncf %271 : vector<16x128xf32> to vector<16x128xbf16>
    %c32_222 = arith.constant 32 : index
    %c0_223 = arith.constant 0 : index
    %273 = vector.load %arg32[%c32_222, %c0_223] : memref<144x512xbf16, #tpu.memory_space<vmem>>, vector<16x128xbf16>
    tpu.vector_store %arg32[%c32_222, %c0_223], %272 {strides = array<i32>} : memref<144x512xbf16, #tpu.memory_space<vmem>>, vector<16x128xbf16>,
    %c1_i32_224 = arith.constant 1 : i32
    %274 = tpu.dynamic_rotate %255 by %c1_i32_224 dim 1 : vector<16x128xf32>, i32 -> vector<16x128xf32>
    %c3_225 = arith.constant 3 : index
    %c0_226 = arith.constant 0 : index
    %c0_227 = arith.constant 0 : index
    %275 = vector.load %arg3[%c3_225, %c0_226, %c0_227] : memref<9x16x128xf32, #tpu.memory_space<vmem>>, vector<1x16x128xf32>
    %276 = vector.shape_cast %275 : vector<1x16x128xf32> to vector<16x128xf32>
    %277 = arith.mulf %274, %276 : vector<16x128xf32>
    %278 = arith.truncf %277 : vector<16x128xf32> to vector<16x128xbf16>
    %c48_228 = arith.constant 48 : index
    %c0_229 = arith.constant 0 : index
    %279 = vector.load %arg32[%c48_228, %c0_229] : memref<144x512xbf16, #tpu.memory_space<vmem>>, vector<16x128xbf16>
    tpu.vector_store %arg32[%c48_228, %c0_229], %278 {strides = array<i32>} : memref<144x512xbf16, #tpu.memory_space<vmem>>, vector<16x128xbf16>,
    %280 = arith.truncf %255 : vector<16x128xf32> to vector<16x128xbf16>
    %c64_230 = arith.constant 64 : index
    %c0_231 = arith.constant 0 : index
    %281 = vector.load %arg32[%c64_230, %c0_231] : memref<144x512xbf16, #tpu.memory_space<vmem>>, vector<16x128xbf16>
    tpu.vector_store %arg32[%c64_230, %c0_231], %280 {strides = array<i32>} : memref<144x512xbf16, #tpu.memory_space<vmem>>, vector<16x128xbf16>,
    %c127_i32_232 = arith.constant 127 : i32
    %282 = tpu.dynamic_rotate %255 by %c127_i32_232 dim 1 : vector<16x128xf32>, i32 -> vector<16x128xf32>
    %c5_233 = arith.constant 5 : index
    %c0_234 = arith.constant 0 : index
    %c0_235 = arith.constant 0 : index
    %283 = vector.load %arg3[%c5_233, %c0_234, %c0_235] : memref<9x16x128xf32, #tpu.memory_space<vmem>>, vector<1x16x128xf32>
    %284 = vector.shape_cast %283 : vector<1x16x128xf32> to vector<16x128xf32>
    %285 = arith.mulf %282, %284 : vector<16x128xf32>
    %286 = arith.truncf %285 : vector<16x128xf32> to vector<16x128xbf16>
    %c80_236 = arith.constant 80 : index
    %c0_237 = arith.constant 0 : index
    %287 = vector.load %arg32[%c80_236, %c0_237] : memref<144x512xbf16, #tpu.memory_space<vmem>>, vector<16x128xbf16>
    tpu.vector_store %arg32[%c80_236, %c0_237], %286 {strides = array<i32>} : memref<144x512xbf16, #tpu.memory_space<vmem>>, vector<16x128xbf16>,
    %c121_i32_238 = arith.constant 121 : i32
    %288 = tpu.dynamic_rotate %255 by %c121_i32_238 dim 1 : vector<16x128xf32>, i32 -> vector<16x128xf32>
    %c6_239 = arith.constant 6 : index
    %c0_240 = arith.constant 0 : index
    %c0_241 = arith.constant 0 : index
    %289 = vector.load %arg3[%c6_239, %c0_240, %c0_241] : memref<9x16x128xf32, #tpu.memory_space<vmem>>, vector<1x16x128xf32>
    %290 = vector.shape_cast %289 : vector<1x16x128xf32> to vector<16x128xf32>
    %291 = arith.mulf %288, %290 : vector<16x128xf32>
    %292 = arith.truncf %291 : vector<16x128xf32> to vector<16x128xbf16>
    %c96_242 = arith.constant 96 : index
    %c0_243 = arith.constant 0 : index
    %293 = vector.load %arg32[%c96_242, %c0_243] : memref<144x512xbf16, #tpu.memory_space<vmem>>, vector<16x128xbf16>
    tpu.vector_store %arg32[%c96_242, %c0_243], %292 {strides = array<i32>} : memref<144x512xbf16, #tpu.memory_space<vmem>>, vector<16x128xbf16>,
    %c120_i32_244 = arith.constant 120 : i32
    %294 = tpu.dynamic_rotate %255 by %c120_i32_244 dim 1 : vector<16x128xf32>, i32 -> vector<16x128xf32>
    %c7_245 = arith.constant 7 : index
    %c0_246 = arith.constant 0 : index
    %c0_247 = arith.constant 0 : index
    %295 = vector.load %arg3[%c7_245, %c0_246, %c0_247] : memref<9x16x128xf32, #tpu.memory_space<vmem>>, vector<1x16x128xf32>
    %296 = vector.shape_cast %295 : vector<1x16x128xf32> to vector<16x128xf32>
    %297 = arith.mulf %294, %296 : vector<16x128xf32>
    %298 = arith.truncf %297 : vector<16x128xf32> to vector<16x128xbf16>
    %c112_248 = arith.constant 112 : index
    %c0_249 = arith.constant 0 : index
    %299 = vector.load %arg32[%c112_248, %c0_249] : memref<144x512xbf16, #tpu.memory_space<vmem>>, vector<16x128xbf16>
    tpu.vector_store %arg32[%c112_248, %c0_249], %298 {strides = array<i32>} : memref<144x512xbf16, #tpu.memory_space<vmem>>, vector<16x128xbf16>,
    %c119_i32_250 = arith.constant 119 : i32
    %300 = tpu.dynamic_rotate %255 by %c119_i32_250 dim 1 : vector<16x128xf32>, i32 -> vector<16x128xf32>
    %c8_251 = arith.constant 8 : index
    %c0_252 = arith.constant 0 : index
    %c0_253 = arith.constant 0 : index
    %301 = vector.load %arg3[%c8_251, %c0_252, %c0_253] : memref<9x16x128xf32, #tpu.memory_space<vmem>>, vector<1x16x128xf32>
    %302 = vector.shape_cast %301 : vector<1x16x128xf32> to vector<16x128xf32>
    %303 = arith.mulf %300, %302 : vector<16x128xf32>
    %304 = arith.truncf %303 : vector<16x128xf32> to vector<16x128xbf16>
    %c128_254 = arith.constant 128 : index
    %c0_255 = arith.constant 0 : index
    %305 = vector.load %arg32[%c128_254, %c0_255] : memref<144x512xbf16, #tpu.memory_space<vmem>>, vector<16x128xbf16>
    tpu.vector_store %arg32[%c128_254, %c0_255], %304 {strides = array<i32>} : memref<144x512xbf16, #tpu.memory_space<vmem>>, vector<16x128xbf16>,
    %c0_256 = arith.constant 0 : index
    %c0_257 = arith.constant 0 : index
    %306 = vector.load %arg14[%c0_256, %c0_257] : memref<8x144xbf16, #tpu.memory_space<vmem>>, vector<8x144xbf16>
    %c0_258 = arith.constant 0 : index
    %c0_259 = arith.constant 0 : index
    %307 = vector.load %arg32[%c0_258, %c0_259] : memref<144x512xbf16, #tpu.memory_space<vmem>>, vector<144x128xbf16>
    %cst_260 = arith.constant dense<0.000000e+00> : vector<8x128xf32>
    %308 = tpu.matmul %306, %307, %cst_260 {dimension_numbers = #tpu.dot_dimension_numbers<[1], [0], [0], [1], [0, 0, 1, 1], [], []>} : vector<8x144xbf16>, vector<144x128xbf16>, vector<8x128xf32> -> vector<8x128xf32>
    %c0_261 = arith.constant 0 : index
    %c0_262 = arith.constant 0 : index
    %309 = vector.load %arg15[%c0_261, %c0_262] : memref<8x1xf32, #tpu.memory_space<vmem>>, vector<8x1xf32>
    %310 = vector.broadcast %309 : vector<8x1xf32> to vector<8x128xf32>
    %311 = arith.addf %308, %310 : vector<8x128xf32>
    %c0_263 = arith.constant 0 : index
    %c0_264 = arith.constant 0 : index
    %312 = vector.load %arg16[%c0_263, %c0_264] : memref<8x8xbf16, #tpu.memory_space<vmem>>, vector<8x8xbf16>
    %313 = arith.truncf %311 : vector<8x128xf32> to vector<8x128xbf16>
    %cst_265 = arith.constant dense<0.000000e+00> : vector<8x128xf32>
    %314 = tpu.matmul %312, %313, %cst_265 {dimension_numbers = #tpu.dot_dimension_numbers<[1], [0], [0], [1], [0, 0, 1, 1], [], []>} : vector<8x8xbf16>, vector<8x128xbf16>, vector<8x128xf32> -> vector<8x128xf32>
    %c0_266 = arith.constant 0 : index
    %c0_267 = arith.constant 0 : index
    %315 = vector.load %arg17[%c0_266, %c0_267] : memref<8x1xf32, #tpu.memory_space<vmem>>, vector<8x1xf32>
    %316 = vector.broadcast %315 : vector<8x1xf32> to vector<8x128xf32>
    %317 = arith.addf %314, %316 : vector<8x128xf32>
    %318 = vector.extract_strided_slice %317 {offsets = [0, 0], sizes = [4, 128], strides = [1, 1]} : vector<8x128xf32> to vector<4x128xf32>
    %319 = vector.extract_strided_slice %317 {offsets = [4, 0], sizes = [4, 128], strides = [1, 1]} : vector<8x128xf32> to vector<4x128xf32>
    %cst_268 = arith.constant -3.000000e+01 : f32
    %cst_269 = arith.constant 2.000000e+01 : f32
    %320 = vector.broadcast %cst_268 : f32 to vector<4x128xf32>
    %321 = arith.maximumf %320, %319 : vector<4x128xf32>
    %322 = vector.broadcast %cst_269 : f32 to vector<4x128xf32>
    %323 = arith.minimumf %322, %321 : vector<4x128xf32>
    %324 = tpu.concatenate %318, %323 in 0 : vector<4x128xf32>, vector<4x128xf32> -> vector<8x128xf32>
    %c0_270 = arith.constant 0 : index
    %c0_271 = arith.constant 0 : index
    %325 = vector.load %arg31[%c0_270, %c0_271] : memref<8x128xf32, #tpu.memory_space<vmem>>, vector<8x128xf32>
    tpu.vector_store %arg31[%c0_270, %c0_271], %324 {strides = array<i32>} : memref<8x128xf32, #tpu.memory_space<vmem>>, vector<8x128xf32>,
    %c0_272 = arith.constant 0 : index
    %c0_273 = arith.constant 0 : index
    %326 = vector.load %arg18[%c0_272, %c0_273] : memref<8x4xbf16, #tpu.memory_space<vmem>>, vector<8x4xbf16>
    %327 = arith.truncf %318 : vector<4x128xf32> to vector<4x128xbf16>
    %cst_274 = arith.constant dense<0.000000e+00> : vector<8x128xf32>
    %328 = tpu.matmul %326, %327, %cst_274 {dimension_numbers = #tpu.dot_dimension_numbers<[1], [0], [0], [1], [0, 0, 1, 1], [], []>} : vector<8x4xbf16>, vector<4x128xbf16>, vector<8x128xf32> -> vector<8x128xf32>
    %c0_275 = arith.constant 0 : index
    %c0_276 = arith.constant 0 : index
    %329 = vector.load %arg19[%c0_275, %c0_276] : memref<8x1xf32, #tpu.memory_space<vmem>>, vector<8x1xf32>
    %330 = vector.broadcast %329 : vector<8x1xf32> to vector<8x128xf32>
    %331 = arith.addf %328, %330 : vector<8x128xf32>
    %c9_i32_277 = arith.constant 9 : i32
    %332 = tpu.dynamic_rotate %331 by %c9_i32_277 dim 1 : vector<8x128xf32>, i32 -> vector<8x128xf32>
    %c0_278 = arith.constant 0 : index
    %c0_279 = arith.constant 0 : index
    %c0_280 = arith.constant 0 : index
    %333 = vector.load %arg3[%c0_278, %c0_279, %c0_280] : memref<9x16x128xf32, #tpu.memory_space<vmem>>, vector<1x8x128xf32>
    %334 = vector.shape_cast %333 : vector<1x8x128xf32> to vector<8x128xf32>
    %335 = arith.mulf %332, %334 : vector<8x128xf32>
    %336 = arith.truncf %335 : vector<8x128xf32> to vector<8x128xbf16>
    %c0_281 = arith.constant 0 : index
    %c0_282 = arith.constant 0 : index
    %337 = vector.load %arg32[%c0_281, %c0_282] : memref<144x512xbf16, #tpu.memory_space<vmem>>, vector<8x128xbf16>
    tpu.vector_store %arg32[%c0_281, %c0_282], %336 {strides = array<i32>} : memref<144x512xbf16, #tpu.memory_space<vmem>>, vector<8x128xbf16>,
    %c8_i32_283 = arith.constant 8 : i32
    %338 = tpu.dynamic_rotate %331 by %c8_i32_283 dim 1 : vector<8x128xf32>, i32 -> vector<8x128xf32>
    %c1_284 = arith.constant 1 : index
    %c0_285 = arith.constant 0 : index
    %c0_286 = arith.constant 0 : index
    %339 = vector.load %arg3[%c1_284, %c0_285, %c0_286] : memref<9x16x128xf32, #tpu.memory_space<vmem>>, vector<1x8x128xf32>
    %340 = vector.shape_cast %339 : vector<1x8x128xf32> to vector<8x128xf32>
    %341 = arith.mulf %338, %340 : vector<8x128xf32>
    %342 = arith.truncf %341 : vector<8x128xf32> to vector<8x128xbf16>
    %c8_287 = arith.constant 8 : index
    %c0_288 = arith.constant 0 : index
    %343 = vector.load %arg32[%c8_287, %c0_288] : memref<144x512xbf16, #tpu.memory_space<vmem>>, vector<8x128xbf16>
    tpu.vector_store %arg32[%c8_287, %c0_288], %342 {strides = array<i32>} : memref<144x512xbf16, #tpu.memory_space<vmem>>, vector<8x128xbf16>,
    %c7_i32_289 = arith.constant 7 : i32
    %344 = tpu.dynamic_rotate %331 by %c7_i32_289 dim 1 : vector<8x128xf32>, i32 -> vector<8x128xf32>
    %c2_290 = arith.constant 2 : index
    %c0_291 = arith.constant 0 : index
    %c0_292 = arith.constant 0 : index
    %345 = vector.load %arg3[%c2_290, %c0_291, %c0_292] : memref<9x16x128xf32, #tpu.memory_space<vmem>>, vector<1x8x128xf32>
    %346 = vector.shape_cast %345 : vector<1x8x128xf32> to vector<8x128xf32>
    %347 = arith.mulf %344, %346 : vector<8x128xf32>
    %348 = arith.truncf %347 : vector<8x128xf32> to vector<8x128xbf16>
    %c16_293 = arith.constant 16 : index
    %c0_294 = arith.constant 0 : index
    %349 = vector.load %arg32[%c16_293, %c0_294] : memref<144x512xbf16, #tpu.memory_space<vmem>>, vector<8x128xbf16>
    tpu.vector_store %arg32[%c16_293, %c0_294], %348 {strides = array<i32>} : memref<144x512xbf16, #tpu.memory_space<vmem>>, vector<8x128xbf16>,
    %c1_i32_295 = arith.constant 1 : i32
    %350 = tpu.dynamic_rotate %331 by %c1_i32_295 dim 1 : vector<8x128xf32>, i32 -> vector<8x128xf32>
    %c3_296 = arith.constant 3 : index
    %c0_297 = arith.constant 0 : index
    %c0_298 = arith.constant 0 : index
    %351 = vector.load %arg3[%c3_296, %c0_297, %c0_298] : memref<9x16x128xf32, #tpu.memory_space<vmem>>, vector<1x8x128xf32>
    %352 = vector.shape_cast %351 : vector<1x8x128xf32> to vector<8x128xf32>
    %353 = arith.mulf %350, %352 : vector<8x128xf32>
    %354 = arith.truncf %353 : vector<8x128xf32> to vector<8x128xbf16>
    %c24_299 = arith.constant 24 : index
    %c0_300 = arith.constant 0 : index
    %355 = vector.load %arg32[%c24_299, %c0_300] : memref<144x512xbf16, #tpu.memory_space<vmem>>, vector<8x128xbf16>
    tpu.vector_store %arg32[%c24_299, %c0_300], %354 {strides = array<i32>} : memref<144x512xbf16, #tpu.memory_space<vmem>>, vector<8x128xbf16>,
    %356 = arith.truncf %331 : vector<8x128xf32> to vector<8x128xbf16>
    %c32_301 = arith.constant 32 : index
    %c0_302 = arith.constant 0 : index
    %357 = vector.load %arg32[%c32_301, %c0_302] : memref<144x512xbf16, #tpu.memory_space<vmem>>, vector<8x128xbf16>
    tpu.vector_store %arg32[%c32_301, %c0_302], %356 {strides = array<i32>} : memref<144x512xbf16, #tpu.memory_space<vmem>>, vector<8x128xbf16>,
    %c127_i32_303 = arith.constant 127 : i32
    %358 = tpu.dynamic_rotate %331 by %c127_i32_303 dim 1 : vector<8x128xf32>, i32 -> vector<8x128xf32>
    %c5_304 = arith.constant 5 : index
    %c0_305 = arith.constant 0 : index
    %c0_306 = arith.constant 0 : index
    %359 = vector.load %arg3[%c5_304, %c0_305, %c0_306] : memref<9x16x128xf32, #tpu.memory_space<vmem>>, vector<1x8x128xf32>
    %360 = vector.shape_cast %359 : vector<1x8x128xf32> to vector<8x128xf32>
    %361 = arith.mulf %358, %360 : vector<8x128xf32>
    %362 = arith.truncf %361 : vector<8x128xf32> to vector<8x128xbf16>
    %c40_307 = arith.constant 40 : index
    %c0_308 = arith.constant 0 : index
    %363 = vector.load %arg32[%c40_307, %c0_308] : memref<144x512xbf16, #tpu.memory_space<vmem>>, vector<8x128xbf16>
    tpu.vector_store %arg32[%c40_307, %c0_308], %362 {strides = array<i32>} : memref<144x512xbf16, #tpu.memory_space<vmem>>, vector<8x128xbf16>,
    %c121_i32_309 = arith.constant 121 : i32
    %364 = tpu.dynamic_rotate %331 by %c121_i32_309 dim 1 : vector<8x128xf32>, i32 -> vector<8x128xf32>
    %c6_310 = arith.constant 6 : index
    %c0_311 = arith.constant 0 : index
    %c0_312 = arith.constant 0 : index
    %365 = vector.load %arg3[%c6_310, %c0_311, %c0_312] : memref<9x16x128xf32, #tpu.memory_space<vmem>>, vector<1x8x128xf32>
    %366 = vector.shape_cast %365 : vector<1x8x128xf32> to vector<8x128xf32>
    %367 = arith.mulf %364, %366 : vector<8x128xf32>
    %368 = arith.truncf %367 : vector<8x128xf32> to vector<8x128xbf16>
    %c48_313 = arith.constant 48 : index
    %c0_314 = arith.constant 0 : index
    %369 = vector.load %arg32[%c48_313, %c0_314] : memref<144x512xbf16, #tpu.memory_space<vmem>>, vector<8x128xbf16>
    tpu.vector_store %arg32[%c48_313, %c0_314], %368 {strides = array<i32>} : memref<144x512xbf16, #tpu.memory_space<vmem>>, vector<8x128xbf16>,
    %c120_i32_315 = arith.constant 120 : i32
    %370 = tpu.dynamic_rotate %331 by %c120_i32_315 dim 1 : vector<8x128xf32>, i32 -> vector<8x128xf32>
    %c7_316 = arith.constant 7 : index
    %c0_317 = arith.constant 0 : index
    %c0_318 = arith.constant 0 : index
    %371 = vector.load %arg3[%c7_316, %c0_317, %c0_318] : memref<9x16x128xf32, #tpu.memory_space<vmem>>, vector<1x8x128xf32>
    %372 = vector.shape_cast %371 : vector<1x8x128xf32> to vector<8x128xf32>
    %373 = arith.mulf %370, %372 : vector<8x128xf32>
    %374 = arith.truncf %373 : vector<8x128xf32> to vector<8x128xbf16>
    %c56_319 = arith.constant 56 : index
    %c0_320 = arith.constant 0 : index
    %375 = vector.load %arg32[%c56_319, %c0_320] : memref<144x512xbf16, #tpu.memory_space<vmem>>, vector<8x128xbf16>
    tpu.vector_store %arg32[%c56_319, %c0_320], %374 {strides = array<i32>} : memref<144x512xbf16, #tpu.memory_space<vmem>>, vector<8x128xbf16>,
    %c119_i32_321 = arith.constant 119 : i32
    %376 = tpu.dynamic_rotate %331 by %c119_i32_321 dim 1 : vector<8x128xf32>, i32 -> vector<8x128xf32>
    %c8_322 = arith.constant 8 : index
    %c0_323 = arith.constant 0 : index
    %c0_324 = arith.constant 0 : index
    %377 = vector.load %arg3[%c8_322, %c0_323, %c0_324] : memref<9x16x128xf32, #tpu.memory_space<vmem>>, vector<1x8x128xf32>
    %378 = vector.shape_cast %377 : vector<1x8x128xf32> to vector<8x128xf32>
    %379 = arith.mulf %376, %378 : vector<8x128xf32>
    %380 = arith.truncf %379 : vector<8x128xf32> to vector<8x128xbf16>
    %c64_325 = arith.constant 64 : index
    %c0_326 = arith.constant 0 : index
    %381 = vector.load %arg32[%c64_325, %c0_326] : memref<144x512xbf16, #tpu.memory_space<vmem>>, vector<8x128xbf16>
    tpu.vector_store %arg32[%c64_325, %c0_326], %380 {strides = array<i32>} : memref<144x512xbf16, #tpu.memory_space<vmem>>, vector<8x128xbf16>,
    %c0_327 = arith.constant 0 : index
    %c0_328 = arith.constant 0 : index
    %382 = vector.load %arg20[%c0_327, %c0_328] : memref<16x72xbf16, #tpu.memory_space<vmem>>, vector<16x72xbf16>
    %c0_329 = arith.constant 0 : index
    %c0_330 = arith.constant 0 : index
    %383 = vector.load %arg32[%c0_329, %c0_330] : memref<144x512xbf16, #tpu.memory_space<vmem>>, vector<72x128xbf16>
    %cst_331 = arith.constant dense<0.000000e+00> : vector<16x128xf32>
    %384 = tpu.matmul %382, %383, %cst_331 {dimension_numbers = #tpu.dot_dimension_numbers<[1], [0], [0], [1], [0, 0, 1, 1], [], []>} : vector<16x72xbf16>, vector<72x128xbf16>, vector<16x128xf32> -> vector<16x128xf32>
    %c0_332 = arith.constant 0 : index
    %c0_333 = arith.constant 0 : index
    %385 = vector.load %arg21[%c0_332, %c0_333] : memref<16x1xf32, #tpu.memory_space<vmem>>, vector<16x1xf32>
    %386 = vector.broadcast %385 : vector<16x1xf32> to vector<16x128xf32>
    %387 = arith.addf %384, %386 : vector<16x128xf32>
    %cst_334 = arith.constant 0.000000e+00 : f32
    %388 = vector.broadcast %cst_334 : f32 to vector<16x128xf32>
    %389 = arith.subf %388, %387 : vector<16x128xf32>
    %390 = math.exp %389 : vector<16x128xf32>
    %cst_335 = arith.constant 1.000000e+00 : f32
    %391 = vector.broadcast %cst_335 : f32 to vector<16x128xf32>
    %392 = arith.addf %391, %390 : vector<16x128xf32>
    %393 = tpu.reciprocal %392 {approx = true} : vector<16x128xf32> -> vector<16x128xf32>
    %394 = arith.mulf %387, %393 : vector<16x128xf32>
    %c9_i32_336 = arith.constant 9 : i32
    %395 = tpu.dynamic_rotate %394 by %c9_i32_336 dim 1 : vector<16x128xf32>, i32 -> vector<16x128xf32>
    %c0_337 = arith.constant 0 : index
    %c0_338 = arith.constant 0 : index
    %c0_339 = arith.constant 0 : index
    %396 = vector.load %arg3[%c0_337, %c0_338, %c0_339] : memref<9x16x128xf32, #tpu.memory_space<vmem>>, vector<1x16x128xf32>
    %397 = vector.shape_cast %396 : vector<1x16x128xf32> to vector<16x128xf32>
    %398 = arith.mulf %395, %397 : vector<16x128xf32>
    %399 = arith.truncf %398 : vector<16x128xf32> to vector<16x128xbf16>
    %c0_340 = arith.constant 0 : index
    %c0_341 = arith.constant 0 : index
    %400 = vector.load %arg32[%c0_340, %c0_341] : memref<144x512xbf16, #tpu.memory_space<vmem>>, vector<16x128xbf16>
    tpu.vector_store %arg32[%c0_340, %c0_341], %399 {strides = array<i32>} : memref<144x512xbf16, #tpu.memory_space<vmem>>, vector<16x128xbf16>,
    %c8_i32_342 = arith.constant 8 : i32
    %401 = tpu.dynamic_rotate %394 by %c8_i32_342 dim 1 : vector<16x128xf32>, i32 -> vector<16x128xf32>
    %c1_343 = arith.constant 1 : index
    %c0_344 = arith.constant 0 : index
    %c0_345 = arith.constant 0 : index
    %402 = vector.load %arg3[%c1_343, %c0_344, %c0_345] : memref<9x16x128xf32, #tpu.memory_space<vmem>>, vector<1x16x128xf32>
    %403 = vector.shape_cast %402 : vector<1x16x128xf32> to vector<16x128xf32>
    %404 = arith.mulf %401, %403 : vector<16x128xf32>
    %405 = arith.truncf %404 : vector<16x128xf32> to vector<16x128xbf16>
    %c16_346 = arith.constant 16 : index
    %c0_347 = arith.constant 0 : index
    %406 = vector.load %arg32[%c16_346, %c0_347] : memref<144x512xbf16, #tpu.memory_space<vmem>>, vector<16x128xbf16>
    tpu.vector_store %arg32[%c16_346, %c0_347], %405 {strides = array<i32>} : memref<144x512xbf16, #tpu.memory_space<vmem>>, vector<16x128xbf16>,
    %c7_i32_348 = arith.constant 7 : i32
    %407 = tpu.dynamic_rotate %394 by %c7_i32_348 dim 1 : vector<16x128xf32>, i32 -> vector<16x128xf32>
    %c2_349 = arith.constant 2 : index
    %c0_350 = arith.constant 0 : index
    %c0_351 = arith.constant 0 : index
    %408 = vector.load %arg3[%c2_349, %c0_350, %c0_351] : memref<9x16x128xf32, #tpu.memory_space<vmem>>, vector<1x16x128xf32>
    %409 = vector.shape_cast %408 : vector<1x16x128xf32> to vector<16x128xf32>
    %410 = arith.mulf %407, %409 : vector<16x128xf32>
    %411 = arith.truncf %410 : vector<16x128xf32> to vector<16x128xbf16>
    %c32_352 = arith.constant 32 : index
    %c0_353 = arith.constant 0 : index
    %412 = vector.load %arg32[%c32_352, %c0_353] : memref<144x512xbf16, #tpu.memory_space<vmem>>, vector<16x128xbf16>
    tpu.vector_store %arg32[%c32_352, %c0_353], %411 {strides = array<i32>} : memref<144x512xbf16, #tpu.memory_space<vmem>>, vector<16x128xbf16>,
    %c1_i32_354 = arith.constant 1 : i32
    %413 = tpu.dynamic_rotate %394 by %c1_i32_354 dim 1 : vector<16x128xf32>, i32 -> vector<16x128xf32>
    %c3_355 = arith.constant 3 : index
    %c0_356 = arith.constant 0 : index
    %c0_357 = arith.constant 0 : index
    %414 = vector.load %arg3[%c3_355, %c0_356, %c0_357] : memref<9x16x128xf32, #tpu.memory_space<vmem>>, vector<1x16x128xf32>
    %415 = vector.shape_cast %414 : vector<1x16x128xf32> to vector<16x128xf32>
    %416 = arith.mulf %413, %415 : vector<16x128xf32>
    %417 = arith.truncf %416 : vector<16x128xf32> to vector<16x128xbf16>
    %c48_358 = arith.constant 48 : index
    %c0_359 = arith.constant 0 : index
    %418 = vector.load %arg32[%c48_358, %c0_359] : memref<144x512xbf16, #tpu.memory_space<vmem>>, vector<16x128xbf16>
    tpu.vector_store %arg32[%c48_358, %c0_359], %417 {strides = array<i32>} : memref<144x512xbf16, #tpu.memory_space<vmem>>, vector<16x128xbf16>,
    %419 = arith.truncf %394 : vector<16x128xf32> to vector<16x128xbf16>
    %c64_360 = arith.constant 64 : index
    %c0_361 = arith.constant 0 : index
    %420 = vector.load %arg32[%c64_360, %c0_361] : memref<144x512xbf16, #tpu.memory_space<vmem>>, vector<16x128xbf16>
    tpu.vector_store %arg32[%c64_360, %c0_361], %419 {strides = array<i32>} : memref<144x512xbf16, #tpu.memory_space<vmem>>, vector<16x128xbf16>,
    %c127_i32_362 = arith.constant 127 : i32
    %421 = tpu.dynamic_rotate %394 by %c127_i32_362 dim 1 : vector<16x128xf32>, i32 -> vector<16x128xf32>
    %c5_363 = arith.constant 5 : index
    %c0_364 = arith.constant 0 : index
    %c0_365 = arith.constant 0 : index
    %422 = vector.load %arg3[%c5_363, %c0_364, %c0_365] : memref<9x16x128xf32, #tpu.memory_space<vmem>>, vector<1x16x128xf32>
    %423 = vector.shape_cast %422 : vector<1x16x128xf32> to vector<16x128xf32>
    %424 = arith.mulf %421, %423 : vector<16x128xf32>
    %425 = arith.truncf %424 : vector<16x128xf32> to vector<16x128xbf16>
    %c80_366 = arith.constant 80 : index
    %c0_367 = arith.constant 0 : index
    %426 = vector.load %arg32[%c80_366, %c0_367] : memref<144x512xbf16, #tpu.memory_space<vmem>>, vector<16x128xbf16>
    tpu.vector_store %arg32[%c80_366, %c0_367], %425 {strides = array<i32>} : memref<144x512xbf16, #tpu.memory_space<vmem>>, vector<16x128xbf16>,
    %c121_i32_368 = arith.constant 121 : i32
    %427 = tpu.dynamic_rotate %394 by %c121_i32_368 dim 1 : vector<16x128xf32>, i32 -> vector<16x128xf32>
    %c6_369 = arith.constant 6 : index
    %c0_370 = arith.constant 0 : index
    %c0_371 = arith.constant 0 : index
    %428 = vector.load %arg3[%c6_369, %c0_370, %c0_371] : memref<9x16x128xf32, #tpu.memory_space<vmem>>, vector<1x16x128xf32>
    %429 = vector.shape_cast %428 : vector<1x16x128xf32> to vector<16x128xf32>
    %430 = arith.mulf %427, %429 : vector<16x128xf32>
    %431 = arith.truncf %430 : vector<16x128xf32> to vector<16x128xbf16>
    %c96_372 = arith.constant 96 : index
    %c0_373 = arith.constant 0 : index
    %432 = vector.load %arg32[%c96_372, %c0_373] : memref<144x512xbf16, #tpu.memory_space<vmem>>, vector<16x128xbf16>
    tpu.vector_store %arg32[%c96_372, %c0_373], %431 {strides = array<i32>} : memref<144x512xbf16, #tpu.memory_space<vmem>>, vector<16x128xbf16>,
    %c120_i32_374 = arith.constant 120 : i32
    %433 = tpu.dynamic_rotate %394 by %c120_i32_374 dim 1 : vector<16x128xf32>, i32 -> vector<16x128xf32>
    %c7_375 = arith.constant 7 : index
    %c0_376 = arith.constant 0 : index
    %c0_377 = arith.constant 0 : index
    %434 = vector.load %arg3[%c7_375, %c0_376, %c0_377] : memref<9x16x128xf32, #tpu.memory_space<vmem>>, vector<1x16x128xf32>
    %435 = vector.shape_cast %434 : vector<1x16x128xf32> to vector<16x128xf32>
    %436 = arith.mulf %433, %435 : vector<16x128xf32>
    %437 = arith.truncf %436 : vector<16x128xf32> to vector<16x128xbf16>
    %c112_378 = arith.constant 112 : index
    %c0_379 = arith.constant 0 : index
    %438 = vector.load %arg32[%c112_378, %c0_379] : memref<144x512xbf16, #tpu.memory_space<vmem>>, vector<16x128xbf16>
    tpu.vector_store %arg32[%c112_378, %c0_379], %437 {strides = array<i32>} : memref<144x512xbf16, #tpu.memory_space<vmem>>, vector<16x128xbf16>,
    %c119_i32_380 = arith.constant 119 : i32
    %439 = tpu.dynamic_rotate %394 by %c119_i32_380 dim 1 : vector<16x128xf32>, i32 -> vector<16x128xf32>
    %c8_381 = arith.constant 8 : index
    %c0_382 = arith.constant 0 : index
    %c0_383 = arith.constant 0 : index
    %440 = vector.load %arg3[%c8_381, %c0_382, %c0_383] : memref<9x16x128xf32, #tpu.memory_space<vmem>>, vector<1x16x128xf32>
    %441 = vector.shape_cast %440 : vector<1x16x128xf32> to vector<16x128xf32>
    %442 = arith.mulf %439, %441 : vector<16x128xf32>
    %443 = arith.truncf %442 : vector<16x128xf32> to vector<16x128xbf16>
    %c128_384 = arith.constant 128 : index
    %c0_385 = arith.constant 0 : index
    %444 = vector.load %arg32[%c128_384, %c0_385] : memref<144x512xbf16, #tpu.memory_space<vmem>>, vector<16x128xbf16>
    tpu.vector_store %arg32[%c128_384, %c0_385], %443 {strides = array<i32>} : memref<144x512xbf16, #tpu.memory_space<vmem>>, vector<16x128xbf16>,
    %c0_386 = arith.constant 0 : index
    %c0_387 = arith.constant 0 : index
    %445 = vector.load %arg22[%c0_386, %c0_387] : memref<16x144xbf16, #tpu.memory_space<vmem>>, vector<16x144xbf16>
    %c0_388 = arith.constant 0 : index
    %c0_389 = arith.constant 0 : index
    %446 = vector.load %arg32[%c0_388, %c0_389] : memref<144x512xbf16, #tpu.memory_space<vmem>>, vector<144x128xbf16>
    %cst_390 = arith.constant dense<0.000000e+00> : vector<16x128xf32>
    %447 = tpu.matmul %445, %446, %cst_390 {dimension_numbers = #tpu.dot_dimension_numbers<[1], [0], [0], [1], [0, 0, 1, 1], [], []>} : vector<16x144xbf16>, vector<144x128xbf16>, vector<16x128xf32> -> vector<16x128xf32>
    %c0_391 = arith.constant 0 : index
    %c0_392 = arith.constant 0 : index
    %448 = vector.load %arg23[%c0_391, %c0_392] : memref<16x1xf32, #tpu.memory_space<vmem>>, vector<16x1xf32>
    %449 = vector.broadcast %448 : vector<16x1xf32> to vector<16x128xf32>
    %450 = arith.addf %447, %449 : vector<16x128xf32>
    %cst_393 = arith.constant 0.000000e+00 : f32
    %451 = vector.broadcast %cst_393 : f32 to vector<16x128xf32>
    %452 = arith.subf %451, %450 : vector<16x128xf32>
    %453 = math.exp %452 : vector<16x128xf32>
    %cst_394 = arith.constant 1.000000e+00 : f32
    %454 = vector.broadcast %cst_394 : f32 to vector<16x128xf32>
    %455 = arith.addf %454, %453 : vector<16x128xf32>
    %456 = tpu.reciprocal %455 {approx = true} : vector<16x128xf32> -> vector<16x128xf32>
    %457 = arith.mulf %450, %456 : vector<16x128xf32>
    %458 = arith.truncf %457 : vector<16x128xf32> to vector<16x128xbf16>
    %c0_395 = arith.constant 0 : index
    %c0_396 = arith.constant 0 : index
    %459 = vector.load %arg5[%c0_395, %c0_396] : memref<128x512xbf16, #tpu.memory_space<vmem>>, vector<128x512xbf16>
    %cst_397 = arith.constant dense<0.000000e+00> : vector<16x512xf32>
    %460 = tpu.matmul %458, %459, %cst_397 {dimension_numbers = #tpu.dot_dimension_numbers<[1], [0], [0], [1], [0, 0, 1, 1], [], []>} : vector<16x128xbf16>, vector<128x512xbf16>, vector<16x512xf32> -> vector<16x512xf32>
    %c17_i32_398 = arith.constant 17 : i32
    %461 = tpu.dynamic_rotate %460 by %c17_i32_398 dim 1 : vector<16x512xf32>, i32 -> vector<16x512xf32>
    %c0_399 = arith.constant 0 : index
    %c0_400 = arith.constant 0 : index
    %c0_401 = arith.constant 0 : index
    %462 = vector.load %arg2[%c0_399, %c0_400, %c0_401] : memref<9x16x512xf32, #tpu.memory_space<vmem>>, vector<1x16x512xf32>
    %463 = vector.shape_cast %462 : vector<1x16x512xf32> to vector<16x512xf32>
    %464 = arith.mulf %461, %463 : vector<16x512xf32>
    %465 = arith.truncf %464 : vector<16x512xf32> to vector<16x512xbf16>
    %c0_402 = arith.constant 0 : index
    %c0_403 = arith.constant 0 : index
    %466 = vector.load %arg32[%c0_402, %c0_403] : memref<144x512xbf16, #tpu.memory_space<vmem>>, vector<16x512xbf16>
    tpu.vector_store %arg32[%c0_402, %c0_403], %465 {strides = array<i32>} : memref<144x512xbf16, #tpu.memory_space<vmem>>, vector<16x512xbf16>,
    %c16_i32_404 = arith.constant 16 : i32
    %467 = tpu.dynamic_rotate %460 by %c16_i32_404 dim 1 : vector<16x512xf32>, i32 -> vector<16x512xf32>
    %c1_405 = arith.constant 1 : index
    %c0_406 = arith.constant 0 : index
    %c0_407 = arith.constant 0 : index
    %468 = vector.load %arg2[%c1_405, %c0_406, %c0_407] : memref<9x16x512xf32, #tpu.memory_space<vmem>>, vector<1x16x512xf32>
    %469 = vector.shape_cast %468 : vector<1x16x512xf32> to vector<16x512xf32>
    %470 = arith.mulf %467, %469 : vector<16x512xf32>
    %471 = arith.truncf %470 : vector<16x512xf32> to vector<16x512xbf16>
    %c16_408 = arith.constant 16 : index
    %c0_409 = arith.constant 0 : index
    %472 = vector.load %arg32[%c16_408, %c0_409] : memref<144x512xbf16, #tpu.memory_space<vmem>>, vector<16x512xbf16>
    tpu.vector_store %arg32[%c16_408, %c0_409], %471 {strides = array<i32>} : memref<144x512xbf16, #tpu.memory_space<vmem>>, vector<16x512xbf16>,
    %c15_i32_410 = arith.constant 15 : i32
    %473 = tpu.dynamic_rotate %460 by %c15_i32_410 dim 1 : vector<16x512xf32>, i32 -> vector<16x512xf32>
    %c2_411 = arith.constant 2 : index
    %c0_412 = arith.constant 0 : index
    %c0_413 = arith.constant 0 : index
    %474 = vector.load %arg2[%c2_411, %c0_412, %c0_413] : memref<9x16x512xf32, #tpu.memory_space<vmem>>, vector<1x16x512xf32>
    %475 = vector.shape_cast %474 : vector<1x16x512xf32> to vector<16x512xf32>
    %476 = arith.mulf %473, %475 : vector<16x512xf32>
    %477 = arith.truncf %476 : vector<16x512xf32> to vector<16x512xbf16>
    %c32_414 = arith.constant 32 : index
    %c0_415 = arith.constant 0 : index
    %478 = vector.load %arg32[%c32_414, %c0_415] : memref<144x512xbf16, #tpu.memory_space<vmem>>, vector<16x512xbf16>
    tpu.vector_store %arg32[%c32_414, %c0_415], %477 {strides = array<i32>} : memref<144x512xbf16, #tpu.memory_space<vmem>>, vector<16x512xbf16>,
    %c1_i32_416 = arith.constant 1 : i32
    %479 = tpu.dynamic_rotate %460 by %c1_i32_416 dim 1 : vector<16x512xf32>, i32 -> vector<16x512xf32>
    %c3_417 = arith.constant 3 : index
    %c0_418 = arith.constant 0 : index
    %c0_419 = arith.constant 0 : index
    %480 = vector.load %arg2[%c3_417, %c0_418, %c0_419] : memref<9x16x512xf32, #tpu.memory_space<vmem>>, vector<1x16x512xf32>
    %481 = vector.shape_cast %480 : vector<1x16x512xf32> to vector<16x512xf32>
    %482 = arith.mulf %479, %481 : vector<16x512xf32>
    %483 = arith.truncf %482 : vector<16x512xf32> to vector<16x512xbf16>
    %c48_420 = arith.constant 48 : index
    %c0_421 = arith.constant 0 : index
    %484 = vector.load %arg32[%c48_420, %c0_421] : memref<144x512xbf16, #tpu.memory_space<vmem>>, vector<16x512xbf16>
    tpu.vector_store %arg32[%c48_420, %c0_421], %483 {strides = array<i32>} : memref<144x512xbf16, #tpu.memory_space<vmem>>, vector<16x512xbf16>,
    %485 = arith.truncf %460 : vector<16x512xf32> to vector<16x512xbf16>
    %c64_422 = arith.constant 64 : index
    %c0_423 = arith.constant 0 : index
    %486 = vector.load %arg32[%c64_422, %c0_423] : memref<144x512xbf16, #tpu.memory_space<vmem>>, vector<16x512xbf16>
    tpu.vector_store %arg32[%c64_422, %c0_423], %485 {strides = array<i32>} : memref<144x512xbf16, #tpu.memory_space<vmem>>, vector<16x512xbf16>,
    %c511_i32_424 = arith.constant 511 : i32
    %487 = tpu.dynamic_rotate %460 by %c511_i32_424 dim 1 : vector<16x512xf32>, i32 -> vector<16x512xf32>
    %c5_425 = arith.constant 5 : index
    %c0_426 = arith.constant 0 : index
    %c0_427 = arith.constant 0 : index
    %488 = vector.load %arg2[%c5_425, %c0_426, %c0_427] : memref<9x16x512xf32, #tpu.memory_space<vmem>>, vector<1x16x512xf32>
    %489 = vector.shape_cast %488 : vector<1x16x512xf32> to vector<16x512xf32>
    %490 = arith.mulf %487, %489 : vector<16x512xf32>
    %491 = arith.truncf %490 : vector<16x512xf32> to vector<16x512xbf16>
    %c80_428 = arith.constant 80 : index
    %c0_429 = arith.constant 0 : index
    %492 = vector.load %arg32[%c80_428, %c0_429] : memref<144x512xbf16, #tpu.memory_space<vmem>>, vector<16x512xbf16>
    tpu.vector_store %arg32[%c80_428, %c0_429], %491 {strides = array<i32>} : memref<144x512xbf16, #tpu.memory_space<vmem>>, vector<16x512xbf16>,
    %c497_i32_430 = arith.constant 497 : i32
    %493 = tpu.dynamic_rotate %460 by %c497_i32_430 dim 1 : vector<16x512xf32>, i32 -> vector<16x512xf32>
    %c6_431 = arith.constant 6 : index
    %c0_432 = arith.constant 0 : index
    %c0_433 = arith.constant 0 : index
    %494 = vector.load %arg2[%c6_431, %c0_432, %c0_433] : memref<9x16x512xf32, #tpu.memory_space<vmem>>, vector<1x16x512xf32>
    %495 = vector.shape_cast %494 : vector<1x16x512xf32> to vector<16x512xf32>
    %496 = arith.mulf %493, %495 : vector<16x512xf32>
    %497 = arith.truncf %496 : vector<16x512xf32> to vector<16x512xbf16>
    %c96_434 = arith.constant 96 : index
    %c0_435 = arith.constant 0 : index
    %498 = vector.load %arg32[%c96_434, %c0_435] : memref<144x512xbf16, #tpu.memory_space<vmem>>, vector<16x512xbf16>
    tpu.vector_store %arg32[%c96_434, %c0_435], %497 {strides = array<i32>} : memref<144x512xbf16, #tpu.memory_space<vmem>>, vector<16x512xbf16>,
    %c496_i32_436 = arith.constant 496 : i32
    %499 = tpu.dynamic_rotate %460 by %c496_i32_436 dim 1 : vector<16x512xf32>, i32 -> vector<16x512xf32>
    %c7_437 = arith.constant 7 : index
    %c0_438 = arith.constant 0 : index
    %c0_439 = arith.constant 0 : index
    %500 = vector.load %arg2[%c7_437, %c0_438, %c0_439] : memref<9x16x512xf32, #tpu.memory_space<vmem>>, vector<1x16x512xf32>
    %501 = vector.shape_cast %500 : vector<1x16x512xf32> to vector<16x512xf32>
    %502 = arith.mulf %499, %501 : vector<16x512xf32>
    %503 = arith.truncf %502 : vector<16x512xf32> to vector<16x512xbf16>
    %c112_440 = arith.constant 112 : index
    %c0_441 = arith.constant 0 : index
    %504 = vector.load %arg32[%c112_440, %c0_441] : memref<144x512xbf16, #tpu.memory_space<vmem>>, vector<16x512xbf16>
    tpu.vector_store %arg32[%c112_440, %c0_441], %503 {strides = array<i32>} : memref<144x512xbf16, #tpu.memory_space<vmem>>, vector<16x512xbf16>,
    %c495_i32_442 = arith.constant 495 : i32
    %505 = tpu.dynamic_rotate %460 by %c495_i32_442 dim 1 : vector<16x512xf32>, i32 -> vector<16x512xf32>
    %c8_443 = arith.constant 8 : index
    %c0_444 = arith.constant 0 : index
    %c0_445 = arith.constant 0 : index
    %506 = vector.load %arg2[%c8_443, %c0_444, %c0_445] : memref<9x16x512xf32, #tpu.memory_space<vmem>>, vector<1x16x512xf32>
    %507 = vector.shape_cast %506 : vector<1x16x512xf32> to vector<16x512xf32>
    %508 = arith.mulf %505, %507 : vector<16x512xf32>
    %509 = arith.truncf %508 : vector<16x512xf32> to vector<16x512xbf16>
    %c128_446 = arith.constant 128 : index
    %c0_447 = arith.constant 0 : index
    %510 = vector.load %arg32[%c128_446, %c0_447] : memref<144x512xbf16, #tpu.memory_space<vmem>>, vector<16x512xbf16>
    tpu.vector_store %arg32[%c128_446, %c0_447], %509 {strides = array<i32>} : memref<144x512xbf16, #tpu.memory_space<vmem>>, vector<16x512xbf16>,
    %c0_448 = arith.constant 0 : index
    %c0_449 = arith.constant 0 : index
    %511 = vector.load %arg24[%c0_448, %c0_449] : memref<16x144xbf16, #tpu.memory_space<vmem>>, vector<16x144xbf16>
    %c0_450 = arith.constant 0 : index
    %c0_451 = arith.constant 0 : index
    %512 = vector.load %arg32[%c0_450, %c0_451] : memref<144x512xbf16, #tpu.memory_space<vmem>>, vector<144x512xbf16>
    %cst_452 = arith.constant dense<0.000000e+00> : vector<16x512xf32>
    %513 = tpu.matmul %511, %512, %cst_452 {dimension_numbers = #tpu.dot_dimension_numbers<[1], [0], [0], [1], [0, 0, 1, 1], [], []>} : vector<16x144xbf16>, vector<144x512xbf16>, vector<16x512xf32> -> vector<16x512xf32>
    %c0_453 = arith.constant 0 : index
    %c0_454 = arith.constant 0 : index
    %514 = vector.load %arg25[%c0_453, %c0_454] : memref<16x1xf32, #tpu.memory_space<vmem>>, vector<16x1xf32>
    %515 = vector.broadcast %514 : vector<16x1xf32> to vector<16x512xf32>
    %516 = arith.addf %513, %515 : vector<16x512xf32>
    %cst_455 = arith.constant 0.000000e+00 : f32
    %517 = vector.broadcast %cst_455 : f32 to vector<16x512xf32>
    %518 = arith.subf %517, %516 : vector<16x512xf32>
    %519 = math.exp %518 : vector<16x512xf32>
    %cst_456 = arith.constant 1.000000e+00 : f32
    %520 = vector.broadcast %cst_456 : f32 to vector<16x512xf32>
    %521 = arith.addf %520, %519 : vector<16x512xf32>
    %522 = tpu.reciprocal %521 {approx = true} : vector<16x512xf32> -> vector<16x512xf32>
    %523 = arith.mulf %516, %522 : vector<16x512xf32>
    %c17_i32_457 = arith.constant 17 : i32
    %524 = tpu.dynamic_rotate %523 by %c17_i32_457 dim 1 : vector<16x512xf32>, i32 -> vector<16x512xf32>
    %c0_458 = arith.constant 0 : index
    %c0_459 = arith.constant 0 : index
    %c0_460 = arith.constant 0 : index
    %525 = vector.load %arg2[%c0_458, %c0_459, %c0_460] : memref<9x16x512xf32, #tpu.memory_space<vmem>>, vector<1x16x512xf32>
    %526 = vector.shape_cast %525 : vector<1x16x512xf32> to vector<16x512xf32>
    %527 = arith.mulf %524, %526 : vector<16x512xf32>
    %528 = arith.truncf %527 : vector<16x512xf32> to vector<16x512xbf16>
    %c0_461 = arith.constant 0 : index
    %c0_462 = arith.constant 0 : index
    %529 = vector.load %arg32[%c0_461, %c0_462] : memref<144x512xbf16, #tpu.memory_space<vmem>>, vector<16x512xbf16>
    tpu.vector_store %arg32[%c0_461, %c0_462], %528 {strides = array<i32>} : memref<144x512xbf16, #tpu.memory_space<vmem>>, vector<16x512xbf16>,
    %c16_i32_463 = arith.constant 16 : i32
    %530 = tpu.dynamic_rotate %523 by %c16_i32_463 dim 1 : vector<16x512xf32>, i32 -> vector<16x512xf32>
    %c1_464 = arith.constant 1 : index
    %c0_465 = arith.constant 0 : index
    %c0_466 = arith.constant 0 : index
    %531 = vector.load %arg2[%c1_464, %c0_465, %c0_466] : memref<9x16x512xf32, #tpu.memory_space<vmem>>, vector<1x16x512xf32>
    %532 = vector.shape_cast %531 : vector<1x16x512xf32> to vector<16x512xf32>
    %533 = arith.mulf %530, %532 : vector<16x512xf32>
    %534 = arith.truncf %533 : vector<16x512xf32> to vector<16x512xbf16>
    %c16_467 = arith.constant 16 : index
    %c0_468 = arith.constant 0 : index
    %535 = vector.load %arg32[%c16_467, %c0_468] : memref<144x512xbf16, #tpu.memory_space<vmem>>, vector<16x512xbf16>
    tpu.vector_store %arg32[%c16_467, %c0_468], %534 {strides = array<i32>} : memref<144x512xbf16, #tpu.memory_space<vmem>>, vector<16x512xbf16>,
    %c15_i32_469 = arith.constant 15 : i32
    %536 = tpu.dynamic_rotate %523 by %c15_i32_469 dim 1 : vector<16x512xf32>, i32 -> vector<16x512xf32>
    %c2_470 = arith.constant 2 : index
    %c0_471 = arith.constant 0 : index
    %c0_472 = arith.constant 0 : index
    %537 = vector.load %arg2[%c2_470, %c0_471, %c0_472] : memref<9x16x512xf32, #tpu.memory_space<vmem>>, vector<1x16x512xf32>
    %538 = vector.shape_cast %537 : vector<1x16x512xf32> to vector<16x512xf32>
    %539 = arith.mulf %536, %538 : vector<16x512xf32>
    %540 = arith.truncf %539 : vector<16x512xf32> to vector<16x512xbf16>
    %c32_473 = arith.constant 32 : index
    %c0_474 = arith.constant 0 : index
    %541 = vector.load %arg32[%c32_473, %c0_474] : memref<144x512xbf16, #tpu.memory_space<vmem>>, vector<16x512xbf16>
    tpu.vector_store %arg32[%c32_473, %c0_474], %540 {strides = array<i32>} : memref<144x512xbf16, #tpu.memory_space<vmem>>, vector<16x512xbf16>,
    %c1_i32_475 = arith.constant 1 : i32
    %542 = tpu.dynamic_rotate %523 by %c1_i32_475 dim 1 : vector<16x512xf32>, i32 -> vector<16x512xf32>
    %c3_476 = arith.constant 3 : index
    %c0_477 = arith.constant 0 : index
    %c0_478 = arith.constant 0 : index
    %543 = vector.load %arg2[%c3_476, %c0_477, %c0_478] : memref<9x16x512xf32, #tpu.memory_space<vmem>>, vector<1x16x512xf32>
    %544 = vector.shape_cast %543 : vector<1x16x512xf32> to vector<16x512xf32>
    %545 = arith.mulf %542, %544 : vector<16x512xf32>
    %546 = arith.truncf %545 : vector<16x512xf32> to vector<16x512xbf16>
    %c48_479 = arith.constant 48 : index
    %c0_480 = arith.constant 0 : index
    %547 = vector.load %arg32[%c48_479, %c0_480] : memref<144x512xbf16, #tpu.memory_space<vmem>>, vector<16x512xbf16>
    tpu.vector_store %arg32[%c48_479, %c0_480], %546 {strides = array<i32>} : memref<144x512xbf16, #tpu.memory_space<vmem>>, vector<16x512xbf16>,
    %548 = arith.truncf %523 : vector<16x512xf32> to vector<16x512xbf16>
    %c64_481 = arith.constant 64 : index
    %c0_482 = arith.constant 0 : index
    %549 = vector.load %arg32[%c64_481, %c0_482] : memref<144x512xbf16, #tpu.memory_space<vmem>>, vector<16x512xbf16>
    tpu.vector_store %arg32[%c64_481, %c0_482], %548 {strides = array<i32>} : memref<144x512xbf16, #tpu.memory_space<vmem>>, vector<16x512xbf16>,
    %c511_i32_483 = arith.constant 511 : i32
    %550 = tpu.dynamic_rotate %523 by %c511_i32_483 dim 1 : vector<16x512xf32>, i32 -> vector<16x512xf32>
    %c5_484 = arith.constant 5 : index
    %c0_485 = arith.constant 0 : index
    %c0_486 = arith.constant 0 : index
    %551 = vector.load %arg2[%c5_484, %c0_485, %c0_486] : memref<9x16x512xf32, #tpu.memory_space<vmem>>, vector<1x16x512xf32>
    %552 = vector.shape_cast %551 : vector<1x16x512xf32> to vector<16x512xf32>
    %553 = arith.mulf %550, %552 : vector<16x512xf32>
    %554 = arith.truncf %553 : vector<16x512xf32> to vector<16x512xbf16>
    %c80_487 = arith.constant 80 : index
    %c0_488 = arith.constant 0 : index
    %555 = vector.load %arg32[%c80_487, %c0_488] : memref<144x512xbf16, #tpu.memory_space<vmem>>, vector<16x512xbf16>
    tpu.vector_store %arg32[%c80_487, %c0_488], %554 {strides = array<i32>} : memref<144x512xbf16, #tpu.memory_space<vmem>>, vector<16x512xbf16>,
    %c497_i32_489 = arith.constant 497 : i32
    %556 = tpu.dynamic_rotate %523 by %c497_i32_489 dim 1 : vector<16x512xf32>, i32 -> vector<16x512xf32>
    %c6_490 = arith.constant 6 : index
    %c0_491 = arith.constant 0 : index
    %c0_492 = arith.constant 0 : index
    %557 = vector.load %arg2[%c6_490, %c0_491, %c0_492] : memref<9x16x512xf32, #tpu.memory_space<vmem>>, vector<1x16x512xf32>
    %558 = vector.shape_cast %557 : vector<1x16x512xf32> to vector<16x512xf32>
    %559 = arith.mulf %556, %558 : vector<16x512xf32>
    %560 = arith.truncf %559 : vector<16x512xf32> to vector<16x512xbf16>
    %c96_493 = arith.constant 96 : index
    %c0_494 = arith.constant 0 : index
    %561 = vector.load %arg32[%c96_493, %c0_494] : memref<144x512xbf16, #tpu.memory_space<vmem>>, vector<16x512xbf16>
    tpu.vector_store %arg32[%c96_493, %c0_494], %560 {strides = array<i32>} : memref<144x512xbf16, #tpu.memory_space<vmem>>, vector<16x512xbf16>,
    %c496_i32_495 = arith.constant 496 : i32
    %562 = tpu.dynamic_rotate %523 by %c496_i32_495 dim 1 : vector<16x512xf32>, i32 -> vector<16x512xf32>
    %c7_496 = arith.constant 7 : index
    %c0_497 = arith.constant 0 : index
    %c0_498 = arith.constant 0 : index
    %563 = vector.load %arg2[%c7_496, %c0_497, %c0_498] : memref<9x16x512xf32, #tpu.memory_space<vmem>>, vector<1x16x512xf32>
    %564 = vector.shape_cast %563 : vector<1x16x512xf32> to vector<16x512xf32>
    %565 = arith.mulf %562, %564 : vector<16x512xf32>
    %566 = arith.truncf %565 : vector<16x512xf32> to vector<16x512xbf16>
    %c112_499 = arith.constant 112 : index
    %c0_500 = arith.constant 0 : index
    %567 = vector.load %arg32[%c112_499, %c0_500] : memref<144x512xbf16, #tpu.memory_space<vmem>>, vector<16x512xbf16>
    tpu.vector_store %arg32[%c112_499, %c0_500], %566 {strides = array<i32>} : memref<144x512xbf16, #tpu.memory_space<vmem>>, vector<16x512xbf16>,
    %c495_i32_501 = arith.constant 495 : i32
    %568 = tpu.dynamic_rotate %523 by %c495_i32_501 dim 1 : vector<16x512xf32>, i32 -> vector<16x512xf32>
    %c8_502 = arith.constant 8 : index
    %c0_503 = arith.constant 0 : index
    %c0_504 = arith.constant 0 : index
    %569 = vector.load %arg2[%c8_502, %c0_503, %c0_504] : memref<9x16x512xf32, #tpu.memory_space<vmem>>, vector<1x16x512xf32>
    %570 = vector.shape_cast %569 : vector<1x16x512xf32> to vector<16x512xf32>
    %571 = arith.mulf %568, %570 : vector<16x512xf32>
    %572 = arith.truncf %571 : vector<16x512xf32> to vector<16x512xbf16>
    %c128_505 = arith.constant 128 : index
    %c0_506 = arith.constant 0 : index
    %573 = vector.load %arg32[%c128_505, %c0_506] : memref<144x512xbf16, #tpu.memory_space<vmem>>, vector<16x512xbf16>
    tpu.vector_store %arg32[%c128_505, %c0_506], %572 {strides = array<i32>} : memref<144x512xbf16, #tpu.memory_space<vmem>>, vector<16x512xbf16>,
    %c0_507 = arith.constant 0 : index
    %c0_508 = arith.constant 0 : index
    %574 = vector.load %arg26[%c0_507, %c0_508] : memref<8x144xbf16, #tpu.memory_space<vmem>>, vector<8x144xbf16>
    %c0_509 = arith.constant 0 : index
    %c0_510 = arith.constant 0 : index
    %575 = vector.load %arg32[%c0_509, %c0_510] : memref<144x512xbf16, #tpu.memory_space<vmem>>, vector<144x512xbf16>
    %cst_511 = arith.constant dense<0.000000e+00> : vector<8x512xf32>
    %576 = tpu.matmul %574, %575, %cst_511 {dimension_numbers = #tpu.dot_dimension_numbers<[1], [0], [0], [1], [0, 0, 1, 1], [], []>} : vector<8x144xbf16>, vector<144x512xbf16>, vector<8x512xf32> -> vector<8x512xf32>
    %c0_512 = arith.constant 0 : index
    %c0_513 = arith.constant 0 : index
    %577 = vector.load %arg27[%c0_512, %c0_513] : memref<8x1xf32, #tpu.memory_space<vmem>>, vector<8x1xf32>
    %578 = vector.broadcast %577 : vector<8x1xf32> to vector<8x512xf32>
    %579 = arith.addf %576, %578 : vector<8x512xf32>
    %cst_514 = arith.constant 0.000000e+00 : f32
    %580 = vector.broadcast %cst_514 : f32 to vector<8x512xf32>
    %581 = arith.subf %580, %579 : vector<8x512xf32>
    %582 = math.exp %581 : vector<8x512xf32>
    %cst_515 = arith.constant 1.000000e+00 : f32
    %583 = vector.broadcast %cst_515 : f32 to vector<8x512xf32>
    %584 = arith.addf %583, %582 : vector<8x512xf32>
    %585 = tpu.reciprocal %584 {approx = true} : vector<8x512xf32> -> vector<8x512xf32>
    %586 = arith.mulf %579, %585 : vector<8x512xf32>
    %c17_i32_516 = arith.constant 17 : i32
    %587 = tpu.dynamic_rotate %586 by %c17_i32_516 dim 1 : vector<8x512xf32>, i32 -> vector<8x512xf32>
    %c0_517 = arith.constant 0 : index
    %c0_518 = arith.constant 0 : index
    %c0_519 = arith.constant 0 : index
    %588 = vector.load %arg2[%c0_517, %c0_518, %c0_519] : memref<9x16x512xf32, #tpu.memory_space<vmem>>, vector<1x8x512xf32>
    %589 = vector.shape_cast %588 : vector<1x8x512xf32> to vector<8x512xf32>
    %590 = arith.mulf %587, %589 : vector<8x512xf32>
    %591 = arith.truncf %590 : vector<8x512xf32> to vector<8x512xbf16>
    %c0_520 = arith.constant 0 : index
    %c0_521 = arith.constant 0 : index
    %592 = vector.load %arg32[%c0_520, %c0_521] : memref<144x512xbf16, #tpu.memory_space<vmem>>, vector<8x512xbf16>
    tpu.vector_store %arg32[%c0_520, %c0_521], %591 {strides = array<i32>} : memref<144x512xbf16, #tpu.memory_space<vmem>>, vector<8x512xbf16>,
    %c16_i32_522 = arith.constant 16 : i32
    %593 = tpu.dynamic_rotate %586 by %c16_i32_522 dim 1 : vector<8x512xf32>, i32 -> vector<8x512xf32>
    %c1_523 = arith.constant 1 : index
    %c0_524 = arith.constant 0 : index
    %c0_525 = arith.constant 0 : index
    %594 = vector.load %arg2[%c1_523, %c0_524, %c0_525] : memref<9x16x512xf32, #tpu.memory_space<vmem>>, vector<1x8x512xf32>
    %595 = vector.shape_cast %594 : vector<1x8x512xf32> to vector<8x512xf32>
    %596 = arith.mulf %593, %595 : vector<8x512xf32>
    %597 = arith.truncf %596 : vector<8x512xf32> to vector<8x512xbf16>
    %c8_526 = arith.constant 8 : index
    %c0_527 = arith.constant 0 : index
    %598 = vector.load %arg32[%c8_526, %c0_527] : memref<144x512xbf16, #tpu.memory_space<vmem>>, vector<8x512xbf16>
    tpu.vector_store %arg32[%c8_526, %c0_527], %597 {strides = array<i32>} : memref<144x512xbf16, #tpu.memory_space<vmem>>, vector<8x512xbf16>,
    %c15_i32_528 = arith.constant 15 : i32
    %599 = tpu.dynamic_rotate %586 by %c15_i32_528 dim 1 : vector<8x512xf32>, i32 -> vector<8x512xf32>
    %c2_529 = arith.constant 2 : index
    %c0_530 = arith.constant 0 : index
    %c0_531 = arith.constant 0 : index
    %600 = vector.load %arg2[%c2_529, %c0_530, %c0_531] : memref<9x16x512xf32, #tpu.memory_space<vmem>>, vector<1x8x512xf32>
    %601 = vector.shape_cast %600 : vector<1x8x512xf32> to vector<8x512xf32>
    %602 = arith.mulf %599, %601 : vector<8x512xf32>
    %603 = arith.truncf %602 : vector<8x512xf32> to vector<8x512xbf16>
    %c16_532 = arith.constant 16 : index
    %c0_533 = arith.constant 0 : index
    %604 = vector.load %arg32[%c16_532, %c0_533] : memref<144x512xbf16, #tpu.memory_space<vmem>>, vector<8x512xbf16>
    tpu.vector_store %arg32[%c16_532, %c0_533], %603 {strides = array<i32>} : memref<144x512xbf16, #tpu.memory_space<vmem>>, vector<8x512xbf16>,
    %c1_i32_534 = arith.constant 1 : i32
    %605 = tpu.dynamic_rotate %586 by %c1_i32_534 dim 1 : vector<8x512xf32>, i32 -> vector<8x512xf32>
    %c3_535 = arith.constant 3 : index
    %c0_536 = arith.constant 0 : index
    %c0_537 = arith.constant 0 : index
    %606 = vector.load %arg2[%c3_535, %c0_536, %c0_537] : memref<9x16x512xf32, #tpu.memory_space<vmem>>, vector<1x8x512xf32>
    %607 = vector.shape_cast %606 : vector<1x8x512xf32> to vector<8x512xf32>
    %608 = arith.mulf %605, %607 : vector<8x512xf32>
    %609 = arith.truncf %608 : vector<8x512xf32> to vector<8x512xbf16>
    %c24_538 = arith.constant 24 : index
    %c0_539 = arith.constant 0 : index
    %610 = vector.load %arg32[%c24_538, %c0_539] : memref<144x512xbf16, #tpu.memory_space<vmem>>, vector<8x512xbf16>
    tpu.vector_store %arg32[%c24_538, %c0_539], %609 {strides = array<i32>} : memref<144x512xbf16, #tpu.memory_space<vmem>>, vector<8x512xbf16>,
    %611 = arith.truncf %586 : vector<8x512xf32> to vector<8x512xbf16>
    %c32_540 = arith.constant 32 : index
    %c0_541 = arith.constant 0 : index
    %612 = vector.load %arg32[%c32_540, %c0_541] : memref<144x512xbf16, #tpu.memory_space<vmem>>, vector<8x512xbf16>
    tpu.vector_store %arg32[%c32_540, %c0_541], %611 {strides = array<i32>} : memref<144x512xbf16, #tpu.memory_space<vmem>>, vector<8x512xbf16>,
    %c511_i32_542 = arith.constant 511 : i32
    %613 = tpu.dynamic_rotate %586 by %c511_i32_542 dim 1 : vector<8x512xf32>, i32 -> vector<8x512xf32>
    %c5_543 = arith.constant 5 : index
    %c0_544 = arith.constant 0 : index
    %c0_545 = arith.constant 0 : index
    %614 = vector.load %arg2[%c5_543, %c0_544, %c0_545] : memref<9x16x512xf32, #tpu.memory_space<vmem>>, vector<1x8x512xf32>
    %615 = vector.shape_cast %614 : vector<1x8x512xf32> to vector<8x512xf32>
    %616 = arith.mulf %613, %615 : vector<8x512xf32>
    %617 = arith.truncf %616 : vector<8x512xf32> to vector<8x512xbf16>
    %c40_546 = arith.constant 40 : index
    %c0_547 = arith.constant 0 : index
    %618 = vector.load %arg32[%c40_546, %c0_547] : memref<144x512xbf16, #tpu.memory_space<vmem>>, vector<8x512xbf16>
    tpu.vector_store %arg32[%c40_546, %c0_547], %617 {strides = array<i32>} : memref<144x512xbf16, #tpu.memory_space<vmem>>, vector<8x512xbf16>,
    %c497_i32_548 = arith.constant 497 : i32
    %619 = tpu.dynamic_rotate %586 by %c497_i32_548 dim 1 : vector<8x512xf32>, i32 -> vector<8x512xf32>
    %c6_549 = arith.constant 6 : index
    %c0_550 = arith.constant 0 : index
    %c0_551 = arith.constant 0 : index
    %620 = vector.load %arg2[%c6_549, %c0_550, %c0_551] : memref<9x16x512xf32, #tpu.memory_space<vmem>>, vector<1x8x512xf32>
    %621 = vector.shape_cast %620 : vector<1x8x512xf32> to vector<8x512xf32>
    %622 = arith.mulf %619, %621 : vector<8x512xf32>
    %623 = arith.truncf %622 : vector<8x512xf32> to vector<8x512xbf16>
    %c48_552 = arith.constant 48 : index
    %c0_553 = arith.constant 0 : index
    %624 = vector.load %arg32[%c48_552, %c0_553] : memref<144x512xbf16, #tpu.memory_space<vmem>>, vector<8x512xbf16>
    tpu.vector_store %arg32[%c48_552, %c0_553], %623 {strides = array<i32>} : memref<144x512xbf16, #tpu.memory_space<vmem>>, vector<8x512xbf16>,
    %c496_i32_554 = arith.constant 496 : i32
    %625 = tpu.dynamic_rotate %586 by %c496_i32_554 dim 1 : vector<8x512xf32>, i32 -> vector<8x512xf32>
    %c7_555 = arith.constant 7 : index
    %c0_556 = arith.constant 0 : index
    %c0_557 = arith.constant 0 : index
    %626 = vector.load %arg2[%c7_555, %c0_556, %c0_557] : memref<9x16x512xf32, #tpu.memory_space<vmem>>, vector<1x8x512xf32>
    %627 = vector.shape_cast %626 : vector<1x8x512xf32> to vector<8x512xf32>
    %628 = arith.mulf %625, %627 : vector<8x512xf32>
    %629 = arith.truncf %628 : vector<8x512xf32> to vector<8x512xbf16>
    %c56_558 = arith.constant 56 : index
    %c0_559 = arith.constant 0 : index
    %630 = vector.load %arg32[%c56_558, %c0_559] : memref<144x512xbf16, #tpu.memory_space<vmem>>, vector<8x512xbf16>
    tpu.vector_store %arg32[%c56_558, %c0_559], %629 {strides = array<i32>} : memref<144x512xbf16, #tpu.memory_space<vmem>>, vector<8x512xbf16>,
    %c495_i32_560 = arith.constant 495 : i32
    %631 = tpu.dynamic_rotate %586 by %c495_i32_560 dim 1 : vector<8x512xf32>, i32 -> vector<8x512xf32>
    %c8_561 = arith.constant 8 : index
    %c0_562 = arith.constant 0 : index
    %c0_563 = arith.constant 0 : index
    %632 = vector.load %arg2[%c8_561, %c0_562, %c0_563] : memref<9x16x512xf32, #tpu.memory_space<vmem>>, vector<1x8x512xf32>
    %633 = vector.shape_cast %632 : vector<1x8x512xf32> to vector<8x512xf32>
    %634 = arith.mulf %631, %633 : vector<8x512xf32>
    %635 = arith.truncf %634 : vector<8x512xf32> to vector<8x512xbf16>
    %c64_564 = arith.constant 64 : index
    %c0_565 = arith.constant 0 : index
    %636 = vector.load %arg32[%c64_564, %c0_565] : memref<144x512xbf16, #tpu.memory_space<vmem>>, vector<8x512xbf16>
    tpu.vector_store %arg32[%c64_564, %c0_565], %635 {strides = array<i32>} : memref<144x512xbf16, #tpu.memory_space<vmem>>, vector<8x512xbf16>,
    %c0_566 = arith.constant 0 : index
    %c0_567 = arith.constant 0 : index
    %637 = vector.load %arg28[%c0_566, %c0_567] : memref<8x72xbf16, #tpu.memory_space<vmem>>, vector<8x72xbf16>
    %c0_568 = arith.constant 0 : index
    %c0_569 = arith.constant 0 : index
    %638 = vector.load %arg32[%c0_568, %c0_569] : memref<144x512xbf16, #tpu.memory_space<vmem>>, vector<72x512xbf16>
    %cst_570 = arith.constant dense<0.000000e+00> : vector<8x512xf32>
    %639 = tpu.matmul %637, %638, %cst_570 {dimension_numbers = #tpu.dot_dimension_numbers<[1], [0], [0], [1], [0, 0, 1, 1], [], []>} : vector<8x72xbf16>, vector<72x512xbf16>, vector<8x512xf32> -> vector<8x512xf32>
    %c0_571 = arith.constant 0 : index
    %c0_572 = arith.constant 0 : index
    %640 = vector.load %arg29[%c0_571, %c0_572] : memref<8x1xf32, #tpu.memory_space<vmem>>, vector<8x1xf32>
    %641 = vector.broadcast %640 : vector<8x1xf32> to vector<8x512xf32>
    %642 = arith.addf %639, %641 : vector<8x512xf32>
    %c0_573 = arith.constant 0 : index
    %c0_574 = arith.constant 0 : index
    %643 = vector.load %arg30[%c0_573, %c0_574] : memref<8x512xf32, #tpu.memory_space<vmem>>, vector<8x512xf32>
    tpu.vector_store %arg30[%c0_573, %c0_574], %642 {strides = array<i32>} : memref<8x512xf32, #tpu.memory_space<vmem>>, vector<8x512xf32>,
    return
  }
}

</mosaic_0001>

<llo_original>
// kernel: representation_ae_forward.1
$region0: #{representation_ae_forward.1}
  #allocation0 [shape = 'u32[]', space=smem, size = 0x4, offset = 0x4, fixed_abs, tag = 'smem constant byte address 0x4 - core index']
  #allocation1 [shape = 'u32[144,128]{1,0:T(1,128)}', space=vmem, size = 0x12000, scoped, tag = 'internal scratch']
  #allocation2 [shape = 'bf16[144,512]{1,0:T(16,128)(2,1)}', space=vmem, size = 0x24000, scoped, tag = 'scratch operand']
  %s0 = inlined_call_operand.smem [shape: u32[32], index: -1, kind: input, shape index: {}]
  %s1 = sld [smem:[%s0]]
  %s2 = scalar_lea.smem %s0, 1
  %s3 = sld [smem:[%s2]]
  %s4 = scalar_lea.smem %s0, 2
  %s5 = sld [smem:[%s4]]
  %s6 = scalar_lea.smem %s0, 3
  %s7 = sld [smem:[%s6]]
  %s8 = scalar_lea.smem %s0, 4
  %s9 = sld [smem:[%s8]]
  %s10 = scalar_lea.smem %s0, 5
  %s11 = sld [smem:[%s10]]
  %s12 = scalar_lea.smem %s0, 6
  %s13 = sld [smem:[%s12]]
  %s14 = scalar_lea.smem %s0, 7
  %s15 = sld [smem:[%s14]]
  %s16 = scalar_lea.smem %s0, 8
  %s17 = sld [smem:[%s16]]
  %s18 = scalar_lea.smem %s0, 9
  %s19 = sld [smem:[%s18]]
  %s20 = scalar_lea.smem %s0, 10
  %s21 = sld [smem:[%s20]]
  %s22 = scalar_lea.smem %s0, 11
  %s23 = sld [smem:[%s22]]
  %s24 = scalar_lea.smem %s0, 12
  %s25 = sld [smem:[%s24]]
  %s26 = scalar_lea.smem %s0, 13
  %s27 = sld [smem:[%s26]]
  %s28 = scalar_lea.smem %s0, 14
  %s29 = sld [smem:[%s28]]
  %s30 = scalar_lea.smem %s0, 15
  %s31 = sld [smem:[%s30]]
  %s32 = scalar_lea.smem %s0, 16
  %s33 = sld [smem:[%s32]]
  %s34 = scalar_lea.smem %s0, 17
  %s35 = sld [smem:[%s34]]
  %s36 = scalar_lea.smem %s0, 18
  %s37 = sld [smem:[%s36]]
  %s38 = scalar_lea.smem %s0, 19
  %s39 = sld [smem:[%s38]]
  %s40 = scalar_lea.smem %s0, 20
  %s41 = sld [smem:[%s40]]
  %s42 = scalar_lea.smem %s0, 21
  %s43 = sld [smem:[%s42]]
  %s44 = scalar_lea.smem %s0, 22
  %s45 = sld [smem:[%s44]]
  %s46 = scalar_lea.smem %s0, 23
  %s47 = sld [smem:[%s46]]
  %s48 = scalar_lea.smem %s0, 24
  %s49 = sld [smem:[%s48]]
  %s50 = scalar_lea.smem %s0, 25
  %s51 = sld [smem:[%s50]]
  %s52 = scalar_lea.smem %s0, 26
  %s53 = sld [smem:[%s52]]
  %s54 = scalar_lea.smem %s0, 27
  %s55 = sld [smem:[%s54]]
  %s56 = scalar_lea.smem %s0, 28
  %s57 = sld [smem:[%s56]]
  %s58 = scalar_lea.smem %s0, 29
  %s59 = sld [smem:[%s58]]
  %s60 = scalar_lea.smem %s0, 30
  %s61 = sld [smem:[%s60]]
  %s62 = scalar_lea.smem %s0, 31
  %s63 = sld [smem:[%s62]]
  %64 = xla_tuple %s61, %s63
  %s65 = sld [smem:[#allocation0]]
  $region186: #{representation_ae_forward.1} parent=0
    _
  %s67 = ssub.s32 1, %s65
  %s68 = scalar_select 0, %s67, %s65
  $region1: #{representation_ae_forward.1} parent=0
    #allocation3 [shape = 'u8[73728]{0}', space=vmem, size = 0x12000, scoped, tag = 'input window, operand 3, single buffered']
    #allocation4 [shape = 's32[1]{0}', space=sflag, size = 0x4, scoped, tag = 'scoped memory for representation_ae_forward.1']
    #allocation5 [shape = 'u8[131072]{0}', space=vmem, size = 0x20000, scoped, tag = 'input window, operand 4, single buffered']
    #allocation6 [shape = 's32[1]{0}', space=sflag, size = 0x4, scoped, tag = 'scoped memory for representation_ae_forward.1']
    #allocation7 [shape = 'u8[131072]{0}', space=vmem, size = 0x20000, scoped, tag = 'input window, operand 5, single buffered']
    #allocation8 [shape = 'u8[2048]{0}', space=vmem, size = 0x800, scoped, tag = 'input window, operand 6, single buffered']
    #allocation9 [shape = 's32[1]{0}', space=sflag, size = 0x4, scoped, tag = 'scoped memory for representation_ae_forward.1']
    #allocation10 [shape = 'u8[2048]{0}', space=vmem, size = 0x800, scoped, tag = 'input window, operand 8, single buffered']
    #allocation11 [shape = 'u8[4096]{0}', space=vmem, size = 0x1000, scoped, tag = 'input window, operand 10, single buffered']
    #allocation12 [shape = 's32[1]{0}', space=sflag, size = 0x4, scoped, tag = 'scoped memory for representation_ae_forward.1']
    #allocation13 [shape = 'u8[4096]{0}', space=vmem, size = 0x1000, scoped, tag = 'input window, operand 14, single buffered']
    #allocation14 [shape = 'u8[2048]{0}', space=vmem, size = 0x800, scoped, tag = 'input window, operand 16, single buffered']
    #allocation15 [shape = 's32[1]{0}', space=sflag, size = 0x4, scoped, tag = 'scoped memory for representation_ae_forward.1']
    #allocation16 [shape = 'u8[4096]{0}', space=vmem, size = 0x1000, scoped, tag = 'input window, operand 20, single buffered']
    #allocation17 [shape = 'u8[8192]{0}', space=vmem, size = 0x2000, scoped, tag = 'input window, operand 24, single buffered']
    #allocation18 [shape = 's32[1]{0}', space=sflag, size = 0x4, scoped, tag = 'scoped memory for representation_ae_forward.1']
    #allocation19 [shape = 'u8[4096]{0}', space=vmem, size = 0x1000, scoped, tag = 'input window, operand 26, single buffered']
    #allocation20 [shape = 'u8[2048]{0}', space=vmem, size = 0x800, scoped, tag = 'input window, operand 28, single buffered']
    #allocation21 [shape = 's32[1]{0}', space=sflag, size = 0x4, scoped, tag = 'scoped memory for representation_ae_forward.1']
    %69 = vsyncpa [#allocation4], 0
    %70 = vsyncpa [#allocation6], 0
    %71 = vsyncpa [#allocation9], 0
    %72 = vsyncpa [#allocation12], 0
    %73 = vsyncpa [#allocation15], 0
    %74 = vsyncpa [#allocation18], 0
    %75 = vsyncpa [#allocation21], 0
    // Predicated region
    $region2: #{representation_ae_forward.1} parent=1 // pred_check
      _
    $region3: #{representation_ae_forward.1} parent=1 // pred_check_branch
      %77 = sbr.rel (0) target = $region5
    $region4: #{representation_ae_forward.1} parent=1 // pred_region
      _
    $region5: #{representation_ae_forward.1} parent=1 // pred_fallthru
      _
    // Predicated region
    $region6: #{representation_ae_forward.1} parent=1 // pred_check
      _
    $region7: #{representation_ae_forward.1} parent=1 // pred_check_branch
      %79 = sbr.rel (0) target = $region9
    $region8: #{representation_ae_forward.1} parent=1 // pred_region
      _
    $region9: #{representation_ae_forward.1} parent=1 // pred_fallthru
      _
    // Predicated region
    $region10: #{representation_ae_forward.1} parent=1 // pred_check
      _
    $region11: #{representation_ae_forward.1} parent=1 // pred_check_branch
      %81 = sbr.rel (0) target = $region13
    $region12: #{representation_ae_forward.1} parent=1 // pred_region
      _
    $region13: #{representation_ae_forward.1} parent=1 // pred_fallthru
      _
    // Predicated region
    $region14: #{representation_ae_forward.1} parent=1 // pred_check
      _
    $region15: #{representation_ae_forward.1} parent=1 // pred_check_branch
      %83 = sbr.rel (0) target = $region17
    $region16: #{representation_ae_forward.1} parent=1 // pred_region
      %s85 = ssub.s32 2304, 2304
      %86 = vsyncadd [#allocation4], %s85
      %s87 = sshll.u32 [#allocation3], 4
      %s88 = int_to_ptr.vmem [resolvable:$true] %s87
      %93 = dma.hbm_to_vmem [thread:$0]  %s7, 2304, %s88, [#allocation4], 128, 128, 8
    $region17: #{representation_ae_forward.1} parent=1 // pred_fallthru
      _
    // Predicated region
    $region18: #{representation_ae_forward.1} parent=1 // pred_check
      _
    $region19: #{representation_ae_forward.1} parent=1 // pred_check_branch
      %95 = sbr.rel (0) target = $region21
    $region20: #{representation_ae_forward.1} parent=1 // pred_region
      %s97 = ssub.s32 4096, 4096
      %98 = vsyncadd [#allocation6], %s97
      %s99 = sshll.u32 [#allocation5], 4
      %s100 = int_to_ptr.vmem [resolvable:$true] %s99
      %105 = dma.hbm_to_vmem [thread:$0]  %s9, 4096, %s100, [#allocation6], 64, 64, 4
    $region21: #{representation_ae_forward.1} parent=1 // pred_fallthru
      _
    // Predicated region
    $region22: #{representation_ae_forward.1} parent=1 // pred_check
      _
    $region23: #{representation_ae_forward.1} parent=1 // pred_check_branch
      %107 = sbr.rel (0) target = $region25
    $region24: #{representation_ae_forward.1} parent=1 // pred_region
      %s109 = ssub.s32 4096, 4096
      %110 = vsyncadd [#allocation6], %s109
      %s111 = sshll.u32 [#allocation7], 4
      %s112 = int_to_ptr.vmem [resolvable:$true] %s111
      %117 = dma.hbm_to_vmem [thread:$0]  %s11, 4096, %s112, [#allocation6], 256, 256, 16
    $region25: #{representation_ae_forward.1} parent=1 // pred_fallthru
      _
    // Predicated region
    $region26: #{representation_ae_forward.1} parent=1 // pred_check
      _
    $region27: #{representation_ae_forward.1} parent=1 // pred_check_branch
      %119 = sbr.rel (0) target = $region29
    $region28: #{representation_ae_forward.1} parent=1 // pred_region
      %s121 = ssub.s32 64, 64
      %122 = vsyncadd [#allocation9], %s121
      %s124 = sshll.u32 [#allocation8], 4
      %s125 = int_to_ptr.vmem [resolvable:$true] %s124
      %127 = dma.hbm_to_vmem [thread:$0]  %s13, 64, %s125, [#allocation9]
    $region29: #{representation_ae_forward.1} parent=1 // pred_fallthru
      _
    // Predicated region
    $region30: #{representation_ae_forward.1} parent=1 // pred_check
      _
    $region31: #{representation_ae_forward.1} parent=1 // pred_check_branch
      %129 = sbr.rel (0) target = $region33
    $region32: #{representation_ae_forward.1} parent=1 // pred_region
      _
    $region33: #{representation_ae_forward.1} parent=1 // pred_fallthru
      _
    // Predicated region
    $region34: #{representation_ae_forward.1} parent=1 // pred_check
      _
    $region35: #{representation_ae_forward.1} parent=1 // pred_check_branch
      %131 = sbr.rel (0) target = $region37
    $region36: #{representation_ae_forward.1} parent=1 // pred_region
      %s133 = ssub.s32 64, 64
      %134 = vsyncadd [#allocation9], %s133
      %s136 = sshll.u32 [#allocation10], 4
      %s137 = int_to_ptr.vmem [resolvable:$true] %s136
      %139 = dma.hbm_to_vmem [thread:$0]  %s17, 64, %s137, [#allocation9]
    $region37: #{representation_ae_forward.1} parent=1 // pred_fallthru
      _
    // Predicated region
    $region38: #{representation_ae_forward.1} parent=1 // pred_check
      _
    $region39: #{representation_ae_forward.1} parent=1 // pred_check_branch
      %141 = sbr.rel (0) target = $region41
    $region40: #{representation_ae_forward.1} parent=1 // pred_region
      _
    $region41: #{representation_ae_forward.1} parent=1 // pred_fallthru
      _
    // Predicated region
    $region42: #{representation_ae_forward.1} parent=1 // pred_check
      _
    $region43: #{representation_ae_forward.1} parent=1 // pred_check_branch
      %143 = sbr.rel (0) target = $region45
    $region44: #{representation_ae_forward.1} parent=1 // pred_region
      %s145 = ssub.s32 128, 128
      %146 = vsyncadd [#allocation12], %s145
      %s147 = sshll.u32 [#allocation11], 4
      %s148 = int_to_ptr.vmem [resolvable:$true] %s147
      %153 = dma.hbm_to_vmem [thread:$0]  %s21, 128, %s148, [#allocation12], 64, 64, 4
    $region45: #{representation_ae_forward.1} parent=1 // pred_fallthru
      _
    // Predicated region
    $region46: #{representation_ae_forward.1} parent=1 // pred_check
      _
    $region47: #{representation_ae_forward.1} parent=1 // pred_check_branch
      %155 = sbr.rel (0) target = $region49
    $region48: #{representation_ae_forward.1} parent=1 // pred_region
      _
    $region49: #{representation_ae_forward.1} parent=1 // pred_fallthru
      _
    // Predicated region
    $region50: #{representation_ae_forward.1} parent=1 // pred_check
      _
    $region51: #{representation_ae_forward.1} parent=1 // pred_check_branch
      %157 = sbr.rel (0) target = $region53
    $region52: #{representation_ae_forward.1} parent=1 // pred_region
      _
    $region53: #{representation_ae_forward.1} parent=1 // pred_fallthru
      _
    // Predicated region
    $region54: #{representation_ae_forward.1} parent=1 // pred_check
      _
    $region55: #{representation_ae_forward.1} parent=1 // pred_check_branch
      %159 = sbr.rel (0) target = $region57
    $region56: #{representation_ae_forward.1} parent=1 // pred_region
      _
    $region57: #{representation_ae_forward.1} parent=1 // pred_fallthru
      _
    // Predicated region
    $region58: #{representation_ae_forward.1} parent=1 // pred_check
      _
    $region59: #{representation_ae_forward.1} parent=1 // pred_check_branch
      %161 = sbr.rel (0) target = $region61
    $region60: #{representation_ae_forward.1} parent=1 // pred_region
      %s163 = ssub.s32 128, 128
      %164 = vsyncadd [#allocation12], %s163
      %s166 = sshll.u32 [#allocation13], 4
      %s167 = int_to_ptr.vmem [resolvable:$true] %s166
      %169 = dma.hbm_to_vmem [thread:$0]  %s29, 128, %s167, [#allocation12]
    $region61: #{representation_ae_forward.1} parent=1 // pred_fallthru
      _
    // Predicated region
    $region62: #{representation_ae_forward.1} parent=1 // pred_check
      _
    $region63: #{representation_ae_forward.1} parent=1 // pred_check_branch
      %171 = sbr.rel (0) target = $region65
    $region64: #{representation_ae_forward.1} parent=1 // pred_region
      _
    $region65: #{representation_ae_forward.1} parent=1 // pred_fallthru
      _
    // Predicated region
    $region66: #{representation_ae_forward.1} parent=1 // pred_check
      _
    $region67: #{representation_ae_forward.1} parent=1 // pred_check_branch
      %173 = sbr.rel (0) target = $region69
    $region68: #{representation_ae_forward.1} parent=1 // pred_region
      %s175 = ssub.s32 64, 64
      %176 = vsyncadd [#allocation15], %s175
      %s178 = sshll.u32 [#allocation14], 4
      %s179 = int_to_ptr.vmem [resolvable:$true] %s178
      %181 = dma.hbm_to_vmem [thread:$0]  %s33, 64, %s179, [#allocation15]
    $region69: #{representation_ae_forward.1} parent=1 // pred_fallthru
      _
    // Predicated region
    $region70: #{representation_ae_forward.1} parent=1 // pred_check
      _
    $region71: #{representation_ae_forward.1} parent=1 // pred_check_branch
      %183 = sbr.rel (0) target = $region73
    $region72: #{representation_ae_forward.1} parent=1 // pred_region
      _
    $region73: #{representation_ae_forward.1} parent=1 // pred_fallthru
      _
    // Predicated region
    $region74: #{representation_ae_forward.1} parent=1 // pred_check
      _
    $region75: #{representation_ae_forward.1} parent=1 // pred_check_branch
      %185 = sbr.rel (0) target = $region77
    $region76: #{representation_ae_forward.1} parent=1 // pred_region
      _
    $region77: #{representation_ae_forward.1} parent=1 // pred_fallthru
      _
    // Predicated region
    $region78: #{representation_ae_forward.1} parent=1 // pred_check
      _
    $region79: #{representation_ae_forward.1} parent=1 // pred_check_branch
      %187 = sbr.rel (0) target = $region81
    $region80: #{representation_ae_forward.1} parent=1 // pred_region
      _
    $region81: #{representation_ae_forward.1} parent=1 // pred_fallthru
      _
    // Predicated region
    $region82: #{representation_ae_forward.1} parent=1 // pred_check
      _
    $region83: #{representation_ae_forward.1} parent=1 // pred_check_branch
      %189 = sbr.rel (0) target = $region85
    $region84: #{representation_ae_forward.1} parent=1 // pred_region
      %s191 = ssub.s32 128, 128
      %192 = vsyncadd [#allocation15], %s191
      %s193 = sshll.u32 [#allocation16], 4
      %s194 = int_to_ptr.vmem [resolvable:$true] %s193
      %199 = dma.hbm_to_vmem [thread:$0]  %s41, 128, %s194, [#allocation15], 64, 64, 4
    $region85: #{representation_ae_forward.1} parent=1 // pred_fallthru
      _
    // Predicated region
    $region86: #{representation_ae_forward.1} parent=1 // pred_check
      _
    $region87: #{representation_ae_forward.1} parent=1 // pred_check_branch
      %201 = sbr.rel (0) target = $region89
    $region88: #{representation_ae_forward.1} parent=1 // pred_region
      _
    $region89: #{representation_ae_forward.1} parent=1 // pred_fallthru
      _
    // Predicated region
    $region90: #{representation_ae_forward.1} parent=1 // pred_check
      _
    $region91: #{representation_ae_forward.1} parent=1 // pred_check_branch
      %203 = sbr.rel (0) target = $region93
    $region92: #{representation_ae_forward.1} parent=1 // pred_region
      _
    $region93: #{representation_ae_forward.1} parent=1 // pred_fallthru
      _
    // Predicated region
    $region94: #{representation_ae_forward.1} parent=1 // pred_check
      _
    $region95: #{representation_ae_forward.1} parent=1 // pred_check_branch
      %205 = sbr.rel (0) target = $region97
    $region96: #{representation_ae_forward.1} parent=1 // pred_region
      _
    $region97: #{representation_ae_forward.1} parent=1 // pred_fallthru
      _
    // Predicated region
    $region98: #{representation_ae_forward.1} parent=1 // pred_check
      _
    $region99: #{representation_ae_forward.1} parent=1 // pred_check_branch
      %207 = sbr.rel (0) target = $region101
    $region100: #{representation_ae_forward.1} parent=1 // pred_region
      %s209 = ssub.s32 256, 256
      %210 = vsyncadd [#allocation18], %s209
      %s211 = sshll.u32 [#allocation17], 4
      %s212 = int_to_ptr.vmem [resolvable:$true] %s211
      %217 = dma.hbm_to_vmem [thread:$0]  %s49, 256, %s212, [#allocation18], 128, 128, 8
    $region101: #{representation_ae_forward.1} parent=1 // pred_fallthru
      _
    // Predicated region
    $region102: #{representation_ae_forward.1} parent=1 // pred_check
      _
    $region103: #{representation_ae_forward.1} parent=1 // pred_check_branch
      %219 = sbr.rel (0) target = $region105
    $region104: #{representation_ae_forward.1} parent=1 // pred_region
      _
    $region105: #{representation_ae_forward.1} parent=1 // pred_fallthru
      _
    // Predicated region
    $region106: #{representation_ae_forward.1} parent=1 // pred_check
      _
    $region107: #{representation_ae_forward.1} parent=1 // pred_check_branch
      %221 = sbr.rel (0) target = $region109
    $region108: #{representation_ae_forward.1} parent=1 // pred_region
      %s223 = ssub.s32 128, 128
      %224 = vsyncadd [#allocation18], %s223
      %s226 = sshll.u32 [#allocation19], 4
      %s227 = int_to_ptr.vmem [resolvable:$true] %s226
      %229 = dma.hbm_to_vmem [thread:$0]  %s53, 128, %s227, [#allocation18]
    $region109: #{representation_ae_forward.1} parent=1 // pred_fallthru
      _
    // Predicated region
    $region110: #{representation_ae_forward.1} parent=1 // pred_check
      _
    $region111: #{representation_ae_forward.1} parent=1 // pred_check_branch
      %231 = sbr.rel (0) target = $region113
    $region112: #{representation_ae_forward.1} parent=1 // pred_region
      _
    $region113: #{representation_ae_forward.1} parent=1 // pred_fallthru
      _
    // Predicated region
    $region114: #{representation_ae_forward.1} parent=1 // pred_check
      _
    $region115: #{representation_ae_forward.1} parent=1 // pred_check_branch
      %233 = sbr.rel (0) target = $region117
    $region116: #{representation_ae_forward.1} parent=1 // pred_region
      %s235 = ssub.s32 64, 64
      %236 = vsyncadd [#allocation21], %s235
      %s238 = sshll.u32 [#allocation20], 4
      %s239 = int_to_ptr.vmem [resolvable:$true] %s238
      %241 = dma.hbm_to_vmem [thread:$0]  %s57, 64, %s239, [#allocation21]
    $region117: #{representation_ae_forward.1} parent=1 // pred_fallthru
      _
    // Predicated region
    $region118: #{representation_ae_forward.1} parent=1 // pred_check
      _
    $region119: #{representation_ae_forward.1} parent=1 // pred_check_branch
      %243 = sbr.rel (0) target = $region121
    $region120: #{representation_ae_forward.1} parent=1 // pred_region
      _
    $region121: #{representation_ae_forward.1} parent=1 // pred_fallthru
      _
    // Predicated region
    $region122: #{representation_ae_forward.1} parent=1 // pred_check
      _
    $region123: #{representation_ae_forward.1} parent=1 // pred_check_branch
      %245 = sbr.rel (0) target = $region125
    $region124: #{representation_ae_forward.1} parent=1 // pred_region
      %246 = dma.done [#allocation4], 2304
    $region125: #{representation_ae_forward.1} parent=1 // pred_fallthru
      _
    // Predicated region
    $region126: #{representation_ae_forward.1} parent=1 // pred_check
      _
    $region127: #{representation_ae_forward.1} parent=1 // pred_check_branch
      %248 = sbr.rel (0) target = $region129
    $region128: #{representation_ae_forward.1} parent=1 // pred_region
      %249 = dma.done [#allocation6], 4096
    $region129: #{representation_ae_forward.1} parent=1 // pred_fallthru
      _
    // Predicated region
    $region130: #{representation_ae_forward.1} parent=1 // pred_check
      _
    $region131: #{representation_ae_forward.1} parent=1 // pred_check_branch
      %251 = sbr.rel (0) target = $region133
    $region132: #{representation_ae_forward.1} parent=1 // pred_region
      %252 = dma.done [#allocation6], 4096
    $region133: #{representation_ae_forward.1} parent=1 // pred_fallthru
      _
    // Predicated region
    $region134: #{representation_ae_forward.1} parent=1 // pred_check
      _
    $region135: #{representation_ae_forward.1} parent=1 // pred_check_branch
      %254 = sbr.rel (0) target = $region137
    $region136: #{representation_ae_forward.1} parent=1 // pred_region
      %255 = dma.done [#allocation9], 64
    $region137: #{representation_ae_forward.1} parent=1 // pred_fallthru
      _
    // Predicated region
    $region138: #{representation_ae_forward.1} parent=1 // pred_check
      _
    $region139: #{representation_ae_forward.1} parent=1 // pred_check_branch
      %257 = sbr.rel (0) target = $region141
    $region140: #{representation_ae_forward.1} parent=1 // pred_region
      %258 = dma.done [#allocation9], 64
    $region141: #{representation_ae_forward.1} parent=1 // pred_fallthru
      _
    // Predicated region
    $region142: #{representation_ae_forward.1} parent=1 // pred_check
      _
    $region143: #{representation_ae_forward.1} parent=1 // pred_check_branch
      %260 = sbr.rel (0) target = $region145
    $region144: #{representation_ae_forward.1} parent=1 // pred_region
      %261 = dma.done [#allocation12], 128
    $region145: #{representation_ae_forward.1} parent=1 // pred_fallthru
      _
    // Predicated region
    $region146: #{representation_ae_forward.1} parent=1 // pred_check
      _
    $region147: #{representation_ae_forward.1} parent=1 // pred_check_branch
      %263 = sbr.rel (0) target = $region149
    $region148: #{representation_ae_forward.1} parent=1 // pred_region
      %264 = dma.done [#allocation12], 128
    $region149: #{representation_ae_forward.1} parent=1 // pred_fallthru
      _
    // Predicated region
    $region150: #{representation_ae_forward.1} parent=1 // pred_check
      _
    $region151: #{representation_ae_forward.1} parent=1 // pred_check_branch
      %266 = sbr.rel (0) target = $region153
    $region152: #{representation_ae_forward.1} parent=1 // pred_region
      %267 = dma.done [#allocation15], 64
    $region153: #{representation_ae_forward.1} parent=1 // pred_fallthru
      _
    // Predicated region
    $region154: #{representation_ae_forward.1} parent=1 // pred_check
      _
    $region155: #{representation_ae_forward.1} parent=1 // pred_check_branch
      %269 = sbr.rel (0) target = $region157
    $region156: #{representation_ae_forward.1} parent=1 // pred_region
      %270 = dma.done [#allocation15], 128
    $region157: #{representation_ae_forward.1} parent=1 // pred_fallthru
      _
    // Predicated region
    $region158: #{representation_ae_forward.1} parent=1 // pred_check
      _
    $region159: #{representation_ae_forward.1} parent=1 // pred_check_branch
      %272 = sbr.rel (0) target = $region161
    $region160: #{representation_ae_forward.1} parent=1 // pred_region
      %273 = dma.done [#allocation18], 256
    $region161: #{representation_ae_forward.1} parent=1 // pred_fallthru
      _
    // Predicated region
    $region162: #{representation_ae_forward.1} parent=1 // pred_check
      _
    $region163: #{representation_ae_forward.1} parent=1 // pred_check_branch
      %275 = sbr.rel (0) target = $region165
    $region164: #{representation_ae_forward.1} parent=1 // pred_region
      %276 = dma.done [#allocation18], 128
    $region165: #{representation_ae_forward.1} parent=1 // pred_fallthru
      _
    // Predicated region
    $region166: #{representation_ae_forward.1} parent=1 // pred_check
      _
    $region167: #{representation_ae_forward.1} parent=1 // pred_check_branch
      %278 = sbr.rel (0) target = $region169
    $region168: #{representation_ae_forward.1} parent=1 // pred_region
      %279 = dma.done [#allocation21], 64
    $region169: #{representation_ae_forward.1} parent=1 // pred_fallthru
      _
    %v281 = vld [vmem:[%s1] sm:$0xff]
    %v282 = vld [vmem:[%s1 + $0x8] sm:$0xff]
    %v283 = vld [vmem:[%s1 + $0x10] sm:$0xff]
    %v284 = vld [vmem:[%s1 + $0x18] sm:$0xff]
    %285 = vrot.lane.b32.xlu0 %v281, 17
    %v286 = vpop.permute.xlu0 %285
    %287 = vrot.lane.b32.xlu0 %v282, 17
    %v288 = vpop.permute.xlu0 %287
    %289 = vrot.lane.b32.xlu0 %v283, 17
    %v290 = vpop.permute.xlu0 %289
    %291 = vrot.lane.b32.xlu0 %v284, 17
    %v292 = vpop.permute.xlu0 %291
    %v293 = vlaneseq
    %v294 = vand.u32 %v293, 127
    %vm295 = vcmp.lt.s32.totalorder %v294, 17
    %v296 = vsel %vm295, %v290, %v292
    %v297 = vsel %vm295, %v288, %v290
    %v298 = vsel %vm295, %v286, %v288
    %v299 = vsel %vm295, %v292, %v286
    %v300 = vld [vmem:[%s5] sm:$0xff]
    %v301 = vld [vmem:[%s5 + $0x8] sm:$0xff]
    %v302 = vld [vmem:[%s5 + $0x10] sm:$0xff]
    %v303 = vld [vmem:[%s5 + $0x18] sm:$0xff]
    %v304 = vmul.f32 %v299, %v300
    %v305 = vmul.f32 %v298, %v301
    %v306 = vmul.f32 %v297, %v302
    %v307 = vmul.f32 %v296, %v303
    %v308 = vpack.c.bf16 %v304, %v304
    %v309 = vpack.c.bf16 %v305, %v305
    %v310 = vpack.c.bf16 %v306, %v306
    %v311 = vpack.c.bf16 %v307, %v307
    %312 = vst [vmem:[#allocation2] sm:$0xf] %v308
    %313 = vst [vmem:[#allocation2 + $0x8] sm:$0xf] %v309
    %314 = vst [vmem:[#allocation2 + $0x10] sm:$0xf] %v310
    %315 = vst [vmem:[#allocation2 + $0x18] sm:$0xf] %v311
    %316 = vrot.lane.b32.xlu0 %v281, 16
    %v317 = vpop.permute.xlu0 %316
    %318 = vrot.lane.b32.xlu0 %v282, 16
    %v319 = vpop.permute.xlu0 %318
    %320 = vrot.lane.b32.xlu0 %v283, 16
    %v321 = vpop.permute.xlu0 %320
    %322 = vrot.lane.b32.xlu0 %v284, 16
    %v323 = vpop.permute.xlu0 %322
    %vm324 = vcmp.lt.s32.totalorder %v294, 16
    %v325 = vsel %vm324, %v321, %v323
    %v326 = vsel %vm324, %v319, %v321
    %v327 = vsel %vm324, %v317, %v319
    %v328 = vsel %vm324, %v323, %v317
    %s329 = scalar_lea.vmem %s5, 64
    %v330 = vld [vmem:[%s329] sm:$0xff]
    %v331 = vld [vmem:[%s329 + $0x8] sm:$0xff]
    %v332 = vld [vmem:[%s329 + $0x10] sm:$0xff]
    %v333 = vld [vmem:[%s329 + $0x18] sm:$0xff]
    %v334 = vmul.f32 %v328, %v330
    %v335 = vmul.f32 %v327, %v331
    %v336 = vmul.f32 %v326, %v332
    %v337 = vmul.f32 %v325, %v333
    %v338 = vpack.c.bf16 %v334, %v334
    %v339 = vpack.c.bf16 %v335, %v335
    %v340 = vpack.c.bf16 %v336, %v336
    %v341 = vpack.c.bf16 %v337, %v337
    %v346 = vrot.slane %v338, 4
    %v347 = vrot.slane %v339, 4
    %v348 = vrot.slane %v340, 4
    %v349 = vrot.slane %v341, 4
    %354 = vst [vmem:[#allocation2] sm:$0xf0] %v346
    %355 = vst [vmem:[#allocation2 + $0x8] sm:$0xf0] %v347
    %356 = vst [vmem:[#allocation2 + $0x10] sm:$0xf0] %v348
    %357 = vst [vmem:[#allocation2 + $0x18] sm:$0xf0] %v349
    %358 = vrot.lane.b32.xlu0 %v281, 15
    %v359 = vpop.permute.xlu0 %358
    %360 = vrot.lane.b32.xlu0 %v282, 15
    %v361 = vpop.permute.xlu0 %360
    %362 = vrot.lane.b32.xlu0 %v283, 15
    %v363 = vpop.permute.xlu0 %362
    %364 = vrot.lane.b32.xlu0 %v284, 15
    %v365 = vpop.permute.xlu0 %364
    %vm366 = vcmp.lt.s32.totalorder %v294, 15
    %v367 = vsel %vm366, %v363, %v365
    %v368 = vsel %vm366, %v361, %v363
    %v369 = vsel %vm366, %v359, %v361
    %v370 = vsel %vm366, %v365, %v359
    %s371 = scalar_lea.vmem %s5, 128
    %v372 = vld [vmem:[%s371] sm:$0xff]
    %v373 = vld [vmem:[%s371 + $0x8] sm:$0xff]
    %v374 = vld [vmem:[%s371 + $0x10] sm:$0xff]
    %v375 = vld [vmem:[%s371 + $0x18] sm:$0xff]
    %v376 = vmul.f32 %v370, %v372
    %v377 = vmul.f32 %v369, %v373
    %v378 = vmul.f32 %v368, %v374
    %v379 = vmul.f32 %v367, %v375
    %v380 = vpack.c.bf16 %v376, %v376
    %v381 = vpack.c.bf16 %v377, %v377
    %v382 = vpack.c.bf16 %v378, %v378
    %v383 = vpack.c.bf16 %v379, %v379
    %384 = vst [vmem:[#allocation2 + $0x20] sm:$0xf] %v380
    %385 = vst [vmem:[#allocation2 + $0x28] sm:$0xf] %v381
    %386 = vst [vmem:[#allocation2 + $0x30] sm:$0xf] %v382
    %387 = vst [vmem:[#allocation2 + $0x38] sm:$0xf] %v383
    %388 = vrot.lane.b32.xlu0 %v281, 1
    %v389 = vpop.permute.xlu0 %388
    %390 = vrot.lane.b32.xlu0 %v282, 1
    %v391 = vpop.permute.xlu0 %390
    %392 = vrot.lane.b32.xlu0 %v283, 1
    %v393 = vpop.permute.xlu0 %392
    %394 = vrot.lane.b32.xlu0 %v284, 1
    %v395 = vpop.permute.xlu0 %394
    %vm396 = vcmp.lt.s32.totalorder %v294, 1
    %v397 = vsel %vm396, %v393, %v395
    %v398 = vsel %vm396, %v391, %v393
    %v399 = vsel %vm396, %v389, %v391
    %v400 = vsel %vm396, %v395, %v389
    %s401 = scalar_lea.vmem %s5, 192
    %v402 = vld [vmem:[%s401] sm:$0xff]
    %v403 = vld [vmem:[%s401 + $0x8] sm:$0xff]
    %v404 = vld [vmem:[%s401 + $0x10] sm:$0xff]
    %v405 = vld [vmem:[%s401 + $0x18] sm:$0xff]
    %v406 = vmul.f32 %v400, %v402
    %v407 = vmul.f32 %v399, %v403
    %v408 = vmul.f32 %v398, %v404
    %v409 = vmul.f32 %v397, %v405
    %v410 = vpack.c.bf16 %v406, %v406
    %v411 = vpack.c.bf16 %v407, %v407
    %v412 = vpack.c.bf16 %v408, %v408
    %v413 = vpack.c.bf16 %v409, %v409
    %v418 = vrot.slane %v410, 4
    %v419 = vrot.slane %v411, 4
    %v420 = vrot.slane %v412, 4
    %v421 = vrot.slane %v413, 4
    %426 = vst [vmem:[#allocation2 + $0x20] sm:$0xf0] %v418
    %427 = vst [vmem:[#allocation2 + $0x28] sm:$0xf0] %v419
    %428 = vst [vmem:[#allocation2 + $0x30] sm:$0xf0] %v420
    %429 = vst [vmem:[#allocation2 + $0x38] sm:$0xf0] %v421
    %v430 = vpack.c.bf16 %v281, %v281
    %v431 = vpack.c.bf16 %v282, %v282
    %v432 = vpack.c.bf16 %v283, %v283
    %v433 = vpack.c.bf16 %v284, %v284
    %434 = vst [vmem:[#allocation2 + $0x40] sm:$0xf] %v430
    %435 = vst [vmem:[#allocation2 + $0x48] sm:$0xf] %v431
    %436 = vst [vmem:[#allocation2 + $0x50] sm:$0xf] %v432
    %437 = vst [vmem:[#allocation2 + $0x58] sm:$0xf] %v433
    %438 = vrot.lane.b32.xlu0 %v281, 127
    %v439 = vpop.permute.xlu0 %438
    %440 = vrot.lane.b32.xlu0 %v282, 127
    %v441 = vpop.permute.xlu0 %440
    %442 = vrot.lane.b32.xlu0 %v283, 127
    %v443 = vpop.permute.xlu0 %442
    %444 = vrot.lane.b32.xlu0 %v284, 127
    %v445 = vpop.permute.xlu0 %444
    %vm446 = vcmp.lt.s32.totalorder %v294, 127
    %v447 = vsel %vm446, %v443, %v445
    %v448 = vsel %vm446, %v441, %v443
    %v449 = vsel %vm446, %v439, %v441
    %v450 = vsel %vm446, %v445, %v439
    %s451 = scalar_lea.vmem %s5, 320
    %v452 = vld [vmem:[%s451] sm:$0xff]
    %v453 = vld [vmem:[%s451 + $0x8] sm:$0xff]
    %v454 = vld [vmem:[%s451 + $0x10] sm:$0xff]
    %v455 = vld [vmem:[%s451 + $0x18] sm:$0xff]
    %v456 = vmul.f32 %v449, %v452
    %v457 = vmul.f32 %v448, %v453
    %v458 = vmul.f32 %v447, %v454
    %v459 = vmul.f32 %v450, %v455
    %v460 = vpack.c.bf16 %v456, %v456
    %v461 = vpack.c.bf16 %v457, %v457
    %v462 = vpack.c.bf16 %v458, %v458
    %v463 = vpack.c.bf16 %v459, %v459
    %v468 = vrot.slane %v460, 4
    %v469 = vrot.slane %v461, 4
    %v470 = vrot.slane %v462, 4
    %v471 = vrot.slane %v463, 4
    %476 = vst [vmem:[#allocation2 + $0x40] sm:$0xf0] %v468
    %477 = vst [vmem:[#allocation2 + $0x48] sm:$0xf0] %v469
    %478 = vst [vmem:[#allocation2 + $0x50] sm:$0xf0] %v470
    %479 = vst [vmem:[#allocation2 + $0x58] sm:$0xf0] %v471
    %480 = vrot.lane.b32.xlu0 %v281, 113
    %v481 = vpop.permute.xlu0 %480
    %482 = vrot.lane.b32.xlu0 %v282, 113
    %v483 = vpop.permute.xlu0 %482
    %484 = vrot.lane.b32.xlu0 %v283, 113
    %v485 = vpop.permute.xlu0 %484
    %486 = vrot.lane.b32.xlu0 %v284, 113
    %v487 = vpop.permute.xlu0 %486
    %vm488 = vcmp.lt.s32.totalorder %v294, 113
    %v489 = vsel %vm488, %v485, %v487
    %v490 = vsel %vm488, %v483, %v485
    %v491 = vsel %vm488, %v481, %v483
    %v492 = vsel %vm488, %v487, %v481
    %s493 = scalar_lea.vmem %s5, 384
    %v494 = vld [vmem:[%s493] sm:$0xff]
    %v495 = vld [vmem:[%s493 + $0x8] sm:$0xff]
    %v496 = vld [vmem:[%s493 + $0x10] sm:$0xff]
    %v497 = vld [vmem:[%s493 + $0x18] sm:$0xff]
    %v498 = vmul.f32 %v491, %v494
    %v499 = vmul.f32 %v490, %v495
    %v500 = vmul.f32 %v489, %v496
    %v501 = vmul.f32 %v492, %v497
    %v502 = vpack.c.bf16 %v498, %v498
    %v503 = vpack.c.bf16 %v499, %v499
    %v504 = vpack.c.bf16 %v500, %v500
    %v505 = vpack.c.bf16 %v501, %v501
    %506 = vst [vmem:[#allocation2 + $0x60] sm:$0xf] %v502
    %507 = vst [vmem:[#allocation2 + $0x68] sm:$0xf] %v503
    %508 = vst [vmem:[#allocation2 + $0x70] sm:$0xf] %v504
    %509 = vst [vmem:[#allocation2 + $0x78] sm:$0xf] %v505
    %510 = vrot.lane.b32.xlu0 %v281, 112
    %v511 = vpop.permute.xlu0 %510
    %512 = vrot.lane.b32.xlu0 %v282, 112
    %v513 = vpop.permute.xlu0 %512
    %514 = vrot.lane.b32.xlu0 %v283, 112
    %v515 = vpop.permute.xlu0 %514
    %516 = vrot.lane.b32.xlu0 %v284, 112
    %v517 = vpop.permute.xlu0 %516
    %vm518 = vcmp.lt.s32.totalorder %v294, 112
    %v519 = vsel %vm518, %v515, %v517
    %v520 = vsel %vm518, %v513, %v515
    %v521 = vsel %vm518, %v511, %v513
    %v522 = vsel %vm518, %v517, %v511
    %s523 = scalar_lea.vmem %s5, 448
    %v524 = vld [vmem:[%s523] sm:$0xff]
    %v525 = vld [vmem:[%s523 + $0x8] sm:$0xff]
    %v526 = vld [vmem:[%s523 + $0x10] sm:$0xff]
    %v527 = vld [vmem:[%s523 + $0x18] sm:$0xff]
    %v528 = vmul.f32 %v521, %v524
    %v529 = vmul.f32 %v520, %v525
    %v530 = vmul.f32 %v519, %v526
    %v531 = vmul.f32 %v522, %v527
    %v532 = vpack.c.bf16 %v528, %v528
    %v533 = vpack.c.bf16 %v529, %v529
    %v534 = vpack.c.bf16 %v530, %v530
    %v535 = vpack.c.bf16 %v531, %v531
    %v540 = vrot.slane %v532, 4
    %v541 = vrot.slane %v533, 4
    %v542 = vrot.slane %v534, 4
    %v543 = vrot.slane %v535, 4
    %548 = vst [vmem:[#allocation2 + $0x60] sm:$0xf0] %v540
    %549 = vst [vmem:[#allocation2 + $0x68] sm:$0xf0] %v541
    %550 = vst [vmem:[#allocation2 + $0x70] sm:$0xf0] %v542
    %551 = vst [vmem:[#allocation2 + $0x78] sm:$0xf0] %v543
    %552 = vrot.lane.b32.xlu0 %v281, 111
    %v553 = vpop.permute.xlu0 %552
    %554 = vrot.lane.b32.xlu0 %v282, 111
    %v555 = vpop.permute.xlu0 %554
    %556 = vrot.lane.b32.xlu0 %v283, 111
    %v557 = vpop.permute.xlu0 %556
    %558 = vrot.lane.b32.xlu0 %v284, 111
    %v559 = vpop.permute.xlu0 %558
    %vm560 = vcmp.lt.s32.totalorder %v294, 111
    %v561 = vsel %vm560, %v557, %v559
    %v562 = vsel %vm560, %v555, %v557
    %v563 = vsel %vm560, %v553, %v555
    %v564 = vsel %vm560, %v559, %v553
    %s565 = scalar_lea.vmem %s5, 512
    %v566 = vld [vmem:[%s565] sm:$0xff]
    %v567 = vld [vmem:[%s565 + $0x8] sm:$0xff]
    %v568 = vld [vmem:[%s565 + $0x10] sm:$0xff]
    %v569 = vld [vmem:[%s565 + $0x18] sm:$0xff]
    %v570 = vmul.f32 %v563, %v566
    %v571 = vmul.f32 %v562, %v567
    %v572 = vmul.f32 %v561, %v568
    %v573 = vmul.f32 %v564, %v569
    %v574 = vpack.c.bf16 %v570, %v570
    %v575 = vpack.c.bf16 %v571, %v571
    %v576 = vpack.c.bf16 %v572, %v572
    %v577 = vpack.c.bf16 %v573, %v573
    %578 = vst [vmem:[#allocation2 + $0x80] sm:$0xf] %v574
    %579 = vst [vmem:[#allocation2 + $0x88] sm:$0xf] %v575
    %580 = vst [vmem:[#allocation2 + $0x90] sm:$0xf] %v576
    %581 = vst [vmem:[#allocation2 + $0x98] sm:$0xf] %v577
    %v582 = vld [vmem:[#allocation8] sm:$0xf]
    %v583 = vld [vmem:[#allocation2] sm:$0xff]
    %v584 = vld [vmem:[#allocation2 + $0x8] sm:$0xff]
    %v585 = vld [vmem:[#allocation2 + $0x10] sm:$0xff]
    %v586 = vld [vmem:[#allocation2 + $0x18] sm:$0xff]
    %v587 = vld [vmem:[#allocation2 + $0x20] sm:$0xff]
    %v588 = vld [vmem:[#allocation2 + $0x28] sm:$0xff]
    %v589 = vld [vmem:[#allocation2 + $0x30] sm:$0xff]
    %v590 = vld [vmem:[#allocation2 + $0x38] sm:$0xff]
    %v591 = vld [vmem:[#allocation2 + $0x40] sm:$0xff]
    %v592 = vld [vmem:[#allocation2 + $0x48] sm:$0xff]
    %v593 = vld [vmem:[#allocation2 + $0x50] sm:$0xff]
    %v594 = vld [vmem:[#allocation2 + $0x58] sm:$0xff]
    %v595 = vld [vmem:[#allocation2 + $0x60] sm:$0xff]
    %v596 = vld [vmem:[#allocation2 + $0x68] sm:$0xff]
    %v597 = vld [vmem:[#allocation2 + $0x70] sm:$0xff]
    %v598 = vld [vmem:[#allocation2 + $0x78] sm:$0xff]
    %v599 = vld [vmem:[#allocation2 + $0x80] sm:$0xf]
    %v600 = vld [vmem:[#allocation2 + $0x88] sm:$0xf]
    %v601 = vld [vmem:[#allocation2 + $0x90] sm:$0xf]
    %v602 = vld [vmem:[#allocation2 + $0x98] sm:$0xf]
    %v603 = vld [vmem:[%s15] sm:$0xff]
    %605 = vset.pattern.permute.xlu0 0
    %606 = vperm.xlu0 %605, %v603
    %v607 = vpop.permute.xlu0 %606
    %vm609 = vcmask 588800
    %v611 = vsel %vm609, %v582, 0
    %vm613 = vcmask 1043456
    %v615 = vsel %vm613, %v599, 0
    %v618 = vsel %vm613, %v600, 0
    %v621 = vsel %vm613, %v601, 0
    %v624 = vsel %vm613, %v602, 0
    %626 = vmatprep.subr.bf16.mxu0 %v584
    %627 = vmatpush1.bf16.msra.mxu0 %v583
    %628 = vmatprep.subr.bf16.mxu0 %v588
    %629 = vmatpush1.bf16.msra.mxu0 %v587
    %630 = vmatprep.subr.bf16.mxu0 %v592
    %631 = vmatpush1.bf16.msra.mxu0 %v591
    %632 = vmatprep.subr.bf16.mxu0 %v596
    %633 = vmatpush1.bf16.msra.mxu0 %v595
    %634 = vmatprep.subr.bf16.mxu0 %v618
    %635 = vmatpush1.bf16.msra.mxu0 %v615
    %636 = vmatprep.subr.bf16.mxu0 0
    %637 = vmatpush1.bf16.msra.mxu0 0
    %638 = vmatprep.subr.bf16.mxu0 0
    %639 = vmatpush1.bf16.msra.mxu0 0
    %640 = vmatprep.subr.bf16.mxu0 0
    %641 = vmatpush1.bf16.msra.mxu0 0
    %642 = vmatprep.subr.bf16.mxu0 0
    %643 = vmatpush1.bf16.msra.mxu0 0
    %644 = vmatprep.subr.bf16.mxu0 0
    %645 = vmatpush1.bf16.msra.mxu0 0
    %646 = vmatprep.subr.bf16.mxu0 0
    %647 = vmatpush1.bf16.msra.mxu0 0
    %648 = vmatprep.subr.bf16.mxu0 0
    %649 = vmatpush1.bf16.msra.mxu0 0
    %650 = vmatprep.subr.bf16.mxu0 0
    %651 = vmatpush1.bf16.msra.mxu0 0
    %652 = vmatprep.subr.bf16.mxu0 0
    %653 = vmatpush1.bf16.msra.mxu0 0
    %654 = vmatprep.subr.bf16.mxu0 0
    %655 = vmatpush1.bf16.msra.mxu0 0
    %656 = vmatprep.subr.bf16.mxu0 0
    %657 = vmatpush1.bf16.msra.mxu0 0
    %658 = vmatprep.mubr.bf16.mxu0 0
    %659 = vmatmul.mubr.bf16.gmra.mrb[0].mxu0 %v611
    %v660 = vpop.f32.mrb[0].mxu0
    %v661 = vadd.f32 %v607, %v660
    %v662 = vpop.f32.mrb[0].mxu0
    %v663 = vadd.f32 %v607, %v662
    %v664 = vpop.f32.mrb[0].mxu0
    %v665 = vpop.f32.mrb[0].mxu0
    %666 = vdwg.mxu0
    %667 = vmatprep.subr.bf16.mxu0 %v586
    %668 = vmatpush1.bf16.msra.mxu0 %v585
    %669 = vmatprep.subr.bf16.mxu0 %v590
    %670 = vmatpush1.bf16.msra.mxu0 %v589
    %671 = vmatprep.subr.bf16.mxu0 %v594
    %672 = vmatpush1.bf16.msra.mxu0 %v593
    %673 = vmatprep.subr.bf16.mxu0 %v598
    %674 = vmatpush1.bf16.msra.mxu0 %v597
    %675 = vmatprep.subr.bf16.mxu0 %v624
    %676 = vmatpush1.bf16.msra.mxu0 %v621
    %677 = vmatprep.subr.bf16.mxu0 0
    %678 = vmatpush1.bf16.msra.mxu0 0
    %679 = vmatprep.subr.bf16.mxu0 0
    %680 = vmatpush1.bf16.msra.mxu0 0
    %681 = vmatprep.subr.bf16.mxu0 0
    %682 = vmatpush1.bf16.msra.mxu0 0
    %683 = vmatprep.subr.bf16.mxu0 0
    %684 = vmatpush1.bf16.msra.mxu0 0
    %685 = vmatprep.subr.bf16.mxu0 0
    %686 = vmatpush1.bf16.msra.mxu0 0
    %687 = vmatprep.subr.bf16.mxu0 0
    %688 = vmatpush1.bf16.msra.mxu0 0
    %689 = vmatprep.subr.bf16.mxu0 0
    %690 = vmatpush1.bf16.msra.mxu0 0
    %691 = vmatprep.subr.bf16.mxu0 0
    %692 = vmatpush1.bf16.msra.mxu0 0
    %693 = vmatprep.subr.bf16.mxu0 0
    %694 = vmatpush1.bf16.msra.mxu0 0
    %695 = vmatprep.subr.bf16.mxu0 0
    %696 = vmatpush1.bf16.msra.mxu0 0
    %697 = vmatprep.subr.bf16.mxu0 0
    %698 = vmatpush1.bf16.msra.mxu0 0
    %699 = vmatprep.mubr.bf16.mxu0 0
    %700 = vmatmul.mubr.bf16.gmra.mrb[0].mxu0 %v611
    %v701 = vpop.f32.mrb[0].mxu0
    %v702 = vadd.f32 %v607, %v701
    %v703 = vpop.f32.mrb[0].mxu0
    %v704 = vadd.f32 %v607, %v703
    %v705 = vpop.f32.mrb[0].mxu0
    %v706 = vpop.f32.mrb[0].mxu0
    %707 = vdwg.mxu0
    %v708 = vsub.f32 0.0, %v661
    %v709 = vsub.f32 0.0, %v663
    %v710 = vsub.f32 0.0, %v702
    %v711 = vsub.f32 0.0, %v704
    %v712 = vmul.f32 %v708, 1.442695
    %v713 = vpow.pop %v712
    %v714 = vmul.f32 %v709, 1.442695
    %v715 = vpow.pop %v714
    %v716 = vmul.f32 %v710, 1.442695
    %v717 = vpow.pop %v716
    %v718 = vmul.f32 %v711, 1.442695
    %v719 = vpow.pop %v718
    %v720 = vadd.f32 %v713, 1.0
    %v721 = vadd.f32 %v715, 1.0
    %v722 = vadd.f32 %v717, 1.0
    %v723 = vadd.f32 %v719, 1.0
    %v724 = vrcp.pop %v720
    %v725 = vrcp.pop %v721
    %v726 = vrcp.pop %v722
    %v727 = vrcp.pop %v723
    %v728 = vmul.f32 %v661, %v724
    %v729 = vmul.f32 %v663, %v725
    %v730 = vmul.f32 %v702, %v726
    %v731 = vmul.f32 %v704, %v727
    %732 = vrot.lane.b32.xlu0 %v728, 17
    %v733 = vpop.permute.xlu0 %732
    %734 = vrot.lane.b32.xlu0 %v729, 17
    %v735 = vpop.permute.xlu0 %734
    %736 = vrot.lane.b32.xlu0 %v730, 17
    %v737 = vpop.permute.xlu0 %736
    %738 = vrot.lane.b32.xlu0 %v731, 17
    %v739 = vpop.permute.xlu0 %738
    %v740 = vsel %vm295, %v737, %v739
    %v741 = vsel %vm295, %v735, %v737
    %v742 = vsel %vm295, %v733, %v735
    %v743 = vsel %vm295, %v739, %v733
    %v744 = vld [vmem:[%s5] sm:$0xff]
    %v745 = vld [vmem:[%s5 + $0x8] sm:$0xff]
    %v746 = vld [vmem:[%s5 + $0x10] sm:$0xff]
    %v747 = vld [vmem:[%s5 + $0x18] sm:$0xff]
    %v748 = vmul.f32 %v743, %v744
    %v749 = vmul.f32 %v742, %v745
    %v750 = vmul.f32 %v741, %v746
    %v751 = vmul.f32 %v740, %v747
    %v752 = vpack.c.bf16 %v748, %v748
    %v753 = vpack.c.bf16 %v749, %v749
    %v754 = vpack.c.bf16 %v750, %v750
    %v755 = vpack.c.bf16 %v751, %v751
    %756 = vst [vmem:[#allocation2] sm:$0xf] %v752
    %757 = vst [vmem:[#allocation2 + $0x8] sm:$0xf] %v753
    %758 = vst [vmem:[#allocation2 + $0x10] sm:$0xf] %v754
    %759 = vst [vmem:[#allocation2 + $0x18] sm:$0xf] %v755
    %760 = vrot.lane.b32.xlu0 %v728, 16
    %v761 = vpop.permute.xlu0 %760
    %762 = vrot.lane.b32.xlu0 %v729, 16
    %v763 = vpop.permute.xlu0 %762
    %764 = vrot.lane.b32.xlu0 %v730, 16
    %v765 = vpop.permute.xlu0 %764
    %766 = vrot.lane.b32.xlu0 %v731, 16
    %v767 = vpop.permute.xlu0 %766
    %v768 = vsel %vm324, %v765, %v767
    %v769 = vsel %vm324, %v763, %v765
    %v770 = vsel %vm324, %v761, %v763
    %v771 = vsel %vm324, %v767, %v761
    %v772 = vld [vmem:[%s329] sm:$0xff]
    %v773 = vld [vmem:[%s329 + $0x8] sm:$0xff]
    %v774 = vld [vmem:[%s329 + $0x10] sm:$0xff]
    %v775 = vld [vmem:[%s329 + $0x18] sm:$0xff]
    %v776 = vmul.f32 %v771, %v772
    %v777 = vmul.f32 %v770, %v773
    %v778 = vmul.f32 %v769, %v774
    %v779 = vmul.f32 %v768, %v775
    %v780 = vpack.c.bf16 %v776, %v776
    %v781 = vpack.c.bf16 %v777, %v777
    %v782 = vpack.c.bf16 %v778, %v778
    %v783 = vpack.c.bf16 %v779, %v779
    %v788 = vrot.slane %v780, 4
    %v789 = vrot.slane %v781, 4
    %v790 = vrot.slane %v782, 4
    %v791 = vrot.slane %v783, 4
    %796 = vst [vmem:[#allocation2] sm:$0xf0] %v788
    %797 = vst [vmem:[#allocation2 + $0x8] sm:$0xf0] %v789
    %798 = vst [vmem:[#allocation2 + $0x10] sm:$0xf0] %v790
    %799 = vst [vmem:[#allocation2 + $0x18] sm:$0xf0] %v791
    %800 = vrot.lane.b32.xlu0 %v728, 15
    %v801 = vpop.permute.xlu0 %800
    %802 = vrot.lane.b32.xlu0 %v729, 15
    %v803 = vpop.permute.xlu0 %802
    %804 = vrot.lane.b32.xlu0 %v730, 15
    %v805 = vpop.permute.xlu0 %804
    %806 = vrot.lane.b32.xlu0 %v731, 15
    %v807 = vpop.permute.xlu0 %806
    %v808 = vsel %vm366, %v805, %v807
    %v809 = vsel %vm366, %v803, %v805
    %v810 = vsel %vm366, %v801, %v803
    %v811 = vsel %vm366, %v807, %v801
    %v812 = vld [vmem:[%s371] sm:$0xff]
    %v813 = vld [vmem:[%s371 + $0x8] sm:$0xff]
    %v814 = vld [vmem:[%s371 + $0x10] sm:$0xff]
    %v815 = vld [vmem:[%s371 + $0x18] sm:$0xff]
    %v816 = vmul.f32 %v811, %v812
    %v817 = vmul.f32 %v810, %v813
    %v818 = vmul.f32 %v809, %v814
    %v819 = vmul.f32 %v808, %v815
    %v820 = vpack.c.bf16 %v816, %v816
    %v821 = vpack.c.bf16 %v817, %v817
    %v822 = vpack.c.bf16 %v818, %v818
    %v823 = vpack.c.bf16 %v819, %v819
    %824 = vst [vmem:[#allocation2 + $0x20] sm:$0xf] %v820
    %825 = vst [vmem:[#allocation2 + $0x28] sm:$0xf] %v821
    %826 = vst [vmem:[#allocation2 + $0x30] sm:$0xf] %v822
    %827 = vst [vmem:[#allocation2 + $0x38] sm:$0xf] %v823
    %828 = vrot.lane.b32.xlu0 %v728, 1
    %v829 = vpop.permute.xlu0 %828
    %830 = vrot.lane.b32.xlu0 %v729, 1
    %v831 = vpop.permute.xlu0 %830
    %832 = vrot.lane.b32.xlu0 %v730, 1
    %v833 = vpop.permute.xlu0 %832
    %834 = vrot.lane.b32.xlu0 %v731, 1
    %v835 = vpop.permute.xlu0 %834
    %v836 = vsel %vm396, %v833, %v835
    %v837 = vsel %vm396, %v831, %v833
    %v838 = vsel %vm396, %v829, %v831
    %v839 = vsel %vm396, %v835, %v829
    %v840 = vld [vmem:[%s401] sm:$0xff]
    %v841 = vld [vmem:[%s401 + $0x8] sm:$0xff]
    %v842 = vld [vmem:[%s401 + $0x10] sm:$0xff]
    %v843 = vld [vmem:[%s401 + $0x18] sm:$0xff]
    %v844 = vmul.f32 %v839, %v840
    %v845 = vmul.f32 %v838, %v841
    %v846 = vmul.f32 %v837, %v842
    %v847 = vmul.f32 %v836, %v843
    %v848 = vpack.c.bf16 %v844, %v844
    %v849 = vpack.c.bf16 %v845, %v845
    %v850 = vpack.c.bf16 %v846, %v846
    %v851 = vpack.c.bf16 %v847, %v847
    %v856 = vrot.slane %v848, 4
    %v857 = vrot.slane %v849, 4
    %v858 = vrot.slane %v850, 4
    %v859 = vrot.slane %v851, 4
    %864 = vst [vmem:[#allocation2 + $0x20] sm:$0xf0] %v856
    %865 = vst [vmem:[#allocation2 + $0x28] sm:$0xf0] %v857
    %866 = vst [vmem:[#allocation2 + $0x30] sm:$0xf0] %v858
    %867 = vst [vmem:[#allocation2 + $0x38] sm:$0xf0] %v859
    %v868 = vpack.c.bf16 %v728, %v728
    %v869 = vpack.c.bf16 %v729, %v729
    %v870 = vpack.c.bf16 %v730, %v730
    %v871 = vpack.c.bf16 %v731, %v731
    %872 = vst [vmem:[#allocation2 + $0x40] sm:$0xf] %v868
    %873 = vst [vmem:[#allocation2 + $0x48] sm:$0xf] %v869
    %874 = vst [vmem:[#allocation2 + $0x50] sm:$0xf] %v870
    %875 = vst [vmem:[#allocation2 + $0x58] sm:$0xf] %v871
    %876 = vrot.lane.b32.xlu0 %v728, 127
    %v877 = vpop.permute.xlu0 %876
    %878 = vrot.lane.b32.xlu0 %v729, 127
    %v879 = vpop.permute.xlu0 %878
    %880 = vrot.lane.b32.xlu0 %v730, 127
    %v881 = vpop.permute.xlu0 %880
    %882 = vrot.lane.b32.xlu0 %v731, 127
    %v883 = vpop.permute.xlu0 %882
    %v884 = vsel %vm446, %v881, %v883
    %v885 = vsel %vm446, %v879, %v881
    %v886 = vsel %vm446, %v877, %v879
    %v887 = vsel %vm446, %v883, %v877
    %v888 = vld [vmem:[%s451] sm:$0xff]
    %v889 = vld [vmem:[%s451 + $0x8] sm:$0xff]
    %v890 = vld [vmem:[%s451 + $0x10] sm:$0xff]
    %v891 = vld [vmem:[%s451 + $0x18] sm:$0xff]
    %v892 = vmul.f32 %v886, %v888
    %v893 = vmul.f32 %v885, %v889
    %v894 = vmul.f32 %v884, %v890
    %v895 = vmul.f32 %v887, %v891
    %v896 = vpack.c.bf16 %v892, %v892
    %v897 = vpack.c.bf16 %v893, %v893
    %v898 = vpack.c.bf16 %v894, %v894
    %v899 = vpack.c.bf16 %v895, %v895
    %v904 = vrot.slane %v896, 4
    %v905 = vrot.slane %v897, 4
    %v906 = vrot.slane %v898, 4
    %v907 = vrot.slane %v899, 4
    %912 = vst [vmem:[#allocation2 + $0x40] sm:$0xf0] %v904
    %913 = vst [vmem:[#allocation2 + $0x48] sm:$0xf0] %v905
    %914 = vst [vmem:[#allocation2 + $0x50] sm:$0xf0] %v906
    %915 = vst [vmem:[#allocation2 + $0x58] sm:$0xf0] %v907
    %916 = vrot.lane.b32.xlu0 %v728, 113
    %v917 = vpop.permute.xlu0 %916
    %918 = vrot.lane.b32.xlu0 %v729, 113
    %v919 = vpop.permute.xlu0 %918
    %920 = vrot.lane.b32.xlu0 %v730, 113
    %v921 = vpop.permute.xlu0 %920
    %922 = vrot.lane.b32.xlu0 %v731, 113
    %v923 = vpop.permute.xlu0 %922
    %v924 = vsel %vm488, %v921, %v923
    %v925 = vsel %vm488, %v919, %v921
    %v926 = vsel %vm488, %v917, %v919
    %v927 = vsel %vm488, %v923, %v917
    %v928 = vld [vmem:[%s493] sm:$0xff]
    %v929 = vld [vmem:[%s493 + $0x8] sm:$0xff]
    %v930 = vld [vmem:[%s493 + $0x10] sm:$0xff]
    %v931 = vld [vmem:[%s493 + $0x18] sm:$0xff]
    %v932 = vmul.f32 %v926, %v928
    %v933 = vmul.f32 %v925, %v929
    %v934 = vmul.f32 %v924, %v930
    %v935 = vmul.f32 %v927, %v931
    %v936 = vpack.c.bf16 %v932, %v932
    %v937 = vpack.c.bf16 %v933, %v933
    %v938 = vpack.c.bf16 %v934, %v934
    %v939 = vpack.c.bf16 %v935, %v935
    %940 = vst [vmem:[#allocation2 + $0x60] sm:$0xf] %v936
    %941 = vst [vmem:[#allocation2 + $0x68] sm:$0xf] %v937
    %942 = vst [vmem:[#allocation2 + $0x70] sm:$0xf] %v938
    %943 = vst [vmem:[#allocation2 + $0x78] sm:$0xf] %v939
    %944 = vrot.lane.b32.xlu0 %v728, 112
    %v945 = vpop.permute.xlu0 %944
    %946 = vrot.lane.b32.xlu0 %v729, 112
    %v947 = vpop.permute.xlu0 %946
    %948 = vrot.lane.b32.xlu0 %v730, 112
    %v949 = vpop.permute.xlu0 %948
    %950 = vrot.lane.b32.xlu0 %v731, 112
    %v951 = vpop.permute.xlu0 %950
    %v952 = vsel %vm518, %v949, %v951
    %v953 = vsel %vm518, %v947, %v949
    %v954 = vsel %vm518, %v945, %v947
    %v955 = vsel %vm518, %v951, %v945
    %v956 = vld [vmem:[%s523] sm:$0xff]
    %v957 = vld [vmem:[%s523 + $0x8] sm:$0xff]
    %v958 = vld [vmem:[%s523 + $0x10] sm:$0xff]
    %v959 = vld [vmem:[%s523 + $0x18] sm:$0xff]
    %v960 = vmul.f32 %v954, %v956
    %v961 = vmul.f32 %v953, %v957
    %v962 = vmul.f32 %v952, %v958
    %v963 = vmul.f32 %v955, %v959
    %v964 = vpack.c.bf16 %v960, %v960
    %v965 = vpack.c.bf16 %v961, %v961
    %v966 = vpack.c.bf16 %v962, %v962
    %v967 = vpack.c.bf16 %v963, %v963
    %v972 = vrot.slane %v964, 4
    %v973 = vrot.slane %v965, 4
    %v974 = vrot.slane %v966, 4
    %v975 = vrot.slane %v967, 4
    %980 = vst [vmem:[#allocation2 + $0x60] sm:$0xf0] %v972
    %981 = vst [vmem:[#allocation2 + $0x68] sm:$0xf0] %v973
    %982 = vst [vmem:[#allocation2 + $0x70] sm:$0xf0] %v974
    %983 = vst [vmem:[#allocation2 + $0x78] sm:$0xf0] %v975
    %984 = vrot.lane.b32.xlu0 %v728, 111
    %v985 = vpop.permute.xlu0 %984
    %986 = vrot.lane.b32.xlu0 %v729, 111
    %v987 = vpop.permute.xlu0 %986
    %988 = vrot.lane.b32.xlu0 %v730, 111
    %v989 = vpop.permute.xlu0 %988
    %990 = vrot.lane.b32.xlu0 %v731, 111
    %v991 = vpop.permute.xlu0 %990
    %v992 = vsel %vm560, %v989, %v991
    %v993 = vsel %vm560, %v987, %v989
    %v994 = vsel %vm560, %v985, %v987
    %v995 = vsel %vm560, %v991, %v985
    %v996 = vld [vmem:[%s565] sm:$0xff]
    %v997 = vld [vmem:[%s565 + $0x8] sm:$0xff]
    %v998 = vld [vmem:[%s565 + $0x10] sm:$0xff]
    %v999 = vld [vmem:[%s565 + $0x18] sm:$0xff]
    %v1000 = vmul.f32 %v994, %v996
    %v1001 = vmul.f32 %v993, %v997
    %v1002 = vmul.f32 %v992, %v998
    %v1003 = vmul.f32 %v995, %v999
    %v1004 = vpack.c.bf16 %v1000, %v1000
    %v1005 = vpack.c.bf16 %v1001, %v1001
    %v1006 = vpack.c.bf16 %v1002, %v1002
    %v1007 = vpack.c.bf16 %v1003, %v1003
    %1008 = vst [vmem:[#allocation2 + $0x80] sm:$0xf] %v1004
    %1009 = vst [vmem:[#allocation2 + $0x88] sm:$0xf] %v1005
    %1010 = vst [vmem:[#allocation2 + $0x90] sm:$0xf] %v1006
    %1011 = vst [vmem:[#allocation2 + $0x98] sm:$0xf] %v1007
    %v1012 = vld [vmem:[#allocation10] sm:$0xf]
    %v1013 = vld [vmem:[#allocation2] sm:$0xff]
    %v1014 = vld [vmem:[#allocation2 + $0x8] sm:$0xff]
    %v1015 = vld [vmem:[#allocation2 + $0x10] sm:$0xff]
    %v1016 = vld [vmem:[#allocation2 + $0x18] sm:$0xff]
    %v1017 = vld [vmem:[#allocation2 + $0x20] sm:$0xff]
    %v1018 = vld [vmem:[#allocation2 + $0x28] sm:$0xff]
    %v1019 = vld [vmem:[#allocation2 + $0x30] sm:$0xff]
    %v1020 = vld [vmem:[#allocation2 + $0x38] sm:$0xff]
    %v1021 = vld [vmem:[#allocation2 + $0x40] sm:$0xff]
    %v1022 = vld [vmem:[#allocation2 + $0x48] sm:$0xff]
    %v1023 = vld [vmem:[#allocation2 + $0x50] sm:$0xff]
    %v1024 = vld [vmem:[#allocation2 + $0x58] sm:$0xff]
    %v1025 = vld [vmem:[#allocation2 + $0x60] sm:$0xff]
    %v1026 = vld [vmem:[#allocation2 + $0x68] sm:$0xff]
    %v1027 = vld [vmem:[#allocation2 + $0x70] sm:$0xff]
    %v1028 = vld [vmem:[#allocation2 + $0x78] sm:$0xff]
    %v1029 = vld [vmem:[#allocation2 + $0x80] sm:$0xf]
    %v1030 = vld [vmem:[#allocation2 + $0x88] sm:$0xf]
    %v1031 = vld [vmem:[#allocation2 + $0x90] sm:$0xf]
    %v1032 = vld [vmem:[#allocation2 + $0x98] sm:$0xf]
    %v1033 = vld [vmem:[%s19] sm:$0xff]
    %1035 = vset.pattern.permute.xlu0 0
    %1036 = vperm.xlu0 %1035, %v1033
    %v1037 = vpop.permute.xlu0 %1036
    %v1040 = vsel %vm609, %v1012, 0
    %v1043 = vsel %vm613, %v1029, 0
    %v1046 = vsel %vm613, %v1030, 0
    %v1049 = vsel %vm613, %v1031, 0
    %v1052 = vsel %vm613, %v1032, 0
    %1054 = vmatprep.subr.bf16.mxu0 %v1014
    %1055 = vmatpush1.bf16.msra.mxu0 %v1013
    %1056 = vmatprep.subr.bf16.mxu0 %v1018
    %1057 = vmatpush1.bf16.msra.mxu0 %v1017
    %1058 = vmatprep.subr.bf16.mxu0 %v1022
    %1059 = vmatpush1.bf16.msra.mxu0 %v1021
    %1060 = vmatprep.subr.bf16.mxu0 %v1026
    %1061 = vmatpush1.bf16.msra.mxu0 %v1025
    %1062 = vmatprep.subr.bf16.mxu0 %v1046
    %1063 = vmatpush1.bf16.msra.mxu0 %v1043
    %1064 = vmatprep.subr.bf16.mxu0 0
    %1065 = vmatpush1.bf16.msra.mxu0 0
    %1066 = vmatprep.subr.bf16.mxu0 0
    %1067 = vmatpush1.bf16.msra.mxu0 0
    %1068 = vmatprep.subr.bf16.mxu0 0
    %1069 = vmatpush1.bf16.msra.mxu0 0
    %1070 = vmatprep.subr.bf16.mxu0 0
    %1071 = vmatpush1.bf16.msra.mxu0 0
    %1072 = vmatprep.subr.bf16.mxu0 0
    %1073 = vmatpush1.bf16.msra.mxu0 0
    %1074 = vmatprep.subr.bf16.mxu0 0
    %1075 = vmatpush1.bf16.msra.mxu0 0
    %1076 = vmatprep.subr.bf16.mxu0 0
    %1077 = vmatpush1.bf16.msra.mxu0 0
    %1078 = vmatprep.subr.bf16.mxu0 0
    %1079 = vmatpush1.bf16.msra.mxu0 0
    %1080 = vmatprep.subr.bf16.mxu0 0
    %1081 = vmatpush1.bf16.msra.mxu0 0
    %1082 = vmatprep.subr.bf16.mxu0 0
    %1083 = vmatpush1.bf16.msra.mxu0 0
    %1084 = vmatprep.subr.bf16.mxu0 0
    %1085 = vmatpush1.bf16.msra.mxu0 0
    %1086 = vmatprep.mubr.bf16.mxu0 0
    %1087 = vmatmul.mubr.bf16.gmra.mrb[0].mxu0 %v1040
    %v1088 = vpop.f32.mrb[0].mxu0
    %v1089 = vadd.f32 %v1037, %v1088
    %v1090 = vpop.f32.mrb[0].mxu0
    %v1091 = vadd.f32 %v1037, %v1090
    %v1092 = vpop.f32.mrb[0].mxu0
    %v1093 = vpop.f32.mrb[0].mxu0
    %1094 = vdwg.mxu0
    %1095 = vmatprep.subr.bf16.mxu0 %v1016
    %1096 = vmatpush1.bf16.msra.mxu0 %v1015
    %1097 = vmatprep.subr.bf16.mxu0 %v1020
    %1098 = vmatpush1.bf16.msra.mxu0 %v1019
    %1099 = vmatprep.subr.bf16.mxu0 %v1024
    %1100 = vmatpush1.bf16.msra.mxu0 %v1023
    %1101 = vmatprep.subr.bf16.mxu0 %v1028
    %1102 = vmatpush1.bf16.msra.mxu0 %v1027
    %1103 = vmatprep.subr.bf16.mxu0 %v1052
    %1104 = vmatpush1.bf16.msra.mxu0 %v1049
    %1105 = vmatprep.subr.bf16.mxu0 0
    %1106 = vmatpush1.bf16.msra.mxu0 0
    %1107 = vmatprep.subr.bf16.mxu0 0
    %1108 = vmatpush1.bf16.msra.mxu0 0
    %1109 = vmatprep.subr.bf16.mxu0 0
    %1110 = vmatpush1.bf16.msra.mxu0 0
    %1111 = vmatprep.subr.bf16.mxu0 0
    %1112 = vmatpush1.bf16.msra.mxu0 0
    %1113 = vmatprep.subr.bf16.mxu0 0
    %1114 = vmatpush1.bf16.msra.mxu0 0
    %1115 = vmatprep.subr.bf16.mxu0 0
    %1116 = vmatpush1.bf16.msra.mxu0 0
    %1117 = vmatprep.subr.bf16.mxu0 0
    %1118 = vmatpush1.bf16.msra.mxu0 0
    %1119 = vmatprep.subr.bf16.mxu0 0
    %1120 = vmatpush1.bf16.msra.mxu0 0
    %1121 = vmatprep.subr.bf16.mxu0 0
    %1122 = vmatpush1.bf16.msra.mxu0 0
    %1123 = vmatprep.subr.bf16.mxu0 0
    %1124 = vmatpush1.bf16.msra.mxu0 0
    %1125 = vmatprep.subr.bf16.mxu0 0
    %1126 = vmatpush1.bf16.msra.mxu0 0
    %1127 = vmatprep.mubr.bf16.mxu0 0
    %1128 = vmatmul.mubr.bf16.gmra.mrb[0].mxu0 %v1040
    %v1129 = vpop.f32.mrb[0].mxu0
    %v1130 = vadd.f32 %v1037, %v1129
    %v1131 = vpop.f32.mrb[0].mxu0
    %v1132 = vadd.f32 %v1037, %v1131
    %v1133 = vpop.f32.mrb[0].mxu0
    %v1134 = vpop.f32.mrb[0].mxu0
    %1135 = vdwg.mxu0
    %v1136 = vsub.f32 0.0, %v1089
    %v1137 = vsub.f32 0.0, %v1091
    %v1138 = vsub.f32 0.0, %v1130
    %v1139 = vsub.f32 0.0, %v1132
    %v1140 = vmul.f32 %v1136, 1.442695
    %v1141 = vpow.pop %v1140
    %v1142 = vmul.f32 %v1137, 1.442695
    %v1143 = vpow.pop %v1142
    %v1144 = vmul.f32 %v1138, 1.442695
    %v1145 = vpow.pop %v1144
    %v1146 = vmul.f32 %v1139, 1.442695
    %v1147 = vpow.pop %v1146
    %v1148 = vadd.f32 %v1141, 1.0
    %v1149 = vadd.f32 %v1143, 1.0
    %v1150 = vadd.f32 %v1145, 1.0
    %v1151 = vadd.f32 %v1147, 1.0
    %v1152 = vrcp.pop %v1148
    %v1153 = vrcp.pop %v1149
    %v1154 = vrcp.pop %v1150
    %v1155 = vrcp.pop %v1151
    %v1156 = vmul.f32 %v1089, %v1152
    %v1157 = vmul.f32 %v1091, %v1153
    %v1158 = vmul.f32 %v1130, %v1154
    %v1159 = vmul.f32 %v1132, %v1155
    %1160 = vrot.lane.b32.xlu0 %v1156, 17
    %v1161 = vpop.permute.xlu0 %1160
    %1162 = vrot.lane.b32.xlu0 %v1157, 17
    %v1163 = vpop.permute.xlu0 %1162
    %1164 = vrot.lane.b32.xlu0 %v1158, 17
    %v1165 = vpop.permute.xlu0 %1164
    %1166 = vrot.lane.b32.xlu0 %v1159, 17
    %v1167 = vpop.permute.xlu0 %1166
    %v1168 = vsel %vm295, %v1165, %v1167
    %v1169 = vsel %vm295, %v1163, %v1165
    %v1170 = vsel %vm295, %v1161, %v1163
    %v1171 = vsel %vm295, %v1167, %v1161
    %v1172 = vld [vmem:[%s5] sm:$0xff]
    %v1173 = vld [vmem:[%s5 + $0x8] sm:$0xff]
    %v1174 = vld [vmem:[%s5 + $0x10] sm:$0xff]
    %v1175 = vld [vmem:[%s5 + $0x18] sm:$0xff]
    %v1176 = vmul.f32 %v1171, %v1172
    %v1177 = vmul.f32 %v1170, %v1173
    %v1178 = vmul.f32 %v1169, %v1174
    %v1179 = vmul.f32 %v1168, %v1175
    %v1180 = vpack.c.bf16 %v1176, %v1176
    %v1181 = vpack.c.bf16 %v1177, %v1177
    %v1182 = vpack.c.bf16 %v1178, %v1178
    %v1183 = vpack.c.bf16 %v1179, %v1179
    %1184 = vst [vmem:[#allocation2] sm:$0xf] %v1180
    %1185 = vst [vmem:[#allocation2 + $0x8] sm:$0xf] %v1181
    %1186 = vst [vmem:[#allocation2 + $0x10] sm:$0xf] %v1182
    %1187 = vst [vmem:[#allocation2 + $0x18] sm:$0xf] %v1183
    %1188 = vrot.lane.b32.xlu0 %v1156, 16
    %v1189 = vpop.permute.xlu0 %1188
    %1190 = vrot.lane.b32.xlu0 %v1157, 16
    %v1191 = vpop.permute.xlu0 %1190
    %1192 = vrot.lane.b32.xlu0 %v1158, 16
    %v1193 = vpop.permute.xlu0 %1192
    %1194 = vrot.lane.b32.xlu0 %v1159, 16
    %v1195 = vpop.permute.xlu0 %1194
    %v1196 = vsel %vm324, %v1193, %v1195
    %v1197 = vsel %vm324, %v1191, %v1193
    %v1198 = vsel %vm324, %v1189, %v1191
    %v1199 = vsel %vm324, %v1195, %v1189
    %v1200 = vld [vmem:[%s329] sm:$0xff]
    %v1201 = vld [vmem:[%s329 + $0x8] sm:$0xff]
    %v1202 = vld [vmem:[%s329 + $0x10] sm:$0xff]
    %v1203 = vld [vmem:[%s329 + $0x18] sm:$0xff]
    %v1204 = vmul.f32 %v1199, %v1200
    %v1205 = vmul.f32 %v1198, %v1201
    %v1206 = vmul.f32 %v1197, %v1202
    %v1207 = vmul.f32 %v1196, %v1203
    %v1208 = vpack.c.bf16 %v1204, %v1204
    %v1209 = vpack.c.bf16 %v1205, %v1205
    %v1210 = vpack.c.bf16 %v1206, %v1206
    %v1211 = vpack.c.bf16 %v1207, %v1207
    %v1216 = vrot.slane %v1208, 4
    %v1217 = vrot.slane %v1209, 4
    %v1218 = vrot.slane %v1210, 4
    %v1219 = vrot.slane %v1211, 4
    %1224 = vst [vmem:[#allocation2] sm:$0xf0] %v1216
    %1225 = vst [vmem:[#allocation2 + $0x8] sm:$0xf0] %v1217
    %1226 = vst [vmem:[#allocation2 + $0x10] sm:$0xf0] %v1218
    %1227 = vst [vmem:[#allocation2 + $0x18] sm:$0xf0] %v1219
    %1228 = vrot.lane.b32.xlu0 %v1156, 15
    %v1229 = vpop.permute.xlu0 %1228
    %1230 = vrot.lane.b32.xlu0 %v1157, 15
    %v1231 = vpop.permute.xlu0 %1230
    %1232 = vrot.lane.b32.xlu0 %v1158, 15
    %v1233 = vpop.permute.xlu0 %1232
    %1234 = vrot.lane.b32.xlu0 %v1159, 15
    %v1235 = vpop.permute.xlu0 %1234
    %v1236 = vsel %vm366, %v1233, %v1235
    %v1237 = vsel %vm366, %v1231, %v1233
    %v1238 = vsel %vm366, %v1229, %v1231
    %v1239 = vsel %vm366, %v1235, %v1229
    %v1240 = vld [vmem:[%s371] sm:$0xff]
    %v1241 = vld [vmem:[%s371 + $0x8] sm:$0xff]
    %v1242 = vld [vmem:[%s371 + $0x10] sm:$0xff]
    %v1243 = vld [vmem:[%s371 + $0x18] sm:$0xff]
    %v1244 = vmul.f32 %v1239, %v1240
    %v1245 = vmul.f32 %v1238, %v1241
    %v1246 = vmul.f32 %v1237, %v1242
    %v1247 = vmul.f32 %v1236, %v1243
    %v1248 = vpack.c.bf16 %v1244, %v1244
    %v1249 = vpack.c.bf16 %v1245, %v1245
    %v1250 = vpack.c.bf16 %v1246, %v1246
    %v1251 = vpack.c.bf16 %v1247, %v1247
    %1252 = vst [vmem:[#allocation2 + $0x20] sm:$0xf] %v1248
    %1253 = vst [vmem:[#allocation2 + $0x28] sm:$0xf] %v1249
    %1254 = vst [vmem:[#allocation2 + $0x30] sm:$0xf] %v1250
    %1255 = vst [vmem:[#allocation2 + $0x38] sm:$0xf] %v1251
    %1256 = vrot.lane.b32.xlu0 %v1156, 1
    %v1257 = vpop.permute.xlu0 %1256
    %1258 = vrot.lane.b32.xlu0 %v1157, 1
    %v1259 = vpop.permute.xlu0 %1258
    %1260 = vrot.lane.b32.xlu0 %v1158, 1
    %v1261 = vpop.permute.xlu0 %1260
    %1262 = vrot.lane.b32.xlu0 %v1159, 1
    %v1263 = vpop.permute.xlu0 %1262
    %v1264 = vsel %vm396, %v1261, %v1263
    %v1265 = vsel %vm396, %v1259, %v1261
    %v1266 = vsel %vm396, %v1257, %v1259
    %v1267 = vsel %vm396, %v1263, %v1257
    %v1268 = vld [vmem:[%s401] sm:$0xff]
    %v1269 = vld [vmem:[%s401 + $0x8] sm:$0xff]
    %v1270 = vld [vmem:[%s401 + $0x10] sm:$0xff]
    %v1271 = vld [vmem:[%s401 + $0x18] sm:$0xff]
    %v1272 = vmul.f32 %v1267, %v1268
    %v1273 = vmul.f32 %v1266, %v1269
    %v1274 = vmul.f32 %v1265, %v1270
    %v1275 = vmul.f32 %v1264, %v1271
    %v1276 = vpack.c.bf16 %v1272, %v1272
    %v1277 = vpack.c.bf16 %v1273, %v1273
    %v1278 = vpack.c.bf16 %v1274, %v1274
    %v1279 = vpack.c.bf16 %v1275, %v1275
    %v1284 = vrot.slane %v1276, 4
    %v1285 = vrot.slane %v1277, 4
    %v1286 = vrot.slane %v1278, 4
    %v1287 = vrot.slane %v1279, 4
    %1292 = vst [vmem:[#allocation2 + $0x20] sm:$0xf0] %v1284
    %1293 = vst [vmem:[#allocation2 + $0x28] sm:$0xf0] %v1285
    %1294 = vst [vmem:[#allocation2 + $0x30] sm:$0xf0] %v1286
    %1295 = vst [vmem:[#allocation2 + $0x38] sm:$0xf0] %v1287
    %v1296 = vpack.c.bf16 %v1156, %v1156
    %v1297 = vpack.c.bf16 %v1157, %v1157
    %v1298 = vpack.c.bf16 %v1158, %v1158
    %v1299 = vpack.c.bf16 %v1159, %v1159
    %1300 = vst [vmem:[#allocation2 + $0x40] sm:$0xf] %v1296
    %1301 = vst [vmem:[#allocation2 + $0x48] sm:$0xf] %v1297
    %1302 = vst [vmem:[#allocation2 + $0x50] sm:$0xf] %v1298
    %1303 = vst [vmem:[#allocation2 + $0x58] sm:$0xf] %v1299
    %1304 = vrot.lane.b32.xlu0 %v1156, 127
    %v1305 = vpop.permute.xlu0 %1304
    %1306 = vrot.lane.b32.xlu0 %v1157, 127
    %v1307 = vpop.permute.xlu0 %1306
    %1308 = vrot.lane.b32.xlu0 %v1158, 127
    %v1309 = vpop.permute.xlu0 %1308
    %1310 = vrot.lane.b32.xlu0 %v1159, 127
    %v1311 = vpop.permute.xlu0 %1310
    %v1312 = vsel %vm446, %v1309, %v1311
    %v1313 = vsel %vm446, %v1307, %v1309
    %v1314 = vsel %vm446, %v1305, %v1307
    %v1315 = vsel %vm446, %v1311, %v1305
    %v1316 = vld [vmem:[%s451] sm:$0xff]
    %v1317 = vld [vmem:[%s451 + $0x8] sm:$0xff]
    %v1318 = vld [vmem:[%s451 + $0x10] sm:$0xff]
    %v1319 = vld [vmem:[%s451 + $0x18] sm:$0xff]
    %v1320 = vmul.f32 %v1314, %v1316
    %v1321 = vmul.f32 %v1313, %v1317
    %v1322 = vmul.f32 %v1312, %v1318
    %v1323 = vmul.f32 %v1315, %v1319
    %v1324 = vpack.c.bf16 %v1320, %v1320
    %v1325 = vpack.c.bf16 %v1321, %v1321
    %v1326 = vpack.c.bf16 %v1322, %v1322
    %v1327 = vpack.c.bf16 %v1323, %v1323
    %v1332 = vrot.slane %v1324, 4
    %v1333 = vrot.slane %v1325, 4
    %v1334 = vrot.slane %v1326, 4
    %v1335 = vrot.slane %v1327, 4
    %1340 = vst [vmem:[#allocation2 + $0x40] sm:$0xf0] %v1332
    %1341 = vst [vmem:[#allocation2 + $0x48] sm:$0xf0] %v1333
    %1342 = vst [vmem:[#allocation2 + $0x50] sm:$0xf0] %v1334
    %1343 = vst [vmem:[#allocation2 + $0x58] sm:$0xf0] %v1335
    %1344 = vrot.lane.b32.xlu0 %v1156, 113
    %v1345 = vpop.permute.xlu0 %1344
    %1346 = vrot.lane.b32.xlu0 %v1157, 113
    %v1347 = vpop.permute.xlu0 %1346
    %1348 = vrot.lane.b32.xlu0 %v1158, 113
    %v1349 = vpop.permute.xlu0 %1348
    %1350 = vrot.lane.b32.xlu0 %v1159, 113
    %v1351 = vpop.permute.xlu0 %1350
    %v1352 = vsel %vm488, %v1349, %v1351
    %v1353 = vsel %vm488, %v1347, %v1349
    %v1354 = vsel %vm488, %v1345, %v1347
    %v1355 = vsel %vm488, %v1351, %v1345
    %v1356 = vld [vmem:[%s493] sm:$0xff]
    %v1357 = vld [vmem:[%s493 + $0x8] sm:$0xff]
    %v1358 = vld [vmem:[%s493 + $0x10] sm:$0xff]
    %v1359 = vld [vmem:[%s493 + $0x18] sm:$0xff]
    %v1360 = vmul.f32 %v1354, %v1356
    %v1361 = vmul.f32 %v1353, %v1357
    %v1362 = vmul.f32 %v1352, %v1358
    %v1363 = vmul.f32 %v1355, %v1359
    %v1364 = vpack.c.bf16 %v1360, %v1360
    %v1365 = vpack.c.bf16 %v1361, %v1361
    %v1366 = vpack.c.bf16 %v1362, %v1362
    %v1367 = vpack.c.bf16 %v1363, %v1363
    %1368 = vst [vmem:[#allocation2 + $0x60] sm:$0xf] %v1364
    %1369 = vst [vmem:[#allocation2 + $0x68] sm:$0xf] %v1365
    %1370 = vst [vmem:[#allocation2 + $0x70] sm:$0xf] %v1366
    %1371 = vst [vmem:[#allocation2 + $0x78] sm:$0xf] %v1367
    %1372 = vrot.lane.b32.xlu0 %v1156, 112
    %v1373 = vpop.permute.xlu0 %1372
    %1374 = vrot.lane.b32.xlu0 %v1157, 112
    %v1375 = vpop.permute.xlu0 %1374
    %1376 = vrot.lane.b32.xlu0 %v1158, 112
    %v1377 = vpop.permute.xlu0 %1376
    %1378 = vrot.lane.b32.xlu0 %v1159, 112
    %v1379 = vpop.permute.xlu0 %1378
    %v1380 = vsel %vm518, %v1377, %v1379
    %v1381 = vsel %vm518, %v1375, %v1377
    %v1382 = vsel %vm518, %v1373, %v1375
    %v1383 = vsel %vm518, %v1379, %v1373
    %v1384 = vld [vmem:[%s523] sm:$0xff]
    %v1385 = vld [vmem:[%s523 + $0x8] sm:$0xff]
    %v1386 = vld [vmem:[%s523 + $0x10] sm:$0xff]
    %v1387 = vld [vmem:[%s523 + $0x18] sm:$0xff]
    %v1388 = vmul.f32 %v1382, %v1384
    %v1389 = vmul.f32 %v1381, %v1385
    %v1390 = vmul.f32 %v1380, %v1386
    %v1391 = vmul.f32 %v1383, %v1387
    %v1392 = vpack.c.bf16 %v1388, %v1388
    %v1393 = vpack.c.bf16 %v1389, %v1389
    %v1394 = vpack.c.bf16 %v1390, %v1390
    %v1395 = vpack.c.bf16 %v1391, %v1391
    %v1400 = vrot.slane %v1392, 4
    %v1401 = vrot.slane %v1393, 4
    %v1402 = vrot.slane %v1394, 4
    %v1403 = vrot.slane %v1395, 4
    %1408 = vst [vmem:[#allocation2 + $0x60] sm:$0xf0] %v1400
    %1409 = vst [vmem:[#allocation2 + $0x68] sm:$0xf0] %v1401
    %1410 = vst [vmem:[#allocation2 + $0x70] sm:$0xf0] %v1402
    %1411 = vst [vmem:[#allocation2 + $0x78] sm:$0xf0] %v1403
    %1412 = vrot.lane.b32.xlu0 %v1156, 111
    %v1413 = vpop.permute.xlu0 %1412
    %1414 = vrot.lane.b32.xlu0 %v1157, 111
    %v1415 = vpop.permute.xlu0 %1414
    %1416 = vrot.lane.b32.xlu0 %v1158, 111
    %v1417 = vpop.permute.xlu0 %1416
    %1418 = vrot.lane.b32.xlu0 %v1159, 111
    %v1419 = vpop.permute.xlu0 %1418
    %v1420 = vsel %vm560, %v1417, %v1419
    %v1421 = vsel %vm560, %v1415, %v1417
    %v1422 = vsel %vm560, %v1413, %v1415
    %v1423 = vsel %vm560, %v1419, %v1413
    %v1424 = vld [vmem:[%s565] sm:$0xff]
    %v1425 = vld [vmem:[%s565 + $0x8] sm:$0xff]
    %v1426 = vld [vmem:[%s565 + $0x10] sm:$0xff]
    %v1427 = vld [vmem:[%s565 + $0x18] sm:$0xff]
    %v1428 = vmul.f32 %v1422, %v1424
    %v1429 = vmul.f32 %v1421, %v1425
    %v1430 = vmul.f32 %v1420, %v1426
    %v1431 = vmul.f32 %v1423, %v1427
    %v1432 = vpack.c.bf16 %v1428, %v1428
    %v1433 = vpack.c.bf16 %v1429, %v1429
    %v1434 = vpack.c.bf16 %v1430, %v1430
    %v1435 = vpack.c.bf16 %v1431, %v1431
    %1436 = vst [vmem:[#allocation2 + $0x80] sm:$0xf] %v1432
    %1437 = vst [vmem:[#allocation2 + $0x88] sm:$0xf] %v1433
    %1438 = vst [vmem:[#allocation2 + $0x90] sm:$0xf] %v1434
    %1439 = vst [vmem:[#allocation2 + $0x98] sm:$0xf] %v1435
    %v1440 = vld [vmem:[#allocation11] sm:$0xf]
    %v1441 = vld [vmem:[#allocation11 + $0x4] sm:$0xf]
    %v1442 = vld [vmem:[#allocation2] sm:$0xff]
    %v1443 = vld [vmem:[#allocation2 + $0x8] sm:$0xff]
    %v1444 = vld [vmem:[#allocation2 + $0x10] sm:$0xff]
    %v1445 = vld [vmem:[#allocation2 + $0x18] sm:$0xff]
    %v1446 = vld [vmem:[#allocation2 + $0x20] sm:$0xff]
    %v1447 = vld [vmem:[#allocation2 + $0x28] sm:$0xff]
    %v1448 = vld [vmem:[#allocation2 + $0x30] sm:$0xff]
    %v1449 = vld [vmem:[#allocation2 + $0x38] sm:$0xff]
    %v1450 = vld [vmem:[#allocation2 + $0x40] sm:$0xff]
    %v1451 = vld [vmem:[#allocation2 + $0x48] sm:$0xff]
    %v1452 = vld [vmem:[#allocation2 + $0x50] sm:$0xff]
    %v1453 = vld [vmem:[#allocation2 + $0x58] sm:$0xff]
    %v1454 = vld [vmem:[#allocation2 + $0x60] sm:$0xff]
    %v1455 = vld [vmem:[#allocation2 + $0x68] sm:$0xff]
    %v1456 = vld [vmem:[#allocation2 + $0x70] sm:$0xff]
    %v1457 = vld [vmem:[#allocation2 + $0x78] sm:$0xff]
    %v1458 = vld [vmem:[#allocation2 + $0x80] sm:$0xf]
    %v1459 = vld [vmem:[#allocation2 + $0x88] sm:$0xf]
    %v1460 = vld [vmem:[#allocation2 + $0x90] sm:$0xf]
    %v1461 = vld [vmem:[#allocation2 + $0x98] sm:$0xf]
    %v1462 = vld [vmem:[%s23] sm:$0xff]
    %v1463 = vld [vmem:[%s23 + $0x8] sm:$0xff]
    %1465 = vset.pattern.permute.xlu0 0
    %1466 = vperm.xlu0 %1465, %v1462
    %v1467 = vpop.permute.xlu0 %1466
    %1470 = vset.pattern.permute.xlu0 0
    %1471 = vperm.xlu0 %1470, %v1463
    %v1472 = vpop.permute.xlu0 %1471
    %v1476 = vunpack.c.l.b16 %v1440
    %v1477 = vunpack.c.l.b16 %v1441
    %v1478 = vpack.c.b16 %v1477, %v1476
    %v1480 = vsel %vm609, %v1478, 0
    %v1483 = vsel %vm613, %v1458, 0
    %v1486 = vsel %vm613, %v1459, 0
    %v1489 = vsel %vm613, %v1460, 0
    %v1492 = vsel %vm613, %v1461, 0
    %1494 = vmatprep.subr.bf16.mxu0 %v1443
    %1495 = vmatpush1.bf16.msra.mxu0 %v1442
    %1496 = vmatprep.subr.bf16.mxu0 %v1447
    %1497 = vmatpush1.bf16.msra.mxu0 %v1446
    %1498 = vmatprep.subr.bf16.mxu0 %v1451
    %1499 = vmatpush1.bf16.msra.mxu0 %v1450
    %1500 = vmatprep.subr.bf16.mxu0 %v1455
    %1501 = vmatpush1.bf16.msra.mxu0 %v1454
    %1502 = vmatprep.subr.bf16.mxu0 %v1486
    %1503 = vmatpush1.bf16.msra.mxu0 %v1483
    %1504 = vmatprep.subr.bf16.mxu0 0
    %1505 = vmatpush1.bf16.msra.mxu0 0
    %1506 = vmatprep.subr.bf16.mxu0 0
    %1507 = vmatpush1.bf16.msra.mxu0 0
    %1508 = vmatprep.subr.bf16.mxu0 0
    %1509 = vmatpush1.bf16.msra.mxu0 0
    %1510 = vmatprep.subr.bf16.mxu0 0
    %1511 = vmatpush1.bf16.msra.mxu0 0
    %1512 = vmatprep.subr.bf16.mxu0 0
    %1513 = vmatpush1.bf16.msra.mxu0 0
    %1514 = vmatprep.subr.bf16.mxu0 0
    %1515 = vmatpush1.bf16.msra.mxu0 0
    %1516 = vmatprep.subr.bf16.mxu0 0
    %1517 = vmatpush1.bf16.msra.mxu0 0
    %1518 = vmatprep.subr.bf16.mxu0 0
    %1519 = vmatpush1.bf16.msra.mxu0 0
    %1520 = vmatprep.subr.bf16.mxu0 0
    %1521 = vmatpush1.bf16.msra.mxu0 0
    %1522 = vmatprep.subr.bf16.mxu0 0
    %1523 = vmatpush1.bf16.msra.mxu0 0
    %1524 = vmatprep.subr.bf16.mxu0 0
    %1525 = vmatpush1.bf16.msra.mxu0 0
    %1526 = vmatprep.mubr.bf16.mxu0 0
    %1527 = vmatmul.mubr.bf16.gmra.mrb[0].mxu0 %v1480
    %v1528 = vpop.f32.mrb[0].mxu0
    %v1529 = vadd.f32 %v1467, %v1528
    %v1530 = vpop.f32.mrb[0].mxu0
    %v1531 = vadd.f32 %v1467, %v1530
    %v1532 = vpop.f32.mrb[0].mxu0
    %v1533 = vadd.f32 %v1472, %v1532
    %v1534 = vpop.f32.mrb[0].mxu0
    %v1535 = vadd.f32 %v1472, %v1534
    %1536 = vdwg.mxu0
    %1537 = vmatprep.subr.bf16.mxu0 %v1445
    %1538 = vmatpush1.bf16.msra.mxu0 %v1444
    %1539 = vmatprep.subr.bf16.mxu0 %v1449
    %1540 = vmatpush1.bf16.msra.mxu0 %v1448
    %1541 = vmatprep.subr.bf16.mxu0 %v1453
    %1542 = vmatpush1.bf16.msra.mxu0 %v1452
    %1543 = vmatprep.subr.bf16.mxu0 %v1457
    %1544 = vmatpush1.bf16.msra.mxu0 %v1456
    %1545 = vmatprep.subr.bf16.mxu0 %v1492
    %1546 = vmatpush1.bf16.msra.mxu0 %v1489
    %1547 = vmatprep.subr.bf16.mxu0 0
    %1548 = vmatpush1.bf16.msra.mxu0 0
    %1549 = vmatprep.subr.bf16.mxu0 0
    %1550 = vmatpush1.bf16.msra.mxu0 0
    %1551 = vmatprep.subr.bf16.mxu0 0
    %1552 = vmatpush1.bf16.msra.mxu0 0
    %1553 = vmatprep.subr.bf16.mxu0 0
    %1554 = vmatpush1.bf16.msra.mxu0 0
    %1555 = vmatprep.subr.bf16.mxu0 0
    %1556 = vmatpush1.bf16.msra.mxu0 0
    %1557 = vmatprep.subr.bf16.mxu0 0
    %1558 = vmatpush1.bf16.msra.mxu0 0
    %1559 = vmatprep.subr.bf16.mxu0 0
    %1560 = vmatpush1.bf16.msra.mxu0 0
    %1561 = vmatprep.subr.bf16.mxu0 0
    %1562 = vmatpush1.bf16.msra.mxu0 0
    %1563 = vmatprep.subr.bf16.mxu0 0
    %1564 = vmatpush1.bf16.msra.mxu0 0
    %1565 = vmatprep.subr.bf16.mxu0 0
    %1566 = vmatpush1.bf16.msra.mxu0 0
    %1567 = vmatprep.subr.bf16.mxu0 0
    %1568 = vmatpush1.bf16.msra.mxu0 0
    %1569 = vmatprep.mubr.bf16.mxu0 0
    %1570 = vmatmul.mubr.bf16.gmra.mrb[0].mxu0 %v1480
    %v1571 = vpop.f32.mrb[0].mxu0
    %v1572 = vadd.f32 %v1467, %v1571
    %v1573 = vpop.f32.mrb[0].mxu0
    %v1574 = vadd.f32 %v1467, %v1573
    %v1575 = vpop.f32.mrb[0].mxu0
    %v1576 = vadd.f32 %v1472, %v1575
    %v1577 = vpop.f32.mrb[0].mxu0
    %v1578 = vadd.f32 %v1472, %v1577
    %1579 = vdwg.mxu0
    %v1580 = vsub.f32 0.0, %v1529
    %v1581 = vsub.f32 0.0, %v1531
    %v1582 = vsub.f32 0.0, %v1572
    %v1583 = vsub.f32 0.0, %v1574
    %v1584 = vsub.f32 0.0, %v1533
    %v1585 = vsub.f32 0.0, %v1535
    %v1586 = vsub.f32 0.0, %v1576
    %v1587 = vsub.f32 0.0, %v1578
    %v1588 = vmul.f32 %v1580, 1.442695
    %v1589 = vpow.pop %v1588
    %v1590 = vmul.f32 %v1581, 1.442695
    %v1591 = vpow.pop %v1590
    %v1592 = vmul.f32 %v1582, 1.442695
    %v1593 = vpow.pop %v1592
    %v1594 = vmul.f32 %v1583, 1.442695
    %v1595 = vpow.pop %v1594
    %v1596 = vmul.f32 %v1584, 1.442695
    %v1597 = vpow.pop %v1596
    %v1598 = vmul.f32 %v1585, 1.442695
    %v1599 = vpow.pop %v1598
    %v1600 = vmul.f32 %v1586, 1.442695
    %v1601 = vpow.pop %v1600
    %v1602 = vmul.f32 %v1587, 1.442695
    %v1603 = vpow.pop %v1602
    %v1604 = vadd.f32 %v1589, 1.0
    %v1605 = vadd.f32 %v1591, 1.0
    %v1606 = vadd.f32 %v1593, 1.0
    %v1607 = vadd.f32 %v1595, 1.0
    %v1608 = vadd.f32 %v1597, 1.0
    %v1609 = vadd.f32 %v1599, 1.0
    %v1610 = vadd.f32 %v1601, 1.0
    %v1611 = vadd.f32 %v1603, 1.0
    %v1612 = vrcp.pop %v1604
    %v1613 = vrcp.pop %v1605
    %v1614 = vrcp.pop %v1606
    %v1615 = vrcp.pop %v1607
    %v1616 = vrcp.pop %v1608
    %v1617 = vrcp.pop %v1609
    %v1618 = vrcp.pop %v1610
    %v1619 = vrcp.pop %v1611
    %v1620 = vmul.f32 %v1529, %v1612
    %v1621 = vmul.f32 %v1531, %v1613
    %v1622 = vmul.f32 %v1572, %v1614
    %v1623 = vmul.f32 %v1574, %v1615
    %v1624 = vmul.f32 %v1533, %v1616
    %v1625 = vmul.f32 %v1535, %v1617
    %v1626 = vmul.f32 %v1576, %v1618
    %v1627 = vmul.f32 %v1578, %v1619
    %v1628 = vpack.c.bf16 %v1624, %v1620
    %v1629 = vpack.c.bf16 %v1625, %v1621
    %v1630 = vpack.c.bf16 %v1626, %v1622
    %v1631 = vpack.c.bf16 %v1627, %v1623
    %v1632 = vld [vmem:[#allocation5] sm:$0xf]
    %v1633 = vld [vmem:[#allocation5 + $0x4] sm:$0xf]
    %v1634 = vld [vmem:[#allocation5 + $0x8] sm:$0xf]
    %v1635 = vld [vmem:[#allocation5 + $0xc] sm:$0xf]
    %v1636 = vld [vmem:[#allocation5 + $0x10] sm:$0xf]
    %v1637 = vld [vmem:[#allocation5 + $0x14] sm:$0xf]
    %v1638 = vld [vmem:[#allocation5 + $0x18] sm:$0xf]
    %v1639 = vld [vmem:[#allocation5 + $0x1c] sm:$0xf]
    %v1640 = vld [vmem:[#allocation5 + $0x20] sm:$0xf]
    %v1641 = vld [vmem:[#allocation5 + $0x24] sm:$0xf]
    %v1642 = vld [vmem:[#allocation5 + $0x28] sm:$0xf]
    %v1643 = vld [vmem:[#allocation5 + $0x2c] sm:$0xf]
    %v1644 = vld [vmem:[#allocation5 + $0x30] sm:$0xf]
    %v1645 = vld [vmem:[#allocation5 + $0x34] sm:$0xf]
    %v1646 = vld [vmem:[#allocation5 + $0x38] sm:$0xf]
    %v1647 = vld [vmem:[#allocation5 + $0x3c] sm:$0xf]
    %v1648 = vld [vmem:[#allocation5 + $0x40] sm:$0xf]
    %v1649 = vld [vmem:[#allocation5 + $0x44] sm:$0xf]
    %v1650 = vld [vmem:[#allocation5 + $0x48] sm:$0xf]
    %v1651 = vld [vmem:[#allocation5 + $0x4c] sm:$0xf]
    %v1652 = vld [vmem:[#allocation5 + $0x50] sm:$0xf]
    %v1653 = vld [vmem:[#allocation5 + $0x54] sm:$0xf]
    %v1654 = vld [vmem:[#allocation5 + $0x58] sm:$0xf]
    %v1655 = vld [vmem:[#allocation5 + $0x5c] sm:$0xf]
    %v1656 = vld [vmem:[#allocation5 + $0x60] sm:$0xf]
    %v1657 = vld [vmem:[#allocation5 + $0x64] sm:$0xf]
    %v1658 = vld [vmem:[#allocation5 + $0x68] sm:$0xf]
    %v1659 = vld [vmem:[#allocation5 + $0x6c] sm:$0xf]
    %v1660 = vld [vmem:[#allocation5 + $0x70] sm:$0xf]
    %v1661 = vld [vmem:[#allocation5 + $0x74] sm:$0xf]
    %v1662 = vld [vmem:[#allocation5 + $0x78] sm:$0xf]
    %v1663 = vld [vmem:[#allocation5 + $0x7c] sm:$0xf]
    %v1664 = vld [vmem:[#allocation5 + $0x80] sm:$0xf]
    %v1665 = vld [vmem:[#allocation5 + $0x84] sm:$0xf]
    %v1666 = vld [vmem:[#allocation5 + $0x88] sm:$0xf]
    %v1667 = vld [vmem:[#allocation5 + $0x8c] sm:$0xf]
    %v1668 = vld [vmem:[#allocation5 + $0x90] sm:$0xf]
    %v1669 = vld [vmem:[#allocation5 + $0x94] sm:$0xf]
    %v1670 = vld [vmem:[#allocation5 + $0x98] sm:$0xf]
    %v1671 = vld [vmem:[#allocation5 + $0x9c] sm:$0xf]
    %v1672 = vld [vmem:[#allocation5 + $0xa0] sm:$0xf]
    %v1673 = vld [vmem:[#allocation5 + $0xa4] sm:$0xf]
    %v1674 = vld [vmem:[#allocation5 + $0xa8] sm:$0xf]
    %v1675 = vld [vmem:[#allocation5 + $0xac] sm:$0xf]
    %v1676 = vld [vmem:[#allocation5 + $0xb0] sm:$0xf]
    %v1677 = vld [vmem:[#allocation5 + $0xb4] sm:$0xf]
    %v1678 = vld [vmem:[#allocation5 + $0xb8] sm:$0xf]
    %v1679 = vld [vmem:[#allocation5 + $0xbc] sm:$0xf]
    %v1680 = vld [vmem:[#allocation5 + $0xc0] sm:$0xf]
    %v1681 = vld [vmem:[#allocation5 + $0xc4] sm:$0xf]
    %v1682 = vld [vmem:[#allocation5 + $0xc8] sm:$0xf]
    %v1683 = vld [vmem:[#allocation5 + $0xcc] sm:$0xf]
    %v1684 = vld [vmem:[#allocation5 + $0xd0] sm:$0xf]
    %v1685 = vld [vmem:[#allocation5 + $0xd4] sm:$0xf]
    %v1686 = vld [vmem:[#allocation5 + $0xd8] sm:$0xf]
    %v1687 = vld [vmem:[#allocation5 + $0xdc] sm:$0xf]
    %v1688 = vld [vmem:[#allocation5 + $0xe0] sm:$0xf]
    %v1689 = vld [vmem:[#allocation5 + $0xe4] sm:$0xf]
    %v1690 = vld [vmem:[#allocation5 + $0xe8] sm:$0xf]
    %v1691 = vld [vmem:[#allocation5 + $0xec] sm:$0xf]
    %v1692 = vld [vmem:[#allocation5 + $0xf0] sm:$0xf]
    %v1693 = vld [vmem:[#allocation5 + $0xf4] sm:$0xf]
    %v1694 = vld [vmem:[#allocation5 + $0xf8] sm:$0xf]
    %v1695 = vld [vmem:[#allocation5 + $0xfc] sm:$0xf]
    %v1760 = vunpack.c.l.b16 %v1632
    %v1761 = vunpack.c.l.b16 %v1633
    %v1762 = vunpack.c.l.b16 %v1634
    %v1763 = vunpack.c.l.b16 %v1635
    %v1764 = vunpack.c.l.b16 %v1636
    %v1765 = vunpack.c.l.b16 %v1637
    %v1766 = vunpack.c.l.b16 %v1638
    %v1767 = vunpack.c.l.b16 %v1639
    %v1768 = vunpack.c.l.b16 %v1640
    %v1769 = vunpack.c.l.b16 %v1641
    %v1770 = vunpack.c.l.b16 %v1642
    %v1771 = vunpack.c.l.b16 %v1643
    %v1772 = vunpack.c.l.b16 %v1644
    %v1773 = vunpack.c.l.b16 %v1645
    %v1774 = vunpack.c.l.b16 %v1646
    %v1775 = vunpack.c.l.b16 %v1647
    %v1776 = vunpack.c.l.b16 %v1648
    %v1777 = vunpack.c.l.b16 %v1649
    %v1778 = vunpack.c.l.b16 %v1650
    %v1779 = vunpack.c.l.b16 %v1651
    %v1780 = vunpack.c.l.b16 %v1652
    %v1781 = vunpack.c.l.b16 %v1653
    %v1782 = vunpack.c.l.b16 %v1654
    %v1783 = vunpack.c.l.b16 %v1655
    %v1784 = vunpack.c.l.b16 %v1656
    %v1785 = vunpack.c.l.b16 %v1657
    %v1786 = vunpack.c.l.b16 %v1658
    %v1787 = vunpack.c.l.b16 %v1659
    %v1788 = vunpack.c.l.b16 %v1660
    %v1789 = vunpack.c.l.b16 %v1661
    %v1790 = vunpack.c.l.b16 %v1662
    %v1791 = vunpack.c.l.b16 %v1663
    %v1792 = vunpack.c.l.b16 %v1664
    %v1793 = vunpack.c.l.b16 %v1665
    %v1794 = vunpack.c.l.b16 %v1666
    %v1795 = vunpack.c.l.b16 %v1667
    %v1796 = vunpack.c.l.b16 %v1668
    %v1797 = vunpack.c.l.b16 %v1669
    %v1798 = vunpack.c.l.b16 %v1670
    %v1799 = vunpack.c.l.b16 %v1671
    %v1800 = vunpack.c.l.b16 %v1672
    %v1801 = vunpack.c.l.b16 %v1673
    %v1802 = vunpack.c.l.b16 %v1674
    %v1803 = vunpack.c.l.b16 %v1675
    %v1804 = vunpack.c.l.b16 %v1676
    %v1805 = vunpack.c.l.b16 %v1677
    %v1806 = vunpack.c.l.b16 %v1678
    %v1807 = vunpack.c.l.b16 %v1679
    %v1808 = vunpack.c.l.b16 %v1680
    %v1809 = vunpack.c.l.b16 %v1681
    %v1810 = vunpack.c.l.b16 %v1682
    %v1811 = vunpack.c.l.b16 %v1683
    %v1812 = vunpack.c.l.b16 %v1684
    %v1813 = vunpack.c.l.b16 %v1685
    %v1814 = vunpack.c.l.b16 %v1686
    %v1815 = vunpack.c.l.b16 %v1687
    %v1816 = vunpack.c.l.b16 %v1688
    %v1817 = vunpack.c.l.b16 %v1689
    %v1818 = vunpack.c.l.b16 %v1690
    %v1819 = vunpack.c.l.b16 %v1691
    %v1820 = vunpack.c.l.b16 %v1692
    %v1821 = vunpack.c.l.b16 %v1693
    %v1822 = vunpack.c.l.b16 %v1694
    %v1823 = vunpack.c.l.b16 %v1695
    %v1824 = vpack.c.b16 %v1761, %v1760
    %v1825 = vpack.c.b16 %v1763, %v1762
    %v1826 = vpack.c.b16 %v1765, %v1764
    %v1827 = vpack.c.b16 %v1767, %v1766
    %v1828 = vpack.c.b16 %v1769, %v1768
    %v1829 = vpack.c.b16 %v1771, %v1770
    %v1830 = vpack.c.b16 %v1773, %v1772
    %v1831 = vpack.c.b16 %v1775, %v1774
    %v1832 = vpack.c.b16 %v1777, %v1776
    %v1833 = vpack.c.b16 %v1779, %v1778
    %v1834 = vpack.c.b16 %v1781, %v1780
    %v1835 = vpack.c.b16 %v1783, %v1782
    %v1836 = vpack.c.b16 %v1785, %v1784
    %v1837 = vpack.c.b16 %v1787, %v1786
    %v1838 = vpack.c.b16 %v1789, %v1788
    %v1839 = vpack.c.b16 %v1791, %v1790
    %v1840 = vpack.c.b16 %v1793, %v1792
    %v1841 = vpack.c.b16 %v1795, %v1794
    %v1842 = vpack.c.b16 %v1797, %v1796
    %v1843 = vpack.c.b16 %v1799, %v1798
    %v1844 = vpack.c.b16 %v1801, %v1800
    %v1845 = vpack.c.b16 %v1803, %v1802
    %v1846 = vpack.c.b16 %v1805, %v1804
    %v1847 = vpack.c.b16 %v1807, %v1806
    %v1848 = vpack.c.b16 %v1809, %v1808
    %v1849 = vpack.c.b16 %v1811, %v1810
    %v1850 = vpack.c.b16 %v1813, %v1812
    %v1851 = vpack.c.b16 %v1815, %v1814
    %v1852 = vpack.c.b16 %v1817, %v1816
    %v1853 = vpack.c.b16 %v1819, %v1818
    %v1854 = vpack.c.b16 %v1821, %v1820
    %v1855 = vpack.c.b16 %v1823, %v1822
    %1888 = vmatprep.subr.bf16.mxu0 0
    %1889 = vmatpush1.bf16.msra.mxu0 %v1824
    %1890 = vmatprep.subr.bf16.mxu0 0
    %1891 = vmatpush1.bf16.msra.mxu0 %v1825
    %1892 = vmatprep.subr.bf16.mxu0 0
    %1893 = vmatpush1.bf16.msra.mxu0 %v1826
    %1894 = vmatprep.subr.bf16.mxu0 0
    %1895 = vmatpush1.bf16.msra.mxu0 %v1827
    %1896 = vmatprep.subr.bf16.mxu0 0
    %1897 = vmatpush1.bf16.msra.mxu0 %v1828
    %1898 = vmatprep.subr.bf16.mxu0 0
    %1899 = vmatpush1.bf16.msra.mxu0 %v1829
    %1900 = vmatprep.subr.bf16.mxu0 0
    %1901 = vmatpush1.bf16.msra.mxu0 %v1830
    %1902 = vmatprep.subr.bf16.mxu0 0
    %1903 = vmatpush1.bf16.msra.mxu0 %v1831
    %1904 = vmatprep.subr.bf16.mxu0 0
    %1905 = vmatpush1.bf16.msra.mxu0 %v1832
    %1906 = vmatprep.subr.bf16.mxu0 0
    %1907 = vmatpush1.bf16.msra.mxu0 %v1833
    %1908 = vmatprep.subr.bf16.mxu0 0
    %1909 = vmatpush1.bf16.msra.mxu0 %v1834
    %1910 = vmatprep.subr.bf16.mxu0 0
    %1911 = vmatpush1.bf16.msra.mxu0 %v1835
    %1912 = vmatprep.subr.bf16.mxu0 0
    %1913 = vmatpush1.bf16.msra.mxu0 %v1836
    %1914 = vmatprep.subr.bf16.mxu0 0
    %1915 = vmatpush1.bf16.msra.mxu0 %v1837
    %1916 = vmatprep.subr.bf16.mxu0 0
    %1917 = vmatpush1.bf16.msra.mxu0 %v1838
    %1918 = vmatprep.subr.bf16.mxu0 0
    %1919 = vmatpush1.bf16.msra.mxu0 %v1839
    %1920 = vmatprep.mubr.bf16.mxu0 %v1629
    %1921 = vmatmul.mubr.bf16.gmra.mrb[0].mxu0 %v1628
    %v1922 = vpop.f32.mrb[0].mxu0
    %v1923 = vadd.f32 0.0, %v1922
    %v1924 = vpop.f32.mrb[0].mxu0
    %v1925 = vpop.f32.mrb[0].mxu0
    %v1926 = vadd.f32 0.0, %v1925
    %v1927 = vpop.f32.mrb[0].mxu0
    %1928 = vdwg.mxu0
    %1929 = vmatprep.subr.bf16.mxu0 0
    %1930 = vmatpush1.bf16.msra.mxu0 %v1840
    %1931 = vmatprep.subr.bf16.mxu0 0
    %1932 = vmatpush1.bf16.msra.mxu0 %v1841
    %1933 = vmatprep.subr.bf16.mxu0 0
    %1934 = vmatpush1.bf16.msra.mxu0 %v1842
    %1935 = vmatprep.subr.bf16.mxu0 0
    %1936 = vmatpush1.bf16.msra.mxu0 %v1843
    %1937 = vmatprep.subr.bf16.mxu0 0
    %1938 = vmatpush1.bf16.msra.mxu0 %v1844
    %1939 = vmatprep.subr.bf16.mxu0 0
    %1940 = vmatpush1.bf16.msra.mxu0 %v1845
    %1941 = vmatprep.subr.bf16.mxu0 0
    %1942 = vmatpush1.bf16.msra.mxu0 %v1846
    %1943 = vmatprep.subr.bf16.mxu0 0
    %1944 = vmatpush1.bf16.msra.mxu0 %v1847
    %1945 = vmatprep.subr.bf16.mxu0 0
    %1946 = vmatpush1.bf16.msra.mxu0 %v1848
    %1947 = vmatprep.subr.bf16.mxu0 0
    %1948 = vmatpush1.bf16.msra.mxu0 %v1849
    %1949 = vmatprep.subr.bf16.mxu0 0
    %1950 = vmatpush1.bf16.msra.mxu0 %v1850
    %1951 = vmatprep.subr.bf16.mxu0 0
    %1952 = vmatpush1.bf16.msra.mxu0 %v1851
    %1953 = vmatprep.subr.bf16.mxu0 0
    %1954 = vmatpush1.bf16.msra.mxu0 %v1852
    %1955 = vmatprep.subr.bf16.mxu0 0
    %1956 = vmatpush1.bf16.msra.mxu0 %v1853
    %1957 = vmatprep.subr.bf16.mxu0 0
    %1958 = vmatpush1.bf16.msra.mxu0 %v1854
    %1959 = vmatprep.subr.bf16.mxu0 0
    %1960 = vmatpush1.bf16.msra.mxu0 %v1855
    %1961 = vmatprep.mubr.bf16.mxu0 %v1631
    %1962 = vmatmul.mubr.bf16.gmra.mrb[0].mxu0 %v1630
    %v1963 = vpop.f32.mrb[0].mxu0
    %v1964 = vadd.f32 %v1923, %v1963
    %v1965 = vpop.f32.mrb[0].mxu0
    %v1966 = vpop.f32.mrb[0].mxu0
    %v1967 = vadd.f32 %v1926, %v1966
    %v1968 = vpop.f32.mrb[0].mxu0
    %1969 = vdwg.mxu0
    %1970 = vrot.lane.b32.xlu0 %v1964, 9
    %v1971 = vpop.permute.xlu0 %1970
    %1972 = vrot.lane.b32.xlu0 %v1967, 9
    %v1973 = vpop.permute.xlu0 %1972
    %v1974 = vld [vmem:[#allocation3] sm:$0xff]
    %v1975 = vld [vmem:[#allocation3 + $0x8] sm:$0xff]
    %v1976 = vmul.f32 %v1971, %v1974
    %v1977 = vmul.f32 %v1973, %v1975
    %v1978 = vpack.c.bf16 %v1977, %v1976
    %1979 = vst [vmem:[#allocation2] sm:$0xff] %v1978
    %1980 = vrot.lane.b32.xlu0 %v1964, 8
    %v1981 = vpop.permute.xlu0 %1980
    %1982 = vrot.lane.b32.xlu0 %v1967, 8
    %v1983 = vpop.permute.xlu0 %1982
    %s1984 = scalar_lea.vmem [#allocation3], 16
    %v1985 = vld [vmem:[%s1984] sm:$0xff]
    %v1986 = vld [vmem:[%s1984 + $0x8] sm:$0xff]
    %v1987 = vmul.f32 %v1981, %v1985
    %v1988 = vmul.f32 %v1983, %v1986
    %v1989 = vpack.c.bf16 %v1988, %v1987
    %1990 = vst [vmem:[#allocation2 + $0x20] sm:$0xff] %v1989
    %1991 = vrot.lane.b32.xlu0 %v1964, 7
    %v1992 = vpop.permute.xlu0 %1991
    %1993 = vrot.lane.b32.xlu0 %v1967, 7
    %v1994 = vpop.permute.xlu0 %1993
    %s1995 = scalar_lea.vmem [#allocation3], 32
    %v1996 = vld [vmem:[%s1995] sm:$0xff]
    %v1997 = vld [vmem:[%s1995 + $0x8] sm:$0xff]
    %v1998 = vmul.f32 %v1992, %v1996
    %v1999 = vmul.f32 %v1994, %v1997
    %v2000 = vpack.c.bf16 %v1999, %v1998
    %2001 = vst [vmem:[#allocation2 + $0x40] sm:$0xff] %v2000
    %2002 = vrot.lane.b32.xlu0 %v1964, 1
    %v2003 = vpop.permute.xlu0 %2002
    %2004 = vrot.lane.b32.xlu0 %v1967, 1
    %v2005 = vpop.permute.xlu0 %2004
    %s2006 = scalar_lea.vmem [#allocation3], 48
    %v2007 = vld [vmem:[%s2006] sm:$0xff]
    %v2008 = vld [vmem:[%s2006 + $0x8] sm:$0xff]
    %v2009 = vmul.f32 %v2003, %v2007
    %v2010 = vmul.f32 %v2005, %v2008
    %v2011 = vpack.c.bf16 %v2010, %v2009
    %2012 = vst [vmem:[#allocation2 + $0x60] sm:$0xff] %v2011
    %v2013 = vpack.c.bf16 %v1967, %v1964
    %2014 = vst [vmem:[#allocation2 + $0x80] sm:$0xff] %v2013
    %2015 = vrot.lane.b32.xlu0 %v1964, 127
    %v2016 = vpop.permute.xlu0 %2015
    %2017 = vrot.lane.b32.xlu0 %v1967, 127
    %v2018 = vpop.permute.xlu0 %2017
    %s2019 = scalar_lea.vmem [#allocation3], 80
    %v2020 = vld [vmem:[%s2019] sm:$0xff]
    %v2021 = vld [vmem:[%s2019 + $0x8] sm:$0xff]
    %v2022 = vmul.f32 %v2016, %v2020
    %v2023 = vmul.f32 %v2018, %v2021
    %v2024 = vpack.c.bf16 %v2023, %v2022
    %2025 = vst [vmem:[#allocation2 + $0xa0] sm:$0xff] %v2024
    %2026 = vrot.lane.b32.xlu0 %v1964, 121
    %v2027 = vpop.permute.xlu0 %2026
    %2028 = vrot.lane.b32.xlu0 %v1967, 121
    %v2029 = vpop.permute.xlu0 %2028
    %s2030 = scalar_lea.vmem [#allocation3], 96
    %v2031 = vld [vmem:[%s2030] sm:$0xff]
    %v2032 = vld [vmem:[%s2030 + $0x8] sm:$0xff]
    %v2033 = vmul.f32 %v2027, %v2031
    %v2034 = vmul.f32 %v2029, %v2032
    %v2035 = vpack.c.bf16 %v2034, %v2033
    %2036 = vst [vmem:[#allocation2 + $0xc0] sm:$0xff] %v2035
    %2037 = vrot.lane.b32.xlu0 %v1964, 120
    %v2038 = vpop.permute.xlu0 %2037
    %2039 = vrot.lane.b32.xlu0 %v1967, 120
    %v2040 = vpop.permute.xlu0 %2039
    %s2041 = scalar_lea.vmem [#allocation3], 112
    %v2042 = vld [vmem:[%s2041] sm:$0xff]
    %v2043 = vld [vmem:[%s2041 + $0x8] sm:$0xff]
    %v2044 = vmul.f32 %v2038, %v2042
    %v2045 = vmul.f32 %v2040, %v2043
    %v2046 = vpack.c.bf16 %v2045, %v2044
    %2047 = vst [vmem:[#allocation2 + $0xe0] sm:$0xff] %v2046
    %2048 = vrot.lane.b32.xlu0 %v1964, 119
    %v2049 = vpop.permute.xlu0 %2048
    %2050 = vrot.lane.b32.xlu0 %v1967, 119
    %v2051 = vpop.permute.xlu0 %2050
    %s2052 = scalar_lea.vmem [#allocation3], 128
    %v2053 = vld [vmem:[%s2052] sm:$0xff]
    %v2054 = vld [vmem:[%s2052 + $0x8] sm:$0xff]
    %v2055 = vmul.f32 %v2049, %v2053
    %v2056 = vmul.f32 %v2051, %v2054
    %v2057 = vpack.c.bf16 %v2056, %v2055
    %2058 = vst [vmem:[#allocation2 + $0x100] sm:$0xff] %v2057
    %v2059 = vld [vmem:[%s25] sm:$0xff]
    %v2060 = vld [vmem:[%s25 + $0x8] sm:$0xff]
    %v2061 = vld [vmem:[#allocation2] sm:$0xff]
    %v2062 = vld [vmem:[#allocation2 + $0x20] sm:$0xff]
    %v2063 = vld [vmem:[#allocation2 + $0x40] sm:$0xff]
    %v2064 = vld [vmem:[#allocation2 + $0x60] sm:$0xff]
    %v2065 = vld [vmem:[#allocation2 + $0x80] sm:$0xff]
    %v2066 = vld [vmem:[#allocation2 + $0xa0] sm:$0xff]
    %v2067 = vld [vmem:[#allocation2 + $0xc0] sm:$0xff]
    %v2068 = vld [vmem:[#allocation2 + $0xe0] sm:$0xff]
    %v2069 = vld [vmem:[#allocation2 + $0x100] sm:$0xff]
    %v2070 = vld [vmem:[%s27] sm:$0xff]
    %v2071 = vld [vmem:[%s27 + $0x8] sm:$0xff]
    %2073 = vset.pattern.permute.xlu0 0
    %2074 = vperm.xlu0 %2073, %v2070
    %v2075 = vpop.permute.xlu0 %2074
    %2078 = vset.pattern.permute.xlu0 0
    %2079 = vperm.xlu0 %2078, %v2071
    %v2080 = vpop.permute.xlu0 %2079
    %v2084 = vunpack.c.l.b16 %v2059
    %v2085 = vunpack.c.h.b16 %v2059
    %v2086 = vunpack.c.l.b16 %v2060
    %v2087 = vunpack.c.h.b16 %v2060
    %v2088 = vpack.c.b16 %v2086, %v2084
    %v2089 = vpack.c.b16 %v2087, %v2085
    %vm2091 = vcmask 130048
    %v2093 = vsel %vm2091, %v2089, 0
    %2095 = vmatprep.subr.bf16.mxu0 0
    %2096 = vmatpush1.bf16.msra.mxu0 %v2061
    %2097 = vmatprep.subr.bf16.mxu0 0
    %2098 = vmatpush1.bf16.msra.mxu0 %v2062
    %2099 = vmatprep.subr.bf16.mxu0 0
    %2100 = vmatpush1.bf16.msra.mxu0 %v2063
    %2101 = vmatprep.subr.bf16.mxu0 0
    %2102 = vmatpush1.bf16.msra.mxu0 %v2064
    %2103 = vmatprep.subr.bf16.mxu0 0
    %2104 = vmatpush1.bf16.msra.mxu0 %v2065
    %2105 = vmatprep.subr.bf16.mxu0 0
    %2106 = vmatpush1.bf16.msra.mxu0 %v2066
    %2107 = vmatprep.subr.bf16.mxu0 0
    %2108 = vmatpush1.bf16.msra.mxu0 %v2067
    %2109 = vmatprep.subr.bf16.mxu0 0
    %2110 = vmatpush1.bf16.msra.mxu0 %v2068
    %2111 = vmatprep.subr.bf16.mxu0 0
    %2112 = vmatpush1.bf16.msra.mxu0 %v2069
    %2113 = vmatprep.subr.bf16.mxu0 0
    %2114 = vmatpush1.bf16.msra.mxu0 0
    %2115 = vmatprep.subr.bf16.mxu0 0
    %2116 = vmatpush1.bf16.msra.mxu0 0
    %2117 = vmatprep.subr.bf16.mxu0 0
    %2118 = vmatpush1.bf16.msra.mxu0 0
    %2119 = vmatprep.subr.bf16.mxu0 0
    %2120 = vmatpush1.bf16.msra.mxu0 0
    %2121 = vmatprep.subr.bf16.mxu0 0
    %2122 = vmatpush1.bf16.msra.mxu0 0
    %2123 = vmatprep.subr.bf16.mxu0 0
    %2124 = vmatpush1.bf16.msra.mxu0 0
    %2125 = vmatprep.subr.bf16.mxu0 0
    %2126 = vmatpush1.bf16.msra.mxu0 0
    %2127 = vmatprep.mubr.bf16.mxu0 %v2093
    %2128 = vmatmul.mubr.bf16.gmra.mrb[0].mxu0 %v2088
    %v2129 = vpop.f32.mrb[0].mxu0
    %v2130 = vadd.f32 %v2075, %v2129
    %v2131 = vpop.f32.mrb[0].mxu0
    %v2132 = vpop.f32.mrb[0].mxu0
    %v2133 = vadd.f32 %v2080, %v2132
    %v2134 = vpop.f32.mrb[0].mxu0
    %2135 = vdwg.mxu0
    %v2136 = vsub.f32 0.0, %v2130
    %v2137 = vsub.f32 0.0, %v2133
    %v2138 = vmul.f32 %v2136, 1.442695
    %v2139 = vpow.pop %v2138
    %v2140 = vmul.f32 %v2137, 1.442695
    %v2141 = vpow.pop %v2140
    %v2142 = vadd.f32 %v2139, 1.0
    %v2143 = vadd.f32 %v2141, 1.0
    %v2144 = vrcp.pop %v2142
    %v2145 = vrcp.pop %v2143
    %v2146 = vmul.f32 %v2130, %v2144
    %v2147 = vmul.f32 %v2133, %v2145
    %2148 = vrot.lane.b32.xlu0 %v2146, 9
    %v2149 = vpop.permute.xlu0 %2148
    %2150 = vrot.lane.b32.xlu0 %v2147, 9
    %v2151 = vpop.permute.xlu0 %2150
    %v2152 = vld [vmem:[#allocation3] sm:$0xff]
    %v2153 = vld [vmem:[#allocation3 + $0x8] sm:$0xff]
    %v2154 = vmul.f32 %v2149, %v2152
    %v2155 = vmul.f32 %v2151, %v2153
    %v2156 = vpack.c.bf16 %v2155, %v2154
    %2157 = vst [vmem:[#allocation2] sm:$0xff] %v2156
    %2158 = vrot.lane.b32.xlu0 %v2146, 8
    %v2159 = vpop.permute.xlu0 %2158
    %2160 = vrot.lane.b32.xlu0 %v2147, 8
    %v2161 = vpop.permute.xlu0 %2160
    %v2162 = vld [vmem:[%s1984] sm:$0xff]
    %v2163 = vld [vmem:[%s1984 + $0x8] sm:$0xff]
    %v2164 = vmul.f32 %v2159, %v2162
    %v2165 = vmul.f32 %v2161, %v2163
    %v2166 = vpack.c.bf16 %v2165, %v2164
    %2167 = vst [vmem:[#allocation2 + $0x20] sm:$0xff] %v2166
    %2168 = vrot.lane.b32.xlu0 %v2146, 7
    %v2169 = vpop.permute.xlu0 %2168
    %2170 = vrot.lane.b32.xlu0 %v2147, 7
    %v2171 = vpop.permute.xlu0 %2170
    %v2172 = vld [vmem:[%s1995] sm:$0xff]
    %v2173 = vld [vmem:[%s1995 + $0x8] sm:$0xff]
    %v2174 = vmul.f32 %v2169, %v2172
    %v2175 = vmul.f32 %v2171, %v2173
    %v2176 = vpack.c.bf16 %v2175, %v2174
    %2177 = vst [vmem:[#allocation2 + $0x40] sm:$0xff] %v2176
    %2178 = vrot.lane.b32.xlu0 %v2146, 1
    %v2179 = vpop.permute.xlu0 %2178
    %2180 = vrot.lane.b32.xlu0 %v2147, 1
    %v2181 = vpop.permute.xlu0 %2180
    %v2182 = vld [vmem:[%s2006] sm:$0xff]
    %v2183 = vld [vmem:[%s2006 + $0x8] sm:$0xff]
    %v2184 = vmul.f32 %v2179, %v2182
    %v2185 = vmul.f32 %v2181, %v2183
    %v2186 = vpack.c.bf16 %v2185, %v2184
    %2187 = vst [vmem:[#allocation2 + $0x60] sm:$0xff] %v2186
    %v2188 = vpack.c.bf16 %v2147, %v2146
    %2189 = vst [vmem:[#allocation2 + $0x80] sm:$0xff] %v2188
    %2190 = vrot.lane.b32.xlu0 %v2146, 127
    %v2191 = vpop.permute.xlu0 %2190
    %2192 = vrot.lane.b32.xlu0 %v2147, 127
    %v2193 = vpop.permute.xlu0 %2192
    %v2194 = vld [vmem:[%s2019] sm:$0xff]
    %v2195 = vld [vmem:[%s2019 + $0x8] sm:$0xff]
    %v2196 = vmul.f32 %v2191, %v2194
    %v2197 = vmul.f32 %v2193, %v2195
    %v2198 = vpack.c.bf16 %v2197, %v2196
    %2199 = vst [vmem:[#allocation2 + $0xa0] sm:$0xff] %v2198
    %2200 = vrot.lane.b32.xlu0 %v2146, 121
    %v2201 = vpop.permute.xlu0 %2200
    %2202 = vrot.lane.b32.xlu0 %v2147, 121
    %v2203 = vpop.permute.xlu0 %2202
    %v2204 = vld [vmem:[%s2030] sm:$0xff]
    %v2205 = vld [vmem:[%s2030 + $0x8] sm:$0xff]
    %v2206 = vmul.f32 %v2201, %v2204
    %v2207 = vmul.f32 %v2203, %v2205
    %v2208 = vpack.c.bf16 %v2207, %v2206
    %2209 = vst [vmem:[#allocation2 + $0xc0] sm:$0xff] %v2208
    %2210 = vrot.lane.b32.xlu0 %v2146, 120
    %v2211 = vpop.permute.xlu0 %2210
    %2212 = vrot.lane.b32.xlu0 %v2147, 120
    %v2213 = vpop.permute.xlu0 %2212
    %v2214 = vld [vmem:[%s2041] sm:$0xff]
    %v2215 = vld [vmem:[%s2041 + $0x8] sm:$0xff]
    %v2216 = vmul.f32 %v2211, %v2214
    %v2217 = vmul.f32 %v2213, %v2215
    %v2218 = vpack.c.bf16 %v2217, %v2216
    %2219 = vst [vmem:[#allocation2 + $0xe0] sm:$0xff] %v2218
    %2220 = vrot.lane.b32.xlu0 %v2146, 119
    %v2221 = vpop.permute.xlu0 %2220
    %2222 = vrot.lane.b32.xlu0 %v2147, 119
    %v2223 = vpop.permute.xlu0 %2222
    %v2224 = vld [vmem:[%s2052] sm:$0xff]
    %v2225 = vld [vmem:[%s2052 + $0x8] sm:$0xff]
    %v2226 = vmul.f32 %v2221, %v2224
    %v2227 = vmul.f32 %v2223, %v2225
    %v2228 = vpack.c.bf16 %v2227, %v2226
    %2229 = vst [vmem:[#allocation2 + $0x100] sm:$0xff] %v2228
    %v2230 = vld [vmem:[#allocation13] sm:$0xff]
    %v2231 = vld [vmem:[#allocation2] sm:$0xff]
    %v2232 = vld [vmem:[#allocation2 + $0x20] sm:$0xff]
    %v2233 = vld [vmem:[#allocation2 + $0x40] sm:$0xff]
    %v2234 = vld [vmem:[#allocation2 + $0x60] sm:$0xff]
    %v2235 = vld [vmem:[#allocation2 + $0x80] sm:$0xff]
    %v2236 = vld [vmem:[#allocation2 + $0xa0] sm:$0xff]
    %v2237 = vld [vmem:[#allocation2 + $0xc0] sm:$0xff]
    %v2238 = vld [vmem:[#allocation2 + $0xe0] sm:$0xff]
    %v2239 = vld [vmem:[#allocation2 + $0x100] sm:$0xff]
    %v2240 = vld [vmem:[%s31] sm:$0xff]
    %2242 = vset.pattern.permute.xlu0 0
    %2243 = vperm.xlu0 %2242, %v2240
    %v2244 = vpop.permute.xlu0 %2243
    %v2247 = vunpack.c.l.b16 %v2230
    %v2248 = vunpack.c.h.b16 %v2230
    %v2249 = vpack.c.b16 %v2247, %v2247
    %v2250 = vpack.c.b16 %v2248, %v2248
    %v2253 = vsel %vm2091, %v2250, 0
    %2255 = vmatprep.subr.bf16.mxu0 0
    %2256 = vmatpush1.bf16.msra.mxu0 %v2231
    %2257 = vmatprep.subr.bf16.mxu0 0
    %2258 = vmatpush1.bf16.msra.mxu0 %v2232
    %2259 = vmatprep.subr.bf16.mxu0 0
    %2260 = vmatpush1.bf16.msra.mxu0 %v2233
    %2261 = vmatprep.subr.bf16.mxu0 0
    %2262 = vmatpush1.bf16.msra.mxu0 %v2234
    %2263 = vmatprep.subr.bf16.mxu0 0
    %2264 = vmatpush1.bf16.msra.mxu0 %v2235
    %2265 = vmatprep.subr.bf16.mxu0 0
    %2266 = vmatpush1.bf16.msra.mxu0 %v2236
    %2267 = vmatprep.subr.bf16.mxu0 0
    %2268 = vmatpush1.bf16.msra.mxu0 %v2237
    %2269 = vmatprep.subr.bf16.mxu0 0
    %2270 = vmatpush1.bf16.msra.mxu0 %v2238
    %2271 = vmatprep.subr.bf16.mxu0 0
    %2272 = vmatpush1.bf16.msra.mxu0 %v2239
    %2273 = vmatprep.subr.bf16.mxu0 0
    %2274 = vmatpush1.bf16.msra.mxu0 0
    %2275 = vmatprep.subr.bf16.mxu0 0
    %2276 = vmatpush1.bf16.msra.mxu0 0
    %2277 = vmatprep.subr.bf16.mxu0 0
    %2278 = vmatpush1.bf16.msra.mxu0 0
    %2279 = vmatprep.subr.bf16.mxu0 0
    %2280 = vmatpush1.bf16.msra.mxu0 0
    %2281 = vmatprep.subr.bf16.mxu0 0
    %2282 = vmatpush1.bf16.msra.mxu0 0
    %2283 = vmatprep.subr.bf16.mxu0 0
    %2284 = vmatpush1.bf16.msra.mxu0 0
    %2285 = vmatprep.subr.bf16.mxu0 0
    %2286 = vmatpush1.bf16.msra.mxu0 0
    %2287 = vmatprep.mubr.bf16.mxu0 %v2253
    %2288 = vmatmul.mubr.bf16.gmra.mrb[0].mxu0 %v2249
    %v2289 = vpop.f32.mrb[0].mxu0
    %v2290 = vadd.f32 %v2244, %v2289
    %v2291 = vpop.f32.mrb[0].mxu0
    %v2292 = vpop.f32.mrb[0].mxu0
    %v2293 = vpop.f32.mrb[0].mxu0
    %2294 = vdwg.mxu0
    %v2295 = vld [vmem:[#allocation14] sm:$0xf]
    %v2296 = vpack.c.bf16 %v2290, %v2290
    %v2297 = vld [vmem:[%s35] sm:$0xff]
    %2299 = vset.pattern.permute.xlu0 0
    %2300 = vperm.xlu0 %2299, %v2297
    %v2301 = vpop.permute.xlu0 %2300
    %vm2303 = vcmask 64512
    %v2305 = vsel %vm2303, %v2295, 0
    %v2308 = vsel %vm613, %v2296, 0
    %2310 = vmatprep.subr.bf16.mxu0 0
    %2311 = vmatpush1.bf16.msra.mxu0 %v2308
    %2312 = vmatprep.subr.bf16.mxu0 0
    %2313 = vmatpush1.bf16.msra.mxu0 0
    %2314 = vmatprep.subr.bf16.mxu0 0
    %2315 = vmatpush1.bf16.msra.mxu0 0
    %2316 = vmatprep.subr.bf16.mxu0 0
    %2317 = vmatpush1.bf16.msra.mxu0 0
    %2318 = vmatprep.subr.bf16.mxu0 0
    %2319 = vmatpush1.bf16.msra.mxu0 0
    %2320 = vmatprep.subr.bf16.mxu0 0
    %2321 = vmatpush1.bf16.msra.mxu0 0
    %2322 = vmatprep.subr.bf16.mxu0 0
    %2323 = vmatpush1.bf16.msra.mxu0 0
    %2324 = vmatprep.subr.bf16.mxu0 0
    %2325 = vmatpush1.bf16.msra.mxu0 0
    %2326 = vmatprep.subr.bf16.mxu0 0
    %2327 = vmatpush1.bf16.msra.mxu0 0
    %2328 = vmatprep.subr.bf16.mxu0 0
    %2329 = vmatpush1.bf16.msra.mxu0 0
    %2330 = vmatprep.subr.bf16.mxu0 0
    %2331 = vmatpush1.bf16.msra.mxu0 0
    %2332 = vmatprep.subr.bf16.mxu0 0
    %2333 = vmatpush1.bf16.msra.mxu0 0
    %2334 = vmatprep.subr.bf16.mxu0 0
    %2335 = vmatpush1.bf16.msra.mxu0 0
    %2336 = vmatprep.subr.bf16.mxu0 0
    %2337 = vmatpush1.bf16.msra.mxu0 0
    %2338 = vmatprep.subr.bf16.mxu0 0
    %2339 = vmatpush1.bf16.msra.mxu0 0
    %2340 = vmatprep.subr.bf16.mxu0 0
    %2341 = vmatpush1.bf16.msra.mxu0 0
    %2342 = vmatprep.mubr.bf16.mxu0 0
    %2343 = vmatmul.mubr.bf16.gmra.mrb[0].mxu0 %v2305
    %v2344 = vpop.f32.mrb[0].mxu0
    %v2345 = vadd.f32 %v2301, %v2344
    %v2346 = vpop.f32.mrb[0].mxu0
    %v2347 = vpop.f32.mrb[0].mxu0
    %v2348 = vpop.f32.mrb[0].mxu0
    %2349 = vdwg.mxu0
    %v2350 = vmax.f32 %v2345, -30.0
    %v2351 = vmin.f32 %v2350, 20.0
    %v2352 = vsel %vm613, %v2345, %v2351
    %2353 = vst [vmem:[%s63] sm:$0xff] %v2352
    %v2354 = vld [vmem:[%s37] sm:$0xf]
    %v2355 = vpack.c.bf16 %v2345, %v2345
    %v2356 = vld [vmem:[%s39] sm:$0xff]
    %2358 = vset.pattern.permute.xlu0 0
    %2359 = vperm.xlu0 %2358, %v2356
    %v2360 = vpop.permute.xlu0 %2359
    %vm2362 = vcmask 31744
    %v2364 = vsel %vm2362, %v2354, 0
    %vm2366 = vcmask 1041408
    %v2368 = vsel %vm2366, %v2355, 0
    %2370 = vmatprep.subr.bf16.mxu0 0
    %2371 = vmatpush1.bf16.msra.mxu0 %v2368
    %2372 = vmatprep.subr.bf16.mxu0 0
    %2373 = vmatpush1.bf16.msra.mxu0 0
    %2374 = vmatprep.subr.bf16.mxu0 0
    %2375 = vmatpush1.bf16.msra.mxu0 0
    %2376 = vmatprep.subr.bf16.mxu0 0
    %2377 = vmatpush1.bf16.msra.mxu0 0
    %2378 = vmatprep.subr.bf16.mxu0 0
    %2379 = vmatpush1.bf16.msra.mxu0 0
    %2380 = vmatprep.subr.bf16.mxu0 0
    %2381 = vmatpush1.bf16.msra.mxu0 0
    %2382 = vmatprep.subr.bf16.mxu0 0
    %2383 = vmatpush1.bf16.msra.mxu0 0
    %2384 = vmatprep.subr.bf16.mxu0 0
    %2385 = vmatpush1.bf16.msra.mxu0 0
    %2386 = vmatprep.subr.bf16.mxu0 0
    %2387 = vmatpush1.bf16.msra.mxu0 0
    %2388 = vmatprep.subr.bf16.mxu0 0
    %2389 = vmatpush1.bf16.msra.mxu0 0
    %2390 = vmatprep.subr.bf16.mxu0 0
    %2391 = vmatpush1.bf16.msra.mxu0 0
    %2392 = vmatprep.subr.bf16.mxu0 0
    %2393 = vmatpush1.bf16.msra.mxu0 0
    %2394 = vmatprep.subr.bf16.mxu0 0
    %2395 = vmatpush1.bf16.msra.mxu0 0
    %2396 = vmatprep.subr.bf16.mxu0 0
    %2397 = vmatpush1.bf16.msra.mxu0 0
    %2398 = vmatprep.subr.bf16.mxu0 0
    %2399 = vmatpush1.bf16.msra.mxu0 0
    %2400 = vmatprep.subr.bf16.mxu0 0
    %2401 = vmatpush1.bf16.msra.mxu0 0
    %2402 = vmatprep.mubr.bf16.mxu0 0
    %2403 = vmatmul.mubr.bf16.gmra.mrb[0].mxu0 %v2364
    %v2404 = vpop.f32.mrb[0].mxu0
    %v2405 = vadd.f32 %v2360, %v2404
    %v2406 = vpop.f32.mrb[0].mxu0
    %v2407 = vpop.f32.mrb[0].mxu0
    %v2408 = vpop.f32.mrb[0].mxu0
    %2409 = vdwg.mxu0
    %2410 = vrot.lane.b32.xlu0 %v2405, 9
    %v2411 = vpop.permute.xlu0 %2410
    %v2412 = vld [vmem:[#allocation3] sm:$0xff]
    %v2413 = vmul.f32 %v2411, %v2412
    %v2414 = vpack.c.bf16 %v2413, %v2413
    %2415 = vst [vmem:[#allocation2] sm:$0xf] %v2414
    %2416 = vrot.lane.b32.xlu0 %v2405, 8
    %v2417 = vpop.permute.xlu0 %2416
    %v2418 = vld [vmem:[%s1984] sm:$0xff]
    %v2419 = vmul.f32 %v2417, %v2418
    %v2420 = vpack.c.bf16 %v2419, %v2419
    %v2422 = vrot.slane %v2420, 4
    %2424 = vst [vmem:[#allocation2] sm:$0xf0] %v2422
    %2425 = vrot.lane.b32.xlu0 %v2405, 7
    %v2426 = vpop.permute.xlu0 %2425
    %v2427 = vld [vmem:[%s1995] sm:$0xff]
    %v2428 = vmul.f32 %v2426, %v2427
    %v2429 = vpack.c.bf16 %v2428, %v2428
    %2430 = vst [vmem:[#allocation2 + $0x20] sm:$0xf] %v2429
    %2431 = vrot.lane.b32.xlu0 %v2405, 1
    %v2432 = vpop.permute.xlu0 %2431
    %v2433 = vld [vmem:[%s2006] sm:$0xff]
    %v2434 = vmul.f32 %v2432, %v2433
    %v2435 = vpack.c.bf16 %v2434, %v2434
    %v2437 = vrot.slane %v2435, 4
    %2439 = vst [vmem:[#allocation2 + $0x20] sm:$0xf0] %v2437
    %v2440 = vpack.c.bf16 %v2405, %v2405
    %2441 = vst [vmem:[#allocation2 + $0x40] sm:$0xf] %v2440
    %2442 = vrot.lane.b32.xlu0 %v2405, 127
    %v2443 = vpop.permute.xlu0 %2442
    %v2444 = vld [vmem:[%s2019] sm:$0xff]
    %v2445 = vmul.f32 %v2443, %v2444
    %v2446 = vpack.c.bf16 %v2445, %v2445
    %v2448 = vrot.slane %v2446, 4
    %2450 = vst [vmem:[#allocation2 + $0x40] sm:$0xf0] %v2448
    %2451 = vrot.lane.b32.xlu0 %v2405, 121
    %v2452 = vpop.permute.xlu0 %2451
    %v2453 = vld [vmem:[%s2030] sm:$0xff]
    %v2454 = vmul.f32 %v2452, %v2453
    %v2455 = vpack.c.bf16 %v2454, %v2454
    %2456 = vst [vmem:[#allocation2 + $0x60] sm:$0xf] %v2455
    %2457 = vrot.lane.b32.xlu0 %v2405, 120
    %v2458 = vpop.permute.xlu0 %2457
    %v2459 = vld [vmem:[%s2041] sm:$0xff]
    %v2460 = vmul.f32 %v2458, %v2459
    %v2461 = vpack.c.bf16 %v2460, %v2460
    %v2463 = vrot.slane %v2461, 4
    %2465 = vst [vmem:[#allocation2 + $0x60] sm:$0xf0] %v2463
    %2466 = vrot.lane.b32.xlu0 %v2405, 119
    %v2467 = vpop.permute.xlu0 %2466
    %v2468 = vld [vmem:[%s2052] sm:$0xff]
    %v2469 = vmul.f32 %v2467, %v2468
    %v2470 = vpack.c.bf16 %v2469, %v2469
    %2471 = vst [vmem:[#allocation2 + $0x80] sm:$0xf] %v2470
    %v2472 = vld [vmem:[#allocation16] sm:$0xf]
    %v2473 = vld [vmem:[#allocation16 + $0x4] sm:$0xf]
    %v2474 = vld [vmem:[#allocation2] sm:$0xff]
    %v2475 = vld [vmem:[#allocation2 + $0x20] sm:$0xff]
    %v2476 = vld [vmem:[#allocation2 + $0x40] sm:$0xff]
    %v2477 = vld [vmem:[#allocation2 + $0x60] sm:$0xff]
    %v2478 = vld [vmem:[#allocation2 + $0x80] sm:$0xf]
    %v2479 = vld [vmem:[%s43] sm:$0xff]
    %v2480 = vld [vmem:[%s43 + $0x8] sm:$0xff]
    %2482 = vset.pattern.permute.xlu0 0
    %2483 = vperm.xlu0 %2482, %v2479
    %v2484 = vpop.permute.xlu0 %2483
    %2487 = vset.pattern.permute.xlu0 0
    %2488 = vperm.xlu0 %2487, %v2480
    %v2489 = vpop.permute.xlu0 %2488
    %v2493 = vunpack.c.l.b16 %v2472
    %v2494 = vunpack.c.l.b16 %v2473
    %v2495 = vpack.c.b16 %v2494, %v2493
    %v2497 = vsel %vm609, %v2495, 0
    %v2500 = vsel %vm613, %v2478, 0
    %2502 = vmatprep.subr.bf16.mxu0 0
    %2503 = vmatpush1.bf16.msra.mxu0 %v2474
    %2504 = vmatprep.subr.bf16.mxu0 0
    %2505 = vmatpush1.bf16.msra.mxu0 %v2475
    %2506 = vmatprep.subr.bf16.mxu0 0
    %2507 = vmatpush1.bf16.msra.mxu0 %v2476
    %2508 = vmatprep.subr.bf16.mxu0 0
    %2509 = vmatpush1.bf16.msra.mxu0 %v2477
    %2510 = vmatprep.subr.bf16.mxu0 0
    %2511 = vmatpush1.bf16.msra.mxu0 %v2500
    %2512 = vmatprep.subr.bf16.mxu0 0
    %2513 = vmatpush1.bf16.msra.mxu0 0
    %2514 = vmatprep.subr.bf16.mxu0 0
    %2515 = vmatpush1.bf16.msra.mxu0 0
    %2516 = vmatprep.subr.bf16.mxu0 0
    %2517 = vmatpush1.bf16.msra.mxu0 0
    %2518 = vmatprep.subr.bf16.mxu0 0
    %2519 = vmatpush1.bf16.msra.mxu0 0
    %2520 = vmatprep.subr.bf16.mxu0 0
    %2521 = vmatpush1.bf16.msra.mxu0 0
    %2522 = vmatprep.subr.bf16.mxu0 0
    %2523 = vmatpush1.bf16.msra.mxu0 0
    %2524 = vmatprep.subr.bf16.mxu0 0
    %2525 = vmatpush1.bf16.msra.mxu0 0
    %2526 = vmatprep.subr.bf16.mxu0 0
    %2527 = vmatpush1.bf16.msra.mxu0 0
    %2528 = vmatprep.subr.bf16.mxu0 0
    %2529 = vmatpush1.bf16.msra.mxu0 0
    %2530 = vmatprep.subr.bf16.mxu0 0
    %2531 = vmatpush1.bf16.msra.mxu0 0
    %2532 = vmatprep.subr.bf16.mxu0 0
    %2533 = vmatpush1.bf16.msra.mxu0 0
    %2534 = vmatprep.mubr.bf16.mxu0 0
    %2535 = vmatmul.mubr.bf16.gmra.mrb[0].mxu0 %v2497
    %v2536 = vpop.f32.mrb[0].mxu0
    %v2537 = vadd.f32 %v2484, %v2536
    %v2538 = vpop.f32.mrb[0].mxu0
    %v2539 = vpop.f32.mrb[0].mxu0
    %v2540 = vadd.f32 %v2489, %v2539
    %v2541 = vpop.f32.mrb[0].mxu0
    %2542 = vdwg.mxu0
    %v2543 = vsub.f32 0.0, %v2537
    %v2544 = vsub.f32 0.0, %v2540
    %v2545 = vmul.f32 %v2543, 1.442695
    %v2546 = vpow.pop %v2545
    %v2547 = vmul.f32 %v2544, 1.442695
    %v2548 = vpow.pop %v2547
    %v2549 = vadd.f32 %v2546, 1.0
    %v2550 = vadd.f32 %v2548, 1.0
    %v2551 = vrcp.pop %v2549
    %v2552 = vrcp.pop %v2550
    %v2553 = vmul.f32 %v2537, %v2551
    %v2554 = vmul.f32 %v2540, %v2552
    %2555 = vrot.lane.b32.xlu0 %v2553, 9
    %v2556 = vpop.permute.xlu0 %2555
    %2557 = vrot.lane.b32.xlu0 %v2554, 9
    %v2558 = vpop.permute.xlu0 %2557
    %v2559 = vld [vmem:[#allocation3] sm:$0xff]
    %v2560 = vld [vmem:[#allocation3 + $0x8] sm:$0xff]
    %v2561 = vmul.f32 %v2556, %v2559
    %v2562 = vmul.f32 %v2558, %v2560
    %v2563 = vpack.c.bf16 %v2562, %v2561
    %2564 = vst [vmem:[#allocation2] sm:$0xff] %v2563
    %2565 = vrot.lane.b32.xlu0 %v2553, 8
    %v2566 = vpop.permute.xlu0 %2565
    %2567 = vrot.lane.b32.xlu0 %v2554, 8
    %v2568 = vpop.permute.xlu0 %2567
    %v2569 = vld [vmem:[%s1984] sm:$0xff]
    %v2570 = vld [vmem:[%s1984 + $0x8] sm:$0xff]
    %v2571 = vmul.f32 %v2566, %v2569
    %v2572 = vmul.f32 %v2568, %v2570
    %v2573 = vpack.c.bf16 %v2572, %v2571
    %2574 = vst [vmem:[#allocation2 + $0x20] sm:$0xff] %v2573
    %2575 = vrot.lane.b32.xlu0 %v2553, 7
    %v2576 = vpop.permute.xlu0 %2575
    %2577 = vrot.lane.b32.xlu0 %v2554, 7
    %v2578 = vpop.permute.xlu0 %2577
    %v2579 = vld [vmem:[%s1995] sm:$0xff]
    %v2580 = vld [vmem:[%s1995 + $0x8] sm:$0xff]
    %v2581 = vmul.f32 %v2576, %v2579
    %v2582 = vmul.f32 %v2578, %v2580
    %v2583 = vpack.c.bf16 %v2582, %v2581
    %2584 = vst [vmem:[#allocation2 + $0x40] sm:$0xff] %v2583
    %2585 = vrot.lane.b32.xlu0 %v2553, 1
    %v2586 = vpop.permute.xlu0 %2585
    %2587 = vrot.lane.b32.xlu0 %v2554, 1
    %v2588 = vpop.permute.xlu0 %2587
    %v2589 = vld [vmem:[%s2006] sm:$0xff]
    %v2590 = vld [vmem:[%s2006 + $0x8] sm:$0xff]
    %v2591 = vmul.f32 %v2586, %v2589
    %v2592 = vmul.f32 %v2588, %v2590
    %v2593 = vpack.c.bf16 %v2592, %v2591
    %2594 = vst [vmem:[#allocation2 + $0x60] sm:$0xff] %v2593
    %v2595 = vpack.c.bf16 %v2554, %v2553
    %2596 = vst [vmem:[#allocation2 + $0x80] sm:$0xff] %v2595
    %2597 = vrot.lane.b32.xlu0 %v2553, 127
    %v2598 = vpop.permute.xlu0 %2597
    %2599 = vrot.lane.b32.xlu0 %v2554, 127
    %v2600 = vpop.permute.xlu0 %2599
    %v2601 = vld [vmem:[%s2019] sm:$0xff]
    %v2602 = vld [vmem:[%s2019 + $0x8] sm:$0xff]
    %v2603 = vmul.f32 %v2598, %v2601
    %v2604 = vmul.f32 %v2600, %v2602
    %v2605 = vpack.c.bf16 %v2604, %v2603
    %2606 = vst [vmem:[#allocation2 + $0xa0] sm:$0xff] %v2605
    %2607 = vrot.lane.b32.xlu0 %v2553, 121
    %v2608 = vpop.permute.xlu0 %2607
    %2609 = vrot.lane.b32.xlu0 %v2554, 121
    %v2610 = vpop.permute.xlu0 %2609
    %v2611 = vld [vmem:[%s2030] sm:$0xff]
    %v2612 = vld [vmem:[%s2030 + $0x8] sm:$0xff]
    %v2613 = vmul.f32 %v2608, %v2611
    %v2614 = vmul.f32 %v2610, %v2612
    %v2615 = vpack.c.bf16 %v2614, %v2613
    %2616 = vst [vmem:[#allocation2 + $0xc0] sm:$0xff] %v2615
    %2617 = vrot.lane.b32.xlu0 %v2553, 120
    %v2618 = vpop.permute.xlu0 %2617
    %2619 = vrot.lane.b32.xlu0 %v2554, 120
    %v2620 = vpop.permute.xlu0 %2619
    %v2621 = vld [vmem:[%s2041] sm:$0xff]
    %v2622 = vld [vmem:[%s2041 + $0x8] sm:$0xff]
    %v2623 = vmul.f32 %v2618, %v2621
    %v2624 = vmul.f32 %v2620, %v2622
    %v2625 = vpack.c.bf16 %v2624, %v2623
    %2626 = vst [vmem:[#allocation2 + $0xe0] sm:$0xff] %v2625
    %2627 = vrot.lane.b32.xlu0 %v2553, 119
    %v2628 = vpop.permute.xlu0 %2627
    %2629 = vrot.lane.b32.xlu0 %v2554, 119
    %v2630 = vpop.permute.xlu0 %2629
    %v2631 = vld [vmem:[%s2052] sm:$0xff]
    %v2632 = vld [vmem:[%s2052 + $0x8] sm:$0xff]
    %v2633 = vmul.f32 %v2628, %v2631
    %v2634 = vmul.f32 %v2630, %v2632
    %v2635 = vpack.c.bf16 %v2634, %v2633
    %2636 = vst [vmem:[#allocation2 + $0x100] sm:$0xff] %v2635
    %v2637 = vld [vmem:[%s45] sm:$0xff]
    %v2638 = vld [vmem:[%s45 + $0x8] sm:$0xff]
    %v2639 = vld [vmem:[#allocation2] sm:$0xff]
    %v2640 = vld [vmem:[#allocation2 + $0x20] sm:$0xff]
    %v2641 = vld [vmem:[#allocation2 + $0x40] sm:$0xff]
    %v2642 = vld [vmem:[#allocation2 + $0x60] sm:$0xff]
    %v2643 = vld [vmem:[#allocation2 + $0x80] sm:$0xff]
    %v2644 = vld [vmem:[#allocation2 + $0xa0] sm:$0xff]
    %v2645 = vld [vmem:[#allocation2 + $0xc0] sm:$0xff]
    %v2646 = vld [vmem:[#allocation2 + $0xe0] sm:$0xff]
    %v2647 = vld [vmem:[#allocation2 + $0x100] sm:$0xff]
    %v2648 = vld [vmem:[%s47] sm:$0xff]
    %v2649 = vld [vmem:[%s47 + $0x8] sm:$0xff]
    %2651 = vset.pattern.permute.xlu0 0
    %2652 = vperm.xlu0 %2651, %v2648
    %v2653 = vpop.permute.xlu0 %2652
    %2656 = vset.pattern.permute.xlu0 0
    %2657 = vperm.xlu0 %2656, %v2649
    %v2658 = vpop.permute.xlu0 %2657
    %v2662 = vunpack.c.l.b16 %v2637
    %v2663 = vunpack.c.h.b16 %v2637
    %v2664 = vunpack.c.l.b16 %v2638
    %v2665 = vunpack.c.h.b16 %v2638
    %v2666 = vpack.c.b16 %v2664, %v2662
    %v2667 = vpack.c.b16 %v2665, %v2663
    %v2670 = vsel %vm2091, %v2667, 0
    %2672 = vmatprep.subr.bf16.mxu0 0
    %2673 = vmatpush1.bf16.msra.mxu0 %v2639
    %2674 = vmatprep.subr.bf16.mxu0 0
    %2675 = vmatpush1.bf16.msra.mxu0 %v2640
    %2676 = vmatprep.subr.bf16.mxu0 0
    %2677 = vmatpush1.bf16.msra.mxu0 %v2641
    %2678 = vmatprep.subr.bf16.mxu0 0
    %2679 = vmatpush1.bf16.msra.mxu0 %v2642
    %2680 = vmatprep.subr.bf16.mxu0 0
    %2681 = vmatpush1.bf16.msra.mxu0 %v2643
    %2682 = vmatprep.subr.bf16.mxu0 0
    %2683 = vmatpush1.bf16.msra.mxu0 %v2644
    %2684 = vmatprep.subr.bf16.mxu0 0
    %2685 = vmatpush1.bf16.msra.mxu0 %v2645
    %2686 = vmatprep.subr.bf16.mxu0 0
    %2687 = vmatpush1.bf16.msra.mxu0 %v2646
    %2688 = vmatprep.subr.bf16.mxu0 0
    %2689 = vmatpush1.bf16.msra.mxu0 %v2647
    %2690 = vmatprep.subr.bf16.mxu0 0
    %2691 = vmatpush1.bf16.msra.mxu0 0
    %2692 = vmatprep.subr.bf16.mxu0 0
    %2693 = vmatpush1.bf16.msra.mxu0 0
    %2694 = vmatprep.subr.bf16.mxu0 0
    %2695 = vmatpush1.bf16.msra.mxu0 0
    %2696 = vmatprep.subr.bf16.mxu0 0
    %2697 = vmatpush1.bf16.msra.mxu0 0
    %2698 = vmatprep.subr.bf16.mxu0 0
    %2699 = vmatpush1.bf16.msra.mxu0 0
    %2700 = vmatprep.subr.bf16.mxu0 0
    %2701 = vmatpush1.bf16.msra.mxu0 0
    %2702 = vmatprep.subr.bf16.mxu0 0
    %2703 = vmatpush1.bf16.msra.mxu0 0
    %2704 = vmatprep.mubr.bf16.mxu0 %v2670
    %2705 = vmatmul.mubr.bf16.gmra.mrb[0].mxu0 %v2666
    %v2706 = vpop.f32.mrb[0].mxu0
    %v2707 = vadd.f32 %v2653, %v2706
    %v2708 = vpop.f32.mrb[0].mxu0
    %v2709 = vpop.f32.mrb[0].mxu0
    %v2710 = vadd.f32 %v2658, %v2709
    %v2711 = vpop.f32.mrb[0].mxu0
    %2712 = vdwg.mxu0
    %v2713 = vsub.f32 0.0, %v2707
    %v2714 = vsub.f32 0.0, %v2710
    %v2715 = vmul.f32 %v2713, 1.442695
    %v2716 = vpow.pop %v2715
    %v2717 = vmul.f32 %v2714, 1.442695
    %v2718 = vpow.pop %v2717
    %v2719 = vadd.f32 %v2716, 1.0
    %v2720 = vadd.f32 %v2718, 1.0
    %v2721 = vrcp.pop %v2719
    %v2722 = vrcp.pop %v2720
    %v2723 = vmul.f32 %v2707, %v2721
    %v2724 = vmul.f32 %v2710, %v2722
    %v2725 = vpack.c.bf16 %v2724, %v2723
    %v2726 = vld [vmem:[#allocation7] sm:$0xff]
    %v2727 = vld [vmem:[#allocation7 + $0x8] sm:$0xff]
    %v2728 = vld [vmem:[#allocation7 + $0x10] sm:$0xff]
    %v2729 = vld [vmem:[#allocation7 + $0x18] sm:$0xff]
    %v2730 = vld [vmem:[#allocation7 + $0x20] sm:$0xff]
    %v2731 = vld [vmem:[#allocation7 + $0x28] sm:$0xff]
    %v2732 = vld [vmem:[#allocation7 + $0x30] sm:$0xff]
    %v2733 = vld [vmem:[#allocation7 + $0x38] sm:$0xff]
    %v2734 = vld [vmem:[#allocation7 + $0x40] sm:$0xff]
    %v2735 = vld [vmem:[#allocation7 + $0x48] sm:$0xff]
    %v2736 = vld [vmem:[#allocation7 + $0x50] sm:$0xff]
    %v2737 = vld [vmem:[#allocation7 + $0x58] sm:$0xff]
    %v2738 = vld [vmem:[#allocation7 + $0x60] sm:$0xff]
    %v2739 = vld [vmem:[#allocation7 + $0x68] sm:$0xff]
    %v2740 = vld [vmem:[#allocation7 + $0x70] sm:$0xff]
    %v2741 = vld [vmem:[#allocation7 + $0x78] sm:$0xff]
    %v2742 = vld [vmem:[#allocation7 + $0x80] sm:$0xff]
    %v2743 = vld [vmem:[#allocation7 + $0x88] sm:$0xff]
    %v2744 = vld [vmem:[#allocation7 + $0x90] sm:$0xff]
    %v2745 = vld [vmem:[#allocation7 + $0x98] sm:$0xff]
    %v2746 = vld [vmem:[#allocation7 + $0xa0] sm:$0xff]
    %v2747 = vld [vmem:[#allocation7 + $0xa8] sm:$0xff]
    %v2748 = vld [vmem:[#allocation7 + $0xb0] sm:$0xff]
    %v2749 = vld [vmem:[#allocation7 + $0xb8] sm:$0xff]
    %v2750 = vld [vmem:[#allocation7 + $0xc0] sm:$0xff]
    %v2751 = vld [vmem:[#allocation7 + $0xc8] sm:$0xff]
    %v2752 = vld [vmem:[#allocation7 + $0xd0] sm:$0xff]
    %v2753 = vld [vmem:[#allocation7 + $0xd8] sm:$0xff]
    %v2754 = vld [vmem:[#allocation7 + $0xe0] sm:$0xff]
    %v2755 = vld [vmem:[#allocation7 + $0xe8] sm:$0xff]
    %v2756 = vld [vmem:[#allocation7 + $0xf0] sm:$0xff]
    %v2757 = vld [vmem:[#allocation7 + $0xf8] sm:$0xff]
    %v2790 = vunpack.c.l.b16 %v2726
    %v2791 = vunpack.c.h.b16 %v2726
    %v2792 = vunpack.c.l.b16 %v2727
    %v2793 = vunpack.c.h.b16 %v2727
    %v2794 = vunpack.c.l.b16 %v2728
    %v2795 = vunpack.c.h.b16 %v2728
    %v2796 = vunpack.c.l.b16 %v2729
    %v2797 = vunpack.c.h.b16 %v2729
    %v2798 = vunpack.c.l.b16 %v2730
    %v2799 = vunpack.c.h.b16 %v2730
    %v2800 = vunpack.c.l.b16 %v2731
    %v2801 = vunpack.c.h.b16 %v2731
    %v2802 = vunpack.c.l.b16 %v2732
    %v2803 = vunpack.c.h.b16 %v2732
    %v2804 = vunpack.c.l.b16 %v2733
    %v2805 = vunpack.c.h.b16 %v2733
    %v2806 = vunpack.c.l.b16 %v2734
    %v2807 = vunpack.c.h.b16 %v2734
    %v2808 = vunpack.c.l.b16 %v2735
    %v2809 = vunpack.c.h.b16 %v2735
    %v2810 = vunpack.c.l.b16 %v2736
    %v2811 = vunpack.c.h.b16 %v2736
    %v2812 = vunpack.c.l.b16 %v2737
    %v2813 = vunpack.c.h.b16 %v2737
    %v2814 = vunpack.c.l.b16 %v2738
    %v2815 = vunpack.c.h.b16 %v2738
    %v2816 = vunpack.c.l.b16 %v2739
    %v2817 = vunpack.c.h.b16 %v2739
    %v2818 = vunpack.c.l.b16 %v2740
    %v2819 = vunpack.c.h.b16 %v2740
    %v2820 = vunpack.c.l.b16 %v2741
    %v2821 = vunpack.c.h.b16 %v2741
    %v2822 = vunpack.c.l.b16 %v2742
    %v2823 = vunpack.c.h.b16 %v2742
    %v2824 = vunpack.c.l.b16 %v2743
    %v2825 = vunpack.c.h.b16 %v2743
    %v2826 = vunpack.c.l.b16 %v2744
    %v2827 = vunpack.c.h.b16 %v2744
    %v2828 = vunpack.c.l.b16 %v2745
    %v2829 = vunpack.c.h.b16 %v2745
    %v2830 = vunpack.c.l.b16 %v2746
    %v2831 = vunpack.c.h.b16 %v2746
    %v2832 = vunpack.c.l.b16 %v2747
    %v2833 = vunpack.c.h.b16 %v2747
    %v2834 = vunpack.c.l.b16 %v2748
    %v2835 = vunpack.c.h.b16 %v2748
    %v2836 = vunpack.c.l.b16 %v2749
    %v2837 = vunpack.c.h.b16 %v2749
    %v2838 = vunpack.c.l.b16 %v2750
    %v2839 = vunpack.c.h.b16 %v2750
    %v2840 = vunpack.c.l.b16 %v2751
    %v2841 = vunpack.c.h.b16 %v2751
    %v2842 = vunpack.c.l.b16 %v2752
    %v2843 = vunpack.c.h.b16 %v2752
    %v2844 = vunpack.c.l.b16 %v2753
    %v2845 = vunpack.c.h.b16 %v2753
    %v2846 = vunpack.c.l.b16 %v2754
    %v2847 = vunpack.c.h.b16 %v2754
    %v2848 = vunpack.c.l.b16 %v2755
    %v2849 = vunpack.c.h.b16 %v2755
    %v2850 = vunpack.c.l.b16 %v2756
    %v2851 = vunpack.c.h.b16 %v2756
    %v2852 = vunpack.c.l.b16 %v2757
    %v2853 = vunpack.c.h.b16 %v2757
    %v2854 = vpack.c.b16 %v2794, %v2790
    %v2855 = vpack.c.b16 %v2795, %v2791
    %v2856 = vpack.c.b16 %v2796, %v2792
    %v2857 = vpack.c.b16 %v2797, %v2793
    %v2858 = vpack.c.b16 %v2802, %v2798
    %v2859 = vpack.c.b16 %v2803, %v2799
    %v2860 = vpack.c.b16 %v2804, %v2800
    %v2861 = vpack.c.b16 %v2805, %v2801
    %v2862 = vpack.c.b16 %v2810, %v2806
    %v2863 = vpack.c.b16 %v2811, %v2807
    %v2864 = vpack.c.b16 %v2812, %v2808
    %v2865 = vpack.c.b16 %v2813, %v2809
    %v2866 = vpack.c.b16 %v2818, %v2814
    %v2867 = vpack.c.b16 %v2819, %v2815
    %v2868 = vpack.c.b16 %v2820, %v2816
    %v2869 = vpack.c.b16 %v2821, %v2817
    %v2870 = vpack.c.b16 %v2826, %v2822
    %v2871 = vpack.c.b16 %v2827, %v2823
    %v2872 = vpack.c.b16 %v2828, %v2824
    %v2873 = vpack.c.b16 %v2829, %v2825
    %v2874 = vpack.c.b16 %v2834, %v2830
    %v2875 = vpack.c.b16 %v2835, %v2831
    %v2876 = vpack.c.b16 %v2836, %v2832
    %v2877 = vpack.c.b16 %v2837, %v2833
    %v2878 = vpack.c.b16 %v2842, %v2838
    %v2879 = vpack.c.b16 %v2843, %v2839
    %v2880 = vpack.c.b16 %v2844, %v2840
    %v2881 = vpack.c.b16 %v2845, %v2841
    %v2882 = vpack.c.b16 %v2850, %v2846
    %v2883 = vpack.c.b16 %v2851, %v2847
    %v2884 = vpack.c.b16 %v2852, %v2848
    %v2885 = vpack.c.b16 %v2853, %v2849
    %2918 = vmatprep.subr.bf16.mxu0 %v2855
    %2919 = vmatpush1.bf16.msra.mxu0 %v2854
    %2920 = vmatprep.subr.bf16.mxu0 %v2859
    %2921 = vmatpush1.bf16.msra.mxu0 %v2858
    %2922 = vmatprep.subr.bf16.mxu0 %v2863
    %2923 = vmatpush1.bf16.msra.mxu0 %v2862
    %2924 = vmatprep.subr.bf16.mxu0 %v2867
    %2925 = vmatpush1.bf16.msra.mxu0 %v2866
    %2926 = vmatprep.subr.bf16.mxu0 %v2871
    %2927 = vmatpush1.bf16.msra.mxu0 %v2870
    %2928 = vmatprep.subr.bf16.mxu0 %v2875
    %2929 = vmatpush1.bf16.msra.mxu0 %v2874
    %2930 = vmatprep.subr.bf16.mxu0 %v2879
    %2931 = vmatpush1.bf16.msra.mxu0 %v2878
    %2932 = vmatprep.subr.bf16.mxu0 %v2883
    %2933 = vmatpush1.bf16.msra.mxu0 %v2882
    %2934 = vmatprep.subr.bf16.mxu0 0
    %2935 = vmatpush1.bf16.msra.mxu0 0
    %2936 = vmatprep.subr.bf16.mxu0 0
    %2937 = vmatpush1.bf16.msra.mxu0 0
    %2938 = vmatprep.subr.bf16.mxu0 0
    %2939 = vmatpush1.bf16.msra.mxu0 0
    %2940 = vmatprep.subr.bf16.mxu0 0
    %2941 = vmatpush1.bf16.msra.mxu0 0
    %2942 = vmatprep.subr.bf16.mxu0 0
    %2943 = vmatpush1.bf16.msra.mxu0 0
    %2944 = vmatprep.subr.bf16.mxu0 0
    %2945 = vmatpush1.bf16.msra.mxu0 0
    %2946 = vmatprep.subr.bf16.mxu0 0
    %2947 = vmatpush1.bf16.msra.mxu0 0
    %2948 = vmatprep.subr.bf16.mxu0 0
    %2949 = vmatpush1.bf16.msra.mxu0 0
    %2950 = vmatprep.mubr.bf16.mxu0 0
    %2951 = vmatmul.mubr.bf16.gmra.mrb[0].mxu0 %v2725
    %v2952 = vpop.f32.mrb[0].mxu0
    %v2953 = vadd.f32 0.0, %v2952
    %v2954 = vpop.f32.mrb[0].mxu0
    %v2955 = vadd.f32 0.0, %v2954
    %v2956 = vpop.f32.mrb[0].mxu0
    %v2957 = vadd.f32 0.0, %v2956
    %v2958 = vpop.f32.mrb[0].mxu0
    %v2959 = vadd.f32 0.0, %v2958
    %2960 = vdwg.mxu0
    %2961 = vmatprep.subr.bf16.mxu0 %v2857
    %2962 = vmatpush1.bf16.msra.mxu0 %v2856
    %2963 = vmatprep.subr.bf16.mxu0 %v2861
    %2964 = vmatpush1.bf16.msra.mxu0 %v2860
    %2965 = vmatprep.subr.bf16.mxu0 %v2865
    %2966 = vmatpush1.bf16.msra.mxu0 %v2864
    %2967 = vmatprep.subr.bf16.mxu0 %v2869
    %2968 = vmatpush1.bf16.msra.mxu0 %v2868
    %2969 = vmatprep.subr.bf16.mxu0 %v2873
    %2970 = vmatpush1.bf16.msra.mxu0 %v2872
    %2971 = vmatprep.subr.bf16.mxu0 %v2877
    %2972 = vmatpush1.bf16.msra.mxu0 %v2876
    %2973 = vmatprep.subr.bf16.mxu0 %v2881
    %2974 = vmatpush1.bf16.msra.mxu0 %v2880
    %2975 = vmatprep.subr.bf16.mxu0 %v2885
    %2976 = vmatpush1.bf16.msra.mxu0 %v2884
    %2977 = vmatprep.subr.bf16.mxu0 0
    %2978 = vmatpush1.bf16.msra.mxu0 0
    %2979 = vmatprep.subr.bf16.mxu0 0
    %2980 = vmatpush1.bf16.msra.mxu0 0
    %2981 = vmatprep.subr.bf16.mxu0 0
    %2982 = vmatpush1.bf16.msra.mxu0 0
    %2983 = vmatprep.subr.bf16.mxu0 0
    %2984 = vmatpush1.bf16.msra.mxu0 0
    %2985 = vmatprep.subr.bf16.mxu0 0
    %2986 = vmatpush1.bf16.msra.mxu0 0
    %2987 = vmatprep.subr.bf16.mxu0 0
    %2988 = vmatpush1.bf16.msra.mxu0 0
    %2989 = vmatprep.subr.bf16.mxu0 0
    %2990 = vmatpush1.bf16.msra.mxu0 0
    %2991 = vmatprep.subr.bf16.mxu0 0
    %2992 = vmatpush1.bf16.msra.mxu0 0
    %2993 = vmatprep.mubr.bf16.mxu0 0
    %2994 = vmatmul.mubr.bf16.gmra.mrb[0].mxu0 %v2725
    %v2995 = vpop.f32.mrb[0].mxu0
    %v2996 = vadd.f32 0.0, %v2995
    %v2997 = vpop.f32.mrb[0].mxu0
    %v2998 = vadd.f32 0.0, %v2997
    %v2999 = vpop.f32.mrb[0].mxu0
    %v3000 = vadd.f32 0.0, %v2999
    %v3001 = vpop.f32.mrb[0].mxu0
    %v3002 = vadd.f32 0.0, %v3001
    %3003 = vdwg.mxu0
    %3004 = vrot.lane.b32.xlu0 %v2953, 17
    %v3005 = vpop.permute.xlu0 %3004
    %3006 = vrot.lane.b32.xlu0 %v2957, 17
    %v3007 = vpop.permute.xlu0 %3006
    %3008 = vrot.lane.b32.xlu0 %v2955, 17
    %v3009 = vpop.permute.xlu0 %3008
    %3010 = vrot.lane.b32.xlu0 %v2959, 17
    %v3011 = vpop.permute.xlu0 %3010
    %3012 = vrot.lane.b32.xlu0 %v2996, 17
    %v3013 = vpop.permute.xlu0 %3012
    %3014 = vrot.lane.b32.xlu0 %v3000, 17
    %v3015 = vpop.permute.xlu0 %3014
    %3016 = vrot.lane.b32.xlu0 %v2998, 17
    %v3017 = vpop.permute.xlu0 %3016
    %3018 = vrot.lane.b32.xlu0 %v3002, 17
    %v3019 = vpop.permute.xlu0 %3018
    %v3020 = vsel %vm295, %v3013, %v3017
    %v3021 = vsel %vm295, %v3015, %v3019
    %v3022 = vsel %vm295, %v3009, %v3013
    %v3023 = vsel %vm295, %v3011, %v3015
    %v3024 = vsel %vm295, %v3005, %v3009
    %v3025 = vsel %vm295, %v3007, %v3011
    %v3026 = vsel %vm295, %v3017, %v3005
    %v3027 = vsel %vm295, %v3019, %v3007
    %v3028 = vld [vmem:[%s5] sm:$0xff]
    %v3029 = vld [vmem:[%s5 + $0x8] sm:$0xff]
    %v3030 = vld [vmem:[%s5 + $0x10] sm:$0xff]
    %v3031 = vld [vmem:[%s5 + $0x18] sm:$0xff]
    %v3032 = vld [vmem:[%s5 + $0x20] sm:$0xff]
    %v3033 = vld [vmem:[%s5 + $0x28] sm:$0xff]
    %v3034 = vld [vmem:[%s5 + $0x30] sm:$0xff]
    %v3035 = vld [vmem:[%s5 + $0x38] sm:$0xff]
    %v3036 = vmul.f32 %v3026, %v3028
    %v3037 = vmul.f32 %v3024, %v3029
    %v3038 = vmul.f32 %v3022, %v3030
    %v3039 = vmul.f32 %v3020, %v3031
    %v3040 = vmul.f32 %v3027, %v3032
    %v3041 = vmul.f32 %v3025, %v3033
    %v3042 = vmul.f32 %v3023, %v3034
    %v3043 = vmul.f32 %v3021, %v3035
    %v3044 = vpack.c.bf16 %v3040, %v3036
    %v3045 = vpack.c.bf16 %v3041, %v3037
    %v3046 = vpack.c.bf16 %v3042, %v3038
    %v3047 = vpack.c.bf16 %v3043, %v3039
    %3048 = vst [vmem:[#allocation2] sm:$0xff] %v3044
    %3049 = vst [vmem:[#allocation2 + $0x8] sm:$0xff] %v3045
    %3050 = vst [vmem:[#allocation2 + $0x10] sm:$0xff] %v3046
    %3051 = vst [vmem:[#allocation2 + $0x18] sm:$0xff] %v3047
    %3052 = vrot.lane.b32.xlu0 %v2953, 16
    %v3053 = vpop.permute.xlu0 %3052
    %3054 = vrot.lane.b32.xlu0 %v2957, 16
    %v3055 = vpop.permute.xlu0 %3054
    %3056 = vrot.lane.b32.xlu0 %v2955, 16
    %v3057 = vpop.permute.xlu0 %3056
    %3058 = vrot.lane.b32.xlu0 %v2959, 16
    %v3059 = vpop.permute.xlu0 %3058
    %3060 = vrot.lane.b32.xlu0 %v2996, 16
    %v3061 = vpop.permute.xlu0 %3060
    %3062 = vrot.lane.b32.xlu0 %v3000, 16
    %v3063 = vpop.permute.xlu0 %3062
    %3064 = vrot.lane.b32.xlu0 %v2998, 16
    %v3065 = vpop.permute.xlu0 %3064
    %3066 = vrot.lane.b32.xlu0 %v3002, 16
    %v3067 = vpop.permute.xlu0 %3066
    %v3068 = vsel %vm324, %v3061, %v3065
    %v3069 = vsel %vm324, %v3063, %v3067
    %v3070 = vsel %vm324, %v3057, %v3061
    %v3071 = vsel %vm324, %v3059, %v3063
    %v3072 = vsel %vm324, %v3053, %v3057
    %v3073 = vsel %vm324, %v3055, %v3059
    %v3074 = vsel %vm324, %v3065, %v3053
    %v3075 = vsel %vm324, %v3067, %v3055
    %v3076 = vld [vmem:[%s329] sm:$0xff]
    %v3077 = vld [vmem:[%s329 + $0x8] sm:$0xff]
    %v3078 = vld [vmem:[%s329 + $0x10] sm:$0xff]
    %v3079 = vld [vmem:[%s329 + $0x18] sm:$0xff]
    %v3080 = vld [vmem:[%s329 + $0x20] sm:$0xff]
    %v3081 = vld [vmem:[%s329 + $0x28] sm:$0xff]
    %v3082 = vld [vmem:[%s329 + $0x30] sm:$0xff]
    %v3083 = vld [vmem:[%s329 + $0x38] sm:$0xff]
    %v3084 = vmul.f32 %v3074, %v3076
    %v3085 = vmul.f32 %v3072, %v3077
    %v3086 = vmul.f32 %v3070, %v3078
    %v3087 = vmul.f32 %v3068, %v3079
    %v3088 = vmul.f32 %v3075, %v3080
    %v3089 = vmul.f32 %v3073, %v3081
    %v3090 = vmul.f32 %v3071, %v3082
    %v3091 = vmul.f32 %v3069, %v3083
    %v3092 = vpack.c.bf16 %v3088, %v3084
    %v3093 = vpack.c.bf16 %v3089, %v3085
    %v3094 = vpack.c.bf16 %v3090, %v3086
    %v3095 = vpack.c.bf16 %v3091, %v3087
    %3096 = vst [vmem:[#allocation2 + $0x20] sm:$0xff] %v3092
    %3097 = vst [vmem:[#allocation2 + $0x28] sm:$0xff] %v3093
    %3098 = vst [vmem:[#allocation2 + $0x30] sm:$0xff] %v3094
    %3099 = vst [vmem:[#allocation2 + $0x38] sm:$0xff] %v3095
    %3100 = vrot.lane.b32.xlu0 %v2953, 15
    %v3101 = vpop.permute.xlu0 %3100
    %3102 = vrot.lane.b32.xlu0 %v2957, 15
    %v3103 = vpop.permute.xlu0 %3102
    %3104 = vrot.lane.b32.xlu0 %v2955, 15
    %v3105 = vpop.permute.xlu0 %3104
    %3106 = vrot.lane.b32.xlu0 %v2959, 15
    %v3107 = vpop.permute.xlu0 %3106
    %3108 = vrot.lane.b32.xlu0 %v2996, 15
    %v3109 = vpop.permute.xlu0 %3108
    %3110 = vrot.lane.b32.xlu0 %v3000, 15
    %v3111 = vpop.permute.xlu0 %3110
    %3112 = vrot.lane.b32.xlu0 %v2998, 15
    %v3113 = vpop.permute.xlu0 %3112
    %3114 = vrot.lane.b32.xlu0 %v3002, 15
    %v3115 = vpop.permute.xlu0 %3114
    %v3116 = vsel %vm366, %v3109, %v3113
    %v3117 = vsel %vm366, %v3111, %v3115
    %v3118 = vsel %vm366, %v3105, %v3109
    %v3119 = vsel %vm366, %v3107, %v3111
    %v3120 = vsel %vm366, %v3101, %v3105
    %v3121 = vsel %vm366, %v3103, %v3107
    %v3122 = vsel %vm366, %v3113, %v3101
    %v3123 = vsel %vm366, %v3115, %v3103
    %v3124 = vld [vmem:[%s371] sm:$0xff]
    %v3125 = vld [vmem:[%s371 + $0x8] sm:$0xff]
    %v3126 = vld [vmem:[%s371 + $0x10] sm:$0xff]
    %v3127 = vld [vmem:[%s371 + $0x18] sm:$0xff]
    %v3128 = vld [vmem:[%s371 + $0x20] sm:$0xff]
    %v3129 = vld [vmem:[%s371 + $0x28] sm:$0xff]
    %v3130 = vld [vmem:[%s371 + $0x30] sm:$0xff]
    %v3131 = vld [vmem:[%s371 + $0x38] sm:$0xff]
    %v3132 = vmul.f32 %v3122, %v3124
    %v3133 = vmul.f32 %v3120, %v3125
    %v3134 = vmul.f32 %v3118, %v3126
    %v3135 = vmul.f32 %v3116, %v3127
    %v3136 = vmul.f32 %v3123, %v3128
    %v3137 = vmul.f32 %v3121, %v3129
    %v3138 = vmul.f32 %v3119, %v3130
    %v3139 = vmul.f32 %v3117, %v3131
    %v3140 = vpack.c.bf16 %v3136, %v3132
    %v3141 = vpack.c.bf16 %v3137, %v3133
    %v3142 = vpack.c.bf16 %v3138, %v3134
    %v3143 = vpack.c.bf16 %v3139, %v3135
    %3144 = vst [vmem:[#allocation2 + $0x40] sm:$0xff] %v3140
    %3145 = vst [vmem:[#allocation2 + $0x48] sm:$0xff] %v3141
    %3146 = vst [vmem:[#allocation2 + $0x50] sm:$0xff] %v3142
    %3147 = vst [vmem:[#allocation2 + $0x58] sm:$0xff] %v3143
    %3148 = vrot.lane.b32.xlu0 %v2953, 1
    %v3149 = vpop.permute.xlu0 %3148
    %3150 = vrot.lane.b32.xlu0 %v2957, 1
    %v3151 = vpop.permute.xlu0 %3150
    %3152 = vrot.lane.b32.xlu0 %v2955, 1
    %v3153 = vpop.permute.xlu0 %3152
    %3154 = vrot.lane.b32.xlu0 %v2959, 1
    %v3155 = vpop.permute.xlu0 %3154
    %3156 = vrot.lane.b32.xlu0 %v2996, 1
    %v3157 = vpop.permute.xlu0 %3156
    %3158 = vrot.lane.b32.xlu0 %v3000, 1
    %v3159 = vpop.permute.xlu0 %3158
    %3160 = vrot.lane.b32.xlu0 %v2998, 1
    %v3161 = vpop.permute.xlu0 %3160
    %3162 = vrot.lane.b32.xlu0 %v3002, 1
    %v3163 = vpop.permute.xlu0 %3162
    %v3164 = vsel %vm396, %v3157, %v3161
    %v3165 = vsel %vm396, %v3159, %v3163
    %v3166 = vsel %vm396, %v3153, %v3157
    %v3167 = vsel %vm396, %v3155, %v3159
    %v3168 = vsel %vm396, %v3149, %v3153
    %v3169 = vsel %vm396, %v3151, %v3155
    %v3170 = vsel %vm396, %v3161, %v3149
    %v3171 = vsel %vm396, %v3163, %v3151
    %v3172 = vld [vmem:[%s401] sm:$0xff]
    %v3173 = vld [vmem:[%s401 + $0x8] sm:$0xff]
    %v3174 = vld [vmem:[%s401 + $0x10] sm:$0xff]
    %v3175 = vld [vmem:[%s401 + $0x18] sm:$0xff]
    %v3176 = vld [vmem:[%s401 + $0x20] sm:$0xff]
    %v3177 = vld [vmem:[%s401 + $0x28] sm:$0xff]
    %v3178 = vld [vmem:[%s401 + $0x30] sm:$0xff]
    %v3179 = vld [vmem:[%s401 + $0x38] sm:$0xff]
    %v3180 = vmul.f32 %v3170, %v3172
    %v3181 = vmul.f32 %v3168, %v3173
    %v3182 = vmul.f32 %v3166, %v3174
    %v3183 = vmul.f32 %v3164, %v3175
    %v3184 = vmul.f32 %v3171, %v3176
    %v3185 = vmul.f32 %v3169, %v3177
    %v3186 = vmul.f32 %v3167, %v3178
    %v3187 = vmul.f32 %v3165, %v3179
    %v3188 = vpack.c.bf16 %v3184, %v3180
    %v3189 = vpack.c.bf16 %v3185, %v3181
    %v3190 = vpack.c.bf16 %v3186, %v3182
    %v3191 = vpack.c.bf16 %v3187, %v3183
    %3192 = vst [vmem:[#allocation2 + $0x60] sm:$0xff] %v3188
    %3193 = vst [vmem:[#allocation2 + $0x68] sm:$0xff] %v3189
    %3194 = vst [vmem:[#allocation2 + $0x70] sm:$0xff] %v3190
    %3195 = vst [vmem:[#allocation2 + $0x78] sm:$0xff] %v3191
    %v3196 = vpack.c.bf16 %v2957, %v2953
    %v3197 = vpack.c.bf16 %v2959, %v2955
    %v3198 = vpack.c.bf16 %v3000, %v2996
    %v3199 = vpack.c.bf16 %v3002, %v2998
    %3200 = vst [vmem:[#allocation2 + $0x80] sm:$0xff] %v3196
    %3201 = vst [vmem:[#allocation2 + $0x88] sm:$0xff] %v3197
    %3202 = vst [vmem:[#allocation2 + $0x90] sm:$0xff] %v3198
    %3203 = vst [vmem:[#allocation2 + $0x98] sm:$0xff] %v3199
    %3204 = vrot.lane.b32.xlu0 %v2953, 127
    %v3205 = vpop.permute.xlu0 %3204
    %3206 = vrot.lane.b32.xlu0 %v2957, 127
    %v3207 = vpop.permute.xlu0 %3206
    %3208 = vrot.lane.b32.xlu0 %v2955, 127
    %v3209 = vpop.permute.xlu0 %3208
    %3210 = vrot.lane.b32.xlu0 %v2959, 127
    %v3211 = vpop.permute.xlu0 %3210
    %3212 = vrot.lane.b32.xlu0 %v2996, 127
    %v3213 = vpop.permute.xlu0 %3212
    %3214 = vrot.lane.b32.xlu0 %v3000, 127
    %v3215 = vpop.permute.xlu0 %3214
    %3216 = vrot.lane.b32.xlu0 %v2998, 127
    %v3217 = vpop.permute.xlu0 %3216
    %3218 = vrot.lane.b32.xlu0 %v3002, 127
    %v3219 = vpop.permute.xlu0 %3218
    %v3220 = vsel %vm446, %v3213, %v3217
    %v3221 = vsel %vm446, %v3215, %v3219
    %v3222 = vsel %vm446, %v3209, %v3213
    %v3223 = vsel %vm446, %v3211, %v3215
    %v3224 = vsel %vm446, %v3205, %v3209
    %v3225 = vsel %vm446, %v3207, %v3211
    %v3226 = vsel %vm446, %v3217, %v3205
    %v3227 = vsel %vm446, %v3219, %v3207
    %v3228 = vld [vmem:[%s451] sm:$0xff]
    %v3229 = vld [vmem:[%s451 + $0x8] sm:$0xff]
    %v3230 = vld [vmem:[%s451 + $0x10] sm:$0xff]
    %v3231 = vld [vmem:[%s451 + $0x18] sm:$0xff]
    %v3232 = vld [vmem:[%s451 + $0x20] sm:$0xff]
    %v3233 = vld [vmem:[%s451 + $0x28] sm:$0xff]
    %v3234 = vld [vmem:[%s451 + $0x30] sm:$0xff]
    %v3235 = vld [vmem:[%s451 + $0x38] sm:$0xff]
    %v3236 = vmul.f32 %v3224, %v3228
    %v3237 = vmul.f32 %v3222, %v3229
    %v3238 = vmul.f32 %v3220, %v3230
    %v3239 = vmul.f32 %v3226, %v3231
    %v3240 = vmul.f32 %v3225, %v3232
    %v3241 = vmul.f32 %v3223, %v3233
    %v3242 = vmul.f32 %v3221, %v3234
    %v3243 = vmul.f32 %v3227, %v3235
    %v3244 = vpack.c.bf16 %v3240, %v3236
    %v3245 = vpack.c.bf16 %v3241, %v3237
    %v3246 = vpack.c.bf16 %v3242, %v3238
    %v3247 = vpack.c.bf16 %v3243, %v3239
    %3248 = vst [vmem:[#allocation2 + $0xa0] sm:$0xff] %v3244
    %3249 = vst [vmem:[#allocation2 + $0xa8] sm:$0xff] %v3245
    %3250 = vst [vmem:[#allocation2 + $0xb0] sm:$0xff] %v3246
    %3251 = vst [vmem:[#allocation2 + $0xb8] sm:$0xff] %v3247
    %3252 = vrot.lane.b32.xlu0 %v2953, 113
    %v3253 = vpop.permute.xlu0 %3252
    %3254 = vrot.lane.b32.xlu0 %v2957, 113
    %v3255 = vpop.permute.xlu0 %3254
    %3256 = vrot.lane.b32.xlu0 %v2955, 113
    %v3257 = vpop.permute.xlu0 %3256
    %3258 = vrot.lane.b32.xlu0 %v2959, 113
    %v3259 = vpop.permute.xlu0 %3258
    %3260 = vrot.lane.b32.xlu0 %v2996, 113
    %v3261 = vpop.permute.xlu0 %3260
    %3262 = vrot.lane.b32.xlu0 %v3000, 113
    %v3263 = vpop.permute.xlu0 %3262
    %3264 = vrot.lane.b32.xlu0 %v2998, 113
    %v3265 = vpop.permute.xlu0 %3264
    %3266 = vrot.lane.b32.xlu0 %v3002, 113
    %v3267 = vpop.permute.xlu0 %3266
    %v3268 = vsel %vm488, %v3261, %v3265
    %v3269 = vsel %vm488, %v3263, %v3267
    %v3270 = vsel %vm488, %v3257, %v3261
    %v3271 = vsel %vm488, %v3259, %v3263
    %v3272 = vsel %vm488, %v3253, %v3257
    %v3273 = vsel %vm488, %v3255, %v3259
    %v3274 = vsel %vm488, %v3265, %v3253
    %v3275 = vsel %vm488, %v3267, %v3255
    %v3276 = vld [vmem:[%s493] sm:$0xff]
    %v3277 = vld [vmem:[%s493 + $0x8] sm:$0xff]
    %v3278 = vld [vmem:[%s493 + $0x10] sm:$0xff]
    %v3279 = vld [vmem:[%s493 + $0x18] sm:$0xff]
    %v3280 = vld [vmem:[%s493 + $0x20] sm:$0xff]
    %v3281 = vld [vmem:[%s493 + $0x28] sm:$0xff]
    %v3282 = vld [vmem:[%s493 + $0x30] sm:$0xff]
    %v3283 = vld [vmem:[%s493 + $0x38] sm:$0xff]
    %v3284 = vmul.f32 %v3272, %v3276
    %v3285 = vmul.f32 %v3270, %v3277
    %v3286 = vmul.f32 %v3268, %v3278
    %v3287 = vmul.f32 %v3274, %v3279
    %v3288 = vmul.f32 %v3273, %v3280
    %v3289 = vmul.f32 %v3271, %v3281
    %v3290 = vmul.f32 %v3269, %v3282
    %v3291 = vmul.f32 %v3275, %v3283
    %v3292 = vpack.c.bf16 %v3288, %v3284
    %v3293 = vpack.c.bf16 %v3289, %v3285
    %v3294 = vpack.c.bf16 %v3290, %v3286
    %v3295 = vpack.c.bf16 %v3291, %v3287
    %3296 = vst [vmem:[#allocation2 + $0xc0] sm:$0xff] %v3292
    %3297 = vst [vmem:[#allocation2 + $0xc8] sm:$0xff] %v3293
    %3298 = vst [vmem:[#allocation2 + $0xd0] sm:$0xff] %v3294
    %3299 = vst [vmem:[#allocation2 + $0xd8] sm:$0xff] %v3295
    %3300 = vrot.lane.b32.xlu0 %v2953, 112
    %v3301 = vpop.permute.xlu0 %3300
    %3302 = vrot.lane.b32.xlu0 %v2957, 112
    %v3303 = vpop.permute.xlu0 %3302
    %3304 = vrot.lane.b32.xlu0 %v2955, 112
    %v3305 = vpop.permute.xlu0 %3304
    %3306 = vrot.lane.b32.xlu0 %v2959, 112
    %v3307 = vpop.permute.xlu0 %3306
    %3308 = vrot.lane.b32.xlu0 %v2996, 112
    %v3309 = vpop.permute.xlu0 %3308
    %3310 = vrot.lane.b32.xlu0 %v3000, 112
    %v3311 = vpop.permute.xlu0 %3310
    %3312 = vrot.lane.b32.xlu0 %v2998, 112
    %v3313 = vpop.permute.xlu0 %3312
    %3314 = vrot.lane.b32.xlu0 %v3002, 112
    %v3315 = vpop.permute.xlu0 %3314
    %v3316 = vsel %vm518, %v3309, %v3313
    %v3317 = vsel %vm518, %v3311, %v3315
    %v3318 = vsel %vm518, %v3305, %v3309
    %v3319 = vsel %vm518, %v3307, %v3311
    %v3320 = vsel %vm518, %v3301, %v3305
    %v3321 = vsel %vm518, %v3303, %v3307
    %v3322 = vsel %vm518, %v3313, %v3301
    %v3323 = vsel %vm518, %v3315, %v3303
    %v3324 = vld [vmem:[%s523] sm:$0xff]
    %v3325 = vld [vmem:[%s523 + $0x8] sm:$0xff]
    %v3326 = vld [vmem:[%s523 + $0x10] sm:$0xff]
    %v3327 = vld [vmem:[%s523 + $0x18] sm:$0xff]
    %v3328 = vld [vmem:[%s523 + $0x20] sm:$0xff]
    %v3329 = vld [vmem:[%s523 + $0x28] sm:$0xff]
    %v3330 = vld [vmem:[%s523 + $0x30] sm:$0xff]
    %v3331 = vld [vmem:[%s523 + $0x38] sm:$0xff]
    %v3332 = vmul.f32 %v3320, %v3324
    %v3333 = vmul.f32 %v3318, %v3325
    %v3334 = vmul.f32 %v3316, %v3326
    %v3335 = vmul.f32 %v3322, %v3327
    %v3336 = vmul.f32 %v3321, %v3328
    %v3337 = vmul.f32 %v3319, %v3329
    %v3338 = vmul.f32 %v3317, %v3330
    %v3339 = vmul.f32 %v3323, %v3331
    %v3340 = vpack.c.bf16 %v3336, %v3332
    %v3341 = vpack.c.bf16 %v3337, %v3333
    %v3342 = vpack.c.bf16 %v3338, %v3334
    %v3343 = vpack.c.bf16 %v3339, %v3335
    %3344 = vst [vmem:[#allocation2 + $0xe0] sm:$0xff] %v3340
    %3345 = vst [vmem:[#allocation2 + $0xe8] sm:$0xff] %v3341
    %3346 = vst [vmem:[#allocation2 + $0xf0] sm:$0xff] %v3342
    %3347 = vst [vmem:[#allocation2 + $0xf8] sm:$0xff] %v3343
    %3348 = vrot.lane.b32.xlu0 %v2953, 111
    %v3349 = vpop.permute.xlu0 %3348
    %3350 = vrot.lane.b32.xlu0 %v2957, 111
    %v3351 = vpop.permute.xlu0 %3350
    %3352 = vrot.lane.b32.xlu0 %v2955, 111
    %v3353 = vpop.permute.xlu0 %3352
    %3354 = vrot.lane.b32.xlu0 %v2959, 111
    %v3355 = vpop.permute.xlu0 %3354
    %3356 = vrot.lane.b32.xlu0 %v2996, 111
    %v3357 = vpop.permute.xlu0 %3356
    %3358 = vrot.lane.b32.xlu0 %v3000, 111
    %v3359 = vpop.permute.xlu0 %3358
    %3360 = vrot.lane.b32.xlu0 %v2998, 111
    %v3361 = vpop.permute.xlu0 %3360
    %3362 = vrot.lane.b32.xlu0 %v3002, 111
    %v3363 = vpop.permute.xlu0 %3362
    %v3364 = vsel %vm560, %v3357, %v3361
    %v3365 = vsel %vm560, %v3359, %v3363
    %v3366 = vsel %vm560, %v3353, %v3357
    %v3367 = vsel %vm560, %v3355, %v3359
    %v3368 = vsel %vm560, %v3349, %v3353
    %v3369 = vsel %vm560, %v3351, %v3355
    %v3370 = vsel %vm560, %v3361, %v3349
    %v3371 = vsel %vm560, %v3363, %v3351
    %v3372 = vld [vmem:[%s565] sm:$0xff]
    %v3373 = vld [vmem:[%s565 + $0x8] sm:$0xff]
    %v3374 = vld [vmem:[%s565 + $0x10] sm:$0xff]
    %v3375 = vld [vmem:[%s565 + $0x18] sm:$0xff]
    %v3376 = vld [vmem:[%s565 + $0x20] sm:$0xff]
    %v3377 = vld [vmem:[%s565 + $0x28] sm:$0xff]
    %v3378 = vld [vmem:[%s565 + $0x30] sm:$0xff]
    %v3379 = vld [vmem:[%s565 + $0x38] sm:$0xff]
    %v3380 = vmul.f32 %v3368, %v3372
    %v3381 = vmul.f32 %v3366, %v3373
    %v3382 = vmul.f32 %v3364, %v3374
    %v3383 = vmul.f32 %v3370, %v3375
    %v3384 = vmul.f32 %v3369, %v3376
    %v3385 = vmul.f32 %v3367, %v3377
    %v3386 = vmul.f32 %v3365, %v3378
    %v3387 = vmul.f32 %v3371, %v3379
    %v3388 = vpack.c.bf16 %v3384, %v3380
    %v3389 = vpack.c.bf16 %v3385, %v3381
    %v3390 = vpack.c.bf16 %v3386, %v3382
    %v3391 = vpack.c.bf16 %v3387, %v3383
    %3392 = vst [vmem:[#allocation2 + $0x100] sm:$0xff] %v3388
    %3393 = vst [vmem:[#allocation2 + $0x108] sm:$0xff] %v3389
    %3394 = vst [vmem:[#allocation2 + $0x110] sm:$0xff] %v3390
    %3395 = vst [vmem:[#allocation2 + $0x118] sm:$0xff] %v3391
    %v3396 = vld [vmem:[#allocation17] sm:$0xff]
    %v3397 = vld [vmem:[#allocation17 + $0x8] sm:$0xff]
    %v3398 = vld [vmem:[#allocation2] sm:$0xff]
    %v3399 = vld [vmem:[#allocation2 + $0x8] sm:$0xff]
    %v3400 = vld [vmem:[#allocation2 + $0x10] sm:$0xff]
    %v3401 = vld [vmem:[#allocation2 + $0x18] sm:$0xff]
    %v3402 = vld [vmem:[#allocation2 + $0x20] sm:$0xff]
    %v3403 = vld [vmem:[#allocation2 + $0x28] sm:$0xff]
    %v3404 = vld [vmem:[#allocation2 + $0x30] sm:$0xff]
    %v3405 = vld [vmem:[#allocation2 + $0x38] sm:$0xff]
    %v3406 = vld [vmem:[#allocation2 + $0x40] sm:$0xff]
    %v3407 = vld [vmem:[#allocation2 + $0x48] sm:$0xff]
    %v3408 = vld [vmem:[#allocation2 + $0x50] sm:$0xff]
    %v3409 = vld [vmem:[#allocation2 + $0x58] sm:$0xff]
    %v3410 = vld [vmem:[#allocation2 + $0x60] sm:$0xff]
    %v3411 = vld [vmem:[#allocation2 + $0x68] sm:$0xff]
    %v3412 = vld [vmem:[#allocation2 + $0x70] sm:$0xff]
    %v3413 = vld [vmem:[#allocation2 + $0x78] sm:$0xff]
    %v3414 = vld [vmem:[#allocation2 + $0x80] sm:$0xff]
    %v3415 = vld [vmem:[#allocation2 + $0x88] sm:$0xff]
    %v3416 = vld [vmem:[#allocation2 + $0x90] sm:$0xff]
    %v3417 = vld [vmem:[#allocation2 + $0x98] sm:$0xff]
    %v3418 = vld [vmem:[#allocation2 + $0xa0] sm:$0xff]
    %v3419 = vld [vmem:[#allocation2 + $0xa8] sm:$0xff]
    %v3420 = vld [vmem:[#allocation2 + $0xb0] sm:$0xff]
    %v3421 = vld [vmem:[#allocation2 + $0xb8] sm:$0xff]
    %v3422 = vld [vmem:[#allocation2 + $0xc0] sm:$0xff]
    %v3423 = vld [vmem:[#allocation2 + $0xc8] sm:$0xff]
    %v3424 = vld [vmem:[#allocation2 + $0xd0] sm:$0xff]
    %v3425 = vld [vmem:[#allocation2 + $0xd8] sm:$0xff]
    %v3426 = vld [vmem:[#allocation2 + $0xe0] sm:$0xff]
    %v3427 = vld [vmem:[#allocation2 + $0xe8] sm:$0xff]
    %v3428 = vld [vmem:[#allocation2 + $0xf0] sm:$0xff]
    %v3429 = vld [vmem:[#allocation2 + $0xf8] sm:$0xff]
    %v3430 = vld [vmem:[#allocation2 + $0x100] sm:$0xff]
    %v3431 = vld [vmem:[#allocation2 + $0x108] sm:$0xff]
    %v3432 = vld [vmem:[#allocation2 + $0x110] sm:$0xff]
    %v3433 = vld [vmem:[#allocation2 + $0x118] sm:$0xff]
    %v3434 = vld [vmem:[%s51] sm:$0xff]
    %v3435 = vld [vmem:[%s51 + $0x8] sm:$0xff]
    %3437 = vset.pattern.permute.xlu0 0
    %3438 = vperm.xlu0 %3437, %v3434
    %v3439 = vpop.permute.xlu0 %3438
    %3442 = vset.pattern.permute.xlu0 0
    %3443 = vperm.xlu0 %3442, %v3435
    %v3444 = vpop.permute.xlu0 %3443
    %v3448 = vunpack.c.l.b16 %v3396
    %v3449 = vunpack.c.h.b16 %v3396
    %v3450 = vunpack.c.l.b16 %v3397
    %v3451 = vunpack.c.h.b16 %v3397
    %v3452 = vpack.c.b16 %v3450, %v3448
    %v3453 = vpack.c.b16 %v3451, %v3449
    %v3456 = vsel %vm2091, %v3453, 0
    %3458 = vmatprep.subr.bf16.mxu0 %v3399
    %3459 = vmatpush1.bf16.msra.mxu0 %v3398
    %3460 = vmatprep.subr.bf16.mxu0 %v3403
    %3461 = vmatpush1.bf16.msra.mxu0 %v3402
    %3462 = vmatprep.subr.bf16.mxu0 %v3407
    %3463 = vmatpush1.bf16.msra.mxu0 %v3406
    %3464 = vmatprep.subr.bf16.mxu0 %v3411
    %3465 = vmatpush1.bf16.msra.mxu0 %v3410
    %3466 = vmatprep.subr.bf16.mxu0 %v3415
    %3467 = vmatpush1.bf16.msra.mxu0 %v3414
    %3468 = vmatprep.subr.bf16.mxu0 %v3419
    %3469 = vmatpush1.bf16.msra.mxu0 %v3418
    %3470 = vmatprep.subr.bf16.mxu0 %v3423
    %3471 = vmatpush1.bf16.msra.mxu0 %v3422
    %3472 = vmatprep.subr.bf16.mxu0 %v3427
    %3473 = vmatpush1.bf16.msra.mxu0 %v3426
    %3474 = vmatprep.subr.bf16.mxu0 %v3431
    %3475 = vmatpush1.bf16.msra.mxu0 %v3430
    %3476 = vmatprep.subr.bf16.mxu0 0
    %3477 = vmatpush1.bf16.msra.mxu0 0
    %3478 = vmatprep.subr.bf16.mxu0 0
    %3479 = vmatpush1.bf16.msra.mxu0 0
    %3480 = vmatprep.subr.bf16.mxu0 0
    %3481 = vmatpush1.bf16.msra.mxu0 0
    %3482 = vmatprep.subr.bf16.mxu0 0
    %3483 = vmatpush1.bf16.msra.mxu0 0
    %3484 = vmatprep.subr.bf16.mxu0 0
    %3485 = vmatpush1.bf16.msra.mxu0 0
    %3486 = vmatprep.subr.bf16.mxu0 0
    %3487 = vmatpush1.bf16.msra.mxu0 0
    %3488 = vmatprep.subr.bf16.mxu0 0
    %3489 = vmatpush1.bf16.msra.mxu0 0
    %3490 = vmatprep.mubr.bf16.mxu0 %v3456
    %3491 = vmatmul.mubr.bf16.gmra.mrb[0].mxu0 %v3452
    %v3492 = vpop.f32.mrb[0].mxu0
    %v3493 = vadd.f32 %v3439, %v3492
    %v3494 = vpop.f32.mrb[0].mxu0
    %v3495 = vadd.f32 %v3439, %v3494
    %v3496 = vpop.f32.mrb[0].mxu0
    %v3497 = vadd.f32 %v3444, %v3496
    %v3498 = vpop.f32.mrb[0].mxu0
    %v3499 = vadd.f32 %v3444, %v3498
    %3500 = vdwg.mxu0
    %3501 = vmatprep.subr.bf16.mxu0 %v3401
    %3502 = vmatpush1.bf16.msra.mxu0 %v3400
    %3503 = vmatprep.subr.bf16.mxu0 %v3405
    %3504 = vmatpush1.bf16.msra.mxu0 %v3404
    %3505 = vmatprep.subr.bf16.mxu0 %v3409
    %3506 = vmatpush1.bf16.msra.mxu0 %v3408
    %3507 = vmatprep.subr.bf16.mxu0 %v3413
    %3508 = vmatpush1.bf16.msra.mxu0 %v3412
    %3509 = vmatprep.subr.bf16.mxu0 %v3417
    %3510 = vmatpush1.bf16.msra.mxu0 %v3416
    %3511 = vmatprep.subr.bf16.mxu0 %v3421
    %3512 = vmatpush1.bf16.msra.mxu0 %v3420
    %3513 = vmatprep.subr.bf16.mxu0 %v3425
    %3514 = vmatpush1.bf16.msra.mxu0 %v3424
    %3515 = vmatprep.subr.bf16.mxu0 %v3429
    %3516 = vmatpush1.bf16.msra.mxu0 %v3428
    %3517 = vmatprep.subr.bf16.mxu0 %v3433
    %3518 = vmatpush1.bf16.msra.mxu0 %v3432
    %3519 = vmatprep.subr.bf16.mxu0 0
    %3520 = vmatpush1.bf16.msra.mxu0 0
    %3521 = vmatprep.subr.bf16.mxu0 0
    %3522 = vmatpush1.bf16.msra.mxu0 0
    %3523 = vmatprep.subr.bf16.mxu0 0
    %3524 = vmatpush1.bf16.msra.mxu0 0
    %3525 = vmatprep.subr.bf16.mxu0 0
    %3526 = vmatpush1.bf16.msra.mxu0 0
    %3527 = vmatprep.subr.bf16.mxu0 0
    %3528 = vmatpush1.bf16.msra.mxu0 0
    %3529 = vmatprep.subr.bf16.mxu0 0
    %3530 = vmatpush1.bf16.msra.mxu0 0
    %3531 = vmatprep.subr.bf16.mxu0 0
    %3532 = vmatpush1.bf16.msra.mxu0 0
    %3533 = vmatprep.mubr.bf16.mxu0 %v3456
    %3534 = vmatmul.mubr.bf16.gmra.mrb[0].mxu0 %v3452
    %v3535 = vpop.f32.mrb[0].mxu0
    %v3536 = vadd.f32 %v3439, %v3535
    %v3537 = vpop.f32.mrb[0].mxu0
    %v3538 = vadd.f32 %v3439, %v3537
    %v3539 = vpop.f32.mrb[0].mxu0
    %v3540 = vadd.f32 %v3444, %v3539
    %v3541 = vpop.f32.mrb[0].mxu0
    %v3542 = vadd.f32 %v3444, %v3541
    %3543 = vdwg.mxu0
    %v3544 = vsub.f32 0.0, %v3493
    %v3545 = vsub.f32 0.0, %v3495
    %v3546 = vsub.f32 0.0, %v3536
    %v3547 = vsub.f32 0.0, %v3538
    %v3548 = vsub.f32 0.0, %v3497
    %v3549 = vsub.f32 0.0, %v3499
    %v3550 = vsub.f32 0.0, %v3540
    %v3551 = vsub.f32 0.0, %v3542
    %v3552 = vmul.f32 %v3544, 1.442695
    %v3553 = vpow.pop %v3552
    %v3554 = vmul.f32 %v3545, 1.442695
    %v3555 = vpow.pop %v3554
    %v3556 = vmul.f32 %v3546, 1.442695
    %v3557 = vpow.pop %v3556
    %v3558 = vmul.f32 %v3547, 1.442695
    %v3559 = vpow.pop %v3558
    %v3560 = vmul.f32 %v3548, 1.442695
    %v3561 = vpow.pop %v3560
    %v3562 = vmul.f32 %v3549, 1.442695
    %v3563 = vpow.pop %v3562
    %v3564 = vmul.f32 %v3550, 1.442695
    %v3565 = vpow.pop %v3564
    %v3566 = vmul.f32 %v3551, 1.442695
    %v3567 = vpow.pop %v3566
    %v3568 = vadd.f32 %v3553, 1.0
    %v3569 = vadd.f32 %v3555, 1.0
    %v3570 = vadd.f32 %v3557, 1.0
    %v3571 = vadd.f32 %v3559, 1.0
    %v3572 = vadd.f32 %v3561, 1.0
    %v3573 = vadd.f32 %v3563, 1.0
    %v3574 = vadd.f32 %v3565, 1.0
    %v3575 = vadd.f32 %v3567, 1.0
    %v3576 = vrcp.pop %v3568
    %v3577 = vrcp.pop %v3569
    %v3578 = vrcp.pop %v3570
    %v3579 = vrcp.pop %v3571
    %v3580 = vrcp.pop %v3572
    %v3581 = vrcp.pop %v3573
    %v3582 = vrcp.pop %v3574
    %v3583 = vrcp.pop %v3575
    %v3584 = vmul.f32 %v3493, %v3576
    %v3585 = vmul.f32 %v3495, %v3577
    %v3586 = vmul.f32 %v3536, %v3578
    %v3587 = vmul.f32 %v3538, %v3579
    %v3588 = vmul.f32 %v3497, %v3580
    %v3589 = vmul.f32 %v3499, %v3581
    %v3590 = vmul.f32 %v3540, %v3582
    %v3591 = vmul.f32 %v3542, %v3583
    %3592 = vrot.lane.b32.xlu0 %v3584, 17
    %v3593 = vpop.permute.xlu0 %3592
    %3594 = vrot.lane.b32.xlu0 %v3588, 17
    %v3595 = vpop.permute.xlu0 %3594
    %3596 = vrot.lane.b32.xlu0 %v3585, 17
    %v3597 = vpop.permute.xlu0 %3596
    %3598 = vrot.lane.b32.xlu0 %v3589, 17
    %v3599 = vpop.permute.xlu0 %3598
    %3600 = vrot.lane.b32.xlu0 %v3586, 17
    %v3601 = vpop.permute.xlu0 %3600
    %3602 = vrot.lane.b32.xlu0 %v3590, 17
    %v3603 = vpop.permute.xlu0 %3602
    %3604 = vrot.lane.b32.xlu0 %v3587, 17
    %v3605 = vpop.permute.xlu0 %3604
    %3606 = vrot.lane.b32.xlu0 %v3591, 17
    %v3607 = vpop.permute.xlu0 %3606
    %v3608 = vsel %vm295, %v3601, %v3605
    %v3609 = vsel %vm295, %v3603, %v3607
    %v3610 = vsel %vm295, %v3597, %v3601
    %v3611 = vsel %vm295, %v3599, %v3603
    %v3612 = vsel %vm295, %v3593, %v3597
    %v3613 = vsel %vm295, %v3595, %v3599
    %v3614 = vsel %vm295, %v3605, %v3593
    %v3615 = vsel %vm295, %v3607, %v3595
    %v3616 = vld [vmem:[%s5] sm:$0xff]
    %v3617 = vld [vmem:[%s5 + $0x8] sm:$0xff]
    %v3618 = vld [vmem:[%s5 + $0x10] sm:$0xff]
    %v3619 = vld [vmem:[%s5 + $0x18] sm:$0xff]
    %v3620 = vld [vmem:[%s5 + $0x20] sm:$0xff]
    %v3621 = vld [vmem:[%s5 + $0x28] sm:$0xff]
    %v3622 = vld [vmem:[%s5 + $0x30] sm:$0xff]
    %v3623 = vld [vmem:[%s5 + $0x38] sm:$0xff]
    %v3624 = vmul.f32 %v3614, %v3616
    %v3625 = vmul.f32 %v3612, %v3617
    %v3626 = vmul.f32 %v3610, %v3618
    %v3627 = vmul.f32 %v3608, %v3619
    %v3628 = vmul.f32 %v3615, %v3620
    %v3629 = vmul.f32 %v3613, %v3621
    %v3630 = vmul.f32 %v3611, %v3622
    %v3631 = vmul.f32 %v3609, %v3623
    %v3632 = vpack.c.bf16 %v3628, %v3624
    %v3633 = vpack.c.bf16 %v3629, %v3625
    %v3634 = vpack.c.bf16 %v3630, %v3626
    %v3635 = vpack.c.bf16 %v3631, %v3627
    %3636 = vst [vmem:[#allocation2] sm:$0xff] %v3632
    %3637 = vst [vmem:[#allocation2 + $0x8] sm:$0xff] %v3633
    %3638 = vst [vmem:[#allocation2 + $0x10] sm:$0xff] %v3634
    %3639 = vst [vmem:[#allocation2 + $0x18] sm:$0xff] %v3635
    %3640 = vrot.lane.b32.xlu0 %v3584, 16
    %v3641 = vpop.permute.xlu0 %3640
    %3642 = vrot.lane.b32.xlu0 %v3588, 16
    %v3643 = vpop.permute.xlu0 %3642
    %3644 = vrot.lane.b32.xlu0 %v3585, 16
    %v3645 = vpop.permute.xlu0 %3644
    %3646 = vrot.lane.b32.xlu0 %v3589, 16
    %v3647 = vpop.permute.xlu0 %3646
    %3648 = vrot.lane.b32.xlu0 %v3586, 16
    %v3649 = vpop.permute.xlu0 %3648
    %3650 = vrot.lane.b32.xlu0 %v3590, 16
    %v3651 = vpop.permute.xlu0 %3650
    %3652 = vrot.lane.b32.xlu0 %v3587, 16
    %v3653 = vpop.permute.xlu0 %3652
    %3654 = vrot.lane.b32.xlu0 %v3591, 16
    %v3655 = vpop.permute.xlu0 %3654
    %v3656 = vsel %vm324, %v3649, %v3653
    %v3657 = vsel %vm324, %v3651, %v3655
    %v3658 = vsel %vm324, %v3645, %v3649
    %v3659 = vsel %vm324, %v3647, %v3651
    %v3660 = vsel %vm324, %v3641, %v3645
    %v3661 = vsel %vm324, %v3643, %v3647
    %v3662 = vsel %vm324, %v3653, %v3641
    %v3663 = vsel %vm324, %v3655, %v3643
    %v3664 = vld [vmem:[%s329] sm:$0xff]
    %v3665 = vld [vmem:[%s329 + $0x8] sm:$0xff]
    %v3666 = vld [vmem:[%s329 + $0x10] sm:$0xff]
    %v3667 = vld [vmem:[%s329 + $0x18] sm:$0xff]
    %v3668 = vld [vmem:[%s329 + $0x20] sm:$0xff]
    %v3669 = vld [vmem:[%s329 + $0x28] sm:$0xff]
    %v3670 = vld [vmem:[%s329 + $0x30] sm:$0xff]
    %v3671 = vld [vmem:[%s329 + $0x38] sm:$0xff]
    %v3672 = vmul.f32 %v3662, %v3664
    %v3673 = vmul.f32 %v3660, %v3665
    %v3674 = vmul.f32 %v3658, %v3666
    %v3675 = vmul.f32 %v3656, %v3667
    %v3676 = vmul.f32 %v3663, %v3668
    %v3677 = vmul.f32 %v3661, %v3669
    %v3678 = vmul.f32 %v3659, %v3670
    %v3679 = vmul.f32 %v3657, %v3671
    %v3680 = vpack.c.bf16 %v3676, %v3672
    %v3681 = vpack.c.bf16 %v3677, %v3673
    %v3682 = vpack.c.bf16 %v3678, %v3674
    %v3683 = vpack.c.bf16 %v3679, %v3675
    %3684 = vst [vmem:[#allocation2 + $0x20] sm:$0xff] %v3680
    %3685 = vst [vmem:[#allocation2 + $0x28] sm:$0xff] %v3681
    %3686 = vst [vmem:[#allocation2 + $0x30] sm:$0xff] %v3682
    %3687 = vst [vmem:[#allocation2 + $0x38] sm:$0xff] %v3683
    %3688 = vrot.lane.b32.xlu0 %v3584, 15
    %v3689 = vpop.permute.xlu0 %3688
    %3690 = vrot.lane.b32.xlu0 %v3588, 15
    %v3691 = vpop.permute.xlu0 %3690
    %3692 = vrot.lane.b32.xlu0 %v3585, 15
    %v3693 = vpop.permute.xlu0 %3692
    %3694 = vrot.lane.b32.xlu0 %v3589, 15
    %v3695 = vpop.permute.xlu0 %3694
    %3696 = vrot.lane.b32.xlu0 %v3586, 15
    %v3697 = vpop.permute.xlu0 %3696
    %3698 = vrot.lane.b32.xlu0 %v3590, 15
    %v3699 = vpop.permute.xlu0 %3698
    %3700 = vrot.lane.b32.xlu0 %v3587, 15
    %v3701 = vpop.permute.xlu0 %3700
    %3702 = vrot.lane.b32.xlu0 %v3591, 15
    %v3703 = vpop.permute.xlu0 %3702
    %v3704 = vsel %vm366, %v3697, %v3701
    %v3705 = vsel %vm366, %v3699, %v3703
    %v3706 = vsel %vm366, %v3693, %v3697
    %v3707 = vsel %vm366, %v3695, %v3699
    %v3708 = vsel %vm366, %v3689, %v3693
    %v3709 = vsel %vm366, %v3691, %v3695
    %v3710 = vsel %vm366, %v3701, %v3689
    %v3711 = vsel %vm366, %v3703, %v3691
    %v3712 = vld [vmem:[%s371] sm:$0xff]
    %v3713 = vld [vmem:[%s371 + $0x8] sm:$0xff]
    %v3714 = vld [vmem:[%s371 + $0x10] sm:$0xff]
    %v3715 = vld [vmem:[%s371 + $0x18] sm:$0xff]
    %v3716 = vld [vmem:[%s371 + $0x20] sm:$0xff]
    %v3717 = vld [vmem:[%s371 + $0x28] sm:$0xff]
    %v3718 = vld [vmem:[%s371 + $0x30] sm:$0xff]
    %v3719 = vld [vmem:[%s371 + $0x38] sm:$0xff]
    %v3720 = vmul.f32 %v3710, %v3712
    %v3721 = vmul.f32 %v3708, %v3713
    %v3722 = vmul.f32 %v3706, %v3714
    %v3723 = vmul.f32 %v3704, %v3715
    %v3724 = vmul.f32 %v3711, %v3716
    %v3725 = vmul.f32 %v3709, %v3717
    %v3726 = vmul.f32 %v3707, %v3718
    %v3727 = vmul.f32 %v3705, %v3719
    %v3728 = vpack.c.bf16 %v3724, %v3720
    %v3729 = vpack.c.bf16 %v3725, %v3721
    %v3730 = vpack.c.bf16 %v3726, %v3722
    %v3731 = vpack.c.bf16 %v3727, %v3723
    %3732 = vst [vmem:[#allocation2 + $0x40] sm:$0xff] %v3728
    %3733 = vst [vmem:[#allocation2 + $0x48] sm:$0xff] %v3729
    %3734 = vst [vmem:[#allocation2 + $0x50] sm:$0xff] %v3730
    %3735 = vst [vmem:[#allocation2 + $0x58] sm:$0xff] %v3731
    %3736 = vrot.lane.b32.xlu0 %v3584, 1
    %v3737 = vpop.permute.xlu0 %3736
    %3738 = vrot.lane.b32.xlu0 %v3588, 1
    %v3739 = vpop.permute.xlu0 %3738
    %3740 = vrot.lane.b32.xlu0 %v3585, 1
    %v3741 = vpop.permute.xlu0 %3740
    %3742 = vrot.lane.b32.xlu0 %v3589, 1
    %v3743 = vpop.permute.xlu0 %3742
    %3744 = vrot.lane.b32.xlu0 %v3586, 1
    %v3745 = vpop.permute.xlu0 %3744
    %3746 = vrot.lane.b32.xlu0 %v3590, 1
    %v3747 = vpop.permute.xlu0 %3746
    %3748 = vrot.lane.b32.xlu0 %v3587, 1
    %v3749 = vpop.permute.xlu0 %3748
    %3750 = vrot.lane.b32.xlu0 %v3591, 1
    %v3751 = vpop.permute.xlu0 %3750
    %v3752 = vsel %vm396, %v3745, %v3749
    %v3753 = vsel %vm396, %v3747, %v3751
    %v3754 = vsel %vm396, %v3741, %v3745
    %v3755 = vsel %vm396, %v3743, %v3747
    %v3756 = vsel %vm396, %v3737, %v3741
    %v3757 = vsel %vm396, %v3739, %v3743
    %v3758 = vsel %vm396, %v3749, %v3737
    %v3759 = vsel %vm396, %v3751, %v3739
    %v3760 = vld [vmem:[%s401] sm:$0xff]
    %v3761 = vld [vmem:[%s401 + $0x8] sm:$0xff]
    %v3762 = vld [vmem:[%s401 + $0x10] sm:$0xff]
    %v3763 = vld [vmem:[%s401 + $0x18] sm:$0xff]
    %v3764 = vld [vmem:[%s401 + $0x20] sm:$0xff]
    %v3765 = vld [vmem:[%s401 + $0x28] sm:$0xff]
    %v3766 = vld [vmem:[%s401 + $0x30] sm:$0xff]
    %v3767 = vld [vmem:[%s401 + $0x38] sm:$0xff]
    %v3768 = vmul.f32 %v3758, %v3760
    %v3769 = vmul.f32 %v3756, %v3761
    %v3770 = vmul.f32 %v3754, %v3762
    %v3771 = vmul.f32 %v3752, %v3763
    %v3772 = vmul.f32 %v3759, %v3764
    %v3773 = vmul.f32 %v3757, %v3765
    %v3774 = vmul.f32 %v3755, %v3766
    %v3775 = vmul.f32 %v3753, %v3767
    %v3776 = vpack.c.bf16 %v3772, %v3768
    %v3777 = vpack.c.bf16 %v3773, %v3769
    %v3778 = vpack.c.bf16 %v3774, %v3770
    %v3779 = vpack.c.bf16 %v3775, %v3771
    %3780 = vst [vmem:[#allocation2 + $0x60] sm:$0xff] %v3776
    %3781 = vst [vmem:[#allocation2 + $0x68] sm:$0xff] %v3777
    %3782 = vst [vmem:[#allocation2 + $0x70] sm:$0xff] %v3778
    %3783 = vst [vmem:[#allocation2 + $0x78] sm:$0xff] %v3779
    %v3784 = vpack.c.bf16 %v3588, %v3584
    %v3785 = vpack.c.bf16 %v3589, %v3585
    %v3786 = vpack.c.bf16 %v3590, %v3586
    %v3787 = vpack.c.bf16 %v3591, %v3587
    %3788 = vst [vmem:[#allocation2 + $0x80] sm:$0xff] %v3784
    %3789 = vst [vmem:[#allocation2 + $0x88] sm:$0xff] %v3785
    %3790 = vst [vmem:[#allocation2 + $0x90] sm:$0xff] %v3786
    %3791 = vst [vmem:[#allocation2 + $0x98] sm:$0xff] %v3787
    %3792 = vrot.lane.b32.xlu0 %v3584, 127
    %v3793 = vpop.permute.xlu0 %3792
    %3794 = vrot.lane.b32.xlu0 %v3588, 127
    %v3795 = vpop.permute.xlu0 %3794
    %3796 = vrot.lane.b32.xlu0 %v3585, 127
    %v3797 = vpop.permute.xlu0 %3796
    %3798 = vrot.lane.b32.xlu0 %v3589, 127
    %v3799 = vpop.permute.xlu0 %3798
    %3800 = vrot.lane.b32.xlu0 %v3586, 127
    %v3801 = vpop.permute.xlu0 %3800
    %3802 = vrot.lane.b32.xlu0 %v3590, 127
    %v3803 = vpop.permute.xlu0 %3802
    %3804 = vrot.lane.b32.xlu0 %v3587, 127
    %v3805 = vpop.permute.xlu0 %3804
    %3806 = vrot.lane.b32.xlu0 %v3591, 127
    %v3807 = vpop.permute.xlu0 %3806
    %v3808 = vsel %vm446, %v3801, %v3805
    %v3809 = vsel %vm446, %v3803, %v3807
    %v3810 = vsel %vm446, %v3797, %v3801
    %v3811 = vsel %vm446, %v3799, %v3803
    %v3812 = vsel %vm446, %v3793, %v3797
    %v3813 = vsel %vm446, %v3795, %v3799
    %v3814 = vsel %vm446, %v3805, %v3793
    %v3815 = vsel %vm446, %v3807, %v3795
    %v3816 = vld [vmem:[%s451] sm:$0xff]
    %v3817 = vld [vmem:[%s451 + $0x8] sm:$0xff]
    %v3818 = vld [vmem:[%s451 + $0x10] sm:$0xff]
    %v3819 = vld [vmem:[%s451 + $0x18] sm:$0xff]
    %v3820 = vld [vmem:[%s451 + $0x20] sm:$0xff]
    %v3821 = vld [vmem:[%s451 + $0x28] sm:$0xff]
    %v3822 = vld [vmem:[%s451 + $0x30] sm:$0xff]
    %v3823 = vld [vmem:[%s451 + $0x38] sm:$0xff]
    %v3824 = vmul.f32 %v3812, %v3816
    %v3825 = vmul.f32 %v3810, %v3817
    %v3826 = vmul.f32 %v3808, %v3818
    %v3827 = vmul.f32 %v3814, %v3819
    %v3828 = vmul.f32 %v3813, %v3820
    %v3829 = vmul.f32 %v3811, %v3821
    %v3830 = vmul.f32 %v3809, %v3822
    %v3831 = vmul.f32 %v3815, %v3823
    %v3832 = vpack.c.bf16 %v3828, %v3824
    %v3833 = vpack.c.bf16 %v3829, %v3825
    %v3834 = vpack.c.bf16 %v3830, %v3826
    %v3835 = vpack.c.bf16 %v3831, %v3827
    %3836 = vst [vmem:[#allocation2 + $0xa0] sm:$0xff] %v3832
    %3837 = vst [vmem:[#allocation2 + $0xa8] sm:$0xff] %v3833
    %3838 = vst [vmem:[#allocation2 + $0xb0] sm:$0xff] %v3834
    %3839 = vst [vmem:[#allocation2 + $0xb8] sm:$0xff] %v3835
    %3840 = vrot.lane.b32.xlu0 %v3584, 113
    %v3841 = vpop.permute.xlu0 %3840
    %3842 = vrot.lane.b32.xlu0 %v3588, 113
    %v3843 = vpop.permute.xlu0 %3842
    %3844 = vrot.lane.b32.xlu0 %v3585, 113
    %v3845 = vpop.permute.xlu0 %3844
    %3846 = vrot.lane.b32.xlu0 %v3589, 113
    %v3847 = vpop.permute.xlu0 %3846
    %3848 = vrot.lane.b32.xlu0 %v3586, 113
    %v3849 = vpop.permute.xlu0 %3848
    %3850 = vrot.lane.b32.xlu0 %v3590, 113
    %v3851 = vpop.permute.xlu0 %3850
    %3852 = vrot.lane.b32.xlu0 %v3587, 113
    %v3853 = vpop.permute.xlu0 %3852
    %3854 = vrot.lane.b32.xlu0 %v3591, 113
    %v3855 = vpop.permute.xlu0 %3854
    %v3856 = vsel %vm488, %v3849, %v3853
    %v3857 = vsel %vm488, %v3851, %v3855
    %v3858 = vsel %vm488, %v3845, %v3849
    %v3859 = vsel %vm488, %v3847, %v3851
    %v3860 = vsel %vm488, %v3841, %v3845
    %v3861 = vsel %vm488, %v3843, %v3847
    %v3862 = vsel %vm488, %v3853, %v3841
    %v3863 = vsel %vm488, %v3855, %v3843
    %v3864 = vld [vmem:[%s493] sm:$0xff]
    %v3865 = vld [vmem:[%s493 + $0x8] sm:$0xff]
    %v3866 = vld [vmem:[%s493 + $0x10] sm:$0xff]
    %v3867 = vld [vmem:[%s493 + $0x18] sm:$0xff]
    %v3868 = vld [vmem:[%s493 + $0x20] sm:$0xff]
    %v3869 = vld [vmem:[%s493 + $0x28] sm:$0xff]
    %v3870 = vld [vmem:[%s493 + $0x30] sm:$0xff]
    %v3871 = vld [vmem:[%s493 + $0x38] sm:$0xff]
    %v3872 = vmul.f32 %v3860, %v3864
    %v3873 = vmul.f32 %v3858, %v3865
    %v3874 = vmul.f32 %v3856, %v3866
    %v3875 = vmul.f32 %v3862, %v3867
    %v3876 = vmul.f32 %v3861, %v3868
    %v3877 = vmul.f32 %v3859, %v3869
    %v3878 = vmul.f32 %v3857, %v3870
    %v3879 = vmul.f32 %v3863, %v3871
    %v3880 = vpack.c.bf16 %v3876, %v3872
    %v3881 = vpack.c.bf16 %v3877, %v3873
    %v3882 = vpack.c.bf16 %v3878, %v3874
    %v3883 = vpack.c.bf16 %v3879, %v3875
    %3884 = vst [vmem:[#allocation2 + $0xc0] sm:$0xff] %v3880
    %3885 = vst [vmem:[#allocation2 + $0xc8] sm:$0xff] %v3881
    %3886 = vst [vmem:[#allocation2 + $0xd0] sm:$0xff] %v3882
    %3887 = vst [vmem:[#allocation2 + $0xd8] sm:$0xff] %v3883
    %3888 = vrot.lane.b32.xlu0 %v3584, 112
    %v3889 = vpop.permute.xlu0 %3888
    %3890 = vrot.lane.b32.xlu0 %v3588, 112
    %v3891 = vpop.permute.xlu0 %3890
    %3892 = vrot.lane.b32.xlu0 %v3585, 112
    %v3893 = vpop.permute.xlu0 %3892
    %3894 = vrot.lane.b32.xlu0 %v3589, 112
    %v3895 = vpop.permute.xlu0 %3894
    %3896 = vrot.lane.b32.xlu0 %v3586, 112
    %v3897 = vpop.permute.xlu0 %3896
    %3898 = vrot.lane.b32.xlu0 %v3590, 112
    %v3899 = vpop.permute.xlu0 %3898
    %3900 = vrot.lane.b32.xlu0 %v3587, 112
    %v3901 = vpop.permute.xlu0 %3900
    %3902 = vrot.lane.b32.xlu0 %v3591, 112
    %v3903 = vpop.permute.xlu0 %3902
    %v3904 = vsel %vm518, %v3897, %v3901
    %v3905 = vsel %vm518, %v3899, %v3903
    %v3906 = vsel %vm518, %v3893, %v3897
    %v3907 = vsel %vm518, %v3895, %v3899
    %v3908 = vsel %vm518, %v3889, %v3893
    %v3909 = vsel %vm518, %v3891, %v3895
    %v3910 = vsel %vm518, %v3901, %v3889
    %v3911 = vsel %vm518, %v3903, %v3891
    %v3912 = vld [vmem:[%s523] sm:$0xff]
    %v3913 = vld [vmem:[%s523 + $0x8] sm:$0xff]
    %v3914 = vld [vmem:[%s523 + $0x10] sm:$0xff]
    %v3915 = vld [vmem:[%s523 + $0x18] sm:$0xff]
    %v3916 = vld [vmem:[%s523 + $0x20] sm:$0xff]
    %v3917 = vld [vmem:[%s523 + $0x28] sm:$0xff]
    %v3918 = vld [vmem:[%s523 + $0x30] sm:$0xff]
    %v3919 = vld [vmem:[%s523 + $0x38] sm:$0xff]
    %v3920 = vmul.f32 %v3908, %v3912
    %v3921 = vmul.f32 %v3906, %v3913
    %v3922 = vmul.f32 %v3904, %v3914
    %v3923 = vmul.f32 %v3910, %v3915
    %v3924 = vmul.f32 %v3909, %v3916
    %v3925 = vmul.f32 %v3907, %v3917
    %v3926 = vmul.f32 %v3905, %v3918
    %v3927 = vmul.f32 %v3911, %v3919
    %v3928 = vpack.c.bf16 %v3924, %v3920
    %v3929 = vpack.c.bf16 %v3925, %v3921
    %v3930 = vpack.c.bf16 %v3926, %v3922
    %v3931 = vpack.c.bf16 %v3927, %v3923
    %3932 = vst [vmem:[#allocation2 + $0xe0] sm:$0xff] %v3928
    %3933 = vst [vmem:[#allocation2 + $0xe8] sm:$0xff] %v3929
    %3934 = vst [vmem:[#allocation2 + $0xf0] sm:$0xff] %v3930
    %3935 = vst [vmem:[#allocation2 + $0xf8] sm:$0xff] %v3931
    %3936 = vrot.lane.b32.xlu0 %v3584, 111
    %v3937 = vpop.permute.xlu0 %3936
    %3938 = vrot.lane.b32.xlu0 %v3588, 111
    %v3939 = vpop.permute.xlu0 %3938
    %3940 = vrot.lane.b32.xlu0 %v3585, 111
    %v3941 = vpop.permute.xlu0 %3940
    %3942 = vrot.lane.b32.xlu0 %v3589, 111
    %v3943 = vpop.permute.xlu0 %3942
    %3944 = vrot.lane.b32.xlu0 %v3586, 111
    %v3945 = vpop.permute.xlu0 %3944
    %3946 = vrot.lane.b32.xlu0 %v3590, 111
    %v3947 = vpop.permute.xlu0 %3946
    %3948 = vrot.lane.b32.xlu0 %v3587, 111
    %v3949 = vpop.permute.xlu0 %3948
    %3950 = vrot.lane.b32.xlu0 %v3591, 111
    %v3951 = vpop.permute.xlu0 %3950
    %v3952 = vsel %vm560, %v3945, %v3949
    %v3953 = vsel %vm560, %v3947, %v3951
    %v3954 = vsel %vm560, %v3941, %v3945
    %v3955 = vsel %vm560, %v3943, %v3947
    %v3956 = vsel %vm560, %v3937, %v3941
    %v3957 = vsel %vm560, %v3939, %v3943
    %v3958 = vsel %vm560, %v3949, %v3937
    %v3959 = vsel %vm560, %v3951, %v3939
    %v3960 = vld [vmem:[%s565] sm:$0xff]
    %v3961 = vld [vmem:[%s565 + $0x8] sm:$0xff]
    %v3962 = vld [vmem:[%s565 + $0x10] sm:$0xff]
    %v3963 = vld [vmem:[%s565 + $0x18] sm:$0xff]
    %v3964 = vld [vmem:[%s565 + $0x20] sm:$0xff]
    %v3965 = vld [vmem:[%s565 + $0x28] sm:$0xff]
    %v3966 = vld [vmem:[%s565 + $0x30] sm:$0xff]
    %v3967 = vld [vmem:[%s565 + $0x38] sm:$0xff]
    %v3968 = vmul.f32 %v3956, %v3960
    %v3969 = vmul.f32 %v3954, %v3961
    %v3970 = vmul.f32 %v3952, %v3962
    %v3971 = vmul.f32 %v3958, %v3963
    %v3972 = vmul.f32 %v3957, %v3964
    %v3973 = vmul.f32 %v3955, %v3965
    %v3974 = vmul.f32 %v3953, %v3966
    %v3975 = vmul.f32 %v3959, %v3967
    %v3976 = vpack.c.bf16 %v3972, %v3968
    %v3977 = vpack.c.bf16 %v3973, %v3969
    %v3978 = vpack.c.bf16 %v3974, %v3970
    %v3979 = vpack.c.bf16 %v3975, %v3971
    %3980 = vst [vmem:[#allocation2 + $0x100] sm:$0xff] %v3976
    %3981 = vst [vmem:[#allocation2 + $0x108] sm:$0xff] %v3977
    %3982 = vst [vmem:[#allocation2 + $0x110] sm:$0xff] %v3978
    %3983 = vst [vmem:[#allocation2 + $0x118] sm:$0xff] %v3979
    %v3984 = vld [vmem:[#allocation19] sm:$0xff]
    %v3985 = vld [vmem:[#allocation2] sm:$0xff]
    %v3986 = vld [vmem:[#allocation2 + $0x8] sm:$0xff]
    %v3987 = vld [vmem:[#allocation2 + $0x10] sm:$0xff]
    %v3988 = vld [vmem:[#allocation2 + $0x18] sm:$0xff]
    %v3989 = vld [vmem:[#allocation2 + $0x20] sm:$0xff]
    %v3990 = vld [vmem:[#allocation2 + $0x28] sm:$0xff]
    %v3991 = vld [vmem:[#allocation2 + $0x30] sm:$0xff]
    %v3992 = vld [vmem:[#allocation2 + $0x38] sm:$0xff]
    %v3993 = vld [vmem:[#allocation2 + $0x40] sm:$0xff]
    %v3994 = vld [vmem:[#allocation2 + $0x48] sm:$0xff]
    %v3995 = vld [vmem:[#allocation2 + $0x50] sm:$0xff]
    %v3996 = vld [vmem:[#allocation2 + $0x58] sm:$0xff]
    %v3997 = vld [vmem:[#allocation2 + $0x60] sm:$0xff]
    %v3998 = vld [vmem:[#allocation2 + $0x68] sm:$0xff]
    %v3999 = vld [vmem:[#allocation2 + $0x70] sm:$0xff]
    %v4000 = vld [vmem:[#allocation2 + $0x78] sm:$0xff]
    %v4001 = vld [vmem:[#allocation2 + $0x80] sm:$0xff]
    %v4002 = vld [vmem:[#allocation2 + $0x88] sm:$0xff]
    %v4003 = vld [vmem:[#allocation2 + $0x90] sm:$0xff]
    %v4004 = vld [vmem:[#allocation2 + $0x98] sm:$0xff]
    %v4005 = vld [vmem:[#allocation2 + $0xa0] sm:$0xff]
    %v4006 = vld [vmem:[#allocation2 + $0xa8] sm:$0xff]
    %v4007 = vld [vmem:[#allocation2 + $0xb0] sm:$0xff]
    %v4008 = vld [vmem:[#allocation2 + $0xb8] sm:$0xff]
    %v4009 = vld [vmem:[#allocation2 + $0xc0] sm:$0xff]
    %v4010 = vld [vmem:[#allocation2 + $0xc8] sm:$0xff]
    %v4011 = vld [vmem:[#allocation2 + $0xd0] sm:$0xff]
    %v4012 = vld [vmem:[#allocation2 + $0xd8] sm:$0xff]
    %v4013 = vld [vmem:[#allocation2 + $0xe0] sm:$0xff]
    %v4014 = vld [vmem:[#allocation2 + $0xe8] sm:$0xff]
    %v4015 = vld [vmem:[#allocation2 + $0xf0] sm:$0xff]
    %v4016 = vld [vmem:[#allocation2 + $0xf8] sm:$0xff]
    %v4017 = vld [vmem:[#allocation2 + $0x100] sm:$0xff]
    %v4018 = vld [vmem:[#allocation2 + $0x108] sm:$0xff]
    %v4019 = vld [vmem:[#allocation2 + $0x110] sm:$0xff]
    %v4020 = vld [vmem:[#allocation2 + $0x118] sm:$0xff]
    %v4021 = vld [vmem:[%s55] sm:$0xff]
    %4023 = vset.pattern.permute.xlu0 0
    %4024 = vperm.xlu0 %4023, %v4021
    %v4025 = vpop.permute.xlu0 %4024
    %v4028 = vunpack.c.l.b16 %v3984
    %v4029 = vunpack.c.h.b16 %v3984
    %v4030 = vpack.c.b16 %v4028, %v4028
    %v4031 = vpack.c.b16 %v4029, %v4029
    %v4034 = vsel %vm2091, %v4031, 0
    %4036 = vmatprep.subr.bf16.mxu0 %v3986
    %4037 = vmatpush1.bf16.msra.mxu0 %v3985
    %4038 = vmatprep.subr.bf16.mxu0 %v3990
    %4039 = vmatpush1.bf16.msra.mxu0 %v3989
    %4040 = vmatprep.subr.bf16.mxu0 %v3994
    %4041 = vmatpush1.bf16.msra.mxu0 %v3993
    %4042 = vmatprep.subr.bf16.mxu0 %v3998
    %4043 = vmatpush1.bf16.msra.mxu0 %v3997
    %4044 = vmatprep.subr.bf16.mxu0 %v4002
    %4045 = vmatpush1.bf16.msra.mxu0 %v4001
    %4046 = vmatprep.subr.bf16.mxu0 %v4006
    %4047 = vmatpush1.bf16.msra.mxu0 %v4005
    %4048 = vmatprep.subr.bf16.mxu0 %v4010
    %4049 = vmatpush1.bf16.msra.mxu0 %v4009
    %4050 = vmatprep.subr.bf16.mxu0 %v4014
    %4051 = vmatpush1.bf16.msra.mxu0 %v4013
    %4052 = vmatprep.subr.bf16.mxu0 %v4018
    %4053 = vmatpush1.bf16.msra.mxu0 %v4017
    %4054 = vmatprep.subr.bf16.mxu0 0
    %4055 = vmatpush1.bf16.msra.mxu0 0
    %4056 = vmatprep.subr.bf16.mxu0 0
    %4057 = vmatpush1.bf16.msra.mxu0 0
    %4058 = vmatprep.subr.bf16.mxu0 0
    %4059 = vmatpush1.bf16.msra.mxu0 0
    %4060 = vmatprep.subr.bf16.mxu0 0
    %4061 = vmatpush1.bf16.msra.mxu0 0
    %4062 = vmatprep.subr.bf16.mxu0 0
    %4063 = vmatpush1.bf16.msra.mxu0 0
    %4064 = vmatprep.subr.bf16.mxu0 0
    %4065 = vmatpush1.bf16.msra.mxu0 0
    %4066 = vmatprep.subr.bf16.mxu0 0
    %4067 = vmatpush1.bf16.msra.mxu0 0
    %4068 = vmatprep.mubr.bf16.mxu0 %v4034
    %4069 = vmatmul.mubr.bf16.gmra.mrb[0].mxu0 %v4030
    %v4070 = vpop.f32.mrb[0].mxu0
    %v4071 = vadd.f32 %v4025, %v4070
    %v4072 = vpop.f32.mrb[0].mxu0
    %v4073 = vadd.f32 %v4025, %v4072
    %v4074 = vpop.f32.mrb[0].mxu0
    %v4075 = vpop.f32.mrb[0].mxu0
    %4076 = vdwg.mxu0
    %4077 = vmatprep.subr.bf16.mxu0 %v3988
    %4078 = vmatpush1.bf16.msra.mxu0 %v3987
    %4079 = vmatprep.subr.bf16.mxu0 %v3992
    %4080 = vmatpush1.bf16.msra.mxu0 %v3991
    %4081 = vmatprep.subr.bf16.mxu0 %v3996
    %4082 = vmatpush1.bf16.msra.mxu0 %v3995
    %4083 = vmatprep.subr.bf16.mxu0 %v4000
    %4084 = vmatpush1.bf16.msra.mxu0 %v3999
    %4085 = vmatprep.subr.bf16.mxu0 %v4004
    %4086 = vmatpush1.bf16.msra.mxu0 %v4003
    %4087 = vmatprep.subr.bf16.mxu0 %v4008
    %4088 = vmatpush1.bf16.msra.mxu0 %v4007
    %4089 = vmatprep.subr.bf16.mxu0 %v4012
    %4090 = vmatpush1.bf16.msra.mxu0 %v4011
    %4091 = vmatprep.subr.bf16.mxu0 %v4016
    %4092 = vmatpush1.bf16.msra.mxu0 %v4015
    %4093 = vmatprep.subr.bf16.mxu0 %v4020
    %4094 = vmatpush1.bf16.msra.mxu0 %v4019
    %4095 = vmatprep.subr.bf16.mxu0 0
    %4096 = vmatpush1.bf16.msra.mxu0 0
    %4097 = vmatprep.subr.bf16.mxu0 0
    %4098 = vmatpush1.bf16.msra.mxu0 0
    %4099 = vmatprep.subr.bf16.mxu0 0
    %4100 = vmatpush1.bf16.msra.mxu0 0
    %4101 = vmatprep.subr.bf16.mxu0 0
    %4102 = vmatpush1.bf16.msra.mxu0 0
    %4103 = vmatprep.subr.bf16.mxu0 0
    %4104 = vmatpush1.bf16.msra.mxu0 0
    %4105 = vmatprep.subr.bf16.mxu0 0
    %4106 = vmatpush1.bf16.msra.mxu0 0
    %4107 = vmatprep.subr.bf16.mxu0 0
    %4108 = vmatpush1.bf16.msra.mxu0 0
    %4109 = vmatprep.mubr.bf16.mxu0 %v4034
    %4110 = vmatmul.mubr.bf16.gmra.mrb[0].mxu0 %v4030
    %v4111 = vpop.f32.mrb[0].mxu0
    %v4112 = vadd.f32 %v4025, %v4111
    %v4113 = vpop.f32.mrb[0].mxu0
    %v4114 = vadd.f32 %v4025, %v4113
    %v4115 = vpop.f32.mrb[0].mxu0
    %v4116 = vpop.f32.mrb[0].mxu0
    %4117 = vdwg.mxu0
    %v4118 = vsub.f32 0.0, %v4071
    %v4119 = vsub.f32 0.0, %v4073
    %v4120 = vsub.f32 0.0, %v4112
    %v4121 = vsub.f32 0.0, %v4114
    %v4122 = vmul.f32 %v4118, 1.442695
    %v4123 = vpow.pop %v4122
    %v4124 = vmul.f32 %v4119, 1.442695
    %v4125 = vpow.pop %v4124
    %v4126 = vmul.f32 %v4120, 1.442695
    %v4127 = vpow.pop %v4126
    %v4128 = vmul.f32 %v4121, 1.442695
    %v4129 = vpow.pop %v4128
    %v4130 = vadd.f32 %v4123, 1.0
    %v4131 = vadd.f32 %v4125, 1.0
    %v4132 = vadd.f32 %v4127, 1.0
    %v4133 = vadd.f32 %v4129, 1.0
    %v4134 = vrcp.pop %v4130
    %v4135 = vrcp.pop %v4131
    %v4136 = vrcp.pop %v4132
    %v4137 = vrcp.pop %v4133
    %v4138 = vmul.f32 %v4071, %v4134
    %v4139 = vmul.f32 %v4073, %v4135
    %v4140 = vmul.f32 %v4112, %v4136
    %v4141 = vmul.f32 %v4114, %v4137
    %4142 = vrot.lane.b32.xlu0 %v4138, 17
    %v4143 = vpop.permute.xlu0 %4142
    %4144 = vrot.lane.b32.xlu0 %v4139, 17
    %v4145 = vpop.permute.xlu0 %4144
    %4146 = vrot.lane.b32.xlu0 %v4140, 17
    %v4147 = vpop.permute.xlu0 %4146
    %4148 = vrot.lane.b32.xlu0 %v4141, 17
    %v4149 = vpop.permute.xlu0 %4148
    %v4150 = vsel %vm295, %v4147, %v4149
    %v4151 = vsel %vm295, %v4145, %v4147
    %v4152 = vsel %vm295, %v4143, %v4145
    %v4153 = vsel %vm295, %v4149, %v4143
    %v4154 = vld [vmem:[%s5] sm:$0xff]
    %v4155 = vld [vmem:[%s5 + $0x8] sm:$0xff]
    %v4156 = vld [vmem:[%s5 + $0x10] sm:$0xff]
    %v4157 = vld [vmem:[%s5 + $0x18] sm:$0xff]
    %v4158 = vmul.f32 %v4153, %v4154
    %v4159 = vmul.f32 %v4152, %v4155
    %v4160 = vmul.f32 %v4151, %v4156
    %v4161 = vmul.f32 %v4150, %v4157
    %v4162 = vpack.c.bf16 %v4158, %v4158
    %v4163 = vpack.c.bf16 %v4159, %v4159
    %v4164 = vpack.c.bf16 %v4160, %v4160
    %v4165 = vpack.c.bf16 %v4161, %v4161
    %4166 = vst [vmem:[#allocation2] sm:$0xf] %v4162
    %4167 = vst [vmem:[#allocation2 + $0x8] sm:$0xf] %v4163
    %4168 = vst [vmem:[#allocation2 + $0x10] sm:$0xf] %v4164
    %4169 = vst [vmem:[#allocation2 + $0x18] sm:$0xf] %v4165
    %4170 = vrot.lane.b32.xlu0 %v4138, 16
    %v4171 = vpop.permute.xlu0 %4170
    %4172 = vrot.lane.b32.xlu0 %v4139, 16
    %v4173 = vpop.permute.xlu0 %4172
    %4174 = vrot.lane.b32.xlu0 %v4140, 16
    %v4175 = vpop.permute.xlu0 %4174
    %4176 = vrot.lane.b32.xlu0 %v4141, 16
    %v4177 = vpop.permute.xlu0 %4176
    %v4178 = vsel %vm324, %v4175, %v4177
    %v4179 = vsel %vm324, %v4173, %v4175
    %v4180 = vsel %vm324, %v4171, %v4173
    %v4181 = vsel %vm324, %v4177, %v4171
    %v4182 = vld [vmem:[%s329] sm:$0xff]
    %v4183 = vld [vmem:[%s329 + $0x8] sm:$0xff]
    %v4184 = vld [vmem:[%s329 + $0x10] sm:$0xff]
    %v4185 = vld [vmem:[%s329 + $0x18] sm:$0xff]
    %v4186 = vmul.f32 %v4181, %v4182
    %v4187 = vmul.f32 %v4180, %v4183
    %v4188 = vmul.f32 %v4179, %v4184
    %v4189 = vmul.f32 %v4178, %v4185
    %v4190 = vpack.c.bf16 %v4186, %v4186
    %v4191 = vpack.c.bf16 %v4187, %v4187
    %v4192 = vpack.c.bf16 %v4188, %v4188
    %v4193 = vpack.c.bf16 %v4189, %v4189
    %v4198 = vrot.slane %v4190, 4
    %v4199 = vrot.slane %v4191, 4
    %v4200 = vrot.slane %v4192, 4
    %v4201 = vrot.slane %v4193, 4
    %4206 = vst [vmem:[#allocation2] sm:$0xf0] %v4198
    %4207 = vst [vmem:[#allocation2 + $0x8] sm:$0xf0] %v4199
    %4208 = vst [vmem:[#allocation2 + $0x10] sm:$0xf0] %v4200
    %4209 = vst [vmem:[#allocation2 + $0x18] sm:$0xf0] %v4201
    %4210 = vrot.lane.b32.xlu0 %v4138, 15
    %v4211 = vpop.permute.xlu0 %4210
    %4212 = vrot.lane.b32.xlu0 %v4139, 15
    %v4213 = vpop.permute.xlu0 %4212
    %4214 = vrot.lane.b32.xlu0 %v4140, 15
    %v4215 = vpop.permute.xlu0 %4214
    %4216 = vrot.lane.b32.xlu0 %v4141, 15
    %v4217 = vpop.permute.xlu0 %4216
    %v4218 = vsel %vm366, %v4215, %v4217
    %v4219 = vsel %vm366, %v4213, %v4215
    %v4220 = vsel %vm366, %v4211, %v4213
    %v4221 = vsel %vm366, %v4217, %v4211
    %v4222 = vld [vmem:[%s371] sm:$0xff]
    %v4223 = vld [vmem:[%s371 + $0x8] sm:$0xff]
    %v4224 = vld [vmem:[%s371 + $0x10] sm:$0xff]
    %v4225 = vld [vmem:[%s371 + $0x18] sm:$0xff]
    %v4226 = vmul.f32 %v4221, %v4222
    %v4227 = vmul.f32 %v4220, %v4223
    %v4228 = vmul.f32 %v4219, %v4224
    %v4229 = vmul.f32 %v4218, %v4225
    %v4230 = vpack.c.bf16 %v4226, %v4226
    %v4231 = vpack.c.bf16 %v4227, %v4227
    %v4232 = vpack.c.bf16 %v4228, %v4228
    %v4233 = vpack.c.bf16 %v4229, %v4229
    %4234 = vst [vmem:[#allocation2 + $0x20] sm:$0xf] %v4230
    %4235 = vst [vmem:[#allocation2 + $0x28] sm:$0xf] %v4231
    %4236 = vst [vmem:[#allocation2 + $0x30] sm:$0xf] %v4232
    %4237 = vst [vmem:[#allocation2 + $0x38] sm:$0xf] %v4233
    %4238 = vrot.lane.b32.xlu0 %v4138, 1
    %v4239 = vpop.permute.xlu0 %4238
    %4240 = vrot.lane.b32.xlu0 %v4139, 1
    %v4241 = vpop.permute.xlu0 %4240
    %4242 = vrot.lane.b32.xlu0 %v4140, 1
    %v4243 = vpop.permute.xlu0 %4242
    %4244 = vrot.lane.b32.xlu0 %v4141, 1
    %v4245 = vpop.permute.xlu0 %4244
    %v4246 = vsel %vm396, %v4243, %v4245
    %v4247 = vsel %vm396, %v4241, %v4243
    %v4248 = vsel %vm396, %v4239, %v4241
    %v4249 = vsel %vm396, %v4245, %v4239
    %v4250 = vld [vmem:[%s401] sm:$0xff]
    %v4251 = vld [vmem:[%s401 + $0x8] sm:$0xff]
    %v4252 = vld [vmem:[%s401 + $0x10] sm:$0xff]
    %v4253 = vld [vmem:[%s401 + $0x18] sm:$0xff]
    %v4254 = vmul.f32 %v4249, %v4250
    %v4255 = vmul.f32 %v4248, %v4251
    %v4256 = vmul.f32 %v4247, %v4252
    %v4257 = vmul.f32 %v4246, %v4253
    %v4258 = vpack.c.bf16 %v4254, %v4254
    %v4259 = vpack.c.bf16 %v4255, %v4255
    %v4260 = vpack.c.bf16 %v4256, %v4256
    %v4261 = vpack.c.bf16 %v4257, %v4257
    %v4266 = vrot.slane %v4258, 4
    %v4267 = vrot.slane %v4259, 4
    %v4268 = vrot.slane %v4260, 4
    %v4269 = vrot.slane %v4261, 4
    %4274 = vst [vmem:[#allocation2 + $0x20] sm:$0xf0] %v4266
    %4275 = vst [vmem:[#allocation2 + $0x28] sm:$0xf0] %v4267
    %4276 = vst [vmem:[#allocation2 + $0x30] sm:$0xf0] %v4268
    %4277 = vst [vmem:[#allocation2 + $0x38] sm:$0xf0] %v4269
    %v4278 = vpack.c.bf16 %v4138, %v4138
    %v4279 = vpack.c.bf16 %v4139, %v4139
    %v4280 = vpack.c.bf16 %v4140, %v4140
    %v4281 = vpack.c.bf16 %v4141, %v4141
    %4282 = vst [vmem:[#allocation2 + $0x40] sm:$0xf] %v4278
    %4283 = vst [vmem:[#allocation2 + $0x48] sm:$0xf] %v4279
    %4284 = vst [vmem:[#allocation2 + $0x50] sm:$0xf] %v4280
    %4285 = vst [vmem:[#allocation2 + $0x58] sm:$0xf] %v4281
    %4286 = vrot.lane.b32.xlu0 %v4138, 127
    %v4287 = vpop.permute.xlu0 %4286
    %4288 = vrot.lane.b32.xlu0 %v4139, 127
    %v4289 = vpop.permute.xlu0 %4288
    %4290 = vrot.lane.b32.xlu0 %v4140, 127
    %v4291 = vpop.permute.xlu0 %4290
    %4292 = vrot.lane.b32.xlu0 %v4141, 127
    %v4293 = vpop.permute.xlu0 %4292
    %v4294 = vsel %vm446, %v4291, %v4293
    %v4295 = vsel %vm446, %v4289, %v4291
    %v4296 = vsel %vm446, %v4287, %v4289
    %v4297 = vsel %vm446, %v4293, %v4287
    %v4298 = vld [vmem:[%s451] sm:$0xff]
    %v4299 = vld [vmem:[%s451 + $0x8] sm:$0xff]
    %v4300 = vld [vmem:[%s451 + $0x10] sm:$0xff]
    %v4301 = vld [vmem:[%s451 + $0x18] sm:$0xff]
    %v4302 = vmul.f32 %v4296, %v4298
    %v4303 = vmul.f32 %v4295, %v4299
    %v4304 = vmul.f32 %v4294, %v4300
    %v4305 = vmul.f32 %v4297, %v4301
    %v4306 = vpack.c.bf16 %v4302, %v4302
    %v4307 = vpack.c.bf16 %v4303, %v4303
    %v4308 = vpack.c.bf16 %v4304, %v4304
    %v4309 = vpack.c.bf16 %v4305, %v4305
    %v4314 = vrot.slane %v4306, 4
    %v4315 = vrot.slane %v4307, 4
    %v4316 = vrot.slane %v4308, 4
    %v4317 = vrot.slane %v4309, 4
    %4322 = vst [vmem:[#allocation2 + $0x40] sm:$0xf0] %v4314
    %4323 = vst [vmem:[#allocation2 + $0x48] sm:$0xf0] %v4315
    %4324 = vst [vmem:[#allocation2 + $0x50] sm:$0xf0] %v4316
    %4325 = vst [vmem:[#allocation2 + $0x58] sm:$0xf0] %v4317
    %4326 = vrot.lane.b32.xlu0 %v4138, 113
    %v4327 = vpop.permute.xlu0 %4326
    %4328 = vrot.lane.b32.xlu0 %v4139, 113
    %v4329 = vpop.permute.xlu0 %4328
    %4330 = vrot.lane.b32.xlu0 %v4140, 113
    %v4331 = vpop.permute.xlu0 %4330
    %4332 = vrot.lane.b32.xlu0 %v4141, 113
    %v4333 = vpop.permute.xlu0 %4332
    %v4334 = vsel %vm488, %v4331, %v4333
    %v4335 = vsel %vm488, %v4329, %v4331
    %v4336 = vsel %vm488, %v4327, %v4329
    %v4337 = vsel %vm488, %v4333, %v4327
    %v4338 = vld [vmem:[%s493] sm:$0xff]
    %v4339 = vld [vmem:[%s493 + $0x8] sm:$0xff]
    %v4340 = vld [vmem:[%s493 + $0x10] sm:$0xff]
    %v4341 = vld [vmem:[%s493 + $0x18] sm:$0xff]
    %v4342 = vmul.f32 %v4336, %v4338
    %v4343 = vmul.f32 %v4335, %v4339
    %v4344 = vmul.f32 %v4334, %v4340
    %v4345 = vmul.f32 %v4337, %v4341
    %v4346 = vpack.c.bf16 %v4342, %v4342
    %v4347 = vpack.c.bf16 %v4343, %v4343
    %v4348 = vpack.c.bf16 %v4344, %v4344
    %v4349 = vpack.c.bf16 %v4345, %v4345
    %4350 = vst [vmem:[#allocation2 + $0x60] sm:$0xf] %v4346
    %4351 = vst [vmem:[#allocation2 + $0x68] sm:$0xf] %v4347
    %4352 = vst [vmem:[#allocation2 + $0x70] sm:$0xf] %v4348
    %4353 = vst [vmem:[#allocation2 + $0x78] sm:$0xf] %v4349
    %4354 = vrot.lane.b32.xlu0 %v4138, 112
    %v4355 = vpop.permute.xlu0 %4354
    %4356 = vrot.lane.b32.xlu0 %v4139, 112
    %v4357 = vpop.permute.xlu0 %4356
    %4358 = vrot.lane.b32.xlu0 %v4140, 112
    %v4359 = vpop.permute.xlu0 %4358
    %4360 = vrot.lane.b32.xlu0 %v4141, 112
    %v4361 = vpop.permute.xlu0 %4360
    %v4362 = vsel %vm518, %v4359, %v4361
    %v4363 = vsel %vm518, %v4357, %v4359
    %v4364 = vsel %vm518, %v4355, %v4357
    %v4365 = vsel %vm518, %v4361, %v4355
    %v4366 = vld [vmem:[%s523] sm:$0xff]
    %v4367 = vld [vmem:[%s523 + $0x8] sm:$0xff]
    %v4368 = vld [vmem:[%s523 + $0x10] sm:$0xff]
    %v4369 = vld [vmem:[%s523 + $0x18] sm:$0xff]
    %v4370 = vmul.f32 %v4364, %v4366
    %v4371 = vmul.f32 %v4363, %v4367
    %v4372 = vmul.f32 %v4362, %v4368
    %v4373 = vmul.f32 %v4365, %v4369
    %v4374 = vpack.c.bf16 %v4370, %v4370
    %v4375 = vpack.c.bf16 %v4371, %v4371
    %v4376 = vpack.c.bf16 %v4372, %v4372
    %v4377 = vpack.c.bf16 %v4373, %v4373
    %v4382 = vrot.slane %v4374, 4
    %v4383 = vrot.slane %v4375, 4
    %v4384 = vrot.slane %v4376, 4
    %v4385 = vrot.slane %v4377, 4
    %4390 = vst [vmem:[#allocation2 + $0x60] sm:$0xf0] %v4382
    %4391 = vst [vmem:[#allocation2 + $0x68] sm:$0xf0] %v4383
    %4392 = vst [vmem:[#allocation2 + $0x70] sm:$0xf0] %v4384
    %4393 = vst [vmem:[#allocation2 + $0x78] sm:$0xf0] %v4385
    %4394 = vrot.lane.b32.xlu0 %v4138, 111
    %v4395 = vpop.permute.xlu0 %4394
    %4396 = vrot.lane.b32.xlu0 %v4139, 111
    %v4397 = vpop.permute.xlu0 %4396
    %4398 = vrot.lane.b32.xlu0 %v4140, 111
    %v4399 = vpop.permute.xlu0 %4398
    %4400 = vrot.lane.b32.xlu0 %v4141, 111
    %v4401 = vpop.permute.xlu0 %4400
    %v4402 = vsel %vm560, %v4399, %v4401
    %v4403 = vsel %vm560, %v4397, %v4399
    %v4404 = vsel %vm560, %v4395, %v4397
    %v4405 = vsel %vm560, %v4401, %v4395
    %v4406 = vld [vmem:[%s565] sm:$0xff]
    %v4407 = vld [vmem:[%s565 + $0x8] sm:$0xff]
    %v4408 = vld [vmem:[%s565 + $0x10] sm:$0xff]
    %v4409 = vld [vmem:[%s565 + $0x18] sm:$0xff]
    %v4410 = vmul.f32 %v4404, %v4406
    %v4411 = vmul.f32 %v4403, %v4407
    %v4412 = vmul.f32 %v4402, %v4408
    %v4413 = vmul.f32 %v4405, %v4409
    %v4414 = vpack.c.bf16 %v4410, %v4410
    %v4415 = vpack.c.bf16 %v4411, %v4411
    %v4416 = vpack.c.bf16 %v4412, %v4412
    %v4417 = vpack.c.bf16 %v4413, %v4413
    %4418 = vst [vmem:[#allocation2 + $0x80] sm:$0xf] %v4414
    %4419 = vst [vmem:[#allocation2 + $0x88] sm:$0xf] %v4415
    %4420 = vst [vmem:[#allocation2 + $0x90] sm:$0xf] %v4416
    %4421 = vst [vmem:[#allocation2 + $0x98] sm:$0xf] %v4417
    %v4422 = vld [vmem:[#allocation20] sm:$0xf]
    %v4423 = vld [vmem:[#allocation2] sm:$0xff]
    %v4424 = vld [vmem:[#allocation2 + $0x8] sm:$0xff]
    %v4425 = vld [vmem:[#allocation2 + $0x10] sm:$0xff]
    %v4426 = vld [vmem:[#allocation2 + $0x18] sm:$0xff]
    %v4427 = vld [vmem:[#allocation2 + $0x20] sm:$0xff]
    %v4428 = vld [vmem:[#allocation2 + $0x28] sm:$0xff]
    %v4429 = vld [vmem:[#allocation2 + $0x30] sm:$0xff]
    %v4430 = vld [vmem:[#allocation2 + $0x38] sm:$0xff]
    %v4431 = vld [vmem:[#allocation2 + $0x40] sm:$0xff]
    %v4432 = vld [vmem:[#allocation2 + $0x48] sm:$0xff]
    %v4433 = vld [vmem:[#allocation2 + $0x50] sm:$0xff]
    %v4434 = vld [vmem:[#allocation2 + $0x58] sm:$0xff]
    %v4435 = vld [vmem:[#allocation2 + $0x60] sm:$0xff]
    %v4436 = vld [vmem:[#allocation2 + $0x68] sm:$0xff]
    %v4437 = vld [vmem:[#allocation2 + $0x70] sm:$0xff]
    %v4438 = vld [vmem:[#allocation2 + $0x78] sm:$0xff]
    %v4439 = vld [vmem:[#allocation2 + $0x80] sm:$0xf]
    %v4440 = vld [vmem:[#allocation2 + $0x88] sm:$0xf]
    %v4441 = vld [vmem:[#allocation2 + $0x90] sm:$0xf]
    %v4442 = vld [vmem:[#allocation2 + $0x98] sm:$0xf]
    %v4443 = vld [vmem:[%s59] sm:$0xff]
    %4445 = vset.pattern.permute.xlu0 0
    %4446 = vperm.xlu0 %4445, %v4443
    %v4447 = vpop.permute.xlu0 %4446
    %v4450 = vsel %vm609, %v4422, 0
    %v4453 = vsel %vm613, %v4439, 0
    %v4456 = vsel %vm613, %v4440, 0
    %v4459 = vsel %vm613, %v4441, 0
    %v4462 = vsel %vm613, %v4442, 0
    %4464 = vmatprep.subr.bf16.mxu0 %v4424
    %4465 = vmatpush1.bf16.msra.mxu0 %v4423
    %4466 = vmatprep.subr.bf16.mxu0 %v4428
    %4467 = vmatpush1.bf16.msra.mxu0 %v4427
    %4468 = vmatprep.subr.bf16.mxu0 %v4432
    %4469 = vmatpush1.bf16.msra.mxu0 %v4431
    %4470 = vmatprep.subr.bf16.mxu0 %v4436
    %4471 = vmatpush1.bf16.msra.mxu0 %v4435
    %4472 = vmatprep.subr.bf16.mxu0 %v4456
    %4473 = vmatpush1.bf16.msra.mxu0 %v4453
    %4474 = vmatprep.subr.bf16.mxu0 0
    %4475 = vmatpush1.bf16.msra.mxu0 0
    %4476 = vmatprep.subr.bf16.mxu0 0
    %4477 = vmatpush1.bf16.msra.mxu0 0
    %4478 = vmatprep.subr.bf16.mxu0 0
    %4479 = vmatpush1.bf16.msra.mxu0 0
    %4480 = vmatprep.subr.bf16.mxu0 0
    %4481 = vmatpush1.bf16.msra.mxu0 0
    %4482 = vmatprep.subr.bf16.mxu0 0
    %4483 = vmatpush1.bf16.msra.mxu0 0
    %4484 = vmatprep.subr.bf16.mxu0 0
    %4485 = vmatpush1.bf16.msra.mxu0 0
    %4486 = vmatprep.subr.bf16.mxu0 0
    %4487 = vmatpush1.bf16.msra.mxu0 0
    %4488 = vmatprep.subr.bf16.mxu0 0
    %4489 = vmatpush1.bf16.msra.mxu0 0
    %4490 = vmatprep.subr.bf16.mxu0 0
    %4491 = vmatpush1.bf16.msra.mxu0 0
    %4492 = vmatprep.subr.bf16.mxu0 0
    %4493 = vmatpush1.bf16.msra.mxu0 0
    %4494 = vmatprep.subr.bf16.mxu0 0
    %4495 = vmatpush1.bf16.msra.mxu0 0
    %4496 = vmatprep.mubr.bf16.mxu0 0
    %4497 = vmatmul.mubr.bf16.gmra.mrb[0].mxu0 %v4450
    %v4498 = vpop.f32.mrb[0].mxu0
    %v4499 = vadd.f32 %v4447, %v4498
    %v4500 = vpop.f32.mrb[0].mxu0
    %v4501 = vadd.f32 %v4447, %v4500
    %v4502 = vpop.f32.mrb[0].mxu0
    %v4503 = vpop.f32.mrb[0].mxu0
    %4504 = vdwg.mxu0
    %4505 = vmatprep.subr.bf16.mxu0 %v4426
    %4506 = vmatpush1.bf16.msra.mxu0 %v4425
    %4507 = vmatprep.subr.bf16.mxu0 %v4430
    %4508 = vmatpush1.bf16.msra.mxu0 %v4429
    %4509 = vmatprep.subr.bf16.mxu0 %v4434
    %4510 = vmatpush1.bf16.msra.mxu0 %v4433
    %4511 = vmatprep.subr.bf16.mxu0 %v4438
    %4512 = vmatpush1.bf16.msra.mxu0 %v4437
    %4513 = vmatprep.subr.bf16.mxu0 %v4462
    %4514 = vmatpush1.bf16.msra.mxu0 %v4459
    %4515 = vmatprep.subr.bf16.mxu0 0
    %4516 = vmatpush1.bf16.msra.mxu0 0
    %4517 = vmatprep.subr.bf16.mxu0 0
    %4518 = vmatpush1.bf16.msra.mxu0 0
    %4519 = vmatprep.subr.bf16.mxu0 0
    %4520 = vmatpush1.bf16.msra.mxu0 0
    %4521 = vmatprep.subr.bf16.mxu0 0
    %4522 = vmatpush1.bf16.msra.mxu0 0
    %4523 = vmatprep.subr.bf16.mxu0 0
    %4524 = vmatpush1.bf16.msra.mxu0 0
    %4525 = vmatprep.subr.bf16.mxu0 0
    %4526 = vmatpush1.bf16.msra.mxu0 0
    %4527 = vmatprep.subr.bf16.mxu0 0
    %4528 = vmatpush1.bf16.msra.mxu0 0
    %4529 = vmatprep.subr.bf16.mxu0 0
    %4530 = vmatpush1.bf16.msra.mxu0 0
    %4531 = vmatprep.subr.bf16.mxu0 0
    %4532 = vmatpush1.bf16.msra.mxu0 0
    %4533 = vmatprep.subr.bf16.mxu0 0
    %4534 = vmatpush1.bf16.msra.mxu0 0
    %4535 = vmatprep.subr.bf16.mxu0 0
    %4536 = vmatpush1.bf16.msra.mxu0 0
    %4537 = vmatprep.mubr.bf16.mxu0 0
    %4538 = vmatmul.mubr.bf16.gmra.mrb[0].mxu0 %v4450
    %v4539 = vpop.f32.mrb[0].mxu0
    %v4540 = vadd.f32 %v4447, %v4539
    %v4541 = vpop.f32.mrb[0].mxu0
    %v4542 = vadd.f32 %v4447, %v4541
    %v4543 = vpop.f32.mrb[0].mxu0
    %v4544 = vpop.f32.mrb[0].mxu0
    %4545 = vdwg.mxu0
    %4546 = vst [vmem:[%s61] sm:$0xff] %v4499
    %4547 = vst [vmem:[%s61 + $0x8] sm:$0xff] %v4501
    %4548 = vst [vmem:[%s61 + $0x10] sm:$0xff] %v4540
    %4549 = vst [vmem:[%s61 + $0x18] sm:$0xff] %v4542
    // Predicated region
    $region170: #{representation_ae_forward.1} parent=1 // pred_check
      _
    $region171: #{representation_ae_forward.1} parent=1 // pred_check_branch
      %4551 = sbr.rel (0) target = $region173
    $region172: #{representation_ae_forward.1} parent=1 // pred_region
      _
    $region173: #{representation_ae_forward.1} parent=1 // pred_fallthru
      _
    // Predicated region
    $region174: #{representation_ae_forward.1} parent=1 // pred_check
      _
    $region175: #{representation_ae_forward.1} parent=1 // pred_check_branch
      %4553 = sbr.rel (0) target = $region177
    $region176: #{representation_ae_forward.1} parent=1 // pred_region
      _
    $region177: #{representation_ae_forward.1} parent=1 // pred_fallthru
      _
    // Predicated region
    $region178: #{representation_ae_forward.1} parent=1 // pred_check
      _
    $region179: #{representation_ae_forward.1} parent=1 // pred_check_branch
      %4555 = sbr.rel (0) target = $region181
    $region180: #{representation_ae_forward.1} parent=1 // pred_region
      _
    $region181: #{representation_ae_forward.1} parent=1 // pred_fallthru
      _
    // Predicated region
    $region182: #{representation_ae_forward.1} parent=1 // pred_check
      _
    $region183: #{representation_ae_forward.1} parent=1 // pred_check_branch
      %4557 = sbr.rel (0) target = $region185
    $region184: #{representation_ae_forward.1} parent=1 // pred_region
      _
    $region185: #{representation_ae_forward.1} parent=1 // pred_fallthru
      _
    %4558 = vsyncpa [#allocation4], 1
    %4559 = vsyncpa [#allocation6], 1
    %4560 = vsyncpa [#allocation9], 1
    %4561 = vsyncpa [#allocation12], 1
    %4562 = vsyncpa [#allocation15], 1
    %4563 = vsyncpa [#allocation18], 1
    %4564 = vsyncpa [#allocation21], 1

</llo_original>
